<compile_context>
chip_gen: v5e
topology: v5e:2x2
jax: 0.10.0
libtpu: 0.0.40
codegen_flags: <defaults>
</compile_context>

<pallas_src>
import functools

import jax
import jax.numpy as jnp
from jax import lax
from jax.experimental import pallas as pl
from jax.experimental.pallas import tpu as pltpu

EPS = 1e-5
LANE = 128
SUB = 8


def _round_up(x, m):
    return ((x + m - 1) // m) * m


# ----------------------------------------------------------------------------
# Fused Pallas kernel (one batch element per grid step)
# ----------------------------------------------------------------------------
def fused_block_kernel(*refs, H, W, Cqp, C8, identity_sc):
    """refs (non-identity): x, w1, s1, b1, w2, s2, b2, wqkv, bqkv, wsc, ssc, bsc, out, pad_sc
       refs (identity)    : x, w1, s1, b1, w2, s2, b2, wqkv, bqkv,                out, pad_sc

       x      : (1, H, W, Cpi)      bf16 lane-padded NHWC input
       w1     : (9*Cpi, Cpo)        bf16 im2col-layout conv1 weight (tap-major rows)
       w2     : (9*Cpo, Cpo)        bf16 im2col-layout conv2 weight
       s*/b*  : (1, Cpo)            f32 folded BN scale/shift
       wsc    : (Cpi, Cpo)          bf16 1x1 projection-shortcut weight
       wqkv   : (Cpo, 2*Cqp + Cpo)  bf16 fused q/k/v weight (gamma folded into v)
       bqkv   : (1, 2*Cqp + Cpo)    f32 fused q/k/v bias
       out    : (1, C8, H*W)        f32 channels-first output (only real channels)
       pad_sc : (H+2, W+2, Cpm)     f32 shared zero-padded conv input scratch."""
    if identity_sc:
        (x_ref, w1_ref, s1_ref, b1_ref, w2_ref, s2_ref, b2_ref,
         wqkv_ref, bqkv_ref, out_ref, pad_sc) = refs
        wsc_ref = ssc_ref = bsc_ref = None
    else:
        (x_ref, w1_ref, s1_ref, b1_ref, w2_ref, s2_ref, b2_ref,
         wqkv_ref, bqkv_ref, wsc_ref, ssc_ref, bsc_ref, out_ref, pad_sc) = refs

    N = H * W
    Cpi = x_ref.shape[-1]
    Cpo = s1_ref.shape[-1]
    Cpm = pad_sc.shape[-1]

    x = x_ref[0]                                                  # (H, W, Cpi) bf16

    # ---- zero only the 1-pixel border of the shared pad buffer --------------
    # (interior is fully overwritten below; done every step so each grid
    #  iteration is self-contained when the batch axis is split across cores).
    zr = jnp.zeros((1, W + 2, Cpm), pad_sc.dtype)
    zc = jnp.zeros((H + 2, 1, Cpm), pad_sc.dtype)
    pad_sc[0:1, :, :] = zr
    pad_sc[H + 1:H + 2, :, :] = zr
    pad_sc[:, 0:1, :] = zc
    pad_sc[:, W + 1:W + 2, :] = zc

    def conv3x3(w_ref, Cin_p):
        # 9 rectangular taps straight from the pad buffer -> accumulated matmuls
        # (no patch-matrix materialization).
        acc = None
        for kh in range(3):
            for kw in range(3):
                j = kh * 3 + kw
                tap = pad_sc[kh:kh + H, kw:kw + W, 0:Cin_p].astype(jnp.bfloat16)
                tap = tap.reshape(N, Cin_p)
                part = jnp.dot(tap, w_ref[j * Cin_p:(j + 1) * Cin_p, :],
                               preferred_element_type=jnp.float32)
                acc = part if acc is None else acc + part
        return acc                                                # (N, Cout_p) f32

    # ---- conv1 (3x3, 'same') + BN + ReLU ------------------------------------
    pad_sc[1:H + 1, 1:W + 1, 0:Cpi] = x.astype(pad_sc.dtype)
    h1 = conv3x3(w1_ref, Cpi)
    h1 = jnp.maximum(h1 * s1_ref[...] + b1_ref[...], 0.0)         # relu(bn1(conv1(x)))

    # ---- conv2 (3x3, 'same') + BN  (reuses the same pad buffer) -------------
    pad_sc[1:H + 1, 1:W + 1, 0:Cpo] = h1.reshape(H, W, Cpo)
    f = conv3x3(w2_ref, Cpo)
    f = f * s2_ref[...] + b2_ref[...]                             # bn2(conv2(.)), (N, Cpo) f32

    # ---- shortcut ------------------------------------------------------------
    if identity_sc:
        sc = x.reshape(N, Cpi).astype(jnp.float32)                # identity: no matmul
    else:
        sc = jnp.dot(x.reshape(N, Cpi), wsc_ref[...],
                     preferred_element_type=jnp.float32)
        sc = sc * ssc_ref[...] + bsc_ref[...]                     # bn_sc(conv1x1(x))

    # ---- self-attention (fused q/k/v projection; gamma folded into v) -------
    fb = f.astype(jnp.bfloat16)
    qkv = jnp.dot(fb, wqkv_ref[...],
                  preferred_element_type=jnp.float32) + bqkv_ref[...]
    q = qkv[:, :Cqp].astype(jnp.bfloat16)
    k = qkv[:, Cqp:2 * Cqp].astype(jnp.bfloat16)
    v = qkv[:, 2 * Cqp:].astype(jnp.bfloat16)
    # TODO(synk): flash-style KV tiling for large H*W (see header note).
    logits = lax.dot_general(q, k, (((1,), (1,)), ((), ())),
                             preferred_element_type=jnp.float32)  # (N, N) = q @ k^T
    logits = logits - jnp.max(logits, axis=-1, keepdims=True)
    e = jnp.exp(logits)
    attn = e * pl.reciprocal(jnp.sum(e, axis=-1, keepdims=True), approx=True)
    att_out = jnp.dot(attn.astype(jnp.bfloat16), v,
                      preferred_element_type=jnp.float32)          # gamma already folded

    # ---- residual adds + final ReLU, channels-first lane-dense writeback ----
    res = jnp.maximum(att_out + f + sc, 0.0)                       # (N, Cpo) f32
    out_ref[0] = jnp.transpose(res)[:C8, :]                        # (C8, N): real channels only


# ----------------------------------------------------------------------------
# Parameter prep (plain JAX on small weight tensors) + pallas_call wrapper
# ----------------------------------------------------------------------------
def _bn_fold_padded(w, b, rm, rv, Cp):
    scale = w / jnp.sqrt(rv + EPS)
    shift = b - rm * scale
    scale = jnp.pad(scale, (0, Cp - scale.shape[0]))
    shift = jnp.pad(shift, (0, Cp - shift.shape[0]))
    return (scale.reshape(1, Cp).astype(jnp.float32),
            shift.reshape(1, Cp).astype(jnp.float32))


def _prep_conv3x3(w_oihw, Cip, Cop):
    Cout, Cin = w_oihw.shape[0], w_oihw.shape[1]
    w = jnp.transpose(w_oihw, (2, 3, 1, 0))                       # HWIO
    w = jnp.pad(w, ((0, 0), (0, 0), (0, Cip - Cin), (0, Cop - Cout)))
    return w.reshape(9 * Cip, Cop).astype(jnp.bfloat16)           # tap-major rows


def residual_attention_block(x_nchw, p):
    """Pallas implementation. Input/output are NCHW (matching PyTorch)."""
    B, Cin, H, W = x_nchw.shape
    Cout = p['conv1_w'].shape[0]
    Cq = Cout // 8

    Cpi = _round_up(Cin, LANE)
    Cpo = _round_up(Cout, LANE)
    Cqp = _round_up(Cq, LANE)
    Cpm = max(Cpi, Cpo)
    C8 = _round_up(Cout, SUB)
    N = H * W
    identity_sc = (Cin == Cout)

    # NCHW -> NHWC, lane-pad channels, bf16 activations for the MXU.
    x = jnp.transpose(x_nchw, (0, 2, 3, 1))
    x = jnp.pad(x, ((0, 0), (0, 0), (0, 0), (0, Cpi - Cin))).astype(jnp.bfloat16)

    w1 = _prep_conv3x3(p['conv1_w'], Cpi, Cpo)
    w2 = _prep_conv3x3(p['conv2_w'], Cpo, Cpo)
    s1, b1 = _bn_fold_padded(p['bn1_w'], p['bn1_b'], p['bn1_rm'], p['bn1_rv'], Cpo)
    s2, b2 = _bn_fold_padded(p['bn2_w'], p['bn2_b'], p['bn2_rm'], p['bn2_rv'], Cpo)

    # Fused q/k/v projection; gamma folded into the v block (gamma * (attn @ v)).
    gamma = p['gamma'].astype(jnp.float32)
    wq = jnp.pad(p['q_w'][:, :, 0, 0].T, ((0, Cpo - Cout), (0, Cqp - Cq)))
    wk = jnp.pad(p['k_w'][:, :, 0, 0].T, ((0, Cpo - Cout), (0, Cqp - Cq)))
    wv = jnp.pad(gamma * p['v_w'][:, :, 0, 0].T, ((0, Cpo - Cout), (0, Cpo - Cout)))
    bq = jnp.pad(p['q_b'], (0, Cqp - Cq))
    bk = jnp.pad(p['k_b'], (0, Cqp - Cq))
    bv = jnp.pad(gamma * p['v_b'], (0, Cpo - Cout))
    wqkv = jnp.concatenate([wq, wk, wv], axis=1).astype(jnp.bfloat16)
    bqkv = jnp.concatenate([bq, bk, bv]).reshape(1, -1).astype(jnp.float32)

    rep = lambda b: (0, 0)                                        # grid-constant weights
    args = [x, w1, s1, b1, w2, s2, b2, wqkv, bqkv]
    in_specs = [
        pl.BlockSpec((1, H, W, Cpi), lambda b: (b, 0, 0, 0)),
        pl.BlockSpec((9 * Cpi, Cpo), rep),
        pl.BlockSpec((1, Cpo), rep),
        pl.BlockSpec((1, Cpo), rep),
        pl.BlockSpec((9 * Cpo, Cpo), rep),
        pl.BlockSpec((1, Cpo), rep),
        pl.BlockSpec((1, Cpo), rep),
        pl.BlockSpec((Cpo, 2 * Cqp + Cpo), rep),
        pl.BlockSpec((1, 2 * Cqp + Cpo), rep),
    ]
    if not identity_sc:
        wsc = jnp.pad(p['sc_w'][:, :, 0, 0].T,
                      ((0, Cpi - Cin), (0, Cpo - Cout))).astype(jnp.bfloat16)
        ssc, bsc = _bn_fold_padded(p['bnsc_w'], p['bnsc_b'],
                                   p['bnsc_rm'], p['bnsc_rv'], Cpo)
        args += [wsc, ssc, bsc]
        in_specs += [pl.BlockSpec((Cpi, Cpo), rep),
                     pl.BlockSpec((1, Cpo), rep),
                     pl.BlockSpec((1, Cpo), rep)]

    # VMEM budget: double-buffered blocks + scratch + in-kernel temporaries (+ margin).
    weight_bytes = sum(int(a.size) * a.dtype.itemsize for a in args[1:])
    x_block_bytes = H * W * Cpi * 2
    out_block_bytes = C8 * N * 4
    scratch_bytes = (H + 2) * (W + 2) * Cpm * 4
    temp_bytes = (4 * N * N * 4                      # logits / exp / attn temporaries
                  + 2 * N * (2 * Cqp + Cpo) * 4      # fused qkv (+ bf16 copies)
                  + 12 * N * Cpm * 4)                # taps / h1 / f / sc / att_out / result
    vmem_limit = (2 * (weight_bytes + x_block_bytes + out_block_bytes)
                  + scratch_bytes + temp_bytes)
    vmem_limit = int(min(64 * 1024 * 1024, max(2 * vmem_limit, 32 * 1024 * 1024)))

    kernel = functools.partial(fused_block_kernel, H=H, W=W, Cqp=Cqp, C8=C8,
                               identity_sc=identity_sc)

    out = pl.pallas_call(
        kernel,
        out_shape=jax.ShapeDtypeStruct((B, C8, N), jnp.float32),
        grid=(B,),
        in_specs=in_specs,
        out_specs=pl.BlockSpec((1, C8, N), lambda b: (b, 0, 0)),
        scratch_shapes=[
            pltpu.VMEM((H + 2, W + 2, Cpm), jnp.float32),    # shared zero-padded conv input
        ],
        compiler_params=pltpu.CompilerParams(
            dimension_semantics=("parallel",),
            vmem_limit_bytes=vmem_limit),
    )(*args)

    # Output is already channels-first: just drop sublane padding and reshape (no transpose).
    return out[:, :Cout, :].reshape(B, Cout, H, W)


# ----------------------------------------------------------------------------
# Pure-JAX fp32 reference with identical math
# ----------------------------------------------------------------------------
def reference_forward(x_nchw, p):
    x = jnp.transpose(x_nchw, (0, 2, 3, 1)).astype(jnp.float32)
    B, H, W, Cin = x.shape
    Cout = p['conv1_w'].shape[0]

    def bn(y, w, b, rm, rv):
        return (y - rm) / jnp.sqrt(rv + EPS) * w + b

    def conv3x3(y, w_oihw):
        w = jnp.transpose(w_oihw, (2, 3, 1, 0))
        yp = jnp.pad(y, ((0, 0), (1, 1), (1, 1), (0, 0)))
        acc = jnp.zeros(y.shape[:3] + (w.shape[-1],), jnp.float32)
        for kh in range(3):
            for kw in range(3):
                acc = acc + jnp.einsum('bhwc,cd->bhwd',
                                       yp[:, kh:kh + H, kw:kw + W, :], w[kh, kw])
        return acc

    h = jax.nn.relu(bn(conv3x3(x, p['conv1_w']),
                       p['bn1_w'], p['bn1_b'], p['bn1_rm'], p['bn1_rv']))
    h = bn(conv3x3(h, p['conv2_w']),
           p['bn2_w'], p['bn2_b'], p['bn2_rm'], p['bn2_rv'])

    f = h.reshape(B, H * W, Cout)
    q = jnp.einsum('bnc,cd->bnd', f, p['q_w'][:, :, 0, 0].T) + p['q_b']
    k = jnp.einsum('bnc,cd->bnd', f, p['k_w'][:, :, 0, 0].T) + p['k_b']
    v = jnp.einsum('bnc,cd->bnd', f, p['v_w'][:, :, 0, 0].T) + p['v_b']
    attn = jax.nn.softmax(jnp.einsum('bnd,bmd->bnm', q, k), axis=-1)
    att_out = jnp.einsum('bnm,bmc->bnc', attn, v)
    h_att = (p['gamma'] * att_out + f).reshape(B, H, W, Cout)

    if Cin != Cout:
        sc = jnp.einsum('bhwc,cd->bhwd', x, p['sc_w'][:, :, 0, 0].T)
        sc = bn(sc, p['bnsc_w'], p['bnsc_b'], p['bnsc_rm'], p['bnsc_rv'])
    else:
        sc = x
    out = jax.nn.relu(h_att + sc)
    return jnp.transpose(out, (0, 3, 1, 2))


# ----------------------------------------------------------------------------
# Deterministic synthetic parameters + run
# ----------------------------------------------------------------------------
def make_params(key, in_channels, out_channels):
    ks = jax.random.split(key, 24)
    n = lambda k, s, sc=0.1: sc * jax.random.normal(k, s, jnp.float32)
    Cq = out_channels // 8
    return {
        'conv1_w': n(ks[0], (out_channels, in_channels, 3, 3)),
        'bn1_w': 1.0 + n(ks[1], (out_channels,)),
        'bn1_b': n(ks[2], (out_channels,)),
        'bn1_rm': n(ks[3], (out_channels,)),
        'bn1_rv': 1.0 + 0.1 * jnp.abs(jax.random.normal(ks[4], (out_channels,))),
        'conv2_w': n(ks[5], (out_channels, out_channels, 3, 3)),
        'bn2_w': 1.0 + n(ks[6], (out_channels,)),
        'bn2_b': n(ks[7], (out_channels,)),
        'bn2_rm': n(ks[8], (out_channels,)),
        'bn2_rv': 1.0 + 0.1 * jnp.abs(jax.random.normal(ks[9], (out_channels,))),
        'q_w': n(ks[10], (Cq, out_channels, 1, 1)),
        'q_b': n(ks[11], (Cq,)),
        'k_w': n(ks[12], (Cq, out_channels, 1, 1)),
        'k_b': n(ks[13], (Cq,)),
        'v_w': n(ks[14], (out_channels, out_channels, 1, 1)),
        'v_b': n(ks[15], (out_channels,)),
        # PyTorch inits gamma to 0; use a nonzero value so the attention path
        # actually contributes to the output in this synthetic test.
        'gamma': jnp.array(0.5, jnp.float32),
        'sc_w': n(ks[16], (out_channels, in_channels, 1, 1)),
        'bnsc_w': 1.0 + n(ks[17], (out_channels,)),
        'bnsc_b': n(ks[18], (out_channels,)),
        'bnsc_rm': n(ks[19], (out_channels,)),
        'bnsc_rv': 1.0 + 0.1 * jnp.abs(jax.random.normal(ks[20], (out_channels,))),
    }


if __name__ == "__main__":
    key = jax.random.PRNGKey(0)
    # (B, Cin, Cout, H, W): projection-shortcut case, then identity-shortcut case.
    for (B, Cin, Cout, H, W) in [(2, 8, 16, 16, 16), (2, 16, 16, 16, 16)]:
        key, kx, kp = jax.random.split(key, 3)
        x = jax.random.normal(kx, (B, Cin, H, W), jnp.float32)    # NCHW, like PyTorch
        params = make_params(kp, Cin, Cout)

        out = jax.block_until_ready(residual_attention_block(x, params))
        ref = jax.block_until_ready(reference_forward(x, params))

        assert out.shape == (B, Cout, H, W)
        # bf16 MXU operands vs fp32 reference -> allow a modest tolerance.
        assert jnp.allclose(out, ref, rtol=5e-2, atol=5e-2), (B, Cin, Cout, H, W)

    print("KERNEL_OK")
</pallas_src>

<mosaic_0001>
module attributes {stable_mosaic.version = 11 : i64} {
  func.func @fused_block_kernel(%arg0: i32, %arg1: memref<1x16x16x128xbf16, #tpu.memory_space<vmem>>, %arg2: memref<1152x128xbf16, #tpu.memory_space<vmem>>, %arg3: memref<1x128xf32, #tpu.memory_space<vmem>>, %arg4: memref<1x128xf32, #tpu.memory_space<vmem>>, %arg5: memref<1152x128xbf16, #tpu.memory_space<vmem>>, %arg6: memref<1x128xf32, #tpu.memory_space<vmem>>, %arg7: memref<1x128xf32, #tpu.memory_space<vmem>>, %arg8: memref<128x384xbf16, #tpu.memory_space<vmem>>, %arg9: memref<1x384xf32, #tpu.memory_space<vmem>>, %arg10: memref<128x128xbf16, #tpu.memory_space<vmem>>, %arg11: memref<1x128xf32, #tpu.memory_space<vmem>>, %arg12: memref<1x128xf32, #tpu.memory_space<vmem>>, %arg13: memref<1x16x256xf32, #tpu.memory_space<vmem>>, %arg14: memref<18x18x128xf32, #tpu.memory_space<vmem>>) attributes {dimension_semantics = [#tpu.dimension_semantics<parallel>], iteration_bounds = array<i64: 2>, scalar_prefetch = 0 : i64, scratch_operands = 1 : i64, tpu.core_type = #tpu.core_type<tc>, window_params = [{transform_indices = @transform_0, window_bounds = array<i64: 1, 16, 16, 128>}, {pipeline_mode = #tpu.pipeline_mode<synchronous>, transform_indices = @transform_1, window_bounds = array<i64: 1152, 128>}, {pipeline_mode = #tpu.pipeline_mode<synchronous>, transform_indices = @transform_2, window_bounds = array<i64: 1, 128>}, {pipeline_mode = #tpu.pipeline_mode<synchronous>, transform_indices = @transform_3, window_bounds = array<i64: 1, 128>}, {pipeline_mode = #tpu.pipeline_mode<synchronous>, transform_indices = @transform_4, window_bounds = array<i64: 1152, 128>}, {pipeline_mode = #tpu.pipeline_mode<synchronous>, transform_indices = @transform_5, window_bounds = array<i64: 1, 128>}, {pipeline_mode = #tpu.pipeline_mode<synchronous>, transform_indices = @transform_6, window_bounds = array<i64: 1, 128>}, {pipeline_mode = #tpu.pipeline_mode<synchronous>, transform_indices = @transform_7, window_bounds = array<i64: 128, 384>}, {pipeline_mode = #tpu.pipeline_mode<synchronous>, transform_indices = @transform_8, window_bounds = array<i64: 1, 384>}, {pipeline_mode = #tpu.pipeline_mode<synchronous>, transform_indices = @transform_9, window_bounds = array<i64: 128, 128>}, {pipeline_mode = #tpu.pipeline_mode<synchronous>, transform_indices = @transform_10, window_bounds = array<i64: 1, 128>}, {pipeline_mode = #tpu.pipeline_mode<synchronous>, transform_indices = @transform_11, window_bounds = array<i64: 1, 128>}, {transform_indices = @transform_12, window_bounds = array<i64: 1, 16, 256>}]} {
    %c0 = arith.constant 0 : index
    %c0_0 = arith.constant 0 : index
    %c0_1 = arith.constant 0 : index
    %c0_2 = arith.constant 0 : index
    %0 = vector.load %arg1[%c0, %c0_0, %c0_1, %c0_2] : memref<1x16x16x128xbf16, #tpu.memory_space<vmem>>, vector<1x16x16x128xbf16>
    %1 = vector.shape_cast %0 : vector<1x16x16x128xbf16> to vector<16x16x128xbf16>
    %cst = arith.constant 0.000000e+00 : f32
    %2 = vector.broadcast %cst : f32 to vector<1x18x128xf32>
    %cst_3 = arith.constant 0.000000e+00 : f32
    %3 = vector.broadcast %cst_3 : f32 to vector<18x1x128xf32>
    %c0_4 = arith.constant 0 : index
    %c0_5 = arith.constant 0 : index
    %c0_6 = arith.constant 0 : index
    %4 = vector.load %arg14[%c0_4, %c0_5, %c0_6] : memref<18x18x128xf32, #tpu.memory_space<vmem>>, vector<1x18x128xf32>
    tpu.vector_store %arg14[%c0_4, %c0_5, %c0_6], %2 {strides = array<i32>} : memref<18x18x128xf32, #tpu.memory_space<vmem>>, vector<1x18x128xf32>,
    %c17 = arith.constant 17 : index
    %c0_7 = arith.constant 0 : index
    %c0_8 = arith.constant 0 : index
    %5 = vector.load %arg14[%c17, %c0_7, %c0_8] : memref<18x18x128xf32, #tpu.memory_space<vmem>>, vector<1x18x128xf32>
    tpu.vector_store %arg14[%c17, %c0_7, %c0_8], %2 {strides = array<i32>} : memref<18x18x128xf32, #tpu.memory_space<vmem>>, vector<1x18x128xf32>,
    %c0_9 = arith.constant 0 : index
    %c0_10 = arith.constant 0 : index
    %c0_11 = arith.constant 0 : index
    %6 = vector.load %arg14[%c0_9, %c0_10, %c0_11] : memref<18x18x128xf32, #tpu.memory_space<vmem>>, vector<18x1x128xf32>
    tpu.vector_store %arg14[%c0_9, %c0_10, %c0_11], %3 {strides = array<i32>} : memref<18x18x128xf32, #tpu.memory_space<vmem>>, vector<18x1x128xf32>,
    %c0_12 = arith.constant 0 : index
    %c17_13 = arith.constant 17 : index
    %c0_14 = arith.constant 0 : index
    %7 = vector.load %arg14[%c0_12, %c17_13, %c0_14] : memref<18x18x128xf32, #tpu.memory_space<vmem>>, vector<18x1x128xf32>
    tpu.vector_store %arg14[%c0_12, %c17_13, %c0_14], %3 {strides = array<i32>} : memref<18x18x128xf32, #tpu.memory_space<vmem>>, vector<18x1x128xf32>,
    %8 = arith.extf %1 : vector<16x16x128xbf16> to vector<16x16x128xf32>
    %c1 = arith.constant 1 : index
    %c1_15 = arith.constant 1 : index
    %c0_16 = arith.constant 0 : index
    %9 = vector.load %arg14[%c1, %c1_15, %c0_16] : memref<18x18x128xf32, #tpu.memory_space<vmem>>, vector<16x16x128xf32>
    tpu.vector_store %arg14[%c1, %c1_15, %c0_16], %8 {strides = array<i32>} : memref<18x18x128xf32, #tpu.memory_space<vmem>>, vector<16x16x128xf32>,
    %c0_17 = arith.constant 0 : index
    %c0_18 = arith.constant 0 : index
    %c0_19 = arith.constant 0 : index
    %10 = vector.load %arg14[%c0_17, %c0_18, %c0_19] : memref<18x18x128xf32, #tpu.memory_space<vmem>>, vector<16x16x128xf32>
    %11 = arith.truncf %10 : vector<16x16x128xf32> to vector<16x16x128xbf16>
    %12 = vector.shape_cast %11 : vector<16x16x128xbf16> to vector<256x128xbf16>
    %c0_20 = arith.constant 0 : index
    %c0_21 = arith.constant 0 : index
    %13 = vector.load %arg2[%c0_20, %c0_21] : memref<1152x128xbf16, #tpu.memory_space<vmem>>, vector<128x128xbf16>
    %cst_22 = arith.constant dense<0.000000e+00> : vector<256x128xf32>
    %14 = tpu.matmul %12, %13, %cst_22 {dimension_numbers = #tpu.dot_dimension_numbers<[1], [0], [0], [1], [0, 0, 1, 1], [], []>} : vector<256x128xbf16>, vector<128x128xbf16>, vector<256x128xf32> -> vector<256x128xf32>
    %c0_23 = arith.constant 0 : index
    %c1_24 = arith.constant 1 : index
    %c0_25 = arith.constant 0 : index
    %15 = vector.load %arg14[%c0_23, %c1_24, %c0_25] : memref<18x18x128xf32, #tpu.memory_space<vmem>>, vector<16x16x128xf32>
    %16 = arith.truncf %15 : vector<16x16x128xf32> to vector<16x16x128xbf16>
    %17 = vector.shape_cast %16 : vector<16x16x128xbf16> to vector<256x128xbf16>
    %c128 = arith.constant 128 : index
    %c0_26 = arith.constant 0 : index
    %18 = vector.load %arg2[%c128, %c0_26] : memref<1152x128xbf16, #tpu.memory_space<vmem>>, vector<128x128xbf16>
    %cst_27 = arith.constant dense<0.000000e+00> : vector<256x128xf32>
    %19 = tpu.matmul %17, %18, %cst_27 {dimension_numbers = #tpu.dot_dimension_numbers<[1], [0], [0], [1], [0, 0, 1, 1], [], []>} : vector<256x128xbf16>, vector<128x128xbf16>, vector<256x128xf32> -> vector<256x128xf32>
    %20 = arith.addf %14, %19 : vector<256x128xf32>
    %c0_28 = arith.constant 0 : index
    %c2 = arith.constant 2 : index
    %c0_29 = arith.constant 0 : index
    %21 = vector.load %arg14[%c0_28, %c2, %c0_29] : memref<18x18x128xf32, #tpu.memory_space<vmem>>, vector<16x16x128xf32>
    %22 = arith.truncf %21 : vector<16x16x128xf32> to vector<16x16x128xbf16>
    %23 = vector.shape_cast %22 : vector<16x16x128xbf16> to vector<256x128xbf16>
    %c256 = arith.constant 256 : index
    %c0_30 = arith.constant 0 : index
    %24 = vector.load %arg2[%c256, %c0_30] : memref<1152x128xbf16, #tpu.memory_space<vmem>>, vector<128x128xbf16>
    %cst_31 = arith.constant dense<0.000000e+00> : vector<256x128xf32>
    %25 = tpu.matmul %23, %24, %cst_31 {dimension_numbers = #tpu.dot_dimension_numbers<[1], [0], [0], [1], [0, 0, 1, 1], [], []>} : vector<256x128xbf16>, vector<128x128xbf16>, vector<256x128xf32> -> vector<256x128xf32>
    %26 = arith.addf %20, %25 : vector<256x128xf32>
    %c1_32 = arith.constant 1 : index
    %c0_33 = arith.constant 0 : index
    %c0_34 = arith.constant 0 : index
    %27 = vector.load %arg14[%c1_32, %c0_33, %c0_34] : memref<18x18x128xf32, #tpu.memory_space<vmem>>, vector<16x16x128xf32>
    %28 = arith.truncf %27 : vector<16x16x128xf32> to vector<16x16x128xbf16>
    %29 = vector.shape_cast %28 : vector<16x16x128xbf16> to vector<256x128xbf16>
    %c384 = arith.constant 384 : index
    %c0_35 = arith.constant 0 : index
    %30 = vector.load %arg2[%c384, %c0_35] : memref<1152x128xbf16, #tpu.memory_space<vmem>>, vector<128x128xbf16>
    %cst_36 = arith.constant dense<0.000000e+00> : vector<256x128xf32>
    %31 = tpu.matmul %29, %30, %cst_36 {dimension_numbers = #tpu.dot_dimension_numbers<[1], [0], [0], [1], [0, 0, 1, 1], [], []>} : vector<256x128xbf16>, vector<128x128xbf16>, vector<256x128xf32> -> vector<256x128xf32>
    %32 = arith.addf %26, %31 : vector<256x128xf32>
    %c1_37 = arith.constant 1 : index
    %c1_38 = arith.constant 1 : index
    %c0_39 = arith.constant 0 : index
    %33 = vector.load %arg14[%c1_37, %c1_38, %c0_39] : memref<18x18x128xf32, #tpu.memory_space<vmem>>, vector<16x16x128xf32>
    %34 = arith.truncf %33 : vector<16x16x128xf32> to vector<16x16x128xbf16>
    %35 = vector.shape_cast %34 : vector<16x16x128xbf16> to vector<256x128xbf16>
    %c512 = arith.constant 512 : index
    %c0_40 = arith.constant 0 : index
    %36 = vector.load %arg2[%c512, %c0_40] : memref<1152x128xbf16, #tpu.memory_space<vmem>>, vector<128x128xbf16>
    %cst_41 = arith.constant dense<0.000000e+00> : vector<256x128xf32>
    %37 = tpu.matmul %35, %36, %cst_41 {dimension_numbers = #tpu.dot_dimension_numbers<[1], [0], [0], [1], [0, 0, 1, 1], [], []>} : vector<256x128xbf16>, vector<128x128xbf16>, vector<256x128xf32> -> vector<256x128xf32>
    %38 = arith.addf %32, %37 : vector<256x128xf32>
    %c1_42 = arith.constant 1 : index
    %c2_43 = arith.constant 2 : index
    %c0_44 = arith.constant 0 : index
    %39 = vector.load %arg14[%c1_42, %c2_43, %c0_44] : memref<18x18x128xf32, #tpu.memory_space<vmem>>, vector<16x16x128xf32>
    %40 = arith.truncf %39 : vector<16x16x128xf32> to vector<16x16x128xbf16>
    %41 = vector.shape_cast %40 : vector<16x16x128xbf16> to vector<256x128xbf16>
    %c640 = arith.constant 640 : index
    %c0_45 = arith.constant 0 : index
    %42 = vector.load %arg2[%c640, %c0_45] : memref<1152x128xbf16, #tpu.memory_space<vmem>>, vector<128x128xbf16>
    %cst_46 = arith.constant dense<0.000000e+00> : vector<256x128xf32>
    %43 = tpu.matmul %41, %42, %cst_46 {dimension_numbers = #tpu.dot_dimension_numbers<[1], [0], [0], [1], [0, 0, 1, 1], [], []>} : vector<256x128xbf16>, vector<128x128xbf16>, vector<256x128xf32> -> vector<256x128xf32>
    %44 = arith.addf %38, %43 : vector<256x128xf32>
    %c2_47 = arith.constant 2 : index
    %c0_48 = arith.constant 0 : index
    %c0_49 = arith.constant 0 : index
    %45 = vector.load %arg14[%c2_47, %c0_48, %c0_49] : memref<18x18x128xf32, #tpu.memory_space<vmem>>, vector<16x16x128xf32>
    %46 = arith.truncf %45 : vector<16x16x128xf32> to vector<16x16x128xbf16>
    %47 = vector.shape_cast %46 : vector<16x16x128xbf16> to vector<256x128xbf16>
    %c768 = arith.constant 768 : index
    %c0_50 = arith.constant 0 : index
    %48 = vector.load %arg2[%c768, %c0_50] : memref<1152x128xbf16, #tpu.memory_space<vmem>>, vector<128x128xbf16>
    %cst_51 = arith.constant dense<0.000000e+00> : vector<256x128xf32>
    %49 = tpu.matmul %47, %48, %cst_51 {dimension_numbers = #tpu.dot_dimension_numbers<[1], [0], [0], [1], [0, 0, 1, 1], [], []>} : vector<256x128xbf16>, vector<128x128xbf16>, vector<256x128xf32> -> vector<256x128xf32>
    %50 = arith.addf %44, %49 : vector<256x128xf32>
    %c2_52 = arith.constant 2 : index
    %c1_53 = arith.constant 1 : index
    %c0_54 = arith.constant 0 : index
    %51 = vector.load %arg14[%c2_52, %c1_53, %c0_54] : memref<18x18x128xf32, #tpu.memory_space<vmem>>, vector<16x16x128xf32>
    %52 = arith.truncf %51 : vector<16x16x128xf32> to vector<16x16x128xbf16>
    %53 = vector.shape_cast %52 : vector<16x16x128xbf16> to vector<256x128xbf16>
    %c896 = arith.constant 896 : index
    %c0_55 = arith.constant 0 : index
    %54 = vector.load %arg2[%c896, %c0_55] : memref<1152x128xbf16, #tpu.memory_space<vmem>>, vector<128x128xbf16>
    %cst_56 = arith.constant dense<0.000000e+00> : vector<256x128xf32>
    %55 = tpu.matmul %53, %54, %cst_56 {dimension_numbers = #tpu.dot_dimension_numbers<[1], [0], [0], [1], [0, 0, 1, 1], [], []>} : vector<256x128xbf16>, vector<128x128xbf16>, vector<256x128xf32> -> vector<256x128xf32>
    %56 = arith.addf %50, %55 : vector<256x128xf32>
    %c2_57 = arith.constant 2 : index
    %c2_58 = arith.constant 2 : index
    %c0_59 = arith.constant 0 : index
    %57 = vector.load %arg14[%c2_57, %c2_58, %c0_59] : memref<18x18x128xf32, #tpu.memory_space<vmem>>, vector<16x16x128xf32>
    %58 = arith.truncf %57 : vector<16x16x128xf32> to vector<16x16x128xbf16>
    %59 = vector.shape_cast %58 : vector<16x16x128xbf16> to vector<256x128xbf16>
    %c1024 = arith.constant 1024 : index
    %c0_60 = arith.constant 0 : index
    %60 = vector.load %arg2[%c1024, %c0_60] : memref<1152x128xbf16, #tpu.memory_space<vmem>>, vector<128x128xbf16>
    %cst_61 = arith.constant dense<0.000000e+00> : vector<256x128xf32>
    %61 = tpu.matmul %59, %60, %cst_61 {dimension_numbers = #tpu.dot_dimension_numbers<[1], [0], [0], [1], [0, 0, 1, 1], [], []>} : vector<256x128xbf16>, vector<128x128xbf16>, vector<256x128xf32> -> vector<256x128xf32>
    %62 = arith.addf %56, %61 : vector<256x128xf32>
    %c0_62 = arith.constant 0 : index
    %c0_63 = arith.constant 0 : index
    %63 = vector.load %arg3[%c0_62, %c0_63] : memref<1x128xf32, #tpu.memory_space<vmem>>, vector<1x128xf32>
    %64 = vector.broadcast %63 : vector<1x128xf32> to vector<256x128xf32>
    %65 = arith.mulf %62, %64 : vector<256x128xf32>
    %c0_64 = arith.constant 0 : index
    %c0_65 = arith.constant 0 : index
    %66 = vector.load %arg4[%c0_64, %c0_65] : memref<1x128xf32, #tpu.memory_space<vmem>>, vector<1x128xf32>
    %67 = vector.broadcast %66 : vector<1x128xf32> to vector<256x128xf32>
    %68 = arith.addf %65, %67 : vector<256x128xf32>
    %cst_66 = arith.constant 0.000000e+00 : f32
    %69 = vector.broadcast %cst_66 : f32 to vector<256x128xf32>
    %70 = arith.maximumf %68, %69 : vector<256x128xf32>
    %71 = vector.shape_cast %70 : vector<256x128xf32> to vector<16x16x128xf32>
    %c1_67 = arith.constant 1 : index
    %c1_68 = arith.constant 1 : index
    %c0_69 = arith.constant 0 : index
    %72 = vector.load %arg14[%c1_67, %c1_68, %c0_69] : memref<18x18x128xf32, #tpu.memory_space<vmem>>, vector<16x16x128xf32>
    tpu.vector_store %arg14[%c1_67, %c1_68, %c0_69], %71 {strides = array<i32>} : memref<18x18x128xf32, #tpu.memory_space<vmem>>, vector<16x16x128xf32>,
    %c0_70 = arith.constant 0 : index
    %c0_71 = arith.constant 0 : index
    %c0_72 = arith.constant 0 : index
    %73 = vector.load %arg14[%c0_70, %c0_71, %c0_72] : memref<18x18x128xf32, #tpu.memory_space<vmem>>, vector<16x16x128xf32>
    %74 = arith.truncf %73 : vector<16x16x128xf32> to vector<16x16x128xbf16>
    %75 = vector.shape_cast %74 : vector<16x16x128xbf16> to vector<256x128xbf16>
    %c0_73 = arith.constant 0 : index
    %c0_74 = arith.constant 0 : index
    %76 = vector.load %arg5[%c0_73, %c0_74] : memref<1152x128xbf16, #tpu.memory_space<vmem>>, vector<128x128xbf16>
    %cst_75 = arith.constant dense<0.000000e+00> : vector<256x128xf32>
    %77 = tpu.matmul %75, %76, %cst_75 {dimension_numbers = #tpu.dot_dimension_numbers<[1], [0], [0], [1], [0, 0, 1, 1], [], []>} : vector<256x128xbf16>, vector<128x128xbf16>, vector<256x128xf32> -> vector<256x128xf32>
    %c0_76 = arith.constant 0 : index
    %c1_77 = arith.constant 1 : index
    %c0_78 = arith.constant 0 : index
    %78 = vector.load %arg14[%c0_76, %c1_77, %c0_78] : memref<18x18x128xf32, #tpu.memory_space<vmem>>, vector<16x16x128xf32>
    %79 = arith.truncf %78 : vector<16x16x128xf32> to vector<16x16x128xbf16>
    %80 = vector.shape_cast %79 : vector<16x16x128xbf16> to vector<256x128xbf16>
    %c128_79 = arith.constant 128 : index
    %c0_80 = arith.constant 0 : index
    %81 = vector.load %arg5[%c128_79, %c0_80] : memref<1152x128xbf16, #tpu.memory_space<vmem>>, vector<128x128xbf16>
    %cst_81 = arith.constant dense<0.000000e+00> : vector<256x128xf32>
    %82 = tpu.matmul %80, %81, %cst_81 {dimension_numbers = #tpu.dot_dimension_numbers<[1], [0], [0], [1], [0, 0, 1, 1], [], []>} : vector<256x128xbf16>, vector<128x128xbf16>, vector<256x128xf32> -> vector<256x128xf32>
    %83 = arith.addf %77, %82 : vector<256x128xf32>
    %c0_82 = arith.constant 0 : index
    %c2_83 = arith.constant 2 : index
    %c0_84 = arith.constant 0 : index
    %84 = vector.load %arg14[%c0_82, %c2_83, %c0_84] : memref<18x18x128xf32, #tpu.memory_space<vmem>>, vector<16x16x128xf32>
    %85 = arith.truncf %84 : vector<16x16x128xf32> to vector<16x16x128xbf16>
    %86 = vector.shape_cast %85 : vector<16x16x128xbf16> to vector<256x128xbf16>
    %c256_85 = arith.constant 256 : index
    %c0_86 = arith.constant 0 : index
    %87 = vector.load %arg5[%c256_85, %c0_86] : memref<1152x128xbf16, #tpu.memory_space<vmem>>, vector<128x128xbf16>
    %cst_87 = arith.constant dense<0.000000e+00> : vector<256x128xf32>
    %88 = tpu.matmul %86, %87, %cst_87 {dimension_numbers = #tpu.dot_dimension_numbers<[1], [0], [0], [1], [0, 0, 1, 1], [], []>} : vector<256x128xbf16>, vector<128x128xbf16>, vector<256x128xf32> -> vector<256x128xf32>
    %89 = arith.addf %83, %88 : vector<256x128xf32>
    %c1_88 = arith.constant 1 : index
    %c0_89 = arith.constant 0 : index
    %c0_90 = arith.constant 0 : index
    %90 = vector.load %arg14[%c1_88, %c0_89, %c0_90] : memref<18x18x128xf32, #tpu.memory_space<vmem>>, vector<16x16x128xf32>
    %91 = arith.truncf %90 : vector<16x16x128xf32> to vector<16x16x128xbf16>
    %92 = vector.shape_cast %91 : vector<16x16x128xbf16> to vector<256x128xbf16>
    %c384_91 = arith.constant 384 : index
    %c0_92 = arith.constant 0 : index
    %93 = vector.load %arg5[%c384_91, %c0_92] : memref<1152x128xbf16, #tpu.memory_space<vmem>>, vector<128x128xbf16>
    %cst_93 = arith.constant dense<0.000000e+00> : vector<256x128xf32>
    %94 = tpu.matmul %92, %93, %cst_93 {dimension_numbers = #tpu.dot_dimension_numbers<[1], [0], [0], [1], [0, 0, 1, 1], [], []>} : vector<256x128xbf16>, vector<128x128xbf16>, vector<256x128xf32> -> vector<256x128xf32>
    %95 = arith.addf %89, %94 : vector<256x128xf32>
    %c1_94 = arith.constant 1 : index
    %c1_95 = arith.constant 1 : index
    %c0_96 = arith.constant 0 : index
    %96 = vector.load %arg14[%c1_94, %c1_95, %c0_96] : memref<18x18x128xf32, #tpu.memory_space<vmem>>, vector<16x16x128xf32>
    %97 = arith.truncf %96 : vector<16x16x128xf32> to vector<16x16x128xbf16>
    %98 = vector.shape_cast %97 : vector<16x16x128xbf16> to vector<256x128xbf16>
    %c512_97 = arith.constant 512 : index
    %c0_98 = arith.constant 0 : index
    %99 = vector.load %arg5[%c512_97, %c0_98] : memref<1152x128xbf16, #tpu.memory_space<vmem>>, vector<128x128xbf16>
    %cst_99 = arith.constant dense<0.000000e+00> : vector<256x128xf32>
    %100 = tpu.matmul %98, %99, %cst_99 {dimension_numbers = #tpu.dot_dimension_numbers<[1], [0], [0], [1], [0, 0, 1, 1], [], []>} : vector<256x128xbf16>, vector<128x128xbf16>, vector<256x128xf32> -> vector<256x128xf32>
    %101 = arith.addf %95, %100 : vector<256x128xf32>
    %c1_100 = arith.constant 1 : index
    %c2_101 = arith.constant 2 : index
    %c0_102 = arith.constant 0 : index
    %102 = vector.load %arg14[%c1_100, %c2_101, %c0_102] : memref<18x18x128xf32, #tpu.memory_space<vmem>>, vector<16x16x128xf32>
    %103 = arith.truncf %102 : vector<16x16x128xf32> to vector<16x16x128xbf16>
    %104 = vector.shape_cast %103 : vector<16x16x128xbf16> to vector<256x128xbf16>
    %c640_103 = arith.constant 640 : index
    %c0_104 = arith.constant 0 : index
    %105 = vector.load %arg5[%c640_103, %c0_104] : memref<1152x128xbf16, #tpu.memory_space<vmem>>, vector<128x128xbf16>
    %cst_105 = arith.constant dense<0.000000e+00> : vector<256x128xf32>
    %106 = tpu.matmul %104, %105, %cst_105 {dimension_numbers = #tpu.dot_dimension_numbers<[1], [0], [0], [1], [0, 0, 1, 1], [], []>} : vector<256x128xbf16>, vector<128x128xbf16>, vector<256x128xf32> -> vector<256x128xf32>
    %107 = arith.addf %101, %106 : vector<256x128xf32>
    %c2_106 = arith.constant 2 : index
    %c0_107 = arith.constant 0 : index
    %c0_108 = arith.constant 0 : index
    %108 = vector.load %arg14[%c2_106, %c0_107, %c0_108] : memref<18x18x128xf32, #tpu.memory_space<vmem>>, vector<16x16x128xf32>
    %109 = arith.truncf %108 : vector<16x16x128xf32> to vector<16x16x128xbf16>
    %110 = vector.shape_cast %109 : vector<16x16x128xbf16> to vector<256x128xbf16>
    %c768_109 = arith.constant 768 : index
    %c0_110 = arith.constant 0 : index
    %111 = vector.load %arg5[%c768_109, %c0_110] : memref<1152x128xbf16, #tpu.memory_space<vmem>>, vector<128x128xbf16>
    %cst_111 = arith.constant dense<0.000000e+00> : vector<256x128xf32>
    %112 = tpu.matmul %110, %111, %cst_111 {dimension_numbers = #tpu.dot_dimension_numbers<[1], [0], [0], [1], [0, 0, 1, 1], [], []>} : vector<256x128xbf16>, vector<128x128xbf16>, vector<256x128xf32> -> vector<256x128xf32>
    %113 = arith.addf %107, %112 : vector<256x128xf32>
    %c2_112 = arith.constant 2 : index
    %c1_113 = arith.constant 1 : index
    %c0_114 = arith.constant 0 : index
    %114 = vector.load %arg14[%c2_112, %c1_113, %c0_114] : memref<18x18x128xf32, #tpu.memory_space<vmem>>, vector<16x16x128xf32>
    %115 = arith.truncf %114 : vector<16x16x128xf32> to vector<16x16x128xbf16>
    %116 = vector.shape_cast %115 : vector<16x16x128xbf16> to vector<256x128xbf16>
    %c896_115 = arith.constant 896 : index
    %c0_116 = arith.constant 0 : index
    %117 = vector.load %arg5[%c896_115, %c0_116] : memref<1152x128xbf16, #tpu.memory_space<vmem>>, vector<128x128xbf16>
    %cst_117 = arith.constant dense<0.000000e+00> : vector<256x128xf32>
    %118 = tpu.matmul %116, %117, %cst_117 {dimension_numbers = #tpu.dot_dimension_numbers<[1], [0], [0], [1], [0, 0, 1, 1], [], []>} : vector<256x128xbf16>, vector<128x128xbf16>, vector<256x128xf32> -> vector<256x128xf32>
    %119 = arith.addf %113, %118 : vector<256x128xf32>
    %c2_118 = arith.constant 2 : index
    %c2_119 = arith.constant 2 : index
    %c0_120 = arith.constant 0 : index
    %120 = vector.load %arg14[%c2_118, %c2_119, %c0_120] : memref<18x18x128xf32, #tpu.memory_space<vmem>>, vector<16x16x128xf32>
    %121 = arith.truncf %120 : vector<16x16x128xf32> to vector<16x16x128xbf16>
    %122 = vector.shape_cast %121 : vector<16x16x128xbf16> to vector<256x128xbf16>
    %c1024_121 = arith.constant 1024 : index
    %c0_122 = arith.constant 0 : index
    %123 = vector.load %arg5[%c1024_121, %c0_122] : memref<1152x128xbf16, #tpu.memory_space<vmem>>, vector<128x128xbf16>
    %cst_123 = arith.constant dense<0.000000e+00> : vector<256x128xf32>
    %124 = tpu.matmul %122, %123, %cst_123 {dimension_numbers = #tpu.dot_dimension_numbers<[1], [0], [0], [1], [0, 0, 1, 1], [], []>} : vector<256x128xbf16>, vector<128x128xbf16>, vector<256x128xf32> -> vector<256x128xf32>
    %125 = arith.addf %119, %124 : vector<256x128xf32>
    %c0_124 = arith.constant 0 : index
    %c0_125 = arith.constant 0 : index
    %126 = vector.load %arg6[%c0_124, %c0_125] : memref<1x128xf32, #tpu.memory_space<vmem>>, vector<1x128xf32>
    %127 = vector.broadcast %126 : vector<1x128xf32> to vector<256x128xf32>
    %128 = arith.mulf %125, %127 : vector<256x128xf32>
    %c0_126 = arith.constant 0 : index
    %c0_127 = arith.constant 0 : index
    %129 = vector.load %arg7[%c0_126, %c0_127] : memref<1x128xf32, #tpu.memory_space<vmem>>, vector<1x128xf32>
    %130 = vector.broadcast %129 : vector<1x128xf32> to vector<256x128xf32>
    %131 = arith.addf %128, %130 : vector<256x128xf32>
    %132 = vector.shape_cast %1 : vector<16x16x128xbf16> to vector<256x128xbf16>
    %c0_128 = arith.constant 0 : index
    %c0_129 = arith.constant 0 : index
    %133 = vector.load %arg10[%c0_128, %c0_129] : memref<128x128xbf16, #tpu.memory_space<vmem>>, vector<128x128xbf16>
    %cst_130 = arith.constant dense<0.000000e+00> : vector<256x128xf32>
    %134 = tpu.matmul %132, %133, %cst_130 {dimension_numbers = #tpu.dot_dimension_numbers<[1], [0], [0], [1], [0, 0, 1, 1], [], []>} : vector<256x128xbf16>, vector<128x128xbf16>, vector<256x128xf32> -> vector<256x128xf32>
    %c0_131 = arith.constant 0 : index
    %c0_132 = arith.constant 0 : index
    %135 = vector.load %arg11[%c0_131, %c0_132] : memref<1x128xf32, #tpu.memory_space<vmem>>, vector<1x128xf32>
    %136 = vector.broadcast %135 : vector<1x128xf32> to vector<256x128xf32>
    %137 = arith.mulf %134, %136 : vector<256x128xf32>
    %c0_133 = arith.constant 0 : index
    %c0_134 = arith.constant 0 : index
    %138 = vector.load %arg12[%c0_133, %c0_134] : memref<1x128xf32, #tpu.memory_space<vmem>>, vector<1x128xf32>
    %139 = vector.broadcast %138 : vector<1x128xf32> to vector<256x128xf32>
    %140 = arith.addf %137, %139 : vector<256x128xf32>
    %141 = arith.truncf %131 : vector<256x128xf32> to vector<256x128xbf16>
    %c0_135 = arith.constant 0 : index
    %c0_136 = arith.constant 0 : index
    %142 = vector.load %arg8[%c0_135, %c0_136] : memref<128x384xbf16, #tpu.memory_space<vmem>>, vector<128x384xbf16>
    %cst_137 = arith.constant dense<0.000000e+00> : vector<256x384xf32>
    %143 = tpu.matmul %141, %142, %cst_137 {dimension_numbers = #tpu.dot_dimension_numbers<[1], [0], [0], [1], [0, 0, 1, 1], [], []>} : vector<256x128xbf16>, vector<128x384xbf16>, vector<256x384xf32> -> vector<256x384xf32>
    %c0_138 = arith.constant 0 : index
    %c0_139 = arith.constant 0 : index
    %144 = vector.load %arg9[%c0_138, %c0_139] : memref<1x384xf32, #tpu.memory_space<vmem>>, vector<1x384xf32>
    %145 = vector.broadcast %144 : vector<1x384xf32> to vector<256x384xf32>
    %146 = arith.addf %143, %145 : vector<256x384xf32>
    %147 = vector.extract_strided_slice %146 {offsets = [0, 0], sizes = [256, 128], strides = [1, 1]} : vector<256x384xf32> to vector<256x128xf32>
    %148 = arith.truncf %147 : vector<256x128xf32> to vector<256x128xbf16>
    %149 = vector.extract_strided_slice %146 {offsets = [0, 128], sizes = [256, 128], strides = [1, 1]} : vector<256x384xf32> to vector<256x128xf32>
    %150 = arith.truncf %149 : vector<256x128xf32> to vector<256x128xbf16>
    %151 = vector.extract_strided_slice %146 {offsets = [0, 256], sizes = [256, 128], strides = [1, 1]} : vector<256x384xf32> to vector<256x128xf32>
    %152 = arith.truncf %151 : vector<256x128xf32> to vector<256x128xbf16>
    %cst_140 = arith.constant dense<0.000000e+00> : vector<256x256xf32>
    %153 = tpu.matmul %148, %150, %cst_140 {dimension_numbers = #tpu.dot_dimension_numbers<[1], [1], [0], [0], [0, 0, 1, 0], [], []>} : vector<256x128xbf16>, vector<256x128xbf16>, vector<256x256xf32> -> vector<256x256xf32>
    %cst_141 = arith.constant dense<0xFF800000> : vector<256xf32>
    %154 = vector.multi_reduction <maximumf>, %153, %cst_141 [1] : vector<256x256xf32> to vector<256xf32>
    %155 = vector.shape_cast %154 : vector<256xf32> to vector<256x1xf32>
    %156 = vector.broadcast %155 : vector<256x1xf32> to vector<256x256xf32>
    %157 = arith.subf %153, %156 : vector<256x256xf32>
    %158 = math.exp %157 : vector<256x256xf32>
    %cst_142 = arith.constant dense<0.000000e+00> : vector<256xf32>
    %159 = vector.multi_reduction <add>, %158, %cst_142 [1] : vector<256x256xf32> to vector<256xf32>
    %160 = vector.shape_cast %159 : vector<256xf32> to vector<256x1xf32>
    %161 = tpu.reciprocal %160 {approx = true} : vector<256x1xf32> -> vector<256x1xf32>
    %162 = vector.broadcast %161 : vector<256x1xf32> to vector<256x256xf32>
    %163 = arith.mulf %158, %162 : vector<256x256xf32>
    %164 = arith.truncf %163 : vector<256x256xf32> to vector<256x256xbf16>
    %cst_143 = arith.constant dense<0.000000e+00> : vector<256x128xf32>
    %165 = tpu.matmul %164, %152, %cst_143 {dimension_numbers = #tpu.dot_dimension_numbers<[1], [0], [0], [1], [0, 0, 1, 1], [], []>} : vector<256x256xbf16>, vector<256x128xbf16>, vector<256x128xf32> -> vector<256x128xf32>
    %166 = arith.addf %165, %131 : vector<256x128xf32>
    %167 = arith.addf %166, %140 : vector<256x128xf32>
    %cst_144 = arith.constant 0.000000e+00 : f32
    %168 = vector.broadcast %cst_144 : f32 to vector<256x128xf32>
    %169 = arith.maximumf %167, %168 : vector<256x128xf32>
    %170 = tpu.transpose %169, [1, 0] : vector<256x128xf32> -> vector<128x256xf32>
    %171 = vector.extract_strided_slice %170 {offsets = [0, 0], sizes = [16, 256], strides = [1, 1]} : vector<128x256xf32> to vector<16x256xf32>
    %c0_145 = arith.constant 0 : index
    %c0_146 = arith.constant 0 : index
    %c0_147 = arith.constant 0 : index
    %172 = vector.load %arg13[%c0_145, %c0_146, %c0_147] : memref<1x16x256xf32, #tpu.memory_space<vmem>>, vector<1x16x256xf32>
    %173 = vector.shape_cast %172 : vector<1x16x256xf32> to vector<16x256xf32>
    %174 = vector.shape_cast %171 : vector<16x256xf32> to vector<1x16x256xf32>
    tpu.vector_store %arg13[%c0_145, %c0_146, %c0_147], %174 {strides = array<i32>} : memref<1x16x256xf32, #tpu.memory_space<vmem>>, vector<1x16x256xf32>,
    return
  }
  func.func @transform_0(%arg0: i32) -> (i32, i32, i32, i32) {
    %c0_i32 = arith.constant 0 : i32
    %c0_i32_0 = arith.constant 0 : i32
    %c0_i32_1 = arith.constant 0 : i32
    %c0_i32_2 = arith.constant 0 : i32
    return %arg0, %c0_i32, %c0_i32_0, %c0_i32_1 : i32, i32, i32, i32
  }
  func.func @transform_1(%arg0: i32) -> (i32, i32) {
    %c0_i32 = arith.constant 0 : i32
    %c0_i32_0 = arith.constant 0 : i32
    %c0_i32_1 = arith.constant 0 : i32
    return %c0_i32, %c0_i32_0 : i32, i32
  }
  func.func @transform_2(%arg0: i32) -> (i32, i32) {
    %c0_i32 = arith.constant 0 : i32
    %c0_i32_0 = arith.constant 0 : i32
    %c0_i32_1 = arith.constant 0 : i32
    return %c0_i32, %c0_i32_0 : i32, i32
  }
  func.func @transform_3(%arg0: i32) -> (i32, i32) {
    %c0_i32 = arith.constant 0 : i32
    %c0_i32_0 = arith.constant 0 : i32
    %c0_i32_1 = arith.constant 0 : i32
    return %c0_i32, %c0_i32_0 : i32, i32
  }
  func.func @transform_4(%arg0: i32) -> (i32, i32) {
    %c0_i32 = arith.constant 0 : i32
    %c0_i32_0 = arith.constant 0 : i32
    %c0_i32_1 = arith.constant 0 : i32
    return %c0_i32, %c0_i32_0 : i32, i32
  }
  func.func @transform_5(%arg0: i32) -> (i32, i32) {
    %c0_i32 = arith.constant 0 : i32
    %c0_i32_0 = arith.constant 0 : i32
    %c0_i32_1 = arith.constant 0 : i32
    return %c0_i32, %c0_i32_0 : i32, i32
  }
  func.func @transform_6(%arg0: i32) -> (i32, i32) {
    %c0_i32 = arith.constant 0 : i32
    %c0_i32_0 = arith.constant 0 : i32
    %c0_i32_1 = arith.constant 0 : i32
    return %c0_i32, %c0_i32_0 : i32, i32
  }
  func.func @transform_7(%arg0: i32) -> (i32, i32) {
    %c0_i32 = arith.constant 0 : i32
    %c0_i32_0 = arith.constant 0 : i32
    %c0_i32_1 = arith.constant 0 : i32
    return %c0_i32, %c0_i32_0 : i32, i32
  }
  func.func @transform_8(%arg0: i32) -> (i32, i32) {
    %c0_i32 = arith.constant 0 : i32
    %c0_i32_0 = arith.constant 0 : i32
    %c0_i32_1 = arith.constant 0 : i32
    return %c0_i32, %c0_i32_0 : i32, i32
  }
  func.func @transform_9(%arg0: i32) -> (i32, i32) {
    %c0_i32 = arith.constant 0 : i32
    %c0_i32_0 = arith.constant 0 : i32
    %c0_i32_1 = arith.constant 0 : i32
    return %c0_i32, %c0_i32_0 : i32, i32
  }
  func.func @transform_10(%arg0: i32) -> (i32, i32) {
    %c0_i32 = arith.constant 0 : i32
    %c0_i32_0 = arith.constant 0 : i32
    %c0_i32_1 = arith.constant 0 : i32
    return %c0_i32, %c0_i32_0 : i32, i32
  }
  func.func @transform_11(%arg0: i32) -> (i32, i32) {
    %c0_i32 = arith.constant 0 : i32
    %c0_i32_0 = arith.constant 0 : i32
    %c0_i32_1 = arith.constant 0 : i32
    return %c0_i32, %c0_i32_0 : i32, i32
  }
  func.func @transform_12(%arg0: i32) -> (i32, i32, i32) {
    %c0_i32 = arith.constant 0 : i32
    %c0_i32_0 = arith.constant 0 : i32
    %c0_i32_1 = arith.constant 0 : i32
    return %arg0, %c0_i32, %c0_i32_0 : i32, i32, i32
  }
}

</mosaic_0001>

<llo_original>
// kernel: tpu_custom_call.1
$region0: #{tpu_custom_call.1}
  #allocation0 [shape = 'u32[]', space=smem, size = 0x4, offset = 0x4, fixed_abs, tag = 'smem constant byte address 0x4 - core index']
  #allocation1 [shape = 'u32[72,128]{1,0:T(1,128)}', space=vmem, size = 0x9000, scoped, tag = 'internal scratch']
  #allocation2 [shape = 'f32[18,18,128]{2,1,0:T(8,128)}', space=vmem, size = 0x36000, scoped, tag = 'scratch operand']
  %s0 = inlined_call_operand.hbm [shape: bf16[2,16,16,128], index: 0, kind: input, shape index: {}]
  %s1 = inlined_call_operand.hbm [shape: bf16[1152,128], index: 1, kind: input, shape index: {}]
  %s2 = inlined_call_operand.vmem [shape: f32[1,128], index: 2, kind: input, shape index: {}]
  %s3 = inlined_call_operand.vmem [shape: f32[1,128], index: 3, kind: input, shape index: {}]
  %s4 = inlined_call_operand.hbm [shape: bf16[1152,128], index: 4, kind: input, shape index: {}]
  %s5 = inlined_call_operand.hbm [shape: f32[1,128], index: 5, kind: input, shape index: {}]
  %s6 = inlined_call_operand.hbm [shape: f32[1,128], index: 6, kind: input, shape index: {}]
  %s7 = inlined_call_operand.hbm [shape: bf16[128,384], index: 7, kind: input, shape index: {}]
  %s8 = inlined_call_operand.vmem [shape: f32[1,384], index: 8, kind: input, shape index: {}]
  %s9 = inlined_call_operand.hbm [shape: bf16[128,128], index: 9, kind: input, shape index: {}]
  %s10 = inlined_call_operand.vmem [shape: f32[1,128], index: 10, kind: input, shape index: {}]
  %s11 = inlined_call_operand.vmem [shape: f32[1,128], index: 11, kind: input, shape index: {}]
  %s12 = inlined_call_operand.hbm [shape: f32[2,16,256], index: 12, kind: output, shape index: {}]
  %s13 = sld [smem:[#allocation0]]
  $region109: #{tpu_custom_call.1} parent=0
    _
  %s15 = ssub.s32 1, %s13
  %s16 = scalar_select 0, %s15, %s13
  $region1: #{tpu_custom_call.1} parent=0
    #allocation3 [shape = 'u8[131072]{0}', space=vmem, size = 0x20000, scoped, tag = 'input window, operand 0']
    #allocation4 [shape = 's32[2]{0}', space=sflag, size = 0x8, scoped, tag = 'scoped memory for tpu_custom_call.1']
    #allocation5 [shape = 's32[2]{0}', space=sflag, size = 0x8, scoped, tag = 'scoped memory for tpu_custom_call.1']
    #allocation6 [shape = 'u8[294912]{0}', space=vmem, size = 0x48000, scoped, tag = 'input window, operand 1, single buffered']
    #allocation7 [shape = 's32[1]{0}', space=sflag, size = 0x4, scoped, tag = 'scoped memory for tpu_custom_call.1']
    #allocation8 [shape = 'u8[294912]{0}', space=vmem, size = 0x48000, scoped, tag = 'input window, operand 4, single buffered']
    #allocation9 [shape = 'u8[512]{0}', space=vmem, size = 0x400, scoped, tag = 'input window, operand 5, single buffered']
    #allocation10 [shape = 's32[1]{0}', space=sflag, size = 0x4, scoped, tag = 'scoped memory for tpu_custom_call.1']
    #allocation11 [shape = 'u8[512]{0}', space=vmem, size = 0x400, scoped, tag = 'input window, operand 6, single buffered']
    #allocation12 [shape = 'u8[98304]{0}', space=vmem, size = 0x18000, scoped, tag = 'input window, operand 7, single buffered']
    #allocation13 [shape = 's32[1]{0}', space=sflag, size = 0x4, scoped, tag = 'scoped memory for tpu_custom_call.1']
    #allocation14 [shape = 'u8[32768]{0}', space=vmem, size = 0x8000, scoped, tag = 'input window, operand 9, single buffered']
    #allocation15 [shape = 'u8[32768]{0}', space=vmem, size = 0x8000, scoped, tag = 'output window, operand 0']
    %17 = vsyncpa [#allocation4], 0
    %s18 = scalar_lea.sflag [#allocation4], 1
    %19 = vsyncpa %s18, 0
    %20 = vsyncpa [#allocation7], 0
    %21 = vsyncpa [#allocation10], 0
    %22 = vsyncpa [#allocation13], 0
    %23 = vsyncpa [#allocation5], 0
    %s24 = scalar_lea.sflag [#allocation5], 1
    %25 = vsyncpa %s24, 0
    loop: start=0, step=1, limit=4
    $region2: #{tpu_custom_call.1} parent=1 // loop_pre_header
      _
    $region3: #{tpu_custom_call.1} parent=1 // loop_header
      %s27 = sphi 0, %s31
      %p28 = scmp.ge.s32.totalorder %s27, 4
      %s37 = sphi 0, %s39
      %s40 = sphi 0, %s37
      %s41 = sphi 0, %s40
      %s57 = sphi 0, %s41
      %s61 = sphi 0, %s61
      %s63 = sphi 0, %s61
      %s64 = sphi 0, %s63
      %s78 = sphi 0, %s64
      %s82 = sphi 0, %s82
      %s84 = sphi 0, %s82
      %s85 = sphi 0, %s84
      %s99 = sphi 0, %s85
      %s103 = sphi 0, %s103
      %s105 = sphi 0, %s103
      %s106 = sphi 0, %s105
      %s120 = sphi 0, %s106
      %s124 = sphi 0, %s124
      %s126 = sphi 0, %s124
      %s127 = sphi 0, %s126
      %s141 = sphi 0, %s127
      %s145 = sphi 0, %s145
      %s147 = sphi 0, %s145
      %s148 = sphi 0, %s147
      %s162 = sphi 0, %s148
      %s166 = sphi 0, %s166
      %s168 = sphi 0, %s166
      %s169 = sphi 0, %s168
      %s183 = sphi 0, %s169
      %s187 = sphi 0, %s187
      %s189 = sphi 0, %s187
      %s190 = sphi 0, %s189
      %s204 = sphi 0, %s190
      %s208 = sphi 0, %s208
      %s210 = sphi 0, %s208
      %s211 = sphi 0, %s210
      %s225 = sphi 0, %s211
      %s229 = sphi 0, %s229
      %s231 = sphi 0, %s229
      %s232 = sphi 0, %s231
      %s246 = sphi 0, %s232
      %s250 = sphi 0, %s250
      %s252 = sphi 0, %s250
      %s253 = sphi 0, %s252
      %s267 = sphi 0, %s253
      %s271 = sphi 0, %s271
      %s273 = sphi 0, %s271
      %s274 = sphi 0, %s273
      %s288 = sphi 0, %s274
      %s294 = sphi 0, %s296
      %s297 = sphi 0, %s294
      %s298 = sphi 0, %s297
      %s314 = sphi 0, %s298
    $region4: #{tpu_custom_call.1} parent=1 // loop_header_branch
      %30 = sbr.rel (%p28) target = $region8
    $region5: #{tpu_custom_call.1} parent=1 // loop_body
      %s32 = ssub.s32 %s27, 1
      %s33 = ssub.s32 %s27, 2
      %s34 = sadd.s32 %s27, 1
      %s35 = ssub.s32 %s27, %s34
      %p36 = scmp.eq.s32.totalorder %s35, 0
      %s38 = sadd.s32 %s37, 1
      %s39 = scalar_select %p36, %s37, %s38
      %p42 = pneg %p36
      %p43 = scmp.eq.s32.totalorder %s27, 1
      %p44 = por %p42, %p43
      %p45 = scmp.ne.s32.totalorder %s37, %s40
      %p46 = scmp.eq.s32.totalorder %s27, 0
      %p47 = por %p45, %p46
      %p48 = scmp.ne.s32.totalorder %s37, %s40
      %p49 = scmp.eq.s32.totalorder %s32, 1
      %p50 = por %p48, %p49
      %p51 = scmp.ne.s32.totalorder %s40, %s41
      %p52 = scmp.eq.s32.totalorder %s32, 0
      %p53 = por %p51, %p52
      %p54 = scmp.ne.s32.totalorder %s40, %s41
      %p55 = scmp.eq.s32.totalorder %s33, 1
      %p56 = por %p54, %p55
      %p58 = scmp.ne.s32.totalorder %s41, %s57
      %p59 = scmp.eq.s32.totalorder %s33, 0
      %p60 = por %p58, %p59
      %s62 = sadd.s32 %s61, 1
      %p65 = scmp.eq.s32.totalorder %s27, 1
      %p66 = scmp.ne.s32.totalorder %s61, %s63
      %p67 = scmp.eq.s32.totalorder %s27, 0
      %p68 = por %p66, %p67
      %p69 = scmp.ne.s32.totalorder %s61, %s63
      %p70 = scmp.eq.s32.totalorder %s32, 1
      %p71 = por %p69, %p70
      %p72 = scmp.ne.s32.totalorder %s63, %s64
      %p73 = scmp.eq.s32.totalorder %s32, 0
      %p74 = por %p72, %p73
      %p75 = scmp.ne.s32.totalorder %s63, %s64
      %p76 = scmp.eq.s32.totalorder %s33, 1
      %p77 = por %p75, %p76
      %p79 = scmp.ne.s32.totalorder %s64, %s78
      %p80 = scmp.eq.s32.totalorder %s33, 0
      %p81 = por %p79, %p80
      %s83 = sadd.s32 %s82, 1
      %p86 = scmp.eq.s32.totalorder %s27, 1
      %p87 = scmp.ne.s32.totalorder %s82, %s84
      %p88 = scmp.eq.s32.totalorder %s27, 0
      %p89 = por %p87, %p88
      %p90 = scmp.ne.s32.totalorder %s82, %s84
      %p91 = scmp.eq.s32.totalorder %s32, 1
      %p92 = por %p90, %p91
      %p93 = scmp.ne.s32.totalorder %s84, %s85
      %p94 = scmp.eq.s32.totalorder %s32, 0
      %p95 = por %p93, %p94
      %p96 = scmp.ne.s32.totalorder %s84, %s85
      %p97 = scmp.eq.s32.totalorder %s33, 1
      %p98 = por %p96, %p97
      %p100 = scmp.ne.s32.totalorder %s85, %s99
      %p101 = scmp.eq.s32.totalorder %s33, 0
      %p102 = por %p100, %p101
      %s104 = sadd.s32 %s103, 1
      %p107 = scmp.eq.s32.totalorder %s27, 1
      %p108 = scmp.ne.s32.totalorder %s103, %s105
      %p109 = scmp.eq.s32.totalorder %s27, 0
      %p110 = por %p108, %p109
      %p111 = scmp.ne.s32.totalorder %s103, %s105
      %p112 = scmp.eq.s32.totalorder %s32, 1
      %p113 = por %p111, %p112
      %p114 = scmp.ne.s32.totalorder %s105, %s106
      %p115 = scmp.eq.s32.totalorder %s32, 0
      %p116 = por %p114, %p115
      %p117 = scmp.ne.s32.totalorder %s105, %s106
      %p118 = scmp.eq.s32.totalorder %s33, 1
      %p119 = por %p117, %p118
      %p121 = scmp.ne.s32.totalorder %s106, %s120
      %p122 = scmp.eq.s32.totalorder %s33, 0
      %p123 = por %p121, %p122
      %s125 = sadd.s32 %s124, 1
      %p128 = scmp.eq.s32.totalorder %s27, 1
      %p129 = scmp.ne.s32.totalorder %s124, %s126
      %p130 = scmp.eq.s32.totalorder %s27, 0
      %p131 = por %p129, %p130
      %p132 = scmp.ne.s32.totalorder %s124, %s126
      %p133 = scmp.eq.s32.totalorder %s32, 1
      %p134 = por %p132, %p133
      %p135 = scmp.ne.s32.totalorder %s126, %s127
      %p136 = scmp.eq.s32.totalorder %s32, 0
      %p137 = por %p135, %p136
      %p138 = scmp.ne.s32.totalorder %s126, %s127
      %p139 = scmp.eq.s32.totalorder %s33, 1
      %p140 = por %p138, %p139
      %p142 = scmp.ne.s32.totalorder %s127, %s141
      %p143 = scmp.eq.s32.totalorder %s33, 0
      %p144 = por %p142, %p143
      %s146 = sadd.s32 %s145, 1
      %p149 = scmp.eq.s32.totalorder %s27, 1
      %p150 = scmp.ne.s32.totalorder %s145, %s147
      %p151 = scmp.eq.s32.totalorder %s27, 0
      %p152 = por %p150, %p151
      %p153 = scmp.ne.s32.totalorder %s145, %s147
      %p154 = scmp.eq.s32.totalorder %s32, 1
      %p155 = por %p153, %p154
      %p156 = scmp.ne.s32.totalorder %s147, %s148
      %p157 = scmp.eq.s32.totalorder %s32, 0
      %p158 = por %p156, %p157
      %p159 = scmp.ne.s32.totalorder %s147, %s148
      %p160 = scmp.eq.s32.totalorder %s33, 1
      %p161 = por %p159, %p160
      %p163 = scmp.ne.s32.totalorder %s148, %s162
      %p164 = scmp.eq.s32.totalorder %s33, 0
      %p165 = por %p163, %p164
      %s167 = sadd.s32 %s166, 1
      %p170 = scmp.eq.s32.totalorder %s27, 1
      %p171 = scmp.ne.s32.totalorder %s166, %s168
      %p172 = scmp.eq.s32.totalorder %s27, 0
      %p173 = por %p171, %p172
      %p174 = scmp.ne.s32.totalorder %s166, %s168
      %p175 = scmp.eq.s32.totalorder %s32, 1
      %p176 = por %p174, %p175
      %p177 = scmp.ne.s32.totalorder %s168, %s169
      %p178 = scmp.eq.s32.totalorder %s32, 0
      %p179 = por %p177, %p178
      %p180 = scmp.ne.s32.totalorder %s168, %s169
      %p181 = scmp.eq.s32.totalorder %s33, 1
      %p182 = por %p180, %p181
      %p184 = scmp.ne.s32.totalorder %s169, %s183
      %p185 = scmp.eq.s32.totalorder %s33, 0
      %p186 = por %p184, %p185
      %s188 = sadd.s32 %s187, 1
      %p191 = scmp.eq.s32.totalorder %s27, 1
      %p192 = scmp.ne.s32.totalorder %s187, %s189
      %p193 = scmp.eq.s32.totalorder %s27, 0
      %p194 = por %p192, %p193
      %p195 = scmp.ne.s32.totalorder %s187, %s189
      %p196 = scmp.eq.s32.totalorder %s32, 1
      %p197 = por %p195, %p196
      %p198 = scmp.ne.s32.totalorder %s189, %s190
      %p199 = scmp.eq.s32.totalorder %s32, 0
      %p200 = por %p198, %p199
      %p201 = scmp.ne.s32.totalorder %s189, %s190
      %p202 = scmp.eq.s32.totalorder %s33, 1
      %p203 = por %p201, %p202
      %p205 = scmp.ne.s32.totalorder %s190, %s204
      %p206 = scmp.eq.s32.totalorder %s33, 0
      %p207 = por %p205, %p206
      %s209 = sadd.s32 %s208, 1
      %p212 = scmp.eq.s32.totalorder %s27, 1
      %p213 = scmp.ne.s32.totalorder %s208, %s210
      %p214 = scmp.eq.s32.totalorder %s27, 0
      %p215 = por %p213, %p214
      %p216 = scmp.ne.s32.totalorder %s208, %s210
      %p217 = scmp.eq.s32.totalorder %s32, 1
      %p218 = por %p216, %p217
      %p219 = scmp.ne.s32.totalorder %s210, %s211
      %p220 = scmp.eq.s32.totalorder %s32, 0
      %p221 = por %p219, %p220
      %p222 = scmp.ne.s32.totalorder %s210, %s211
      %p223 = scmp.eq.s32.totalorder %s33, 1
      %p224 = por %p222, %p223
      %p226 = scmp.ne.s32.totalorder %s211, %s225
      %p227 = scmp.eq.s32.totalorder %s33, 0
      %p228 = por %p226, %p227
      %s230 = sadd.s32 %s229, 1
      %p233 = scmp.eq.s32.totalorder %s27, 1
      %p234 = scmp.ne.s32.totalorder %s229, %s231
      %p235 = scmp.eq.s32.totalorder %s27, 0
      %p236 = por %p234, %p235
      %p237 = scmp.ne.s32.totalorder %s229, %s231
      %p238 = scmp.eq.s32.totalorder %s32, 1
      %p239 = por %p237, %p238
      %p240 = scmp.ne.s32.totalorder %s231, %s232
      %p241 = scmp.eq.s32.totalorder %s32, 0
      %p242 = por %p240, %p241
      %p243 = scmp.ne.s32.totalorder %s231, %s232
      %p244 = scmp.eq.s32.totalorder %s33, 1
      %p245 = por %p243, %p244
      %p247 = scmp.ne.s32.totalorder %s232, %s246
      %p248 = scmp.eq.s32.totalorder %s33, 0
      %p249 = por %p247, %p248
      %s251 = sadd.s32 %s250, 1
      %p254 = scmp.eq.s32.totalorder %s27, 1
      %p255 = scmp.ne.s32.totalorder %s250, %s252
      %p256 = scmp.eq.s32.totalorder %s27, 0
      %p257 = por %p255, %p256
      %p258 = scmp.ne.s32.totalorder %s250, %s252
      %p259 = scmp.eq.s32.totalorder %s32, 1
      %p260 = por %p258, %p259
      %p261 = scmp.ne.s32.totalorder %s252, %s253
      %p262 = scmp.eq.s32.totalorder %s32, 0
      %p263 = por %p261, %p262
      %p264 = scmp.ne.s32.totalorder %s252, %s253
      %p265 = scmp.eq.s32.totalorder %s33, 1
      %p266 = por %p264, %p265
      %p268 = scmp.ne.s32.totalorder %s253, %s267
      %p269 = scmp.eq.s32.totalorder %s33, 0
      %p270 = por %p268, %p269
      %s272 = sadd.s32 %s271, 1
      %p275 = scmp.eq.s32.totalorder %s27, 1
      %p276 = scmp.ne.s32.totalorder %s271, %s273
      %p277 = scmp.eq.s32.totalorder %s27, 0
      %p278 = por %p276, %p277
      %p279 = scmp.ne.s32.totalorder %s271, %s273
      %p280 = scmp.eq.s32.totalorder %s32, 1
      %p281 = por %p279, %p280
      %p282 = scmp.ne.s32.totalorder %s273, %s274
      %p283 = scmp.eq.s32.totalorder %s32, 0
      %p284 = por %p282, %p283
      %p285 = scmp.ne.s32.totalorder %s273, %s274
      %p286 = scmp.eq.s32.totalorder %s33, 1
      %p287 = por %p285, %p286
      %p289 = scmp.ne.s32.totalorder %s274, %s288
      %p290 = scmp.eq.s32.totalorder %s33, 0
      %p291 = por %p289, %p290
      %s292 = ssub.s32 %s27, %s34
      %p293 = scmp.eq.s32.totalorder %s292, 0
      %s295 = sadd.s32 %s294, 1
      %s296 = scalar_select %p293, %s294, %s295
      %p299 = pneg %p293
      %p300 = scmp.eq.s32.totalorder %s27, 1
      %p301 = por %p299, %p300
      %p302 = scmp.ne.s32.totalorder %s294, %s297
      %p303 = scmp.eq.s32.totalorder %s27, 0
      %p304 = por %p302, %p303
      %p305 = scmp.ne.s32.totalorder %s294, %s297
      %p306 = scmp.eq.s32.totalorder %s32, 1
      %p307 = por %p305, %p306
      %p308 = scmp.ne.s32.totalorder %s297, %s298
      %p309 = scmp.eq.s32.totalorder %s32, 0
      %p310 = por %p308, %p309
      %p311 = scmp.ne.s32.totalorder %s297, %s298
      %p312 = scmp.eq.s32.totalorder %s33, 1
      %p313 = por %p311, %p312
      %p315 = scmp.ne.s32.totalorder %s298, %s314
      %p316 = scmp.eq.s32.totalorder %s33, 0
      %p317 = por %p315, %p316
      %p318 = scmp.le.s32.totalorder 1, %s27
      %p319 = scmp.lt.s32.totalorder %s27, 3
      %p320 = pnand %p318, %p319
      %p321 = pneg %p320
      // Predicated region
      $region9: #{tpu_custom_call.1} parent=5 // pred_check
        _
      $region10: #{tpu_custom_call.1} parent=5 // pred_check_branch
        %323 = sbr.rel (%p320) target = $region12
      $region11: #{tpu_custom_call.1} parent=5 // pred_region
        %s324 = ssub.s32 %s27, 1
        // Predicated region
        $region13: #{tpu_custom_call.1} parent=11 // pred_check
          %p325 = pneg %p74
        $region14: #{tpu_custom_call.1} parent=11 // pred_check_branch
          %327 = sbr.rel (%p325) target = $region16
        $region15: #{tpu_custom_call.1} parent=11 // pred_region
          %329 = vsyncadd [#allocation7], 0
          %s330 = sshll.u32 %s1, 4
          %s331 = int_to_ptr.hbm [resolvable:$true] %s330
          %s332 = sshll.u32 [#allocation6], 4
          %s333 = int_to_ptr.vmem [resolvable:$true] %s332
          %338 = dma.hbm_to_vmem [thread:$0]  %s331, 9216, %s333, [#allocation7], 64, 64, 4
        $region16: #{tpu_custom_call.1} parent=11 // pred_fallthru
          _
        // Predicated region
        $region17: #{tpu_custom_call.1} parent=11 // pred_check
          %p339 = pneg %p95
        $region18: #{tpu_custom_call.1} parent=11 // pred_check_branch
          %341 = sbr.rel (%p339) target = $region20
        $region19: #{tpu_custom_call.1} parent=11 // pred_region
          _
        $region20: #{tpu_custom_call.1} parent=11 // pred_fallthru
          _
        // Predicated region
        $region21: #{tpu_custom_call.1} parent=11 // pred_check
          %p342 = pneg %p116
        $region22: #{tpu_custom_call.1} parent=11 // pred_check_branch
          %344 = sbr.rel (%p342) target = $region24
        $region23: #{tpu_custom_call.1} parent=11 // pred_region
          _
        $region24: #{tpu_custom_call.1} parent=11 // pred_fallthru
          _
        // Predicated region
        $region25: #{tpu_custom_call.1} parent=11 // pred_check
          %p345 = pneg %p137
        $region26: #{tpu_custom_call.1} parent=11 // pred_check_branch
          %347 = sbr.rel (%p345) target = $region28
        $region27: #{tpu_custom_call.1} parent=11 // pred_region
          %349 = vsyncadd [#allocation7], 0
          %s350 = sshll.u32 %s4, 4
          %s351 = int_to_ptr.hbm [resolvable:$true] %s350
          %s352 = sshll.u32 [#allocation8], 4
          %s353 = int_to_ptr.vmem [resolvable:$true] %s352
          %358 = dma.hbm_to_vmem [thread:$0]  %s351, 9216, %s353, [#allocation7], 64, 64, 4
        $region28: #{tpu_custom_call.1} parent=11 // pred_fallthru
          _
        // Predicated region
        $region29: #{tpu_custom_call.1} parent=11 // pred_check
          %p359 = pneg %p158
        $region30: #{tpu_custom_call.1} parent=11 // pred_check_branch
          %361 = sbr.rel (%p359) target = $region32
        $region31: #{tpu_custom_call.1} parent=11 // pred_region
          %363 = vsyncadd [#allocation10], 0
          %s365 = sshll.u32 %s5, 4
          %s366 = int_to_ptr.hbm [resolvable:$true] %s365
          %s367 = sshll.u32 [#allocation9], 4
          %s368 = int_to_ptr.vmem [resolvable:$true] %s367
          %370 = dma.hbm_to_vmem [thread:$0]  %s366, 16, %s368, [#allocation10]
        $region32: #{tpu_custom_call.1} parent=11 // pred_fallthru
          _
        // Predicated region
        $region33: #{tpu_custom_call.1} parent=11 // pred_check
          %p371 = pneg %p179
        $region34: #{tpu_custom_call.1} parent=11 // pred_check_branch
          %373 = sbr.rel (%p371) target = $region36
        $region35: #{tpu_custom_call.1} parent=11 // pred_region
          %375 = vsyncadd [#allocation10], 0
          %s377 = sshll.u32 %s6, 4
          %s378 = int_to_ptr.hbm [resolvable:$true] %s377
          %s379 = sshll.u32 [#allocation11], 4
          %s380 = int_to_ptr.vmem [resolvable:$true] %s379
          %382 = dma.hbm_to_vmem [thread:$0]  %s378, 16, %s380, [#allocation10]
        $region36: #{tpu_custom_call.1} parent=11 // pred_fallthru
          _
        // Predicated region
        $region37: #{tpu_custom_call.1} parent=11 // pred_check
          %p383 = pneg %p200
        $region38: #{tpu_custom_call.1} parent=11 // pred_check_branch
          %385 = sbr.rel (%p383) target = $region40
        $region39: #{tpu_custom_call.1} parent=11 // pred_region
          %387 = vsyncadd [#allocation13], 0
          %s388 = sshll.u32 %s7, 4
          %s389 = int_to_ptr.hbm [resolvable:$true] %s388
          %s390 = sshll.u32 [#allocation12], 4
          %s391 = int_to_ptr.vmem [resolvable:$true] %s390
          %396 = dma.hbm_to_vmem [thread:$0]  %s389, 3072, %s391, [#allocation13], 192, 192, 12
        $region40: #{tpu_custom_call.1} parent=11 // pred_fallthru
          _
        // Predicated region
        $region41: #{tpu_custom_call.1} parent=11 // pred_check
          %p397 = pneg %p221
        $region42: #{tpu_custom_call.1} parent=11 // pred_check_branch
          %399 = sbr.rel (%p397) target = $region44
        $region43: #{tpu_custom_call.1} parent=11 // pred_region
          _
        $region44: #{tpu_custom_call.1} parent=11 // pred_fallthru
          _
        // Predicated region
        $region45: #{tpu_custom_call.1} parent=11 // pred_check
          %p400 = pneg %p242
        $region46: #{tpu_custom_call.1} parent=11 // pred_check_branch
          %402 = sbr.rel (%p400) target = $region48
        $region47: #{tpu_custom_call.1} parent=11 // pred_region
          %404 = vsyncadd [#allocation13], 0
          %s405 = sshll.u32 %s9, 4
          %s406 = int_to_ptr.hbm [resolvable:$true] %s405
          %s407 = sshll.u32 [#allocation14], 4
          %s408 = int_to_ptr.vmem [resolvable:$true] %s407
          %413 = dma.hbm_to_vmem [thread:$0]  %s406, 1024, %s408, [#allocation13], 64, 64, 4
        $region48: #{tpu_custom_call.1} parent=11 // pred_fallthru
          _
        // Predicated region
        $region49: #{tpu_custom_call.1} parent=11 // pred_check
          %p414 = pneg %p263
        $region50: #{tpu_custom_call.1} parent=11 // pred_check_branch
          %416 = sbr.rel (%p414) target = $region52
        $region51: #{tpu_custom_call.1} parent=11 // pred_region
          _
        $region52: #{tpu_custom_call.1} parent=11 // pred_fallthru
          _
        // Predicated region
        $region53: #{tpu_custom_call.1} parent=11 // pred_check
          %p417 = pneg %p284
        $region54: #{tpu_custom_call.1} parent=11 // pred_check_branch
          %419 = sbr.rel (%p417) target = $region56
        $region55: #{tpu_custom_call.1} parent=11 // pred_region
          _
        $region56: #{tpu_custom_call.1} parent=11 // pred_fallthru
          _
      $region12: #{tpu_custom_call.1} parent=5 // pred_fallthru
        _
      %p420 = scmp.lt.s32.totalorder %s27, 2
      // Predicated region
      $region57: #{tpu_custom_call.1} parent=5 // pred_check
        %p421 = pneg %p420
      $region58: #{tpu_custom_call.1} parent=5 // pred_check_branch
        %423 = sbr.rel (%p421) target = $region60
      $region59: #{tpu_custom_call.1} parent=5 // pred_region
        // Predicated region
        $region61: #{tpu_custom_call.1} parent=59 // pred_check
          %p424 = pneg %p47
        $region62: #{tpu_custom_call.1} parent=59 // pred_check_branch
          %426 = sbr.rel (%p424) target = $region64
        $region63: #{tpu_custom_call.1} parent=59 // pred_region
          %s427 = sand.u32 %s37, 1
          %s428 = scalar_lea.sflag [#allocation4], %s427
          %s429 = sand.u32 %s37, 1
          %s430 = smul.addr %s429, 128
          %s431 = scalar_lea.vmem [#allocation3], %s430
          %433 = vsyncadd %s428, 0
          %s434 = smul.addr %s27, 32
          %s435 = smul.addr %s434, 4
          %s436 = scalar_lea.hbm %s0, %s435
          %s437 = sshll.u32 %s436, 4
          %s438 = int_to_ptr.hbm [resolvable:$true] %s437
          %s439 = sshll.u32 %s431, 4
          %s440 = int_to_ptr.vmem [resolvable:$true] %s439
          %445 = dma.hbm_to_vmem [thread:$0]  %s438, 2048, %s440, %s428, 64, 64, 4
        $region64: #{tpu_custom_call.1} parent=59 // pred_fallthru
          _
      $region60: #{tpu_custom_call.1} parent=5 // pred_fallthru
        _
      %p446 = scmp.le.s32.totalorder 1, %s27
      %p447 = scmp.lt.s32.totalorder %s27, 3
      %p448 = pnand %p446, %p447
      %p449 = pneg %p448
      // Predicated region
      $region65: #{tpu_custom_call.1} parent=5 // pred_check
        _
      $region66: #{tpu_custom_call.1} parent=5 // pred_check_branch
        %451 = sbr.rel (%p448) target = $region68
      $region67: #{tpu_custom_call.1} parent=5 // pred_region
        %s452 = ssub.s32 %s27, 1
        %s453 = sand.u32 %s40, 1
        %s454 = scalar_lea.sflag [#allocation4], %s453
        %s455 = sand.u32 %s40, 1
        %s456 = smul.addr %s455, 128
        %s457 = scalar_lea.vmem [#allocation3], %s456
        // Predicated region
        $region69: #{tpu_custom_call.1} parent=67 // pred_check
          %p458 = pneg %p53
        $region70: #{tpu_custom_call.1} parent=67 // pred_check_branch
          %460 = sbr.rel (%p458) target = $region72
        $region71: #{tpu_custom_call.1} parent=67 // pred_region
          %462 = dma.done %s454, 2048
        $region72: #{tpu_custom_call.1} parent=67 // pred_fallthru
          _
        // Predicated region
        $region73: #{tpu_custom_call.1} parent=67 // pred_check
          %p463 = pneg %p74
        $region74: #{tpu_custom_call.1} parent=67 // pred_check_branch
          %465 = sbr.rel (%p463) target = $region76
        $region75: #{tpu_custom_call.1} parent=67 // pred_region
          %467 = dma.done [#allocation7], 9216
        $region76: #{tpu_custom_call.1} parent=67 // pred_fallthru
          _
        // Predicated region
        $region77: #{tpu_custom_call.1} parent=67 // pred_check
          %p468 = pneg %p137
        $region78: #{tpu_custom_call.1} parent=67 // pred_check_branch
          %470 = sbr.rel (%p468) target = $region80
        $region79: #{tpu_custom_call.1} parent=67 // pred_region
          %472 = dma.done [#allocation7], 9216
        $region80: #{tpu_custom_call.1} parent=67 // pred_fallthru
          _
        // Predicated region
        $region81: #{tpu_custom_call.1} parent=67 // pred_check
          %p473 = pneg %p158
        $region82: #{tpu_custom_call.1} parent=67 // pred_check_branch
          %475 = sbr.rel (%p473) target = $region84
        $region83: #{tpu_custom_call.1} parent=67 // pred_region
          %477 = dma.done [#allocation10], 16
        $region84: #{tpu_custom_call.1} parent=67 // pred_fallthru
          _
        // Predicated region
        $region85: #{tpu_custom_call.1} parent=67 // pred_check
          %p478 = pneg %p179
        $region86: #{tpu_custom_call.1} parent=67 // pred_check_branch
          %480 = sbr.rel (%p478) target = $region88
        $region87: #{tpu_custom_call.1} parent=67 // pred_region
          %482 = dma.done [#allocation10], 16
        $region88: #{tpu_custom_call.1} parent=67 // pred_fallthru
          _
        // Predicated region
        $region89: #{tpu_custom_call.1} parent=67 // pred_check
          %p483 = pneg %p200
        $region90: #{tpu_custom_call.1} parent=67 // pred_check_branch
          %485 = sbr.rel (%p483) target = $region92
        $region91: #{tpu_custom_call.1} parent=67 // pred_region
          %487 = dma.done [#allocation13], 3072
        $region92: #{tpu_custom_call.1} parent=67 // pred_fallthru
          _
        // Predicated region
        $region93: #{tpu_custom_call.1} parent=67 // pred_check
          %p488 = pneg %p242
        $region94: #{tpu_custom_call.1} parent=67 // pred_check_branch
          %490 = sbr.rel (%p488) target = $region96
        $region95: #{tpu_custom_call.1} parent=67 // pred_region
          %492 = dma.done [#allocation13], 1024
        $region96: #{tpu_custom_call.1} parent=67 // pred_fallthru
          _
        %s493 = sand.u32 %s40, 1
        %s494 = scalar_lea.sflag [#allocation4], %s493
        %s495 = sand.u32 %s40, 1
        %s496 = smul.addr %s495, 128
        %s497 = scalar_lea.vmem [#allocation3], %s496
        %p498 = pneg %p53
        %p499 = pneg %p50
        %p500 = pneg %p74
        %p501 = pneg %p71
        %p502 = pneg %p95
        %p503 = pneg %p92
        %p504 = pneg %p116
        %p505 = pneg %p113
        %p506 = pneg %p137
        %p507 = pneg %p134
        %p508 = pneg %p158
        %p509 = pneg %p155
        %p510 = pneg %p179
        %p511 = pneg %p176
        %p512 = pneg %p200
        %p513 = pneg %p197
        %p514 = pneg %p221
        %p515 = pneg %p218
        %p516 = pneg %p242
        %p517 = pneg %p239
        %p518 = pneg %p263
        %p519 = pneg %p260
        %p520 = pneg %p284
        %p521 = pneg %p281
        %p522 = pneg %p310
        %p523 = pneg %p307
        %s524 = sand.u32 %s297, 1
        %s525 = scalar_lea.sflag [#allocation5], %s524
        %s526 = sand.u32 %s297, 1
        %s527 = smul.addr %s526, 32
        %s528 = scalar_lea.vmem [#allocation15], %s527
        %v529 = vld [vmem:[%s457] sm:$0xf]
        %v530 = vld [vmem:[%s457 + $0x4] sm:$0xf]
        %v531 = vld [vmem:[%s457 + $0x8] sm:$0xf]
        %v532 = vld [vmem:[%s457 + $0xc] sm:$0xf]
        %v533 = vld [vmem:[%s457 + $0x10] sm:$0xf]
        %v534 = vld [vmem:[%s457 + $0x14] sm:$0xf]
        %v535 = vld [vmem:[%s457 + $0x18] sm:$0xf]
        %v536 = vld [vmem:[%s457 + $0x1c] sm:$0xf]
        %v537 = vld [vmem:[%s457 + $0x20] sm:$0xf]
        %v538 = vld [vmem:[%s457 + $0x24] sm:$0xf]
        %v539 = vld [vmem:[%s457 + $0x28] sm:$0xf]
        %v540 = vld [vmem:[%s457 + $0x2c] sm:$0xf]
        %v541 = vld [vmem:[%s457 + $0x30] sm:$0xf]
        %v542 = vld [vmem:[%s457 + $0x34] sm:$0xf]
        %v543 = vld [vmem:[%s457 + $0x38] sm:$0xf]
        %v544 = vld [vmem:[%s457 + $0x3c] sm:$0xf]
        %v545 = vld [vmem:[%s457 + $0x40] sm:$0xf]
        %v546 = vld [vmem:[%s457 + $0x44] sm:$0xf]
        %v547 = vld [vmem:[%s457 + $0x48] sm:$0xf]
        %v548 = vld [vmem:[%s457 + $0x4c] sm:$0xf]
        %v549 = vld [vmem:[%s457 + $0x50] sm:$0xf]
        %v550 = vld [vmem:[%s457 + $0x54] sm:$0xf]
        %v551 = vld [vmem:[%s457 + $0x58] sm:$0xf]
        %v552 = vld [vmem:[%s457 + $0x5c] sm:$0xf]
        %v553 = vld [vmem:[%s457 + $0x60] sm:$0xf]
        %v554 = vld [vmem:[%s457 + $0x64] sm:$0xf]
        %v555 = vld [vmem:[%s457 + $0x68] sm:$0xf]
        %v556 = vld [vmem:[%s457 + $0x6c] sm:$0xf]
        %v557 = vld [vmem:[%s457 + $0x70] sm:$0xf]
        %v558 = vld [vmem:[%s457 + $0x74] sm:$0xf]
        %v559 = vld [vmem:[%s457 + $0x78] sm:$0xf]
        %v560 = vld [vmem:[%s457 + $0x7c] sm:$0xf]
        %561 = vst [vmem:[#allocation2] sm:$0xff] 0.0
        %562 = vst [vmem:[#allocation2 + $0x8] sm:$0xff] 0.0
        %563 = vst [vmem:[#allocation2 + $0x10] sm:$0x3] 0.0
        %s564 = scalar_lea.vmem [#allocation2], 408
        %565 = vst [vmem:[%s564] sm:$0xff] 0.0
        %566 = vst [vmem:[%s564 + $0x8] sm:$0xff] 0.0
        %567 = vst [vmem:[%s564 + $0x10] sm:$0x3] 0.0
        %568 = vst [vmem:[#allocation2] sm:$0x1] 0.0
        %569 = vst [vmem:[#allocation2 + $0x18] sm:$0x1] 0.0
        %570 = vst [vmem:[#allocation2 + $0x30] sm:$0x1] 0.0
        %571 = vst [vmem:[#allocation2 + $0x48] sm:$0x1] 0.0
        %572 = vst [vmem:[#allocation2 + $0x60] sm:$0x1] 0.0
        %573 = vst [vmem:[#allocation2 + $0x78] sm:$0x1] 0.0
        %574 = vst [vmem:[#allocation2 + $0x90] sm:$0x1] 0.0
        %575 = vst [vmem:[#allocation2 + $0xa8] sm:$0x1] 0.0
        %576 = vst [vmem:[#allocation2 + $0xc0] sm:$0x1] 0.0
        %577 = vst [vmem:[#allocation2 + $0xd8] sm:$0x1] 0.0
        %578 = vst [vmem:[#allocation2 + $0xf0] sm:$0x1] 0.0
        %579 = vst [vmem:[#allocation2 + $0x108] sm:$0x1] 0.0
        %580 = vst [vmem:[#allocation2 + $0x120] sm:$0x1] 0.0
        %581 = vst [vmem:[#allocation2 + $0x138] sm:$0x1] 0.0
        %582 = vst [vmem:[#allocation2 + $0x150] sm:$0x1] 0.0
        %583 = vst [vmem:[#allocation2 + $0x168] sm:$0x1] 0.0
        %584 = vst [vmem:[#allocation2 + $0x180] sm:$0x1] 0.0
        %585 = vst [vmem:[#allocation2 + $0x198] sm:$0x1] 0.0
        %586 = vst [vmem:[#allocation2 + $0x11] sm:$0x1] 0.0
        %587 = vst [vmem:[#allocation2 + $0x29] sm:$0x1] 0.0
        %588 = vst [vmem:[#allocation2 + $0x41] sm:$0x1] 0.0
        %589 = vst [vmem:[#allocation2 + $0x59] sm:$0x1] 0.0
        %590 = vst [vmem:[#allocation2 + $0x71] sm:$0x1] 0.0
        %591 = vst [vmem:[#allocation2 + $0x89] sm:$0x1] 0.0
        %592 = vst [vmem:[#allocation2 + $0xa1] sm:$0x1] 0.0
        %593 = vst [vmem:[#allocation2 + $0xb9] sm:$0x1] 0.0
        %594 = vst [vmem:[#allocation2 + $0xd1] sm:$0x1] 0.0
        %595 = vst [vmem:[#allocation2 + $0xe9] sm:$0x1] 0.0
        %596 = vst [vmem:[#allocation2 + $0x101] sm:$0x1] 0.0
        %597 = vst [vmem:[#allocation2 + $0x119] sm:$0x1] 0.0
        %598 = vst [vmem:[#allocation2 + $0x131] sm:$0x1] 0.0
        %599 = vst [vmem:[#allocation2 + $0x149] sm:$0x1] 0.0
        %600 = vst [vmem:[#allocation2 + $0x161] sm:$0x1] 0.0
        %601 = vst [vmem:[#allocation2 + $0x179] sm:$0x1] 0.0
        %602 = vst [vmem:[#allocation2 + $0x191] sm:$0x1] 0.0
        %603 = vst [vmem:[#allocation2 + $0x1a9] sm:$0x1] 0.0
        %v604 = vunpack.c.l.bf16 %v529
        %v605 = vunpack.c.l.bf16 %v530
        %v606 = vunpack.c.l.bf16 %v531
        %v607 = vunpack.c.l.bf16 %v532
        %v608 = vunpack.c.l.bf16 %v533
        %v609 = vunpack.c.l.bf16 %v534
        %v610 = vunpack.c.l.bf16 %v535
        %v611 = vunpack.c.l.bf16 %v536
        %v612 = vunpack.c.l.bf16 %v537
        %v613 = vunpack.c.l.bf16 %v538
        %v614 = vunpack.c.l.bf16 %v539
        %v615 = vunpack.c.l.bf16 %v540
        %v616 = vunpack.c.l.bf16 %v541
        %v617 = vunpack.c.l.bf16 %v542
        %v618 = vunpack.c.l.bf16 %v543
        %v619 = vunpack.c.l.bf16 %v544
        %v620 = vunpack.c.l.bf16 %v545
        %v621 = vunpack.c.l.bf16 %v546
        %v622 = vunpack.c.l.bf16 %v547
        %v623 = vunpack.c.l.bf16 %v548
        %v624 = vunpack.c.l.bf16 %v549
        %v625 = vunpack.c.l.bf16 %v550
        %v626 = vunpack.c.l.bf16 %v551
        %v627 = vunpack.c.l.bf16 %v552
        %v628 = vunpack.c.l.bf16 %v553
        %v629 = vunpack.c.l.bf16 %v554
        %v630 = vunpack.c.l.bf16 %v555
        %v631 = vunpack.c.l.bf16 %v556
        %v632 = vunpack.c.l.bf16 %v557
        %v633 = vunpack.c.l.bf16 %v558
        %v634 = vunpack.c.l.bf16 %v559
        %v635 = vunpack.c.l.bf16 %v560
        %s636 = scalar_lea.vmem [#allocation2], 24
        %637 = vst [vmem:[%s636 + $0x1] sm:$0xff] %v604
        %638 = vst [vmem:[%s636 + $0x9] sm:$0xff] %v605
        %639 = vst [vmem:[%s636 + $0x19] sm:$0xff] %v606
        %640 = vst [vmem:[%s636 + $0x21] sm:$0xff] %v607
        %641 = vst [vmem:[%s636 + $0x31] sm:$0xff] %v608
        %642 = vst [vmem:[%s636 + $0x39] sm:$0xff] %v609
        %643 = vst [vmem:[%s636 + $0x49] sm:$0xff] %v610
        %644 = vst [vmem:[%s636 + $0x51] sm:$0xff] %v611
        %645 = vst [vmem:[%s636 + $0x61] sm:$0xff] %v612
        %646 = vst [vmem:[%s636 + $0x69] sm:$0xff] %v613
        %647 = vst [vmem:[%s636 + $0x79] sm:$0xff] %v614
        %648 = vst [vmem:[%s636 + $0x81] sm:$0xff] %v615
        %649 = vst [vmem:[%s636 + $0x91] sm:$0xff] %v616
        %650 = vst [vmem:[%s636 + $0x99] sm:$0xff] %v617
        %651 = vst [vmem:[%s636 + $0xa9] sm:$0xff] %v618
        %652 = vst [vmem:[%s636 + $0xb1] sm:$0xff] %v619
        %653 = vst [vmem:[%s636 + $0xc1] sm:$0xff] %v620
        %654 = vst [vmem:[%s636 + $0xc9] sm:$0xff] %v621
        %655 = vst [vmem:[%s636 + $0xd9] sm:$0xff] %v622
        %656 = vst [vmem:[%s636 + $0xe1] sm:$0xff] %v623
        %657 = vst [vmem:[%s636 + $0xf1] sm:$0xff] %v624
        %658 = vst [vmem:[%s636 + $0xf9] sm:$0xff] %v625
        %659 = vst [vmem:[%s636 + $0x109] sm:$0xff] %v626
        %660 = vst [vmem:[%s636 + $0x111] sm:$0xff] %v627
        %661 = vst [vmem:[%s636 + $0x121] sm:$0xff] %v628
        %662 = vst [vmem:[%s636 + $0x129] sm:$0xff] %v629
        %663 = vst [vmem:[%s636 + $0x139] sm:$0xff] %v630
        %664 = vst [vmem:[%s636 + $0x141] sm:$0xff] %v631
        %665 = vst [vmem:[%s636 + $0x151] sm:$0xff] %v632
        %666 = vst [vmem:[%s636 + $0x159] sm:$0xff] %v633
        %667 = vst [vmem:[%s636 + $0x169] sm:$0xff] %v634
        %668 = vst [vmem:[%s636 + $0x171] sm:$0xff] %v635
        %v669 = vld [vmem:[#allocation2] sm:$0xff]
        %v670 = vld [vmem:[#allocation2 + $0x8] sm:$0xff]
        %v671 = vld [vmem:[#allocation2 + $0x18] sm:$0xff]
        %v672 = vld [vmem:[#allocation2 + $0x20] sm:$0xff]
        %v673 = vld [vmem:[#allocation2 + $0x30] sm:$0xff]
        %v674 = vld [vmem:[#allocation2 + $0x38] sm:$0xff]
        %v675 = vld [vmem:[#allocation2 + $0x48] sm:$0xff]
        %v676 = vld [vmem:[#allocation2 + $0x50] sm:$0xff]
        %v677 = vld [vmem:[#allocation2 + $0x60] sm:$0xff]
        %v678 = vld [vmem:[#allocation2 + $0x68] sm:$0xff]
        %v679 = vld [vmem:[#allocation2 + $0x78] sm:$0xff]
        %v680 = vld [vmem:[#allocation2 + $0x80] sm:$0xff]
        %v681 = vld [vmem:[#allocation2 + $0x90] sm:$0xff]
        %v682 = vld [vmem:[#allocation2 + $0x98] sm:$0xff]
        %v683 = vld [vmem:[#allocation2 + $0xa8] sm:$0xff]
        %v684 = vld [vmem:[#allocation2 + $0xb0] sm:$0xff]
        %v685 = vld [vmem:[#allocation2 + $0xc0] sm:$0xff]
        %v686 = vld [vmem:[#allocation2 + $0xc8] sm:$0xff]
        %v687 = vld [vmem:[#allocation2 + $0xd8] sm:$0xff]
        %v688 = vld [vmem:[#allocation2 + $0xe0] sm:$0xff]
        %v689 = vld [vmem:[#allocation2 + $0xf0] sm:$0xff]
        %v690 = vld [vmem:[#allocation2 + $0xf8] sm:$0xff]
        %v691 = vld [vmem:[#allocation2 + $0x108] sm:$0xff]
        %v692 = vld [vmem:[#allocation2 + $0x110] sm:$0xff]
        %v693 = vld [vmem:[#allocation2 + $0x120] sm:$0xff]
        %v694 = vld [vmem:[#allocation2 + $0x128] sm:$0xff]
        %v695 = vld [vmem:[#allocation2 + $0x138] sm:$0xff]
        %v696 = vld [vmem:[#allocation2 + $0x140] sm:$0xff]
        %v697 = vld [vmem:[#allocation2 + $0x150] sm:$0xff]
        %v698 = vld [vmem:[#allocation2 + $0x158] sm:$0xff]
        %v699 = vld [vmem:[#allocation2 + $0x168] sm:$0xff]
        %v700 = vld [vmem:[#allocation2 + $0x170] sm:$0xff]
        %v701 = vpack.c.bf16 %v669, %v669
        %v702 = vpack.c.bf16 %v670, %v670
        %v703 = vpack.c.bf16 %v671, %v671
        %v704 = vpack.c.bf16 %v672, %v672
        %v705 = vpack.c.bf16 %v673, %v673
        %v706 = vpack.c.bf16 %v674, %v674
        %v707 = vpack.c.bf16 %v675, %v675
        %v708 = vpack.c.bf16 %v676, %v676
        %v709 = vpack.c.bf16 %v677, %v677
        %v710 = vpack.c.bf16 %v678, %v678
        %v711 = vpack.c.bf16 %v679, %v679
        %v712 = vpack.c.bf16 %v680, %v680
        %v713 = vpack.c.bf16 %v681, %v681
        %v714 = vpack.c.bf16 %v682, %v682
        %v715 = vpack.c.bf16 %v683, %v683
        %v716 = vpack.c.bf16 %v684, %v684
        %v717 = vpack.c.bf16 %v685, %v685
        %v718 = vpack.c.bf16 %v686, %v686
        %v719 = vpack.c.bf16 %v687, %v687
        %v720 = vpack.c.bf16 %v688, %v688
        %v721 = vpack.c.bf16 %v689, %v689
        %v722 = vpack.c.bf16 %v690, %v690
        %v723 = vpack.c.bf16 %v691, %v691
        %v724 = vpack.c.bf16 %v692, %v692
        %v725 = vpack.c.bf16 %v693, %v693
        %v726 = vpack.c.bf16 %v694, %v694
        %v727 = vpack.c.bf16 %v695, %v695
        %v728 = vpack.c.bf16 %v696, %v696
        %v729 = vpack.c.bf16 %v697, %v697
        %v730 = vpack.c.bf16 %v698, %v698
        %v731 = vpack.c.bf16 %v699, %v699
        %v732 = vpack.c.bf16 %v700, %v700
        %v733 = vld [vmem:[#allocation6] sm:$0xf]
        %v734 = vld [vmem:[#allocation6 + $0x4] sm:$0xf]
        %v735 = vld [vmem:[#allocation6 + $0x8] sm:$0xf]
        %v736 = vld [vmem:[#allocation6 + $0xc] sm:$0xf]
        %v737 = vld [vmem:[#allocation6 + $0x10] sm:$0xf]
        %v738 = vld [vmem:[#allocation6 + $0x14] sm:$0xf]
        %v739 = vld [vmem:[#allocation6 + $0x18] sm:$0xf]
        %v740 = vld [vmem:[#allocation6 + $0x1c] sm:$0xf]
        %v741 = vld [vmem:[#allocation6 + $0x20] sm:$0xf]
        %v742 = vld [vmem:[#allocation6 + $0x24] sm:$0xf]
        %v743 = vld [vmem:[#allocation6 + $0x28] sm:$0xf]
        %v744 = vld [vmem:[#allocation6 + $0x2c] sm:$0xf]
        %v745 = vld [vmem:[#allocation6 + $0x30] sm:$0xf]
        %v746 = vld [vmem:[#allocation6 + $0x34] sm:$0xf]
        %v747 = vld [vmem:[#allocation6 + $0x38] sm:$0xf]
        %v748 = vld [vmem:[#allocation6 + $0x3c] sm:$0xf]
        %v749 = vld [vmem:[#allocation2 + $0x1] sm:$0xff]
        %v750 = vld [vmem:[#allocation2 + $0x9] sm:$0xff]
        %v751 = vld [vmem:[#allocation2 + $0x19] sm:$0xff]
        %v752 = vld [vmem:[#allocation2 + $0x21] sm:$0xff]
        %v753 = vld [vmem:[#allocation2 + $0x31] sm:$0xff]
        %v754 = vld [vmem:[#allocation2 + $0x39] sm:$0xff]
        %v755 = vld [vmem:[#allocation2 + $0x49] sm:$0xff]
        %v756 = vld [vmem:[#allocation2 + $0x51] sm:$0xff]
        %v757 = vld [vmem:[#allocation2 + $0x61] sm:$0xff]
        %v758 = vld [vmem:[#allocation2 + $0x69] sm:$0xff]
        %v759 = vld [vmem:[#allocation2 + $0x79] sm:$0xff]
        %v760 = vld [vmem:[#allocation2 + $0x81] sm:$0xff]
        %v761 = vld [vmem:[#allocation2 + $0x91] sm:$0xff]
        %v762 = vld [vmem:[#allocation2 + $0x99] sm:$0xff]
        %v763 = vld [vmem:[#allocation2 + $0xa9] sm:$0xff]
        %v764 = vld [vmem:[#allocation2 + $0xb1] sm:$0xff]
        %v765 = vld [vmem:[#allocation2 + $0xc1] sm:$0xff]
        %v766 = vld [vmem:[#allocation2 + $0xc9] sm:$0xff]
        %v767 = vld [vmem:[#allocation2 + $0xd9] sm:$0xff]
        %v768 = vld [vmem:[#allocation2 + $0xe1] sm:$0xff]
        %v769 = vld [vmem:[#allocation2 + $0xf1] sm:$0xff]
        %v770 = vld [vmem:[#allocation2 + $0xf9] sm:$0xff]
        %v771 = vld [vmem:[#allocation2 + $0x109] sm:$0xff]
        %v772 = vld [vmem:[#allocation2 + $0x111] sm:$0xff]
        %v773 = vld [vmem:[#allocation2 + $0x121] sm:$0xff]
        %v774 = vld [vmem:[#allocation2 + $0x129] sm:$0xff]
        %v775 = vld [vmem:[#allocation2 + $0x139] sm:$0xff]
        %v776 = vld [vmem:[#allocation2 + $0x141] sm:$0xff]
        %v777 = vld [vmem:[#allocation2 + $0x151] sm:$0xff]
        %v778 = vld [vmem:[#allocation2 + $0x159] sm:$0xff]
        %v779 = vld [vmem:[#allocation2 + $0x169] sm:$0xff]
        %v780 = vld [vmem:[#allocation2 + $0x171] sm:$0xff]
        %v781 = vpack.c.bf16 %v749, %v749
        %v782 = vpack.c.bf16 %v750, %v750
        %v783 = vpack.c.bf16 %v751, %v751
        %v784 = vpack.c.bf16 %v752, %v752
        %v785 = vpack.c.bf16 %v753, %v753
        %v786 = vpack.c.bf16 %v754, %v754
        %v787 = vpack.c.bf16 %v755, %v755
        %v788 = vpack.c.bf16 %v756, %v756
        %v789 = vpack.c.bf16 %v757, %v757
        %v790 = vpack.c.bf16 %v758, %v758
        %v791 = vpack.c.bf16 %v759, %v759
        %v792 = vpack.c.bf16 %v760, %v760
        %v793 = vpack.c.bf16 %v761, %v761
        %v794 = vpack.c.bf16 %v762, %v762
        %v795 = vpack.c.bf16 %v763, %v763
        %v796 = vpack.c.bf16 %v764, %v764
        %v797 = vpack.c.bf16 %v765, %v765
        %v798 = vpack.c.bf16 %v766, %v766
        %v799 = vpack.c.bf16 %v767, %v767
        %v800 = vpack.c.bf16 %v768, %v768
        %v801 = vpack.c.bf16 %v769, %v769
        %v802 = vpack.c.bf16 %v770, %v770
        %v803 = vpack.c.bf16 %v771, %v771
        %v804 = vpack.c.bf16 %v772, %v772
        %v805 = vpack.c.bf16 %v773, %v773
        %v806 = vpack.c.bf16 %v774, %v774
        %v807 = vpack.c.bf16 %v775, %v775
        %v808 = vpack.c.bf16 %v776, %v776
        %v809 = vpack.c.bf16 %v777, %v777
        %v810 = vpack.c.bf16 %v778, %v778
        %v811 = vpack.c.bf16 %v779, %v779
        %v812 = vpack.c.bf16 %v780, %v780
        %v813 = vld [vmem:[#allocation6 + $0x40] sm:$0xf]
        %v814 = vld [vmem:[#allocation6 + $0x44] sm:$0xf]
        %v815 = vld [vmem:[#allocation6 + $0x48] sm:$0xf]
        %v816 = vld [vmem:[#allocation6 + $0x4c] sm:$0xf]
        %v817 = vld [vmem:[#allocation6 + $0x50] sm:$0xf]
        %v818 = vld [vmem:[#allocation6 + $0x54] sm:$0xf]
        %v819 = vld [vmem:[#allocation6 + $0x58] sm:$0xf]
        %v820 = vld [vmem:[#allocation6 + $0x5c] sm:$0xf]
        %v821 = vld [vmem:[#allocation6 + $0x60] sm:$0xf]
        %v822 = vld [vmem:[#allocation6 + $0x64] sm:$0xf]
        %v823 = vld [vmem:[#allocation6 + $0x68] sm:$0xf]
        %v824 = vld [vmem:[#allocation6 + $0x6c] sm:$0xf]
        %v825 = vld [vmem:[#allocation6 + $0x70] sm:$0xf]
        %v826 = vld [vmem:[#allocation6 + $0x74] sm:$0xf]
        %v827 = vld [vmem:[#allocation6 + $0x78] sm:$0xf]
        %v828 = vld [vmem:[#allocation6 + $0x7c] sm:$0xf]
        %v861 = vunpack.c.l.b16 %v781
        %v862 = vunpack.c.l.b16 %v782
        %v863 = vunpack.c.l.b16 %v783
        %v864 = vunpack.c.l.b16 %v784
        %v865 = vunpack.c.l.b16 %v785
        %v866 = vunpack.c.l.b16 %v786
        %v867 = vunpack.c.l.b16 %v787
        %v868 = vunpack.c.l.b16 %v788
        %v869 = vunpack.c.l.b16 %v789
        %v870 = vunpack.c.l.b16 %v790
        %v871 = vunpack.c.l.b16 %v791
        %v872 = vunpack.c.l.b16 %v792
        %v873 = vunpack.c.l.b16 %v793
        %v874 = vunpack.c.l.b16 %v794
        %v875 = vunpack.c.l.b16 %v795
        %v876 = vunpack.c.l.b16 %v796
        %v877 = vunpack.c.l.b16 %v797
        %v878 = vunpack.c.l.b16 %v798
        %v879 = vunpack.c.l.b16 %v799
        %v880 = vunpack.c.l.b16 %v800
        %v881 = vunpack.c.l.b16 %v801
        %v882 = vunpack.c.l.b16 %v802
        %v883 = vunpack.c.l.b16 %v803
        %v884 = vunpack.c.l.b16 %v804
        %v885 = vunpack.c.l.b16 %v805
        %v886 = vunpack.c.l.b16 %v806
        %v887 = vunpack.c.l.b16 %v807
        %v888 = vunpack.c.l.b16 %v808
        %v889 = vunpack.c.l.b16 %v809
        %v890 = vunpack.c.l.b16 %v810
        %v891 = vunpack.c.l.b16 %v811
        %v892 = vunpack.c.l.b16 %v812
        %v893 = vpack.c.b16 %v862, %v861
        %v894 = vpack.c.b16 %v864, %v863
        %v895 = vpack.c.b16 %v866, %v865
        %v896 = vpack.c.b16 %v868, %v867
        %v897 = vpack.c.b16 %v870, %v869
        %v898 = vpack.c.b16 %v872, %v871
        %v899 = vpack.c.b16 %v874, %v873
        %v900 = vpack.c.b16 %v876, %v875
        %v901 = vpack.c.b16 %v878, %v877
        %v902 = vpack.c.b16 %v880, %v879
        %v903 = vpack.c.b16 %v882, %v881
        %v904 = vpack.c.b16 %v884, %v883
        %v905 = vpack.c.b16 %v886, %v885
        %v906 = vpack.c.b16 %v888, %v887
        %v907 = vpack.c.b16 %v890, %v889
        %v908 = vpack.c.b16 %v892, %v891
        %v941 = vunpack.c.l.b16 %v813
        %v942 = vunpack.c.l.b16 %v814
        %v943 = vunpack.c.l.b16 %v815
        %v944 = vunpack.c.l.b16 %v816
        %v945 = vunpack.c.l.b16 %v817
        %v946 = vunpack.c.l.b16 %v818
        %v947 = vunpack.c.l.b16 %v819
        %v948 = vunpack.c.l.b16 %v820
        %v949 = vunpack.c.l.b16 %v821
        %v950 = vunpack.c.l.b16 %v822
        %v951 = vunpack.c.l.b16 %v823
        %v952 = vunpack.c.l.b16 %v824
        %v953 = vunpack.c.l.b16 %v825
        %v954 = vunpack.c.l.b16 %v826
        %v955 = vunpack.c.l.b16 %v827
        %v956 = vunpack.c.l.b16 %v828
        %v957 = vpack.c.b16 %v942, %v941
        %v958 = vpack.c.b16 %v944, %v943
        %v959 = vpack.c.b16 %v946, %v945
        %v960 = vpack.c.b16 %v948, %v947
        %v961 = vpack.c.b16 %v950, %v949
        %v962 = vpack.c.b16 %v952, %v951
        %v963 = vpack.c.b16 %v954, %v953
        %v964 = vpack.c.b16 %v956, %v955
        %973 = vmatpush.bf16.msra.mxu0 %v964
        %974 = vmatpush.bf16.msra.mxu0 %v963
        %975 = vmatpush.bf16.msra.mxu0 %v962
        %976 = vmatpush.bf16.msra.mxu0 %v961
        %977 = vmatpush.bf16.msra.mxu0 %v960
        %978 = vmatpush.bf16.msra.mxu0 %v959
        %979 = vmatpush.bf16.msra.mxu0 %v958
        %980 = vmatpush.bf16.msra.mxu0 %v957
        %981 = vmatmul.bf16.gmra.mxu0 %v893
        %v982 = vpop.f32.mrf.mxu0
        %v983 = vadd.f32 0.0, %v982
        %v984 = vpop.f32.mrf.mxu0
        %v985 = vadd.f32 0.0, %v984
        %986 = vmatmul.bf16.gmra.mxu0 %v894
        %v987 = vpop.f32.mrf.mxu0
        %v988 = vadd.f32 0.0, %v987
        %v989 = vpop.f32.mrf.mxu0
        %v990 = vadd.f32 0.0, %v989
        %991 = vmatmul.bf16.gmra.mxu0 %v895
        %v992 = vpop.f32.mrf.mxu0
        %v993 = vadd.f32 0.0, %v992
        %v994 = vpop.f32.mrf.mxu0
        %v995 = vadd.f32 0.0, %v994
        %996 = vmatmul.bf16.gmra.mxu0 %v896
        %v997 = vpop.f32.mrf.mxu0
        %v998 = vadd.f32 0.0, %v997
        %v999 = vpop.f32.mrf.mxu0
        %v1000 = vadd.f32 0.0, %v999
        %1001 = vmatmul.bf16.gmra.mxu0 %v897
        %v1002 = vpop.f32.mrf.mxu0
        %v1003 = vadd.f32 0.0, %v1002
        %v1004 = vpop.f32.mrf.mxu0
        %v1005 = vadd.f32 0.0, %v1004
        %1006 = vmatmul.bf16.gmra.mxu0 %v898
        %v1007 = vpop.f32.mrf.mxu0
        %v1008 = vadd.f32 0.0, %v1007
        %v1009 = vpop.f32.mrf.mxu0
        %v1010 = vadd.f32 0.0, %v1009
        %1011 = vmatmul.bf16.gmra.mxu0 %v899
        %v1012 = vpop.f32.mrf.mxu0
        %v1013 = vadd.f32 0.0, %v1012
        %v1014 = vpop.f32.mrf.mxu0
        %v1015 = vadd.f32 0.0, %v1014
        %1016 = vmatmul.bf16.gmra.mxu0 %v900
        %v1017 = vpop.f32.mrf.mxu0
        %v1018 = vadd.f32 0.0, %v1017
        %v1019 = vpop.f32.mrf.mxu0
        %v1020 = vadd.f32 0.0, %v1019
        %1021 = vmatmul.bf16.gmra.mxu0 %v901
        %v1022 = vpop.f32.mrf.mxu0
        %v1023 = vadd.f32 0.0, %v1022
        %v1024 = vpop.f32.mrf.mxu0
        %v1025 = vadd.f32 0.0, %v1024
        %1026 = vmatmul.bf16.gmra.mxu0 %v902
        %v1027 = vpop.f32.mrf.mxu0
        %v1028 = vadd.f32 0.0, %v1027
        %v1029 = vpop.f32.mrf.mxu0
        %v1030 = vadd.f32 0.0, %v1029
        %1031 = vmatmul.bf16.gmra.mxu0 %v903
        %v1032 = vpop.f32.mrf.mxu0
        %v1033 = vadd.f32 0.0, %v1032
        %v1034 = vpop.f32.mrf.mxu0
        %v1035 = vadd.f32 0.0, %v1034
        %1036 = vmatmul.bf16.gmra.mxu0 %v904
        %v1037 = vpop.f32.mrf.mxu0
        %v1038 = vadd.f32 0.0, %v1037
        %v1039 = vpop.f32.mrf.mxu0
        %v1040 = vadd.f32 0.0, %v1039
        %1041 = vmatmul.bf16.gmra.mxu0 %v905
        %v1042 = vpop.f32.mrf.mxu0
        %v1043 = vadd.f32 0.0, %v1042
        %v1044 = vpop.f32.mrf.mxu0
        %v1045 = vadd.f32 0.0, %v1044
        %1046 = vmatmul.bf16.gmra.mxu0 %v906
        %v1047 = vpop.f32.mrf.mxu0
        %v1048 = vadd.f32 0.0, %v1047
        %v1049 = vpop.f32.mrf.mxu0
        %v1050 = vadd.f32 0.0, %v1049
        %1051 = vmatmul.bf16.gmra.mxu0 %v907
        %v1052 = vpop.f32.mrf.mxu0
        %v1053 = vadd.f32 0.0, %v1052
        %v1054 = vpop.f32.mrf.mxu0
        %v1055 = vadd.f32 0.0, %v1054
        %1056 = vmatmul.bf16.gmra.mxu0 %v908
        %v1057 = vpop.f32.mrf.mxu0
        %v1058 = vadd.f32 0.0, %v1057
        %v1059 = vpop.f32.mrf.mxu0
        %v1060 = vadd.f32 0.0, %v1059
        %1061 = vdwg.mxu0
        %v1094 = vunpack.c.l.b16 %v701
        %v1095 = vunpack.c.l.b16 %v702
        %v1096 = vunpack.c.l.b16 %v703
        %v1097 = vunpack.c.l.b16 %v704
        %v1098 = vunpack.c.l.b16 %v705
        %v1099 = vunpack.c.l.b16 %v706
        %v1100 = vunpack.c.l.b16 %v707
        %v1101 = vunpack.c.l.b16 %v708
        %v1102 = vunpack.c.l.b16 %v709
        %v1103 = vunpack.c.l.b16 %v710
        %v1104 = vunpack.c.l.b16 %v711
        %v1105 = vunpack.c.l.b16 %v712
        %v1106 = vunpack.c.l.b16 %v713
        %v1107 = vunpack.c.l.b16 %v714
        %v1108 = vunpack.c.l.b16 %v715
        %v1109 = vunpack.c.l.b16 %v716
        %v1110 = vunpack.c.l.b16 %v717
        %v1111 = vunpack.c.l.b16 %v718
        %v1112 = vunpack.c.l.b16 %v719
        %v1113 = vunpack.c.l.b16 %v720
        %v1114 = vunpack.c.l.b16 %v721
        %v1115 = vunpack.c.l.b16 %v722
        %v1116 = vunpack.c.l.b16 %v723
        %v1117 = vunpack.c.l.b16 %v724
        %v1118 = vunpack.c.l.b16 %v725
        %v1119 = vunpack.c.l.b16 %v726
        %v1120 = vunpack.c.l.b16 %v727
        %v1121 = vunpack.c.l.b16 %v728
        %v1122 = vunpack.c.l.b16 %v729
        %v1123 = vunpack.c.l.b16 %v730
        %v1124 = vunpack.c.l.b16 %v731
        %v1125 = vunpack.c.l.b16 %v732
        %v1126 = vpack.c.b16 %v1095, %v1094
        %v1127 = vpack.c.b16 %v1097, %v1096
        %v1128 = vpack.c.b16 %v1099, %v1098
        %v1129 = vpack.c.b16 %v1101, %v1100
        %v1130 = vpack.c.b16 %v1103, %v1102
        %v1131 = vpack.c.b16 %v1105, %v1104
        %v1132 = vpack.c.b16 %v1107, %v1106
        %v1133 = vpack.c.b16 %v1109, %v1108
        %v1134 = vpack.c.b16 %v1111, %v1110
        %v1135 = vpack.c.b16 %v1113, %v1112
        %v1136 = vpack.c.b16 %v1115, %v1114
        %v1137 = vpack.c.b16 %v1117, %v1116
        %v1138 = vpack.c.b16 %v1119, %v1118
        %v1139 = vpack.c.b16 %v1121, %v1120
        %v1140 = vpack.c.b16 %v1123, %v1122
        %v1141 = vpack.c.b16 %v1125, %v1124
        %v1174 = vunpack.c.l.b16 %v733
        %v1175 = vunpack.c.l.b16 %v734
        %v1176 = vunpack.c.l.b16 %v735
        %v1177 = vunpack.c.l.b16 %v736
        %v1178 = vunpack.c.l.b16 %v737
        %v1179 = vunpack.c.l.b16 %v738
        %v1180 = vunpack.c.l.b16 %v739
        %v1181 = vunpack.c.l.b16 %v740
        %v1182 = vunpack.c.l.b16 %v741
        %v1183 = vunpack.c.l.b16 %v742
        %v1184 = vunpack.c.l.b16 %v743
        %v1185 = vunpack.c.l.b16 %v744
        %v1186 = vunpack.c.l.b16 %v745
        %v1187 = vunpack.c.l.b16 %v746
        %v1188 = vunpack.c.l.b16 %v747
        %v1189 = vunpack.c.l.b16 %v748
        %v1190 = vpack.c.b16 %v1175, %v1174
        %v1191 = vpack.c.b16 %v1177, %v1176
        %v1192 = vpack.c.b16 %v1179, %v1178
        %v1193 = vpack.c.b16 %v1181, %v1180
        %v1194 = vpack.c.b16 %v1183, %v1182
        %v1195 = vpack.c.b16 %v1185, %v1184
        %v1196 = vpack.c.b16 %v1187, %v1186
        %v1197 = vpack.c.b16 %v1189, %v1188
        %1206 = vmatpush.bf16.msra.mxu0 %v1197
        %1207 = vmatpush.bf16.msra.mxu0 %v1196
        %1208 = vmatpush.bf16.msra.mxu0 %v1195
        %1209 = vmatpush.bf16.msra.mxu0 %v1194
        %1210 = vmatpush.bf16.msra.mxu0 %v1193
        %1211 = vmatpush.bf16.msra.mxu0 %v1192
        %1212 = vmatpush.bf16.msra.mxu0 %v1191
        %1213 = vmatpush.bf16.msra.mxu0 %v1190
        %1214 = vmatmul.bf16.gmra.mxu0 %v1126
        %v1215 = vpop.f32.mrf.mxu0
        %v1216 = vadd.f32 %v983, %v1215
        %v1217 = vpop.f32.mrf.mxu0
        %v1218 = vadd.f32 %v985, %v1217
        %1219 = vmatmul.bf16.gmra.mxu0 %v1127
        %v1220 = vpop.f32.mrf.mxu0
        %v1221 = vadd.f32 %v988, %v1220
        %v1222 = vpop.f32.mrf.mxu0
        %v1223 = vadd.f32 %v990, %v1222
        %1224 = vmatmul.bf16.gmra.mxu0 %v1128
        %v1225 = vpop.f32.mrf.mxu0
        %v1226 = vadd.f32 %v993, %v1225
        %v1227 = vpop.f32.mrf.mxu0
        %v1228 = vadd.f32 %v995, %v1227
        %1229 = vmatmul.bf16.gmra.mxu0 %v1129
        %v1230 = vpop.f32.mrf.mxu0
        %v1231 = vadd.f32 %v998, %v1230
        %v1232 = vpop.f32.mrf.mxu0
        %v1233 = vadd.f32 %v1000, %v1232
        %1234 = vmatmul.bf16.gmra.mxu0 %v1130
        %v1235 = vpop.f32.mrf.mxu0
        %v1236 = vadd.f32 %v1003, %v1235
        %v1237 = vpop.f32.mrf.mxu0
        %v1238 = vadd.f32 %v1005, %v1237
        %1239 = vmatmul.bf16.gmra.mxu0 %v1131
        %v1240 = vpop.f32.mrf.mxu0
        %v1241 = vadd.f32 %v1008, %v1240
        %v1242 = vpop.f32.mrf.mxu0
        %v1243 = vadd.f32 %v1010, %v1242
        %1244 = vmatmul.bf16.gmra.mxu0 %v1132
        %v1245 = vpop.f32.mrf.mxu0
        %v1246 = vadd.f32 %v1013, %v1245
        %v1247 = vpop.f32.mrf.mxu0
        %v1248 = vadd.f32 %v1015, %v1247
        %1249 = vmatmul.bf16.gmra.mxu0 %v1133
        %v1250 = vpop.f32.mrf.mxu0
        %v1251 = vadd.f32 %v1018, %v1250
        %v1252 = vpop.f32.mrf.mxu0
        %v1253 = vadd.f32 %v1020, %v1252
        %1254 = vmatmul.bf16.gmra.mxu0 %v1134
        %v1255 = vpop.f32.mrf.mxu0
        %v1256 = vadd.f32 %v1023, %v1255
        %v1257 = vpop.f32.mrf.mxu0
        %v1258 = vadd.f32 %v1025, %v1257
        %1259 = vmatmul.bf16.gmra.mxu0 %v1135
        %v1260 = vpop.f32.mrf.mxu0
        %v1261 = vadd.f32 %v1028, %v1260
        %v1262 = vpop.f32.mrf.mxu0
        %v1263 = vadd.f32 %v1030, %v1262
        %1264 = vmatmul.bf16.gmra.mxu0 %v1136
        %v1265 = vpop.f32.mrf.mxu0
        %v1266 = vadd.f32 %v1033, %v1265
        %v1267 = vpop.f32.mrf.mxu0
        %v1268 = vadd.f32 %v1035, %v1267
        %1269 = vmatmul.bf16.gmra.mxu0 %v1137
        %v1270 = vpop.f32.mrf.mxu0
        %v1271 = vadd.f32 %v1038, %v1270
        %v1272 = vpop.f32.mrf.mxu0
        %v1273 = vadd.f32 %v1040, %v1272
        %1274 = vmatmul.bf16.gmra.mxu0 %v1138
        %v1275 = vpop.f32.mrf.mxu0
        %v1276 = vadd.f32 %v1043, %v1275
        %v1277 = vpop.f32.mrf.mxu0
        %v1278 = vadd.f32 %v1045, %v1277
        %1279 = vmatmul.bf16.gmra.mxu0 %v1139
        %v1280 = vpop.f32.mrf.mxu0
        %v1281 = vadd.f32 %v1048, %v1280
        %v1282 = vpop.f32.mrf.mxu0
        %v1283 = vadd.f32 %v1050, %v1282
        %1284 = vmatmul.bf16.gmra.mxu0 %v1140
        %v1285 = vpop.f32.mrf.mxu0
        %v1286 = vadd.f32 %v1053, %v1285
        %v1287 = vpop.f32.mrf.mxu0
        %v1288 = vadd.f32 %v1055, %v1287
        %1289 = vmatmul.bf16.gmra.mxu0 %v1141
        %v1290 = vpop.f32.mrf.mxu0
        %v1291 = vadd.f32 %v1058, %v1290
        %v1292 = vpop.f32.mrf.mxu0
        %v1293 = vadd.f32 %v1060, %v1292
        %1294 = vdwg.mxu0
        %v1295 = vld [vmem:[#allocation2 + $0x2] sm:$0xff]
        %v1296 = vld [vmem:[#allocation2 + $0xa] sm:$0xff]
        %v1297 = vld [vmem:[#allocation2 + $0x1a] sm:$0xff]
        %v1298 = vld [vmem:[#allocation2 + $0x22] sm:$0xff]
        %v1299 = vld [vmem:[#allocation2 + $0x32] sm:$0xff]
        %v1300 = vld [vmem:[#allocation2 + $0x3a] sm:$0xff]
        %v1301 = vld [vmem:[#allocation2 + $0x4a] sm:$0xff]
        %v1302 = vld [vmem:[#allocation2 + $0x52] sm:$0xff]
        %v1303 = vld [vmem:[#allocation2 + $0x62] sm:$0xff]
        %v1304 = vld [vmem:[#allocation2 + $0x6a] sm:$0xff]
        %v1305 = vld [vmem:[#allocation2 + $0x7a] sm:$0xff]
        %v1306 = vld [vmem:[#allocation2 + $0x82] sm:$0xff]
        %v1307 = vld [vmem:[#allocation2 + $0x92] sm:$0xff]
        %v1308 = vld [vmem:[#allocation2 + $0x9a] sm:$0xff]
        %v1309 = vld [vmem:[#allocation2 + $0xaa] sm:$0xff]
        %v1310 = vld [vmem:[#allocation2 + $0xb2] sm:$0xff]
        %v1311 = vld [vmem:[#allocation2 + $0xc2] sm:$0xff]
        %v1312 = vld [vmem:[#allocation2 + $0xca] sm:$0xff]
        %v1313 = vld [vmem:[#allocation2 + $0xda] sm:$0xff]
        %v1314 = vld [vmem:[#allocation2 + $0xe2] sm:$0xff]
        %v1315 = vld [vmem:[#allocation2 + $0xf2] sm:$0xff]
        %v1316 = vld [vmem:[#allocation2 + $0xfa] sm:$0xff]
        %v1317 = vld [vmem:[#allocation2 + $0x10a] sm:$0xff]
        %v1318 = vld [vmem:[#allocation2 + $0x112] sm:$0xff]
        %v1319 = vld [vmem:[#allocation2 + $0x122] sm:$0xff]
        %v1320 = vld [vmem:[#allocation2 + $0x12a] sm:$0xff]
        %v1321 = vld [vmem:[#allocation2 + $0x13a] sm:$0xff]
        %v1322 = vld [vmem:[#allocation2 + $0x142] sm:$0xff]
        %v1323 = vld [vmem:[#allocation2 + $0x152] sm:$0xff]
        %v1324 = vld [vmem:[#allocation2 + $0x15a] sm:$0xff]
        %v1325 = vld [vmem:[#allocation2 + $0x16a] sm:$0xff]
        %v1326 = vld [vmem:[#allocation2 + $0x172] sm:$0xff]
        %v1327 = vpack.c.bf16 %v1295, %v1295
        %v1328 = vpack.c.bf16 %v1296, %v1296
        %v1329 = vpack.c.bf16 %v1297, %v1297
        %v1330 = vpack.c.bf16 %v1298, %v1298
        %v1331 = vpack.c.bf16 %v1299, %v1299
        %v1332 = vpack.c.bf16 %v1300, %v1300
        %v1333 = vpack.c.bf16 %v1301, %v1301
        %v1334 = vpack.c.bf16 %v1302, %v1302
        %v1335 = vpack.c.bf16 %v1303, %v1303
        %v1336 = vpack.c.bf16 %v1304, %v1304
        %v1337 = vpack.c.bf16 %v1305, %v1305
        %v1338 = vpack.c.bf16 %v1306, %v1306
        %v1339 = vpack.c.bf16 %v1307, %v1307
        %v1340 = vpack.c.bf16 %v1308, %v1308
        %v1341 = vpack.c.bf16 %v1309, %v1309
        %v1342 = vpack.c.bf16 %v1310, %v1310
        %v1343 = vpack.c.bf16 %v1311, %v1311
        %v1344 = vpack.c.bf16 %v1312, %v1312
        %v1345 = vpack.c.bf16 %v1313, %v1313
        %v1346 = vpack.c.bf16 %v1314, %v1314
        %v1347 = vpack.c.bf16 %v1315, %v1315
        %v1348 = vpack.c.bf16 %v1316, %v1316
        %v1349 = vpack.c.bf16 %v1317, %v1317
        %v1350 = vpack.c.bf16 %v1318, %v1318
        %v1351 = vpack.c.bf16 %v1319, %v1319
        %v1352 = vpack.c.bf16 %v1320, %v1320
        %v1353 = vpack.c.bf16 %v1321, %v1321
        %v1354 = vpack.c.bf16 %v1322, %v1322
        %v1355 = vpack.c.bf16 %v1323, %v1323
        %v1356 = vpack.c.bf16 %v1324, %v1324
        %v1357 = vpack.c.bf16 %v1325, %v1325
        %v1358 = vpack.c.bf16 %v1326, %v1326
        %v1359 = vld [vmem:[#allocation6 + $0x80] sm:$0xf]
        %v1360 = vld [vmem:[#allocation6 + $0x84] sm:$0xf]
        %v1361 = vld [vmem:[#allocation6 + $0x88] sm:$0xf]
        %v1362 = vld [vmem:[#allocation6 + $0x8c] sm:$0xf]
        %v1363 = vld [vmem:[#allocation6 + $0x90] sm:$0xf]
        %v1364 = vld [vmem:[#allocation6 + $0x94] sm:$0xf]
        %v1365 = vld [vmem:[#allocation6 + $0x98] sm:$0xf]
        %v1366 = vld [vmem:[#allocation6 + $0x9c] sm:$0xf]
        %v1367 = vld [vmem:[#allocation6 + $0xa0] sm:$0xf]
        %v1368 = vld [vmem:[#allocation6 + $0xa4] sm:$0xf]
        %v1369 = vld [vmem:[#allocation6 + $0xa8] sm:$0xf]
        %v1370 = vld [vmem:[#allocation6 + $0xac] sm:$0xf]
        %v1371 = vld [vmem:[#allocation6 + $0xb0] sm:$0xf]
        %v1372 = vld [vmem:[#allocation6 + $0xb4] sm:$0xf]
        %v1373 = vld [vmem:[#allocation6 + $0xb8] sm:$0xf]
        %v1374 = vld [vmem:[#allocation6 + $0xbc] sm:$0xf]
        %v1407 = vunpack.c.l.b16 %v1327
        %v1408 = vunpack.c.l.b16 %v1328
        %v1409 = vunpack.c.l.b16 %v1329
        %v1410 = vunpack.c.l.b16 %v1330
        %v1411 = vunpack.c.l.b16 %v1331
        %v1412 = vunpack.c.l.b16 %v1332
        %v1413 = vunpack.c.l.b16 %v1333
        %v1414 = vunpack.c.l.b16 %v1334
        %v1415 = vunpack.c.l.b16 %v1335
        %v1416 = vunpack.c.l.b16 %v1336
        %v1417 = vunpack.c.l.b16 %v1337
        %v1418 = vunpack.c.l.b16 %v1338
        %v1419 = vunpack.c.l.b16 %v1339
        %v1420 = vunpack.c.l.b16 %v1340
        %v1421 = vunpack.c.l.b16 %v1341
        %v1422 = vunpack.c.l.b16 %v1342
        %v1423 = vunpack.c.l.b16 %v1343
        %v1424 = vunpack.c.l.b16 %v1344
        %v1425 = vunpack.c.l.b16 %v1345
        %v1426 = vunpack.c.l.b16 %v1346
        %v1427 = vunpack.c.l.b16 %v1347
        %v1428 = vunpack.c.l.b16 %v1348
        %v1429 = vunpack.c.l.b16 %v1349
        %v1430 = vunpack.c.l.b16 %v1350
        %v1431 = vunpack.c.l.b16 %v1351
        %v1432 = vunpack.c.l.b16 %v1352
        %v1433 = vunpack.c.l.b16 %v1353
        %v1434 = vunpack.c.l.b16 %v1354
        %v1435 = vunpack.c.l.b16 %v1355
        %v1436 = vunpack.c.l.b16 %v1356
        %v1437 = vunpack.c.l.b16 %v1357
        %v1438 = vunpack.c.l.b16 %v1358
        %v1439 = vpack.c.b16 %v1408, %v1407
        %v1440 = vpack.c.b16 %v1410, %v1409
        %v1441 = vpack.c.b16 %v1412, %v1411
        %v1442 = vpack.c.b16 %v1414, %v1413
        %v1443 = vpack.c.b16 %v1416, %v1415
        %v1444 = vpack.c.b16 %v1418, %v1417
        %v1445 = vpack.c.b16 %v1420, %v1419
        %v1446 = vpack.c.b16 %v1422, %v1421
        %v1447 = vpack.c.b16 %v1424, %v1423
        %v1448 = vpack.c.b16 %v1426, %v1425
        %v1449 = vpack.c.b16 %v1428, %v1427
        %v1450 = vpack.c.b16 %v1430, %v1429
        %v1451 = vpack.c.b16 %v1432, %v1431
        %v1452 = vpack.c.b16 %v1434, %v1433
        %v1453 = vpack.c.b16 %v1436, %v1435
        %v1454 = vpack.c.b16 %v1438, %v1437
        %v1487 = vunpack.c.l.b16 %v1359
        %v1488 = vunpack.c.l.b16 %v1360
        %v1489 = vunpack.c.l.b16 %v1361
        %v1490 = vunpack.c.l.b16 %v1362
        %v1491 = vunpack.c.l.b16 %v1363
        %v1492 = vunpack.c.l.b16 %v1364
        %v1493 = vunpack.c.l.b16 %v1365
        %v1494 = vunpack.c.l.b16 %v1366
        %v1495 = vunpack.c.l.b16 %v1367
        %v1496 = vunpack.c.l.b16 %v1368
        %v1497 = vunpack.c.l.b16 %v1369
        %v1498 = vunpack.c.l.b16 %v1370
        %v1499 = vunpack.c.l.b16 %v1371
        %v1500 = vunpack.c.l.b16 %v1372
        %v1501 = vunpack.c.l.b16 %v1373
        %v1502 = vunpack.c.l.b16 %v1374
        %v1503 = vpack.c.b16 %v1488, %v1487
        %v1504 = vpack.c.b16 %v1490, %v1489
        %v1505 = vpack.c.b16 %v1492, %v1491
        %v1506 = vpack.c.b16 %v1494, %v1493
        %v1507 = vpack.c.b16 %v1496, %v1495
        %v1508 = vpack.c.b16 %v1498, %v1497
        %v1509 = vpack.c.b16 %v1500, %v1499
        %v1510 = vpack.c.b16 %v1502, %v1501
        %1519 = vmatpush.bf16.msra.mxu0 %v1510
        %1520 = vmatpush.bf16.msra.mxu0 %v1509
        %1521 = vmatpush.bf16.msra.mxu0 %v1508
        %1522 = vmatpush.bf16.msra.mxu0 %v1507
        %1523 = vmatpush.bf16.msra.mxu0 %v1506
        %1524 = vmatpush.bf16.msra.mxu0 %v1505
        %1525 = vmatpush.bf16.msra.mxu0 %v1504
        %1526 = vmatpush.bf16.msra.mxu0 %v1503
        %1527 = vmatmul.bf16.gmra.mxu0 %v1439
        %v1528 = vpop.f32.mrf.mxu0
        %v1529 = vadd.f32 0.0, %v1528
        %v1530 = vpop.f32.mrf.mxu0
        %v1531 = vadd.f32 0.0, %v1530
        %1532 = vmatmul.bf16.gmra.mxu0 %v1440
        %v1533 = vpop.f32.mrf.mxu0
        %v1534 = vadd.f32 0.0, %v1533
        %v1535 = vpop.f32.mrf.mxu0
        %v1536 = vadd.f32 0.0, %v1535
        %1537 = vmatmul.bf16.gmra.mxu0 %v1441
        %v1538 = vpop.f32.mrf.mxu0
        %v1539 = vadd.f32 0.0, %v1538
        %v1540 = vpop.f32.mrf.mxu0
        %v1541 = vadd.f32 0.0, %v1540
        %1542 = vmatmul.bf16.gmra.mxu0 %v1442
        %v1543 = vpop.f32.mrf.mxu0
        %v1544 = vadd.f32 0.0, %v1543
        %v1545 = vpop.f32.mrf.mxu0
        %v1546 = vadd.f32 0.0, %v1545
        %1547 = vmatmul.bf16.gmra.mxu0 %v1443
        %v1548 = vpop.f32.mrf.mxu0
        %v1549 = vadd.f32 0.0, %v1548
        %v1550 = vpop.f32.mrf.mxu0
        %v1551 = vadd.f32 0.0, %v1550
        %1552 = vmatmul.bf16.gmra.mxu0 %v1444
        %v1553 = vpop.f32.mrf.mxu0
        %v1554 = vadd.f32 0.0, %v1553
        %v1555 = vpop.f32.mrf.mxu0
        %v1556 = vadd.f32 0.0, %v1555
        %1557 = vmatmul.bf16.gmra.mxu0 %v1445
        %v1558 = vpop.f32.mrf.mxu0
        %v1559 = vadd.f32 0.0, %v1558
        %v1560 = vpop.f32.mrf.mxu0
        %v1561 = vadd.f32 0.0, %v1560
        %1562 = vmatmul.bf16.gmra.mxu0 %v1446
        %v1563 = vpop.f32.mrf.mxu0
        %v1564 = vadd.f32 0.0, %v1563
        %v1565 = vpop.f32.mrf.mxu0
        %v1566 = vadd.f32 0.0, %v1565
        %1567 = vmatmul.bf16.gmra.mxu0 %v1447
        %v1568 = vpop.f32.mrf.mxu0
        %v1569 = vadd.f32 0.0, %v1568
        %v1570 = vpop.f32.mrf.mxu0
        %v1571 = vadd.f32 0.0, %v1570
        %1572 = vmatmul.bf16.gmra.mxu0 %v1448
        %v1573 = vpop.f32.mrf.mxu0
        %v1574 = vadd.f32 0.0, %v1573
        %v1575 = vpop.f32.mrf.mxu0
        %v1576 = vadd.f32 0.0, %v1575
        %1577 = vmatmul.bf16.gmra.mxu0 %v1449
        %v1578 = vpop.f32.mrf.mxu0
        %v1579 = vadd.f32 0.0, %v1578
        %v1580 = vpop.f32.mrf.mxu0
        %v1581 = vadd.f32 0.0, %v1580
        %1582 = vmatmul.bf16.gmra.mxu0 %v1450
        %v1583 = vpop.f32.mrf.mxu0
        %v1584 = vadd.f32 0.0, %v1583
        %v1585 = vpop.f32.mrf.mxu0
        %v1586 = vadd.f32 0.0, %v1585
        %1587 = vmatmul.bf16.gmra.mxu0 %v1451
        %v1588 = vpop.f32.mrf.mxu0
        %v1589 = vadd.f32 0.0, %v1588
        %v1590 = vpop.f32.mrf.mxu0
        %v1591 = vadd.f32 0.0, %v1590
        %1592 = vmatmul.bf16.gmra.mxu0 %v1452
        %v1593 = vpop.f32.mrf.mxu0
        %v1594 = vadd.f32 0.0, %v1593
        %v1595 = vpop.f32.mrf.mxu0
        %v1596 = vadd.f32 0.0, %v1595
        %1597 = vmatmul.bf16.gmra.mxu0 %v1453
        %v1598 = vpop.f32.mrf.mxu0
        %v1599 = vadd.f32 0.0, %v1598
        %v1600 = vpop.f32.mrf.mxu0
        %v1601 = vadd.f32 0.0, %v1600
        %1602 = vmatmul.bf16.gmra.mxu0 %v1454
        %v1603 = vpop.f32.mrf.mxu0
        %v1604 = vadd.f32 0.0, %v1603
        %v1605 = vpop.f32.mrf.mxu0
        %v1606 = vadd.f32 0.0, %v1605
        %1607 = vdwg.mxu0
        %v1608 = vadd.f32 %v1216, %v1529
        %v1609 = vadd.f32 %v1218, %v1531
        %v1610 = vadd.f32 %v1221, %v1534
        %v1611 = vadd.f32 %v1223, %v1536
        %v1612 = vadd.f32 %v1226, %v1539
        %v1613 = vadd.f32 %v1228, %v1541
        %v1614 = vadd.f32 %v1231, %v1544
        %v1615 = vadd.f32 %v1233, %v1546
        %v1616 = vadd.f32 %v1236, %v1549
        %v1617 = vadd.f32 %v1238, %v1551
        %v1618 = vadd.f32 %v1241, %v1554
        %v1619 = vadd.f32 %v1243, %v1556
        %v1620 = vadd.f32 %v1246, %v1559
        %v1621 = vadd.f32 %v1248, %v1561
        %v1622 = vadd.f32 %v1251, %v1564
        %v1623 = vadd.f32 %v1253, %v1566
        %v1624 = vadd.f32 %v1256, %v1569
        %v1625 = vadd.f32 %v1258, %v1571
        %v1626 = vadd.f32 %v1261, %v1574
        %v1627 = vadd.f32 %v1263, %v1576
        %v1628 = vadd.f32 %v1266, %v1579
        %v1629 = vadd.f32 %v1268, %v1581
        %v1630 = vadd.f32 %v1271, %v1584
        %v1631 = vadd.f32 %v1273, %v1586
        %v1632 = vadd.f32 %v1276, %v1589
        %v1633 = vadd.f32 %v1278, %v1591
        %v1634 = vadd.f32 %v1281, %v1594
        %v1635 = vadd.f32 %v1283, %v1596
        %v1636 = vadd.f32 %v1286, %v1599
        %v1637 = vadd.f32 %v1288, %v1601
        %v1638 = vadd.f32 %v1291, %v1604
        %v1639 = vadd.f32 %v1293, %v1606
        %v1640 = vld [vmem:[%s636] sm:$0xff]
        %v1641 = vld [vmem:[%s636 + $0x8] sm:$0xff]
        %v1642 = vld [vmem:[%s636 + $0x18] sm:$0xff]
        %v1643 = vld [vmem:[%s636 + $0x20] sm:$0xff]
        %v1644 = vld [vmem:[%s636 + $0x30] sm:$0xff]
        %v1645 = vld [vmem:[%s636 + $0x38] sm:$0xff]
        %v1646 = vld [vmem:[%s636 + $0x48] sm:$0xff]
        %v1647 = vld [vmem:[%s636 + $0x50] sm:$0xff]
        %v1648 = vld [vmem:[%s636 + $0x60] sm:$0xff]
        %v1649 = vld [vmem:[%s636 + $0x68] sm:$0xff]
        %v1650 = vld [vmem:[%s636 + $0x78] sm:$0xff]
        %v1651 = vld [vmem:[%s636 + $0x80] sm:$0xff]
        %v1652 = vld [vmem:[%s636 + $0x90] sm:$0xff]
        %v1653 = vld [vmem:[%s636 + $0x98] sm:$0xff]
        %v1654 = vld [vmem:[%s636 + $0xa8] sm:$0xff]
        %v1655 = vld [vmem:[%s636 + $0xb0] sm:$0xff]
        %v1656 = vld [vmem:[%s636 + $0xc0] sm:$0xff]
        %v1657 = vld [vmem:[%s636 + $0xc8] sm:$0xff]
        %v1658 = vld [vmem:[%s636 + $0xd8] sm:$0xff]
        %v1659 = vld [vmem:[%s636 + $0xe0] sm:$0xff]
        %v1660 = vld [vmem:[%s636 + $0xf0] sm:$0xff]
        %v1661 = vld [vmem:[%s636 + $0xf8] sm:$0xff]
        %v1662 = vld [vmem:[%s636 + $0x108] sm:$0xff]
        %v1663 = vld [vmem:[%s636 + $0x110] sm:$0xff]
        %v1664 = vld [vmem:[%s636 + $0x120] sm:$0xff]
        %v1665 = vld [vmem:[%s636 + $0x128] sm:$0xff]
        %v1666 = vld [vmem:[%s636 + $0x138] sm:$0xff]
        %v1667 = vld [vmem:[%s636 + $0x140] sm:$0xff]
        %v1668 = vld [vmem:[%s636 + $0x150] sm:$0xff]
        %v1669 = vld [vmem:[%s636 + $0x158] sm:$0xff]
        %v1670 = vld [vmem:[%s636 + $0x168] sm:$0xff]
        %v1671 = vld [vmem:[%s636 + $0x170] sm:$0xff]
        %v1672 = vpack.c.bf16 %v1640, %v1640
        %v1673 = vpack.c.bf16 %v1641, %v1641
        %v1674 = vpack.c.bf16 %v1642, %v1642
        %v1675 = vpack.c.bf16 %v1643, %v1643
        %v1676 = vpack.c.bf16 %v1644, %v1644
        %v1677 = vpack.c.bf16 %v1645, %v1645
        %v1678 = vpack.c.bf16 %v1646, %v1646
        %v1679 = vpack.c.bf16 %v1647, %v1647
        %v1680 = vpack.c.bf16 %v1648, %v1648
        %v1681 = vpack.c.bf16 %v1649, %v1649
        %v1682 = vpack.c.bf16 %v1650, %v1650
        %v1683 = vpack.c.bf16 %v1651, %v1651
        %v1684 = vpack.c.bf16 %v1652, %v1652
        %v1685 = vpack.c.bf16 %v1653, %v1653
        %v1686 = vpack.c.bf16 %v1654, %v1654
        %v1687 = vpack.c.bf16 %v1655, %v1655
        %v1688 = vpack.c.bf16 %v1656, %v1656
        %v1689 = vpack.c.bf16 %v1657, %v1657
        %v1690 = vpack.c.bf16 %v1658, %v1658
        %v1691 = vpack.c.bf16 %v1659, %v1659
        %v1692 = vpack.c.bf16 %v1660, %v1660
        %v1693 = vpack.c.bf16 %v1661, %v1661
        %v1694 = vpack.c.bf16 %v1662, %v1662
        %v1695 = vpack.c.bf16 %v1663, %v1663
        %v1696 = vpack.c.bf16 %v1664, %v1664
        %v1697 = vpack.c.bf16 %v1665, %v1665
        %v1698 = vpack.c.bf16 %v1666, %v1666
        %v1699 = vpack.c.bf16 %v1667, %v1667
        %v1700 = vpack.c.bf16 %v1668, %v1668
        %v1701 = vpack.c.bf16 %v1669, %v1669
        %v1702 = vpack.c.bf16 %v1670, %v1670
        %v1703 = vpack.c.bf16 %v1671, %v1671
        %v1704 = vld [vmem:[#allocation6 + $0xc0] sm:$0xf]
        %v1705 = vld [vmem:[#allocation6 + $0xc4] sm:$0xf]
        %v1706 = vld [vmem:[#allocation6 + $0xc8] sm:$0xf]
        %v1707 = vld [vmem:[#allocation6 + $0xcc] sm:$0xf]
        %v1708 = vld [vmem:[#allocation6 + $0xd0] sm:$0xf]
        %v1709 = vld [vmem:[#allocation6 + $0xd4] sm:$0xf]
        %v1710 = vld [vmem:[#allocation6 + $0xd8] sm:$0xf]
        %v1711 = vld [vmem:[#allocation6 + $0xdc] sm:$0xf]
        %v1712 = vld [vmem:[#allocation6 + $0xe0] sm:$0xf]
        %v1713 = vld [vmem:[#allocation6 + $0xe4] sm:$0xf]
        %v1714 = vld [vmem:[#allocation6 + $0xe8] sm:$0xf]
        %v1715 = vld [vmem:[#allocation6 + $0xec] sm:$0xf]
        %v1716 = vld [vmem:[#allocation6 + $0xf0] sm:$0xf]
        %v1717 = vld [vmem:[#allocation6 + $0xf4] sm:$0xf]
        %v1718 = vld [vmem:[#allocation6 + $0xf8] sm:$0xf]
        %v1719 = vld [vmem:[#allocation6 + $0xfc] sm:$0xf]
        %v1752 = vunpack.c.l.b16 %v1672
        %v1753 = vunpack.c.l.b16 %v1673
        %v1754 = vunpack.c.l.b16 %v1674
        %v1755 = vunpack.c.l.b16 %v1675
        %v1756 = vunpack.c.l.b16 %v1676
        %v1757 = vunpack.c.l.b16 %v1677
        %v1758 = vunpack.c.l.b16 %v1678
        %v1759 = vunpack.c.l.b16 %v1679
        %v1760 = vunpack.c.l.b16 %v1680
        %v1761 = vunpack.c.l.b16 %v1681
        %v1762 = vunpack.c.l.b16 %v1682
        %v1763 = vunpack.c.l.b16 %v1683
        %v1764 = vunpack.c.l.b16 %v1684
        %v1765 = vunpack.c.l.b16 %v1685
        %v1766 = vunpack.c.l.b16 %v1686
        %v1767 = vunpack.c.l.b16 %v1687
        %v1768 = vunpack.c.l.b16 %v1688
        %v1769 = vunpack.c.l.b16 %v1689
        %v1770 = vunpack.c.l.b16 %v1690
        %v1771 = vunpack.c.l.b16 %v1691
        %v1772 = vunpack.c.l.b16 %v1692
        %v1773 = vunpack.c.l.b16 %v1693
        %v1774 = vunpack.c.l.b16 %v1694
        %v1775 = vunpack.c.l.b16 %v1695
        %v1776 = vunpack.c.l.b16 %v1696
        %v1777 = vunpack.c.l.b16 %v1697
        %v1778 = vunpack.c.l.b16 %v1698
        %v1779 = vunpack.c.l.b16 %v1699
        %v1780 = vunpack.c.l.b16 %v1700
        %v1781 = vunpack.c.l.b16 %v1701
        %v1782 = vunpack.c.l.b16 %v1702
        %v1783 = vunpack.c.l.b16 %v1703
        %v1784 = vpack.c.b16 %v1753, %v1752
        %v1785 = vpack.c.b16 %v1755, %v1754
        %v1786 = vpack.c.b16 %v1757, %v1756
        %v1787 = vpack.c.b16 %v1759, %v1758
        %v1788 = vpack.c.b16 %v1761, %v1760
        %v1789 = vpack.c.b16 %v1763, %v1762
        %v1790 = vpack.c.b16 %v1765, %v1764
        %v1791 = vpack.c.b16 %v1767, %v1766
        %v1792 = vpack.c.b16 %v1769, %v1768
        %v1793 = vpack.c.b16 %v1771, %v1770
        %v1794 = vpack.c.b16 %v1773, %v1772
        %v1795 = vpack.c.b16 %v1775, %v1774
        %v1796 = vpack.c.b16 %v1777, %v1776
        %v1797 = vpack.c.b16 %v1779, %v1778
        %v1798 = vpack.c.b16 %v1781, %v1780
        %v1799 = vpack.c.b16 %v1783, %v1782
        %v1832 = vunpack.c.l.b16 %v1704
        %v1833 = vunpack.c.l.b16 %v1705
        %v1834 = vunpack.c.l.b16 %v1706
        %v1835 = vunpack.c.l.b16 %v1707
        %v1836 = vunpack.c.l.b16 %v1708
        %v1837 = vunpack.c.l.b16 %v1709
        %v1838 = vunpack.c.l.b16 %v1710
        %v1839 = vunpack.c.l.b16 %v1711
        %v1840 = vunpack.c.l.b16 %v1712
        %v1841 = vunpack.c.l.b16 %v1713
        %v1842 = vunpack.c.l.b16 %v1714
        %v1843 = vunpack.c.l.b16 %v1715
        %v1844 = vunpack.c.l.b16 %v1716
        %v1845 = vunpack.c.l.b16 %v1717
        %v1846 = vunpack.c.l.b16 %v1718
        %v1847 = vunpack.c.l.b16 %v1719
        %v1848 = vpack.c.b16 %v1833, %v1832
        %v1849 = vpack.c.b16 %v1835, %v1834
        %v1850 = vpack.c.b16 %v1837, %v1836
        %v1851 = vpack.c.b16 %v1839, %v1838
        %v1852 = vpack.c.b16 %v1841, %v1840
        %v1853 = vpack.c.b16 %v1843, %v1842
        %v1854 = vpack.c.b16 %v1845, %v1844
        %v1855 = vpack.c.b16 %v1847, %v1846
        %1864 = vmatpush.bf16.msra.mxu0 %v1855
        %1865 = vmatpush.bf16.msra.mxu0 %v1854
        %1866 = vmatpush.bf16.msra.mxu0 %v1853
        %1867 = vmatpush.bf16.msra.mxu0 %v1852
        %1868 = vmatpush.bf16.msra.mxu0 %v1851
        %1869 = vmatpush.bf16.msra.mxu0 %v1850
        %1870 = vmatpush.bf16.msra.mxu0 %v1849
        %1871 = vmatpush.bf16.msra.mxu0 %v1848
        %1872 = vmatmul.bf16.gmra.mxu0 %v1784
        %v1873 = vpop.f32.mrf.mxu0
        %v1874 = vadd.f32 0.0, %v1873
        %v1875 = vpop.f32.mrf.mxu0
        %v1876 = vadd.f32 0.0, %v1875
        %1877 = vmatmul.bf16.gmra.mxu0 %v1785
        %v1878 = vpop.f32.mrf.mxu0
        %v1879 = vadd.f32 0.0, %v1878
        %v1880 = vpop.f32.mrf.mxu0
        %v1881 = vadd.f32 0.0, %v1880
        %1882 = vmatmul.bf16.gmra.mxu0 %v1786
        %v1883 = vpop.f32.mrf.mxu0
        %v1884 = vadd.f32 0.0, %v1883
        %v1885 = vpop.f32.mrf.mxu0
        %v1886 = vadd.f32 0.0, %v1885
        %1887 = vmatmul.bf16.gmra.mxu0 %v1787
        %v1888 = vpop.f32.mrf.mxu0
        %v1889 = vadd.f32 0.0, %v1888
        %v1890 = vpop.f32.mrf.mxu0
        %v1891 = vadd.f32 0.0, %v1890
        %1892 = vmatmul.bf16.gmra.mxu0 %v1788
        %v1893 = vpop.f32.mrf.mxu0
        %v1894 = vadd.f32 0.0, %v1893
        %v1895 = vpop.f32.mrf.mxu0
        %v1896 = vadd.f32 0.0, %v1895
        %1897 = vmatmul.bf16.gmra.mxu0 %v1789
        %v1898 = vpop.f32.mrf.mxu0
        %v1899 = vadd.f32 0.0, %v1898
        %v1900 = vpop.f32.mrf.mxu0
        %v1901 = vadd.f32 0.0, %v1900
        %1902 = vmatmul.bf16.gmra.mxu0 %v1790
        %v1903 = vpop.f32.mrf.mxu0
        %v1904 = vadd.f32 0.0, %v1903
        %v1905 = vpop.f32.mrf.mxu0
        %v1906 = vadd.f32 0.0, %v1905
        %1907 = vmatmul.bf16.gmra.mxu0 %v1791
        %v1908 = vpop.f32.mrf.mxu0
        %v1909 = vadd.f32 0.0, %v1908
        %v1910 = vpop.f32.mrf.mxu0
        %v1911 = vadd.f32 0.0, %v1910
        %1912 = vmatmul.bf16.gmra.mxu0 %v1792
        %v1913 = vpop.f32.mrf.mxu0
        %v1914 = vadd.f32 0.0, %v1913
        %v1915 = vpop.f32.mrf.mxu0
        %v1916 = vadd.f32 0.0, %v1915
        %1917 = vmatmul.bf16.gmra.mxu0 %v1793
        %v1918 = vpop.f32.mrf.mxu0
        %v1919 = vadd.f32 0.0, %v1918
        %v1920 = vpop.f32.mrf.mxu0
        %v1921 = vadd.f32 0.0, %v1920
        %1922 = vmatmul.bf16.gmra.mxu0 %v1794
        %v1923 = vpop.f32.mrf.mxu0
        %v1924 = vadd.f32 0.0, %v1923
        %v1925 = vpop.f32.mrf.mxu0
        %v1926 = vadd.f32 0.0, %v1925
        %1927 = vmatmul.bf16.gmra.mxu0 %v1795
        %v1928 = vpop.f32.mrf.mxu0
        %v1929 = vadd.f32 0.0, %v1928
        %v1930 = vpop.f32.mrf.mxu0
        %v1931 = vadd.f32 0.0, %v1930
        %1932 = vmatmul.bf16.gmra.mxu0 %v1796
        %v1933 = vpop.f32.mrf.mxu0
        %v1934 = vadd.f32 0.0, %v1933
        %v1935 = vpop.f32.mrf.mxu0
        %v1936 = vadd.f32 0.0, %v1935
        %1937 = vmatmul.bf16.gmra.mxu0 %v1797
        %v1938 = vpop.f32.mrf.mxu0
        %v1939 = vadd.f32 0.0, %v1938
        %v1940 = vpop.f32.mrf.mxu0
        %v1941 = vadd.f32 0.0, %v1940
        %1942 = vmatmul.bf16.gmra.mxu0 %v1798
        %v1943 = vpop.f32.mrf.mxu0
        %v1944 = vadd.f32 0.0, %v1943
        %v1945 = vpop.f32.mrf.mxu0
        %v1946 = vadd.f32 0.0, %v1945
        %1947 = vmatmul.bf16.gmra.mxu0 %v1799
        %v1948 = vpop.f32.mrf.mxu0
        %v1949 = vadd.f32 0.0, %v1948
        %v1950 = vpop.f32.mrf.mxu0
        %v1951 = vadd.f32 0.0, %v1950
        %1952 = vdwg.mxu0
        %v1953 = vadd.f32 %v1608, %v1874
        %v1954 = vadd.f32 %v1609, %v1876
        %v1955 = vadd.f32 %v1610, %v1879
        %v1956 = vadd.f32 %v1611, %v1881
        %v1957 = vadd.f32 %v1612, %v1884
        %v1958 = vadd.f32 %v1613, %v1886
        %v1959 = vadd.f32 %v1614, %v1889
        %v1960 = vadd.f32 %v1615, %v1891
        %v1961 = vadd.f32 %v1616, %v1894
        %v1962 = vadd.f32 %v1617, %v1896
        %v1963 = vadd.f32 %v1618, %v1899
        %v1964 = vadd.f32 %v1619, %v1901
        %v1965 = vadd.f32 %v1620, %v1904
        %v1966 = vadd.f32 %v1621, %v1906
        %v1967 = vadd.f32 %v1622, %v1909
        %v1968 = vadd.f32 %v1623, %v1911
        %v1969 = vadd.f32 %v1624, %v1914
        %v1970 = vadd.f32 %v1625, %v1916
        %v1971 = vadd.f32 %v1626, %v1919
        %v1972 = vadd.f32 %v1627, %v1921
        %v1973 = vadd.f32 %v1628, %v1924
        %v1974 = vadd.f32 %v1629, %v1926
        %v1975 = vadd.f32 %v1630, %v1929
        %v1976 = vadd.f32 %v1631, %v1931
        %v1977 = vadd.f32 %v1632, %v1934
        %v1978 = vadd.f32 %v1633, %v1936
        %v1979 = vadd.f32 %v1634, %v1939
        %v1980 = vadd.f32 %v1635, %v1941
        %v1981 = vadd.f32 %v1636, %v1944
        %v1982 = vadd.f32 %v1637, %v1946
        %v1983 = vadd.f32 %v1638, %v1949
        %v1984 = vadd.f32 %v1639, %v1951
        %v1985 = vld [vmem:[%s636 + $0x1] sm:$0xff]
        %v1986 = vld [vmem:[%s636 + $0x9] sm:$0xff]
        %v1987 = vld [vmem:[%s636 + $0x19] sm:$0xff]
        %v1988 = vld [vmem:[%s636 + $0x21] sm:$0xff]
        %v1989 = vld [vmem:[%s636 + $0x31] sm:$0xff]
        %v1990 = vld [vmem:[%s636 + $0x39] sm:$0xff]
        %v1991 = vld [vmem:[%s636 + $0x49] sm:$0xff]
        %v1992 = vld [vmem:[%s636 + $0x51] sm:$0xff]
        %v1993 = vld [vmem:[%s636 + $0x61] sm:$0xff]
        %v1994 = vld [vmem:[%s636 + $0x69] sm:$0xff]
        %v1995 = vld [vmem:[%s636 + $0x79] sm:$0xff]
        %v1996 = vld [vmem:[%s636 + $0x81] sm:$0xff]
        %v1997 = vld [vmem:[%s636 + $0x91] sm:$0xff]
        %v1998 = vld [vmem:[%s636 + $0x99] sm:$0xff]
        %v1999 = vld [vmem:[%s636 + $0xa9] sm:$0xff]
        %v2000 = vld [vmem:[%s636 + $0xb1] sm:$0xff]
        %v2001 = vld [vmem:[%s636 + $0xc1] sm:$0xff]
        %v2002 = vld [vmem:[%s636 + $0xc9] sm:$0xff]
        %v2003 = vld [vmem:[%s636 + $0xd9] sm:$0xff]
        %v2004 = vld [vmem:[%s636 + $0xe1] sm:$0xff]
        %v2005 = vld [vmem:[%s636 + $0xf1] sm:$0xff]
        %v2006 = vld [vmem:[%s636 + $0xf9] sm:$0xff]
        %v2007 = vld [vmem:[%s636 + $0x109] sm:$0xff]
        %v2008 = vld [vmem:[%s636 + $0x111] sm:$0xff]
        %v2009 = vld [vmem:[%s636 + $0x121] sm:$0xff]
        %v2010 = vld [vmem:[%s636 + $0x129] sm:$0xff]
        %v2011 = vld [vmem:[%s636 + $0x139] sm:$0xff]
        %v2012 = vld [vmem:[%s636 + $0x141] sm:$0xff]
        %v2013 = vld [vmem:[%s636 + $0x151] sm:$0xff]
        %v2014 = vld [vmem:[%s636 + $0x159] sm:$0xff]
        %v2015 = vld [vmem:[%s636 + $0x169] sm:$0xff]
        %v2016 = vld [vmem:[%s636 + $0x171] sm:$0xff]
        %v2017 = vpack.c.bf16 %v1985, %v1985
        %v2018 = vpack.c.bf16 %v1986, %v1986
        %v2019 = vpack.c.bf16 %v1987, %v1987
        %v2020 = vpack.c.bf16 %v1988, %v1988
        %v2021 = vpack.c.bf16 %v1989, %v1989
        %v2022 = vpack.c.bf16 %v1990, %v1990
        %v2023 = vpack.c.bf16 %v1991, %v1991
        %v2024 = vpack.c.bf16 %v1992, %v1992
        %v2025 = vpack.c.bf16 %v1993, %v1993
        %v2026 = vpack.c.bf16 %v1994, %v1994
        %v2027 = vpack.c.bf16 %v1995, %v1995
        %v2028 = vpack.c.bf16 %v1996, %v1996
        %v2029 = vpack.c.bf16 %v1997, %v1997
        %v2030 = vpack.c.bf16 %v1998, %v1998
        %v2031 = vpack.c.bf16 %v1999, %v1999
        %v2032 = vpack.c.bf16 %v2000, %v2000
        %v2033 = vpack.c.bf16 %v2001, %v2001
        %v2034 = vpack.c.bf16 %v2002, %v2002
        %v2035 = vpack.c.bf16 %v2003, %v2003
        %v2036 = vpack.c.bf16 %v2004, %v2004
        %v2037 = vpack.c.bf16 %v2005, %v2005
        %v2038 = vpack.c.bf16 %v2006, %v2006
        %v2039 = vpack.c.bf16 %v2007, %v2007
        %v2040 = vpack.c.bf16 %v2008, %v2008
        %v2041 = vpack.c.bf16 %v2009, %v2009
        %v2042 = vpack.c.bf16 %v2010, %v2010
        %v2043 = vpack.c.bf16 %v2011, %v2011
        %v2044 = vpack.c.bf16 %v2012, %v2012
        %v2045 = vpack.c.bf16 %v2013, %v2013
        %v2046 = vpack.c.bf16 %v2014, %v2014
        %v2047 = vpack.c.bf16 %v2015, %v2015
        %v2048 = vpack.c.bf16 %v2016, %v2016
        %v2049 = vld [vmem:[#allocation6 + $0x100] sm:$0xf]
        %v2050 = vld [vmem:[#allocation6 + $0x104] sm:$0xf]
        %v2051 = vld [vmem:[#allocation6 + $0x108] sm:$0xf]
        %v2052 = vld [vmem:[#allocation6 + $0x10c] sm:$0xf]
        %v2053 = vld [vmem:[#allocation6 + $0x110] sm:$0xf]
        %v2054 = vld [vmem:[#allocation6 + $0x114] sm:$0xf]
        %v2055 = vld [vmem:[#allocation6 + $0x118] sm:$0xf]
        %v2056 = vld [vmem:[#allocation6 + $0x11c] sm:$0xf]
        %v2057 = vld [vmem:[#allocation6 + $0x120] sm:$0xf]
        %v2058 = vld [vmem:[#allocation6 + $0x124] sm:$0xf]
        %v2059 = vld [vmem:[#allocation6 + $0x128] sm:$0xf]
        %v2060 = vld [vmem:[#allocation6 + $0x12c] sm:$0xf]
        %v2061 = vld [vmem:[#allocation6 + $0x130] sm:$0xf]
        %v2062 = vld [vmem:[#allocation6 + $0x134] sm:$0xf]
        %v2063 = vld [vmem:[#allocation6 + $0x138] sm:$0xf]
        %v2064 = vld [vmem:[#allocation6 + $0x13c] sm:$0xf]
        %v2097 = vunpack.c.l.b16 %v2017
        %v2098 = vunpack.c.l.b16 %v2018
        %v2099 = vunpack.c.l.b16 %v2019
        %v2100 = vunpack.c.l.b16 %v2020
        %v2101 = vunpack.c.l.b16 %v2021
        %v2102 = vunpack.c.l.b16 %v2022
        %v2103 = vunpack.c.l.b16 %v2023
        %v2104 = vunpack.c.l.b16 %v2024
        %v2105 = vunpack.c.l.b16 %v2025
        %v2106 = vunpack.c.l.b16 %v2026
        %v2107 = vunpack.c.l.b16 %v2027
        %v2108 = vunpack.c.l.b16 %v2028
        %v2109 = vunpack.c.l.b16 %v2029
        %v2110 = vunpack.c.l.b16 %v2030
        %v2111 = vunpack.c.l.b16 %v2031
        %v2112 = vunpack.c.l.b16 %v2032
        %v2113 = vunpack.c.l.b16 %v2033
        %v2114 = vunpack.c.l.b16 %v2034
        %v2115 = vunpack.c.l.b16 %v2035
        %v2116 = vunpack.c.l.b16 %v2036
        %v2117 = vunpack.c.l.b16 %v2037
        %v2118 = vunpack.c.l.b16 %v2038
        %v2119 = vunpack.c.l.b16 %v2039
        %v2120 = vunpack.c.l.b16 %v2040
        %v2121 = vunpack.c.l.b16 %v2041
        %v2122 = vunpack.c.l.b16 %v2042
        %v2123 = vunpack.c.l.b16 %v2043
        %v2124 = vunpack.c.l.b16 %v2044
        %v2125 = vunpack.c.l.b16 %v2045
        %v2126 = vunpack.c.l.b16 %v2046
        %v2127 = vunpack.c.l.b16 %v2047
        %v2128 = vunpack.c.l.b16 %v2048
        %v2129 = vpack.c.b16 %v2098, %v2097
        %v2130 = vpack.c.b16 %v2100, %v2099
        %v2131 = vpack.c.b16 %v2102, %v2101
        %v2132 = vpack.c.b16 %v2104, %v2103
        %v2133 = vpack.c.b16 %v2106, %v2105
        %v2134 = vpack.c.b16 %v2108, %v2107
        %v2135 = vpack.c.b16 %v2110, %v2109
        %v2136 = vpack.c.b16 %v2112, %v2111
        %v2137 = vpack.c.b16 %v2114, %v2113
        %v2138 = vpack.c.b16 %v2116, %v2115
        %v2139 = vpack.c.b16 %v2118, %v2117
        %v2140 = vpack.c.b16 %v2120, %v2119
        %v2141 = vpack.c.b16 %v2122, %v2121
        %v2142 = vpack.c.b16 %v2124, %v2123
        %v2143 = vpack.c.b16 %v2126, %v2125
        %v2144 = vpack.c.b16 %v2128, %v2127
        %v2177 = vunpack.c.l.b16 %v2049
        %v2178 = vunpack.c.l.b16 %v2050
        %v2179 = vunpack.c.l.b16 %v2051
        %v2180 = vunpack.c.l.b16 %v2052
        %v2181 = vunpack.c.l.b16 %v2053
        %v2182 = vunpack.c.l.b16 %v2054
        %v2183 = vunpack.c.l.b16 %v2055
        %v2184 = vunpack.c.l.b16 %v2056
        %v2185 = vunpack.c.l.b16 %v2057
        %v2186 = vunpack.c.l.b16 %v2058
        %v2187 = vunpack.c.l.b16 %v2059
        %v2188 = vunpack.c.l.b16 %v2060
        %v2189 = vunpack.c.l.b16 %v2061
        %v2190 = vunpack.c.l.b16 %v2062
        %v2191 = vunpack.c.l.b16 %v2063
        %v2192 = vunpack.c.l.b16 %v2064
        %v2193 = vpack.c.b16 %v2178, %v2177
        %v2194 = vpack.c.b16 %v2180, %v2179
        %v2195 = vpack.c.b16 %v2182, %v2181
        %v2196 = vpack.c.b16 %v2184, %v2183
        %v2197 = vpack.c.b16 %v2186, %v2185
        %v2198 = vpack.c.b16 %v2188, %v2187
        %v2199 = vpack.c.b16 %v2190, %v2189
        %v2200 = vpack.c.b16 %v2192, %v2191
        %2209 = vmatpush.bf16.msra.mxu0 %v2200
        %2210 = vmatpush.bf16.msra.mxu0 %v2199
        %2211 = vmatpush.bf16.msra.mxu0 %v2198
        %2212 = vmatpush.bf16.msra.mxu0 %v2197
        %2213 = vmatpush.bf16.msra.mxu0 %v2196
        %2214 = vmatpush.bf16.msra.mxu0 %v2195
        %2215 = vmatpush.bf16.msra.mxu0 %v2194
        %2216 = vmatpush.bf16.msra.mxu0 %v2193
        %2217 = vmatmul.bf16.gmra.mxu0 %v2129
        %v2218 = vpop.f32.mrf.mxu0
        %v2219 = vadd.f32 0.0, %v2218
        %v2220 = vpop.f32.mrf.mxu0
        %v2221 = vadd.f32 0.0, %v2220
        %2222 = vmatmul.bf16.gmra.mxu0 %v2130
        %v2223 = vpop.f32.mrf.mxu0
        %v2224 = vadd.f32 0.0, %v2223
        %v2225 = vpop.f32.mrf.mxu0
        %v2226 = vadd.f32 0.0, %v2225
        %2227 = vmatmul.bf16.gmra.mxu0 %v2131
        %v2228 = vpop.f32.mrf.mxu0
        %v2229 = vadd.f32 0.0, %v2228
        %v2230 = vpop.f32.mrf.mxu0
        %v2231 = vadd.f32 0.0, %v2230
        %2232 = vmatmul.bf16.gmra.mxu0 %v2132
        %v2233 = vpop.f32.mrf.mxu0
        %v2234 = vadd.f32 0.0, %v2233
        %v2235 = vpop.f32.mrf.mxu0
        %v2236 = vadd.f32 0.0, %v2235
        %2237 = vmatmul.bf16.gmra.mxu0 %v2133
        %v2238 = vpop.f32.mrf.mxu0
        %v2239 = vadd.f32 0.0, %v2238
        %v2240 = vpop.f32.mrf.mxu0
        %v2241 = vadd.f32 0.0, %v2240
        %2242 = vmatmul.bf16.gmra.mxu0 %v2134
        %v2243 = vpop.f32.mrf.mxu0
        %v2244 = vadd.f32 0.0, %v2243
        %v2245 = vpop.f32.mrf.mxu0
        %v2246 = vadd.f32 0.0, %v2245
        %2247 = vmatmul.bf16.gmra.mxu0 %v2135
        %v2248 = vpop.f32.mrf.mxu0
        %v2249 = vadd.f32 0.0, %v2248
        %v2250 = vpop.f32.mrf.mxu0
        %v2251 = vadd.f32 0.0, %v2250
        %2252 = vmatmul.bf16.gmra.mxu0 %v2136
        %v2253 = vpop.f32.mrf.mxu0
        %v2254 = vadd.f32 0.0, %v2253
        %v2255 = vpop.f32.mrf.mxu0
        %v2256 = vadd.f32 0.0, %v2255
        %2257 = vmatmul.bf16.gmra.mxu0 %v2137
        %v2258 = vpop.f32.mrf.mxu0
        %v2259 = vadd.f32 0.0, %v2258
        %v2260 = vpop.f32.mrf.mxu0
        %v2261 = vadd.f32 0.0, %v2260
        %2262 = vmatmul.bf16.gmra.mxu0 %v2138
        %v2263 = vpop.f32.mrf.mxu0
        %v2264 = vadd.f32 0.0, %v2263
        %v2265 = vpop.f32.mrf.mxu0
        %v2266 = vadd.f32 0.0, %v2265
        %2267 = vmatmul.bf16.gmra.mxu0 %v2139
        %v2268 = vpop.f32.mrf.mxu0
        %v2269 = vadd.f32 0.0, %v2268
        %v2270 = vpop.f32.mrf.mxu0
        %v2271 = vadd.f32 0.0, %v2270
        %2272 = vmatmul.bf16.gmra.mxu0 %v2140
        %v2273 = vpop.f32.mrf.mxu0
        %v2274 = vadd.f32 0.0, %v2273
        %v2275 = vpop.f32.mrf.mxu0
        %v2276 = vadd.f32 0.0, %v2275
        %2277 = vmatmul.bf16.gmra.mxu0 %v2141
        %v2278 = vpop.f32.mrf.mxu0
        %v2279 = vadd.f32 0.0, %v2278
        %v2280 = vpop.f32.mrf.mxu0
        %v2281 = vadd.f32 0.0, %v2280
        %2282 = vmatmul.bf16.gmra.mxu0 %v2142
        %v2283 = vpop.f32.mrf.mxu0
        %v2284 = vadd.f32 0.0, %v2283
        %v2285 = vpop.f32.mrf.mxu0
        %v2286 = vadd.f32 0.0, %v2285
        %2287 = vmatmul.bf16.gmra.mxu0 %v2143
        %v2288 = vpop.f32.mrf.mxu0
        %v2289 = vadd.f32 0.0, %v2288
        %v2290 = vpop.f32.mrf.mxu0
        %v2291 = vadd.f32 0.0, %v2290
        %2292 = vmatmul.bf16.gmra.mxu0 %v2144
        %v2293 = vpop.f32.mrf.mxu0
        %v2294 = vadd.f32 0.0, %v2293
        %v2295 = vpop.f32.mrf.mxu0
        %v2296 = vadd.f32 0.0, %v2295
        %2297 = vdwg.mxu0
        %v2298 = vadd.f32 %v1953, %v2219
        %v2299 = vadd.f32 %v1954, %v2221
        %v2300 = vadd.f32 %v1955, %v2224
        %v2301 = vadd.f32 %v1956, %v2226
        %v2302 = vadd.f32 %v1957, %v2229
        %v2303 = vadd.f32 %v1958, %v2231
        %v2304 = vadd.f32 %v1959, %v2234
        %v2305 = vadd.f32 %v1960, %v2236
        %v2306 = vadd.f32 %v1961, %v2239
        %v2307 = vadd.f32 %v1962, %v2241
        %v2308 = vadd.f32 %v1963, %v2244
        %v2309 = vadd.f32 %v1964, %v2246
        %v2310 = vadd.f32 %v1965, %v2249
        %v2311 = vadd.f32 %v1966, %v2251
        %v2312 = vadd.f32 %v1967, %v2254
        %v2313 = vadd.f32 %v1968, %v2256
        %v2314 = vadd.f32 %v1969, %v2259
        %v2315 = vadd.f32 %v1970, %v2261
        %v2316 = vadd.f32 %v1971, %v2264
        %v2317 = vadd.f32 %v1972, %v2266
        %v2318 = vadd.f32 %v1973, %v2269
        %v2319 = vadd.f32 %v1974, %v2271
        %v2320 = vadd.f32 %v1975, %v2274
        %v2321 = vadd.f32 %v1976, %v2276
        %v2322 = vadd.f32 %v1977, %v2279
        %v2323 = vadd.f32 %v1978, %v2281
        %v2324 = vadd.f32 %v1979, %v2284
        %v2325 = vadd.f32 %v1980, %v2286
        %v2326 = vadd.f32 %v1981, %v2289
        %v2327 = vadd.f32 %v1982, %v2291
        %v2328 = vadd.f32 %v1983, %v2294
        %v2329 = vadd.f32 %v1984, %v2296
        %v2330 = vld [vmem:[%s636 + $0x2] sm:$0xff]
        %v2331 = vld [vmem:[%s636 + $0xa] sm:$0xff]
        %v2332 = vld [vmem:[%s636 + $0x1a] sm:$0xff]
        %v2333 = vld [vmem:[%s636 + $0x22] sm:$0xff]
        %v2334 = vld [vmem:[%s636 + $0x32] sm:$0xff]
        %v2335 = vld [vmem:[%s636 + $0x3a] sm:$0xff]
        %v2336 = vld [vmem:[%s636 + $0x4a] sm:$0xff]
        %v2337 = vld [vmem:[%s636 + $0x52] sm:$0xff]
        %v2338 = vld [vmem:[%s636 + $0x62] sm:$0xff]
        %v2339 = vld [vmem:[%s636 + $0x6a] sm:$0xff]
        %v2340 = vld [vmem:[%s636 + $0x7a] sm:$0xff]
        %v2341 = vld [vmem:[%s636 + $0x82] sm:$0xff]
        %v2342 = vld [vmem:[%s636 + $0x92] sm:$0xff]
        %v2343 = vld [vmem:[%s636 + $0x9a] sm:$0xff]
        %v2344 = vld [vmem:[%s636 + $0xaa] sm:$0xff]
        %v2345 = vld [vmem:[%s636 + $0xb2] sm:$0xff]
        %v2346 = vld [vmem:[%s636 + $0xc2] sm:$0xff]
        %v2347 = vld [vmem:[%s636 + $0xca] sm:$0xff]
        %v2348 = vld [vmem:[%s636 + $0xda] sm:$0xff]
        %v2349 = vld [vmem:[%s636 + $0xe2] sm:$0xff]
        %v2350 = vld [vmem:[%s636 + $0xf2] sm:$0xff]
        %v2351 = vld [vmem:[%s636 + $0xfa] sm:$0xff]
        %v2352 = vld [vmem:[%s636 + $0x10a] sm:$0xff]
        %v2353 = vld [vmem:[%s636 + $0x112] sm:$0xff]
        %v2354 = vld [vmem:[%s636 + $0x122] sm:$0xff]
        %v2355 = vld [vmem:[%s636 + $0x12a] sm:$0xff]
        %v2356 = vld [vmem:[%s636 + $0x13a] sm:$0xff]
        %v2357 = vld [vmem:[%s636 + $0x142] sm:$0xff]
        %v2358 = vld [vmem:[%s636 + $0x152] sm:$0xff]
        %v2359 = vld [vmem:[%s636 + $0x15a] sm:$0xff]
        %v2360 = vld [vmem:[%s636 + $0x16a] sm:$0xff]
        %v2361 = vld [vmem:[%s636 + $0x172] sm:$0xff]
        %v2362 = vpack.c.bf16 %v2330, %v2330
        %v2363 = vpack.c.bf16 %v2331, %v2331
        %v2364 = vpack.c.bf16 %v2332, %v2332
        %v2365 = vpack.c.bf16 %v2333, %v2333
        %v2366 = vpack.c.bf16 %v2334, %v2334
        %v2367 = vpack.c.bf16 %v2335, %v2335
        %v2368 = vpack.c.bf16 %v2336, %v2336
        %v2369 = vpack.c.bf16 %v2337, %v2337
        %v2370 = vpack.c.bf16 %v2338, %v2338
        %v2371 = vpack.c.bf16 %v2339, %v2339
        %v2372 = vpack.c.bf16 %v2340, %v2340
        %v2373 = vpack.c.bf16 %v2341, %v2341
        %v2374 = vpack.c.bf16 %v2342, %v2342
        %v2375 = vpack.c.bf16 %v2343, %v2343
        %v2376 = vpack.c.bf16 %v2344, %v2344
        %v2377 = vpack.c.bf16 %v2345, %v2345
        %v2378 = vpack.c.bf16 %v2346, %v2346
        %v2379 = vpack.c.bf16 %v2347, %v2347
        %v2380 = vpack.c.bf16 %v2348, %v2348
        %v2381 = vpack.c.bf16 %v2349, %v2349
        %v2382 = vpack.c.bf16 %v2350, %v2350
        %v2383 = vpack.c.bf16 %v2351, %v2351
        %v2384 = vpack.c.bf16 %v2352, %v2352
        %v2385 = vpack.c.bf16 %v2353, %v2353
        %v2386 = vpack.c.bf16 %v2354, %v2354
        %v2387 = vpack.c.bf16 %v2355, %v2355
        %v2388 = vpack.c.bf16 %v2356, %v2356
        %v2389 = vpack.c.bf16 %v2357, %v2357
        %v2390 = vpack.c.bf16 %v2358, %v2358
        %v2391 = vpack.c.bf16 %v2359, %v2359
        %v2392 = vpack.c.bf16 %v2360, %v2360
        %v2393 = vpack.c.bf16 %v2361, %v2361
        %v2394 = vld [vmem:[#allocation6 + $0x140] sm:$0xf]
        %v2395 = vld [vmem:[#allocation6 + $0x144] sm:$0xf]
        %v2396 = vld [vmem:[#allocation6 + $0x148] sm:$0xf]
        %v2397 = vld [vmem:[#allocation6 + $0x14c] sm:$0xf]
        %v2398 = vld [vmem:[#allocation6 + $0x150] sm:$0xf]
        %v2399 = vld [vmem:[#allocation6 + $0x154] sm:$0xf]
        %v2400 = vld [vmem:[#allocation6 + $0x158] sm:$0xf]
        %v2401 = vld [vmem:[#allocation6 + $0x15c] sm:$0xf]
        %v2402 = vld [vmem:[#allocation6 + $0x160] sm:$0xf]
        %v2403 = vld [vmem:[#allocation6 + $0x164] sm:$0xf]
        %v2404 = vld [vmem:[#allocation6 + $0x168] sm:$0xf]
        %v2405 = vld [vmem:[#allocation6 + $0x16c] sm:$0xf]
        %v2406 = vld [vmem:[#allocation6 + $0x170] sm:$0xf]
        %v2407 = vld [vmem:[#allocation6 + $0x174] sm:$0xf]
        %v2408 = vld [vmem:[#allocation6 + $0x178] sm:$0xf]
        %v2409 = vld [vmem:[#allocation6 + $0x17c] sm:$0xf]
        %v2442 = vunpack.c.l.b16 %v2362
        %v2443 = vunpack.c.l.b16 %v2363
        %v2444 = vunpack.c.l.b16 %v2364
        %v2445 = vunpack.c.l.b16 %v2365
        %v2446 = vunpack.c.l.b16 %v2366
        %v2447 = vunpack.c.l.b16 %v2367
        %v2448 = vunpack.c.l.b16 %v2368
        %v2449 = vunpack.c.l.b16 %v2369
        %v2450 = vunpack.c.l.b16 %v2370
        %v2451 = vunpack.c.l.b16 %v2371
        %v2452 = vunpack.c.l.b16 %v2372
        %v2453 = vunpack.c.l.b16 %v2373
        %v2454 = vunpack.c.l.b16 %v2374
        %v2455 = vunpack.c.l.b16 %v2375
        %v2456 = vunpack.c.l.b16 %v2376
        %v2457 = vunpack.c.l.b16 %v2377
        %v2458 = vunpack.c.l.b16 %v2378
        %v2459 = vunpack.c.l.b16 %v2379
        %v2460 = vunpack.c.l.b16 %v2380
        %v2461 = vunpack.c.l.b16 %v2381
        %v2462 = vunpack.c.l.b16 %v2382
        %v2463 = vunpack.c.l.b16 %v2383
        %v2464 = vunpack.c.l.b16 %v2384
        %v2465 = vunpack.c.l.b16 %v2385
        %v2466 = vunpack.c.l.b16 %v2386
        %v2467 = vunpack.c.l.b16 %v2387
        %v2468 = vunpack.c.l.b16 %v2388
        %v2469 = vunpack.c.l.b16 %v2389
        %v2470 = vunpack.c.l.b16 %v2390
        %v2471 = vunpack.c.l.b16 %v2391
        %v2472 = vunpack.c.l.b16 %v2392
        %v2473 = vunpack.c.l.b16 %v2393
        %v2474 = vpack.c.b16 %v2443, %v2442
        %v2475 = vpack.c.b16 %v2445, %v2444
        %v2476 = vpack.c.b16 %v2447, %v2446
        %v2477 = vpack.c.b16 %v2449, %v2448
        %v2478 = vpack.c.b16 %v2451, %v2450
        %v2479 = vpack.c.b16 %v2453, %v2452
        %v2480 = vpack.c.b16 %v2455, %v2454
        %v2481 = vpack.c.b16 %v2457, %v2456
        %v2482 = vpack.c.b16 %v2459, %v2458
        %v2483 = vpack.c.b16 %v2461, %v2460
        %v2484 = vpack.c.b16 %v2463, %v2462
        %v2485 = vpack.c.b16 %v2465, %v2464
        %v2486 = vpack.c.b16 %v2467, %v2466
        %v2487 = vpack.c.b16 %v2469, %v2468
        %v2488 = vpack.c.b16 %v2471, %v2470
        %v2489 = vpack.c.b16 %v2473, %v2472
        %v2522 = vunpack.c.l.b16 %v2394
        %v2523 = vunpack.c.l.b16 %v2395
        %v2524 = vunpack.c.l.b16 %v2396
        %v2525 = vunpack.c.l.b16 %v2397
        %v2526 = vunpack.c.l.b16 %v2398
        %v2527 = vunpack.c.l.b16 %v2399
        %v2528 = vunpack.c.l.b16 %v2400
        %v2529 = vunpack.c.l.b16 %v2401
        %v2530 = vunpack.c.l.b16 %v2402
        %v2531 = vunpack.c.l.b16 %v2403
        %v2532 = vunpack.c.l.b16 %v2404
        %v2533 = vunpack.c.l.b16 %v2405
        %v2534 = vunpack.c.l.b16 %v2406
        %v2535 = vunpack.c.l.b16 %v2407
        %v2536 = vunpack.c.l.b16 %v2408
        %v2537 = vunpack.c.l.b16 %v2409
        %v2538 = vpack.c.b16 %v2523, %v2522
        %v2539 = vpack.c.b16 %v2525, %v2524
        %v2540 = vpack.c.b16 %v2527, %v2526
        %v2541 = vpack.c.b16 %v2529, %v2528
        %v2542 = vpack.c.b16 %v2531, %v2530
        %v2543 = vpack.c.b16 %v2533, %v2532
        %v2544 = vpack.c.b16 %v2535, %v2534
        %v2545 = vpack.c.b16 %v2537, %v2536
        %2554 = vmatpush.bf16.msra.mxu0 %v2545
        %2555 = vmatpush.bf16.msra.mxu0 %v2544
        %2556 = vmatpush.bf16.msra.mxu0 %v2543
        %2557 = vmatpush.bf16.msra.mxu0 %v2542
        %2558 = vmatpush.bf16.msra.mxu0 %v2541
        %2559 = vmatpush.bf16.msra.mxu0 %v2540
        %2560 = vmatpush.bf16.msra.mxu0 %v2539
        %2561 = vmatpush.bf16.msra.mxu0 %v2538
        %2562 = vmatmul.bf16.gmra.mxu0 %v2474
        %v2563 = vpop.f32.mrf.mxu0
        %v2564 = vadd.f32 0.0, %v2563
        %v2565 = vpop.f32.mrf.mxu0
        %v2566 = vadd.f32 0.0, %v2565
        %2567 = vmatmul.bf16.gmra.mxu0 %v2475
        %v2568 = vpop.f32.mrf.mxu0
        %v2569 = vadd.f32 0.0, %v2568
        %v2570 = vpop.f32.mrf.mxu0
        %v2571 = vadd.f32 0.0, %v2570
        %2572 = vmatmul.bf16.gmra.mxu0 %v2476
        %v2573 = vpop.f32.mrf.mxu0
        %v2574 = vadd.f32 0.0, %v2573
        %v2575 = vpop.f32.mrf.mxu0
        %v2576 = vadd.f32 0.0, %v2575
        %2577 = vmatmul.bf16.gmra.mxu0 %v2477
        %v2578 = vpop.f32.mrf.mxu0
        %v2579 = vadd.f32 0.0, %v2578
        %v2580 = vpop.f32.mrf.mxu0
        %v2581 = vadd.f32 0.0, %v2580
        %2582 = vmatmul.bf16.gmra.mxu0 %v2478
        %v2583 = vpop.f32.mrf.mxu0
        %v2584 = vadd.f32 0.0, %v2583
        %v2585 = vpop.f32.mrf.mxu0
        %v2586 = vadd.f32 0.0, %v2585
        %2587 = vmatmul.bf16.gmra.mxu0 %v2479
        %v2588 = vpop.f32.mrf.mxu0
        %v2589 = vadd.f32 0.0, %v2588
        %v2590 = vpop.f32.mrf.mxu0
        %v2591 = vadd.f32 0.0, %v2590
        %2592 = vmatmul.bf16.gmra.mxu0 %v2480
        %v2593 = vpop.f32.mrf.mxu0
        %v2594 = vadd.f32 0.0, %v2593
        %v2595 = vpop.f32.mrf.mxu0
        %v2596 = vadd.f32 0.0, %v2595
        %2597 = vmatmul.bf16.gmra.mxu0 %v2481
        %v2598 = vpop.f32.mrf.mxu0
        %v2599 = vadd.f32 0.0, %v2598
        %v2600 = vpop.f32.mrf.mxu0
        %v2601 = vadd.f32 0.0, %v2600
        %2602 = vmatmul.bf16.gmra.mxu0 %v2482
        %v2603 = vpop.f32.mrf.mxu0
        %v2604 = vadd.f32 0.0, %v2603
        %v2605 = vpop.f32.mrf.mxu0
        %v2606 = vadd.f32 0.0, %v2605
        %2607 = vmatmul.bf16.gmra.mxu0 %v2483
        %v2608 = vpop.f32.mrf.mxu0
        %v2609 = vadd.f32 0.0, %v2608
        %v2610 = vpop.f32.mrf.mxu0
        %v2611 = vadd.f32 0.0, %v2610
        %2612 = vmatmul.bf16.gmra.mxu0 %v2484
        %v2613 = vpop.f32.mrf.mxu0
        %v2614 = vadd.f32 0.0, %v2613
        %v2615 = vpop.f32.mrf.mxu0
        %v2616 = vadd.f32 0.0, %v2615
        %2617 = vmatmul.bf16.gmra.mxu0 %v2485
        %v2618 = vpop.f32.mrf.mxu0
        %v2619 = vadd.f32 0.0, %v2618
        %v2620 = vpop.f32.mrf.mxu0
        %v2621 = vadd.f32 0.0, %v2620
        %2622 = vmatmul.bf16.gmra.mxu0 %v2486
        %v2623 = vpop.f32.mrf.mxu0
        %v2624 = vadd.f32 0.0, %v2623
        %v2625 = vpop.f32.mrf.mxu0
        %v2626 = vadd.f32 0.0, %v2625
        %2627 = vmatmul.bf16.gmra.mxu0 %v2487
        %v2628 = vpop.f32.mrf.mxu0
        %v2629 = vadd.f32 0.0, %v2628
        %v2630 = vpop.f32.mrf.mxu0
        %v2631 = vadd.f32 0.0, %v2630
        %2632 = vmatmul.bf16.gmra.mxu0 %v2488
        %v2633 = vpop.f32.mrf.mxu0
        %v2634 = vadd.f32 0.0, %v2633
        %v2635 = vpop.f32.mrf.mxu0
        %v2636 = vadd.f32 0.0, %v2635
        %2637 = vmatmul.bf16.gmra.mxu0 %v2489
        %v2638 = vpop.f32.mrf.mxu0
        %v2639 = vadd.f32 0.0, %v2638
        %v2640 = vpop.f32.mrf.mxu0
        %v2641 = vadd.f32 0.0, %v2640
        %2642 = vdwg.mxu0
        %v2643 = vadd.f32 %v2298, %v2564
        %v2644 = vadd.f32 %v2299, %v2566
        %v2645 = vadd.f32 %v2300, %v2569
        %v2646 = vadd.f32 %v2301, %v2571
        %v2647 = vadd.f32 %v2302, %v2574
        %v2648 = vadd.f32 %v2303, %v2576
        %v2649 = vadd.f32 %v2304, %v2579
        %v2650 = vadd.f32 %v2305, %v2581
        %v2651 = vadd.f32 %v2306, %v2584
        %v2652 = vadd.f32 %v2307, %v2586
        %v2653 = vadd.f32 %v2308, %v2589
        %v2654 = vadd.f32 %v2309, %v2591
        %v2655 = vadd.f32 %v2310, %v2594
        %v2656 = vadd.f32 %v2311, %v2596
        %v2657 = vadd.f32 %v2312, %v2599
        %v2658 = vadd.f32 %v2313, %v2601
        %v2659 = vadd.f32 %v2314, %v2604
        %v2660 = vadd.f32 %v2315, %v2606
        %v2661 = vadd.f32 %v2316, %v2609
        %v2662 = vadd.f32 %v2317, %v2611
        %v2663 = vadd.f32 %v2318, %v2614
        %v2664 = vadd.f32 %v2319, %v2616
        %v2665 = vadd.f32 %v2320, %v2619
        %v2666 = vadd.f32 %v2321, %v2621
        %v2667 = vadd.f32 %v2322, %v2624
        %v2668 = vadd.f32 %v2323, %v2626
        %v2669 = vadd.f32 %v2324, %v2629
        %v2670 = vadd.f32 %v2325, %v2631
        %v2671 = vadd.f32 %v2326, %v2634
        %v2672 = vadd.f32 %v2327, %v2636
        %v2673 = vadd.f32 %v2328, %v2639
        %v2674 = vadd.f32 %v2329, %v2641
        %s2675 = scalar_lea.vmem [#allocation2], 48
        %v2676 = vld [vmem:[%s2675] sm:$0xff]
        %v2677 = vld [vmem:[%s2675 + $0x8] sm:$0xff]
        %v2678 = vld [vmem:[%s2675 + $0x18] sm:$0xff]
        %v2679 = vld [vmem:[%s2675 + $0x20] sm:$0xff]
        %v2680 = vld [vmem:[%s2675 + $0x30] sm:$0xff]
        %v2681 = vld [vmem:[%s2675 + $0x38] sm:$0xff]
        %v2682 = vld [vmem:[%s2675 + $0x48] sm:$0xff]
        %v2683 = vld [vmem:[%s2675 + $0x50] sm:$0xff]
        %v2684 = vld [vmem:[%s2675 + $0x60] sm:$0xff]
        %v2685 = vld [vmem:[%s2675 + $0x68] sm:$0xff]
        %v2686 = vld [vmem:[%s2675 + $0x78] sm:$0xff]
        %v2687 = vld [vmem:[%s2675 + $0x80] sm:$0xff]
        %v2688 = vld [vmem:[%s2675 + $0x90] sm:$0xff]
        %v2689 = vld [vmem:[%s2675 + $0x98] sm:$0xff]
        %v2690 = vld [vmem:[%s2675 + $0xa8] sm:$0xff]
        %v2691 = vld [vmem:[%s2675 + $0xb0] sm:$0xff]
        %v2692 = vld [vmem:[%s2675 + $0xc0] sm:$0xff]
        %v2693 = vld [vmem:[%s2675 + $0xc8] sm:$0xff]
        %v2694 = vld [vmem:[%s2675 + $0xd8] sm:$0xff]
        %v2695 = vld [vmem:[%s2675 + $0xe0] sm:$0xff]
        %v2696 = vld [vmem:[%s2675 + $0xf0] sm:$0xff]
        %v2697 = vld [vmem:[%s2675 + $0xf8] sm:$0xff]
        %v2698 = vld [vmem:[%s2675 + $0x108] sm:$0xff]
        %v2699 = vld [vmem:[%s2675 + $0x110] sm:$0xff]
        %v2700 = vld [vmem:[%s2675 + $0x120] sm:$0xff]
        %v2701 = vld [vmem:[%s2675 + $0x128] sm:$0xff]
        %v2702 = vld [vmem:[%s2675 + $0x138] sm:$0xff]
        %v2703 = vld [vmem:[%s2675 + $0x140] sm:$0xff]
        %v2704 = vld [vmem:[%s2675 + $0x150] sm:$0xff]
        %v2705 = vld [vmem:[%s2675 + $0x158] sm:$0xff]
        %v2706 = vld [vmem:[%s2675 + $0x168] sm:$0xff]
        %v2707 = vld [vmem:[%s2675 + $0x170] sm:$0xff]
        %v2708 = vpack.c.bf16 %v2676, %v2676
        %v2709 = vpack.c.bf16 %v2677, %v2677
        %v2710 = vpack.c.bf16 %v2678, %v2678
        %v2711 = vpack.c.bf16 %v2679, %v2679
        %v2712 = vpack.c.bf16 %v2680, %v2680
        %v2713 = vpack.c.bf16 %v2681, %v2681
        %v2714 = vpack.c.bf16 %v2682, %v2682
        %v2715 = vpack.c.bf16 %v2683, %v2683
        %v2716 = vpack.c.bf16 %v2684, %v2684
        %v2717 = vpack.c.bf16 %v2685, %v2685
        %v2718 = vpack.c.bf16 %v2686, %v2686
        %v2719 = vpack.c.bf16 %v2687, %v2687
        %v2720 = vpack.c.bf16 %v2688, %v2688
        %v2721 = vpack.c.bf16 %v2689, %v2689
        %v2722 = vpack.c.bf16 %v2690, %v2690
        %v2723 = vpack.c.bf16 %v2691, %v2691
        %v2724 = vpack.c.bf16 %v2692, %v2692
        %v2725 = vpack.c.bf16 %v2693, %v2693
        %v2726 = vpack.c.bf16 %v2694, %v2694
        %v2727 = vpack.c.bf16 %v2695, %v2695
        %v2728 = vpack.c.bf16 %v2696, %v2696
        %v2729 = vpack.c.bf16 %v2697, %v2697
        %v2730 = vpack.c.bf16 %v2698, %v2698
        %v2731 = vpack.c.bf16 %v2699, %v2699
        %v2732 = vpack.c.bf16 %v2700, %v2700
        %v2733 = vpack.c.bf16 %v2701, %v2701
        %v2734 = vpack.c.bf16 %v2702, %v2702
        %v2735 = vpack.c.bf16 %v2703, %v2703
        %v2736 = vpack.c.bf16 %v2704, %v2704
        %v2737 = vpack.c.bf16 %v2705, %v2705
        %v2738 = vpack.c.bf16 %v2706, %v2706
        %v2739 = vpack.c.bf16 %v2707, %v2707
        %v2740 = vld [vmem:[#allocation6 + $0x180] sm:$0xf]
        %v2741 = vld [vmem:[#allocation6 + $0x184] sm:$0xf]
        %v2742 = vld [vmem:[#allocation6 + $0x188] sm:$0xf]
        %v2743 = vld [vmem:[#allocation6 + $0x18c] sm:$0xf]
        %v2744 = vld [vmem:[#allocation6 + $0x190] sm:$0xf]
        %v2745 = vld [vmem:[#allocation6 + $0x194] sm:$0xf]
        %v2746 = vld [vmem:[#allocation6 + $0x198] sm:$0xf]
        %v2747 = vld [vmem:[#allocation6 + $0x19c] sm:$0xf]
        %v2748 = vld [vmem:[#allocation6 + $0x1a0] sm:$0xf]
        %v2749 = vld [vmem:[#allocation6 + $0x1a4] sm:$0xf]
        %v2750 = vld [vmem:[#allocation6 + $0x1a8] sm:$0xf]
        %v2751 = vld [vmem:[#allocation6 + $0x1ac] sm:$0xf]
        %v2752 = vld [vmem:[#allocation6 + $0x1b0] sm:$0xf]
        %v2753 = vld [vmem:[#allocation6 + $0x1b4] sm:$0xf]
        %v2754 = vld [vmem:[#allocation6 + $0x1b8] sm:$0xf]
        %v2755 = vld [vmem:[#allocation6 + $0x1bc] sm:$0xf]
        %v2788 = vunpack.c.l.b16 %v2708
        %v2789 = vunpack.c.l.b16 %v2709
        %v2790 = vunpack.c.l.b16 %v2710
        %v2791 = vunpack.c.l.b16 %v2711
        %v2792 = vunpack.c.l.b16 %v2712
        %v2793 = vunpack.c.l.b16 %v2713
        %v2794 = vunpack.c.l.b16 %v2714
        %v2795 = vunpack.c.l.b16 %v2715
        %v2796 = vunpack.c.l.b16 %v2716
        %v2797 = vunpack.c.l.b16 %v2717
        %v2798 = vunpack.c.l.b16 %v2718
        %v2799 = vunpack.c.l.b16 %v2719
        %v2800 = vunpack.c.l.b16 %v2720
        %v2801 = vunpack.c.l.b16 %v2721
        %v2802 = vunpack.c.l.b16 %v2722
        %v2803 = vunpack.c.l.b16 %v2723
        %v2804 = vunpack.c.l.b16 %v2724
        %v2805 = vunpack.c.l.b16 %v2725
        %v2806 = vunpack.c.l.b16 %v2726
        %v2807 = vunpack.c.l.b16 %v2727
        %v2808 = vunpack.c.l.b16 %v2728
        %v2809 = vunpack.c.l.b16 %v2729
        %v2810 = vunpack.c.l.b16 %v2730
        %v2811 = vunpack.c.l.b16 %v2731
        %v2812 = vunpack.c.l.b16 %v2732
        %v2813 = vunpack.c.l.b16 %v2733
        %v2814 = vunpack.c.l.b16 %v2734
        %v2815 = vunpack.c.l.b16 %v2735
        %v2816 = vunpack.c.l.b16 %v2736
        %v2817 = vunpack.c.l.b16 %v2737
        %v2818 = vunpack.c.l.b16 %v2738
        %v2819 = vunpack.c.l.b16 %v2739
        %v2820 = vpack.c.b16 %v2789, %v2788
        %v2821 = vpack.c.b16 %v2791, %v2790
        %v2822 = vpack.c.b16 %v2793, %v2792
        %v2823 = vpack.c.b16 %v2795, %v2794
        %v2824 = vpack.c.b16 %v2797, %v2796
        %v2825 = vpack.c.b16 %v2799, %v2798
        %v2826 = vpack.c.b16 %v2801, %v2800
        %v2827 = vpack.c.b16 %v2803, %v2802
        %v2828 = vpack.c.b16 %v2805, %v2804
        %v2829 = vpack.c.b16 %v2807, %v2806
        %v2830 = vpack.c.b16 %v2809, %v2808
        %v2831 = vpack.c.b16 %v2811, %v2810
        %v2832 = vpack.c.b16 %v2813, %v2812
        %v2833 = vpack.c.b16 %v2815, %v2814
        %v2834 = vpack.c.b16 %v2817, %v2816
        %v2835 = vpack.c.b16 %v2819, %v2818
        %v2868 = vunpack.c.l.b16 %v2740
        %v2869 = vunpack.c.l.b16 %v2741
        %v2870 = vunpack.c.l.b16 %v2742
        %v2871 = vunpack.c.l.b16 %v2743
        %v2872 = vunpack.c.l.b16 %v2744
        %v2873 = vunpack.c.l.b16 %v2745
        %v2874 = vunpack.c.l.b16 %v2746
        %v2875 = vunpack.c.l.b16 %v2747
        %v2876 = vunpack.c.l.b16 %v2748
        %v2877 = vunpack.c.l.b16 %v2749
        %v2878 = vunpack.c.l.b16 %v2750
        %v2879 = vunpack.c.l.b16 %v2751
        %v2880 = vunpack.c.l.b16 %v2752
        %v2881 = vunpack.c.l.b16 %v2753
        %v2882 = vunpack.c.l.b16 %v2754
        %v2883 = vunpack.c.l.b16 %v2755
        %v2884 = vpack.c.b16 %v2869, %v2868
        %v2885 = vpack.c.b16 %v2871, %v2870
        %v2886 = vpack.c.b16 %v2873, %v2872
        %v2887 = vpack.c.b16 %v2875, %v2874
        %v2888 = vpack.c.b16 %v2877, %v2876
        %v2889 = vpack.c.b16 %v2879, %v2878
        %v2890 = vpack.c.b16 %v2881, %v2880
        %v2891 = vpack.c.b16 %v2883, %v2882
        %2900 = vmatpush.bf16.msra.mxu0 %v2891
        %2901 = vmatpush.bf16.msra.mxu0 %v2890
        %2902 = vmatpush.bf16.msra.mxu0 %v2889
        %2903 = vmatpush.bf16.msra.mxu0 %v2888
        %2904 = vmatpush.bf16.msra.mxu0 %v2887
        %2905 = vmatpush.bf16.msra.mxu0 %v2886
        %2906 = vmatpush.bf16.msra.mxu0 %v2885
        %2907 = vmatpush.bf16.msra.mxu0 %v2884
        %2908 = vmatmul.bf16.gmra.mxu0 %v2820
        %v2909 = vpop.f32.mrf.mxu0
        %v2910 = vadd.f32 0.0, %v2909
        %v2911 = vpop.f32.mrf.mxu0
        %v2912 = vadd.f32 0.0, %v2911
        %2913 = vmatmul.bf16.gmra.mxu0 %v2821
        %v2914 = vpop.f32.mrf.mxu0
        %v2915 = vadd.f32 0.0, %v2914
        %v2916 = vpop.f32.mrf.mxu0
        %v2917 = vadd.f32 0.0, %v2916
        %2918 = vmatmul.bf16.gmra.mxu0 %v2822
        %v2919 = vpop.f32.mrf.mxu0
        %v2920 = vadd.f32 0.0, %v2919
        %v2921 = vpop.f32.mrf.mxu0
        %v2922 = vadd.f32 0.0, %v2921
        %2923 = vmatmul.bf16.gmra.mxu0 %v2823
        %v2924 = vpop.f32.mrf.mxu0
        %v2925 = vadd.f32 0.0, %v2924
        %v2926 = vpop.f32.mrf.mxu0
        %v2927 = vadd.f32 0.0, %v2926
        %2928 = vmatmul.bf16.gmra.mxu0 %v2824
        %v2929 = vpop.f32.mrf.mxu0
        %v2930 = vadd.f32 0.0, %v2929
        %v2931 = vpop.f32.mrf.mxu0
        %v2932 = vadd.f32 0.0, %v2931
        %2933 = vmatmul.bf16.gmra.mxu0 %v2825
        %v2934 = vpop.f32.mrf.mxu0
        %v2935 = vadd.f32 0.0, %v2934
        %v2936 = vpop.f32.mrf.mxu0
        %v2937 = vadd.f32 0.0, %v2936
        %2938 = vmatmul.bf16.gmra.mxu0 %v2826
        %v2939 = vpop.f32.mrf.mxu0
        %v2940 = vadd.f32 0.0, %v2939
        %v2941 = vpop.f32.mrf.mxu0
        %v2942 = vadd.f32 0.0, %v2941
        %2943 = vmatmul.bf16.gmra.mxu0 %v2827
        %v2944 = vpop.f32.mrf.mxu0
        %v2945 = vadd.f32 0.0, %v2944
        %v2946 = vpop.f32.mrf.mxu0
        %v2947 = vadd.f32 0.0, %v2946
        %2948 = vmatmul.bf16.gmra.mxu0 %v2828
        %v2949 = vpop.f32.mrf.mxu0
        %v2950 = vadd.f32 0.0, %v2949
        %v2951 = vpop.f32.mrf.mxu0
        %v2952 = vadd.f32 0.0, %v2951
        %2953 = vmatmul.bf16.gmra.mxu0 %v2829
        %v2954 = vpop.f32.mrf.mxu0
        %v2955 = vadd.f32 0.0, %v2954
        %v2956 = vpop.f32.mrf.mxu0
        %v2957 = vadd.f32 0.0, %v2956
        %2958 = vmatmul.bf16.gmra.mxu0 %v2830
        %v2959 = vpop.f32.mrf.mxu0
        %v2960 = vadd.f32 0.0, %v2959
        %v2961 = vpop.f32.mrf.mxu0
        %v2962 = vadd.f32 0.0, %v2961
        %2963 = vmatmul.bf16.gmra.mxu0 %v2831
        %v2964 = vpop.f32.mrf.mxu0
        %v2965 = vadd.f32 0.0, %v2964
        %v2966 = vpop.f32.mrf.mxu0
        %v2967 = vadd.f32 0.0, %v2966
        %2968 = vmatmul.bf16.gmra.mxu0 %v2832
        %v2969 = vpop.f32.mrf.mxu0
        %v2970 = vadd.f32 0.0, %v2969
        %v2971 = vpop.f32.mrf.mxu0
        %v2972 = vadd.f32 0.0, %v2971
        %2973 = vmatmul.bf16.gmra.mxu0 %v2833
        %v2974 = vpop.f32.mrf.mxu0
        %v2975 = vadd.f32 0.0, %v2974
        %v2976 = vpop.f32.mrf.mxu0
        %v2977 = vadd.f32 0.0, %v2976
        %2978 = vmatmul.bf16.gmra.mxu0 %v2834
        %v2979 = vpop.f32.mrf.mxu0
        %v2980 = vadd.f32 0.0, %v2979
        %v2981 = vpop.f32.mrf.mxu0
        %v2982 = vadd.f32 0.0, %v2981
        %2983 = vmatmul.bf16.gmra.mxu0 %v2835
        %v2984 = vpop.f32.mrf.mxu0
        %v2985 = vadd.f32 0.0, %v2984
        %v2986 = vpop.f32.mrf.mxu0
        %v2987 = vadd.f32 0.0, %v2986
        %2988 = vdwg.mxu0
        %v2989 = vadd.f32 %v2643, %v2910
        %v2990 = vadd.f32 %v2644, %v2912
        %v2991 = vadd.f32 %v2645, %v2915
        %v2992 = vadd.f32 %v2646, %v2917
        %v2993 = vadd.f32 %v2647, %v2920
        %v2994 = vadd.f32 %v2648, %v2922
        %v2995 = vadd.f32 %v2649, %v2925
        %v2996 = vadd.f32 %v2650, %v2927
        %v2997 = vadd.f32 %v2651, %v2930
        %v2998 = vadd.f32 %v2652, %v2932
        %v2999 = vadd.f32 %v2653, %v2935
        %v3000 = vadd.f32 %v2654, %v2937
        %v3001 = vadd.f32 %v2655, %v2940
        %v3002 = vadd.f32 %v2656, %v2942
        %v3003 = vadd.f32 %v2657, %v2945
        %v3004 = vadd.f32 %v2658, %v2947
        %v3005 = vadd.f32 %v2659, %v2950
        %v3006 = vadd.f32 %v2660, %v2952
        %v3007 = vadd.f32 %v2661, %v2955
        %v3008 = vadd.f32 %v2662, %v2957
        %v3009 = vadd.f32 %v2663, %v2960
        %v3010 = vadd.f32 %v2664, %v2962
        %v3011 = vadd.f32 %v2665, %v2965
        %v3012 = vadd.f32 %v2666, %v2967
        %v3013 = vadd.f32 %v2667, %v2970
        %v3014 = vadd.f32 %v2668, %v2972
        %v3015 = vadd.f32 %v2669, %v2975
        %v3016 = vadd.f32 %v2670, %v2977
        %v3017 = vadd.f32 %v2671, %v2980
        %v3018 = vadd.f32 %v2672, %v2982
        %v3019 = vadd.f32 %v2673, %v2985
        %v3020 = vadd.f32 %v2674, %v2987
        %v3021 = vld [vmem:[%s2675 + $0x1] sm:$0xff]
        %v3022 = vld [vmem:[%s2675 + $0x9] sm:$0xff]
        %v3023 = vld [vmem:[%s2675 + $0x19] sm:$0xff]
        %v3024 = vld [vmem:[%s2675 + $0x21] sm:$0xff]
        %v3025 = vld [vmem:[%s2675 + $0x31] sm:$0xff]
        %v3026 = vld [vmem:[%s2675 + $0x39] sm:$0xff]
        %v3027 = vld [vmem:[%s2675 + $0x49] sm:$0xff]
        %v3028 = vld [vmem:[%s2675 + $0x51] sm:$0xff]
        %v3029 = vld [vmem:[%s2675 + $0x61] sm:$0xff]
        %v3030 = vld [vmem:[%s2675 + $0x69] sm:$0xff]
        %v3031 = vld [vmem:[%s2675 + $0x79] sm:$0xff]
        %v3032 = vld [vmem:[%s2675 + $0x81] sm:$0xff]
        %v3033 = vld [vmem:[%s2675 + $0x91] sm:$0xff]
        %v3034 = vld [vmem:[%s2675 + $0x99] sm:$0xff]
        %v3035 = vld [vmem:[%s2675 + $0xa9] sm:$0xff]
        %v3036 = vld [vmem:[%s2675 + $0xb1] sm:$0xff]
        %v3037 = vld [vmem:[%s2675 + $0xc1] sm:$0xff]
        %v3038 = vld [vmem:[%s2675 + $0xc9] sm:$0xff]
        %v3039 = vld [vmem:[%s2675 + $0xd9] sm:$0xff]
        %v3040 = vld [vmem:[%s2675 + $0xe1] sm:$0xff]
        %v3041 = vld [vmem:[%s2675 + $0xf1] sm:$0xff]
        %v3042 = vld [vmem:[%s2675 + $0xf9] sm:$0xff]
        %v3043 = vld [vmem:[%s2675 + $0x109] sm:$0xff]
        %v3044 = vld [vmem:[%s2675 + $0x111] sm:$0xff]
        %v3045 = vld [vmem:[%s2675 + $0x121] sm:$0xff]
        %v3046 = vld [vmem:[%s2675 + $0x129] sm:$0xff]
        %v3047 = vld [vmem:[%s2675 + $0x139] sm:$0xff]
        %v3048 = vld [vmem:[%s2675 + $0x141] sm:$0xff]
        %v3049 = vld [vmem:[%s2675 + $0x151] sm:$0xff]
        %v3050 = vld [vmem:[%s2675 + $0x159] sm:$0xff]
        %v3051 = vld [vmem:[%s2675 + $0x169] sm:$0xff]
        %v3052 = vld [vmem:[%s2675 + $0x171] sm:$0xff]
        %v3053 = vpack.c.bf16 %v3021, %v3021
        %v3054 = vpack.c.bf16 %v3022, %v3022
        %v3055 = vpack.c.bf16 %v3023, %v3023
        %v3056 = vpack.c.bf16 %v3024, %v3024
        %v3057 = vpack.c.bf16 %v3025, %v3025
        %v3058 = vpack.c.bf16 %v3026, %v3026
        %v3059 = vpack.c.bf16 %v3027, %v3027
        %v3060 = vpack.c.bf16 %v3028, %v3028
        %v3061 = vpack.c.bf16 %v3029, %v3029
        %v3062 = vpack.c.bf16 %v3030, %v3030
        %v3063 = vpack.c.bf16 %v3031, %v3031
        %v3064 = vpack.c.bf16 %v3032, %v3032
        %v3065 = vpack.c.bf16 %v3033, %v3033
        %v3066 = vpack.c.bf16 %v3034, %v3034
        %v3067 = vpack.c.bf16 %v3035, %v3035
        %v3068 = vpack.c.bf16 %v3036, %v3036
        %v3069 = vpack.c.bf16 %v3037, %v3037
        %v3070 = vpack.c.bf16 %v3038, %v3038
        %v3071 = vpack.c.bf16 %v3039, %v3039
        %v3072 = vpack.c.bf16 %v3040, %v3040
        %v3073 = vpack.c.bf16 %v3041, %v3041
        %v3074 = vpack.c.bf16 %v3042, %v3042
        %v3075 = vpack.c.bf16 %v3043, %v3043
        %v3076 = vpack.c.bf16 %v3044, %v3044
        %v3077 = vpack.c.bf16 %v3045, %v3045
        %v3078 = vpack.c.bf16 %v3046, %v3046
        %v3079 = vpack.c.bf16 %v3047, %v3047
        %v3080 = vpack.c.bf16 %v3048, %v3048
        %v3081 = vpack.c.bf16 %v3049, %v3049
        %v3082 = vpack.c.bf16 %v3050, %v3050
        %v3083 = vpack.c.bf16 %v3051, %v3051
        %v3084 = vpack.c.bf16 %v3052, %v3052
        %v3085 = vld [vmem:[#allocation6 + $0x1c0] sm:$0xf]
        %v3086 = vld [vmem:[#allocation6 + $0x1c4] sm:$0xf]
        %v3087 = vld [vmem:[#allocation6 + $0x1c8] sm:$0xf]
        %v3088 = vld [vmem:[#allocation6 + $0x1cc] sm:$0xf]
        %v3089 = vld [vmem:[#allocation6 + $0x1d0] sm:$0xf]
        %v3090 = vld [vmem:[#allocation6 + $0x1d4] sm:$0xf]
        %v3091 = vld [vmem:[#allocation6 + $0x1d8] sm:$0xf]
        %v3092 = vld [vmem:[#allocation6 + $0x1dc] sm:$0xf]
        %v3093 = vld [vmem:[#allocation6 + $0x1e0] sm:$0xf]
        %v3094 = vld [vmem:[#allocation6 + $0x1e4] sm:$0xf]
        %v3095 = vld [vmem:[#allocation6 + $0x1e8] sm:$0xf]
        %v3096 = vld [vmem:[#allocation6 + $0x1ec] sm:$0xf]
        %v3097 = vld [vmem:[#allocation6 + $0x1f0] sm:$0xf]
        %v3098 = vld [vmem:[#allocation6 + $0x1f4] sm:$0xf]
        %v3099 = vld [vmem:[#allocation6 + $0x1f8] sm:$0xf]
        %v3100 = vld [vmem:[#allocation6 + $0x1fc] sm:$0xf]
        %v3133 = vunpack.c.l.b16 %v3053
        %v3134 = vunpack.c.l.b16 %v3054
        %v3135 = vunpack.c.l.b16 %v3055
        %v3136 = vunpack.c.l.b16 %v3056
        %v3137 = vunpack.c.l.b16 %v3057
        %v3138 = vunpack.c.l.b16 %v3058
        %v3139 = vunpack.c.l.b16 %v3059
        %v3140 = vunpack.c.l.b16 %v3060
        %v3141 = vunpack.c.l.b16 %v3061
        %v3142 = vunpack.c.l.b16 %v3062
        %v3143 = vunpack.c.l.b16 %v3063
        %v3144 = vunpack.c.l.b16 %v3064
        %v3145 = vunpack.c.l.b16 %v3065
        %v3146 = vunpack.c.l.b16 %v3066
        %v3147 = vunpack.c.l.b16 %v3067
        %v3148 = vunpack.c.l.b16 %v3068
        %v3149 = vunpack.c.l.b16 %v3069
        %v3150 = vunpack.c.l.b16 %v3070
        %v3151 = vunpack.c.l.b16 %v3071
        %v3152 = vunpack.c.l.b16 %v3072
        %v3153 = vunpack.c.l.b16 %v3073
        %v3154 = vunpack.c.l.b16 %v3074
        %v3155 = vunpack.c.l.b16 %v3075
        %v3156 = vunpack.c.l.b16 %v3076
        %v3157 = vunpack.c.l.b16 %v3077
        %v3158 = vunpack.c.l.b16 %v3078
        %v3159 = vunpack.c.l.b16 %v3079
        %v3160 = vunpack.c.l.b16 %v3080
        %v3161 = vunpack.c.l.b16 %v3081
        %v3162 = vunpack.c.l.b16 %v3082
        %v3163 = vunpack.c.l.b16 %v3083
        %v3164 = vunpack.c.l.b16 %v3084
        %v3165 = vpack.c.b16 %v3134, %v3133
        %v3166 = vpack.c.b16 %v3136, %v3135
        %v3167 = vpack.c.b16 %v3138, %v3137
        %v3168 = vpack.c.b16 %v3140, %v3139
        %v3169 = vpack.c.b16 %v3142, %v3141
        %v3170 = vpack.c.b16 %v3144, %v3143
        %v3171 = vpack.c.b16 %v3146, %v3145
        %v3172 = vpack.c.b16 %v3148, %v3147
        %v3173 = vpack.c.b16 %v3150, %v3149
        %v3174 = vpack.c.b16 %v3152, %v3151
        %v3175 = vpack.c.b16 %v3154, %v3153
        %v3176 = vpack.c.b16 %v3156, %v3155
        %v3177 = vpack.c.b16 %v3158, %v3157
        %v3178 = vpack.c.b16 %v3160, %v3159
        %v3179 = vpack.c.b16 %v3162, %v3161
        %v3180 = vpack.c.b16 %v3164, %v3163
        %v3213 = vunpack.c.l.b16 %v3085
        %v3214 = vunpack.c.l.b16 %v3086
        %v3215 = vunpack.c.l.b16 %v3087
        %v3216 = vunpack.c.l.b16 %v3088
        %v3217 = vunpack.c.l.b16 %v3089
        %v3218 = vunpack.c.l.b16 %v3090
        %v3219 = vunpack.c.l.b16 %v3091
        %v3220 = vunpack.c.l.b16 %v3092
        %v3221 = vunpack.c.l.b16 %v3093
        %v3222 = vunpack.c.l.b16 %v3094
        %v3223 = vunpack.c.l.b16 %v3095
        %v3224 = vunpack.c.l.b16 %v3096
        %v3225 = vunpack.c.l.b16 %v3097
        %v3226 = vunpack.c.l.b16 %v3098
        %v3227 = vunpack.c.l.b16 %v3099
        %v3228 = vunpack.c.l.b16 %v3100
        %v3229 = vpack.c.b16 %v3214, %v3213
        %v3230 = vpack.c.b16 %v3216, %v3215
        %v3231 = vpack.c.b16 %v3218, %v3217
        %v3232 = vpack.c.b16 %v3220, %v3219
        %v3233 = vpack.c.b16 %v3222, %v3221
        %v3234 = vpack.c.b16 %v3224, %v3223
        %v3235 = vpack.c.b16 %v3226, %v3225
        %v3236 = vpack.c.b16 %v3228, %v3227
        %3245 = vmatpush.bf16.msra.mxu0 %v3236
        %3246 = vmatpush.bf16.msra.mxu0 %v3235
        %3247 = vmatpush.bf16.msra.mxu0 %v3234
        %3248 = vmatpush.bf16.msra.mxu0 %v3233
        %3249 = vmatpush.bf16.msra.mxu0 %v3232
        %3250 = vmatpush.bf16.msra.mxu0 %v3231
        %3251 = vmatpush.bf16.msra.mxu0 %v3230
        %3252 = vmatpush.bf16.msra.mxu0 %v3229
        %3253 = vmatmul.bf16.gmra.mxu0 %v3165
        %v3254 = vpop.f32.mrf.mxu0
        %v3255 = vadd.f32 0.0, %v3254
        %v3256 = vpop.f32.mrf.mxu0
        %v3257 = vadd.f32 0.0, %v3256
        %3258 = vmatmul.bf16.gmra.mxu0 %v3166
        %v3259 = vpop.f32.mrf.mxu0
        %v3260 = vadd.f32 0.0, %v3259
        %v3261 = vpop.f32.mrf.mxu0
        %v3262 = vadd.f32 0.0, %v3261
        %3263 = vmatmul.bf16.gmra.mxu0 %v3167
        %v3264 = vpop.f32.mrf.mxu0
        %v3265 = vadd.f32 0.0, %v3264
        %v3266 = vpop.f32.mrf.mxu0
        %v3267 = vadd.f32 0.0, %v3266
        %3268 = vmatmul.bf16.gmra.mxu0 %v3168
        %v3269 = vpop.f32.mrf.mxu0
        %v3270 = vadd.f32 0.0, %v3269
        %v3271 = vpop.f32.mrf.mxu0
        %v3272 = vadd.f32 0.0, %v3271
        %3273 = vmatmul.bf16.gmra.mxu0 %v3169
        %v3274 = vpop.f32.mrf.mxu0
        %v3275 = vadd.f32 0.0, %v3274
        %v3276 = vpop.f32.mrf.mxu0
        %v3277 = vadd.f32 0.0, %v3276
        %3278 = vmatmul.bf16.gmra.mxu0 %v3170
        %v3279 = vpop.f32.mrf.mxu0
        %v3280 = vadd.f32 0.0, %v3279
        %v3281 = vpop.f32.mrf.mxu0
        %v3282 = vadd.f32 0.0, %v3281
        %3283 = vmatmul.bf16.gmra.mxu0 %v3171
        %v3284 = vpop.f32.mrf.mxu0
        %v3285 = vadd.f32 0.0, %v3284
        %v3286 = vpop.f32.mrf.mxu0
        %v3287 = vadd.f32 0.0, %v3286
        %3288 = vmatmul.bf16.gmra.mxu0 %v3172
        %v3289 = vpop.f32.mrf.mxu0
        %v3290 = vadd.f32 0.0, %v3289
        %v3291 = vpop.f32.mrf.mxu0
        %v3292 = vadd.f32 0.0, %v3291
        %3293 = vmatmul.bf16.gmra.mxu0 %v3173
        %v3294 = vpop.f32.mrf.mxu0
        %v3295 = vadd.f32 0.0, %v3294
        %v3296 = vpop.f32.mrf.mxu0
        %v3297 = vadd.f32 0.0, %v3296
        %3298 = vmatmul.bf16.gmra.mxu0 %v3174
        %v3299 = vpop.f32.mrf.mxu0
        %v3300 = vadd.f32 0.0, %v3299
        %v3301 = vpop.f32.mrf.mxu0
        %v3302 = vadd.f32 0.0, %v3301
        %3303 = vmatmul.bf16.gmra.mxu0 %v3175
        %v3304 = vpop.f32.mrf.mxu0
        %v3305 = vadd.f32 0.0, %v3304
        %v3306 = vpop.f32.mrf.mxu0
        %v3307 = vadd.f32 0.0, %v3306
        %3308 = vmatmul.bf16.gmra.mxu0 %v3176
        %v3309 = vpop.f32.mrf.mxu0
        %v3310 = vadd.f32 0.0, %v3309
        %v3311 = vpop.f32.mrf.mxu0
        %v3312 = vadd.f32 0.0, %v3311
        %3313 = vmatmul.bf16.gmra.mxu0 %v3177
        %v3314 = vpop.f32.mrf.mxu0
        %v3315 = vadd.f32 0.0, %v3314
        %v3316 = vpop.f32.mrf.mxu0
        %v3317 = vadd.f32 0.0, %v3316
        %3318 = vmatmul.bf16.gmra.mxu0 %v3178
        %v3319 = vpop.f32.mrf.mxu0
        %v3320 = vadd.f32 0.0, %v3319
        %v3321 = vpop.f32.mrf.mxu0
        %v3322 = vadd.f32 0.0, %v3321
        %3323 = vmatmul.bf16.gmra.mxu0 %v3179
        %v3324 = vpop.f32.mrf.mxu0
        %v3325 = vadd.f32 0.0, %v3324
        %v3326 = vpop.f32.mrf.mxu0
        %v3327 = vadd.f32 0.0, %v3326
        %3328 = vmatmul.bf16.gmra.mxu0 %v3180
        %v3329 = vpop.f32.mrf.mxu0
        %v3330 = vadd.f32 0.0, %v3329
        %v3331 = vpop.f32.mrf.mxu0
        %v3332 = vadd.f32 0.0, %v3331
        %3333 = vdwg.mxu0
        %v3334 = vadd.f32 %v2989, %v3255
        %v3335 = vadd.f32 %v2990, %v3257
        %v3336 = vadd.f32 %v2991, %v3260
        %v3337 = vadd.f32 %v2992, %v3262
        %v3338 = vadd.f32 %v2993, %v3265
        %v3339 = vadd.f32 %v2994, %v3267
        %v3340 = vadd.f32 %v2995, %v3270
        %v3341 = vadd.f32 %v2996, %v3272
        %v3342 = vadd.f32 %v2997, %v3275
        %v3343 = vadd.f32 %v2998, %v3277
        %v3344 = vadd.f32 %v2999, %v3280
        %v3345 = vadd.f32 %v3000, %v3282
        %v3346 = vadd.f32 %v3001, %v3285
        %v3347 = vadd.f32 %v3002, %v3287
        %v3348 = vadd.f32 %v3003, %v3290
        %v3349 = vadd.f32 %v3004, %v3292
        %v3350 = vadd.f32 %v3005, %v3295
        %v3351 = vadd.f32 %v3006, %v3297
        %v3352 = vadd.f32 %v3007, %v3300
        %v3353 = vadd.f32 %v3008, %v3302
        %v3354 = vadd.f32 %v3009, %v3305
        %v3355 = vadd.f32 %v3010, %v3307
        %v3356 = vadd.f32 %v3011, %v3310
        %v3357 = vadd.f32 %v3012, %v3312
        %v3358 = vadd.f32 %v3013, %v3315
        %v3359 = vadd.f32 %v3014, %v3317
        %v3360 = vadd.f32 %v3015, %v3320
        %v3361 = vadd.f32 %v3016, %v3322
        %v3362 = vadd.f32 %v3017, %v3325
        %v3363 = vadd.f32 %v3018, %v3327
        %v3364 = vadd.f32 %v3019, %v3330
        %v3365 = vadd.f32 %v3020, %v3332
        %v3366 = vld [vmem:[%s2675 + $0x2] sm:$0xff]
        %v3367 = vld [vmem:[%s2675 + $0xa] sm:$0xff]
        %v3368 = vld [vmem:[%s2675 + $0x1a] sm:$0xff]
        %v3369 = vld [vmem:[%s2675 + $0x22] sm:$0xff]
        %v3370 = vld [vmem:[%s2675 + $0x32] sm:$0xff]
        %v3371 = vld [vmem:[%s2675 + $0x3a] sm:$0xff]
        %v3372 = vld [vmem:[%s2675 + $0x4a] sm:$0xff]
        %v3373 = vld [vmem:[%s2675 + $0x52] sm:$0xff]
        %v3374 = vld [vmem:[%s2675 + $0x62] sm:$0xff]
        %v3375 = vld [vmem:[%s2675 + $0x6a] sm:$0xff]
        %v3376 = vld [vmem:[%s2675 + $0x7a] sm:$0xff]
        %v3377 = vld [vmem:[%s2675 + $0x82] sm:$0xff]
        %v3378 = vld [vmem:[%s2675 + $0x92] sm:$0xff]
        %v3379 = vld [vmem:[%s2675 + $0x9a] sm:$0xff]
        %v3380 = vld [vmem:[%s2675 + $0xaa] sm:$0xff]
        %v3381 = vld [vmem:[%s2675 + $0xb2] sm:$0xff]
        %v3382 = vld [vmem:[%s2675 + $0xc2] sm:$0xff]
        %v3383 = vld [vmem:[%s2675 + $0xca] sm:$0xff]
        %v3384 = vld [vmem:[%s2675 + $0xda] sm:$0xff]
        %v3385 = vld [vmem:[%s2675 + $0xe2] sm:$0xff]
        %v3386 = vld [vmem:[%s2675 + $0xf2] sm:$0xff]
        %v3387 = vld [vmem:[%s2675 + $0xfa] sm:$0xff]
        %v3388 = vld [vmem:[%s2675 + $0x10a] sm:$0xff]
        %v3389 = vld [vmem:[%s2675 + $0x112] sm:$0xff]
        %v3390 = vld [vmem:[%s2675 + $0x122] sm:$0xff]
        %v3391 = vld [vmem:[%s2675 + $0x12a] sm:$0xff]
        %v3392 = vld [vmem:[%s2675 + $0x13a] sm:$0xff]
        %v3393 = vld [vmem:[%s2675 + $0x142] sm:$0xff]
        %v3394 = vld [vmem:[%s2675 + $0x152] sm:$0xff]
        %v3395 = vld [vmem:[%s2675 + $0x15a] sm:$0xff]
        %v3396 = vld [vmem:[%s2675 + $0x16a] sm:$0xff]
        %v3397 = vld [vmem:[%s2675 + $0x172] sm:$0xff]
        %v3398 = vpack.c.bf16 %v3366, %v3366
        %v3399 = vpack.c.bf16 %v3367, %v3367
        %v3400 = vpack.c.bf16 %v3368, %v3368
        %v3401 = vpack.c.bf16 %v3369, %v3369
        %v3402 = vpack.c.bf16 %v3370, %v3370
        %v3403 = vpack.c.bf16 %v3371, %v3371
        %v3404 = vpack.c.bf16 %v3372, %v3372
        %v3405 = vpack.c.bf16 %v3373, %v3373
        %v3406 = vpack.c.bf16 %v3374, %v3374
        %v3407 = vpack.c.bf16 %v3375, %v3375
        %v3408 = vpack.c.bf16 %v3376, %v3376
        %v3409 = vpack.c.bf16 %v3377, %v3377
        %v3410 = vpack.c.bf16 %v3378, %v3378
        %v3411 = vpack.c.bf16 %v3379, %v3379
        %v3412 = vpack.c.bf16 %v3380, %v3380
        %v3413 = vpack.c.bf16 %v3381, %v3381
        %v3414 = vpack.c.bf16 %v3382, %v3382
        %v3415 = vpack.c.bf16 %v3383, %v3383
        %v3416 = vpack.c.bf16 %v3384, %v3384
        %v3417 = vpack.c.bf16 %v3385, %v3385
        %v3418 = vpack.c.bf16 %v3386, %v3386
        %v3419 = vpack.c.bf16 %v3387, %v3387
        %v3420 = vpack.c.bf16 %v3388, %v3388
        %v3421 = vpack.c.bf16 %v3389, %v3389
        %v3422 = vpack.c.bf16 %v3390, %v3390
        %v3423 = vpack.c.bf16 %v3391, %v3391
        %v3424 = vpack.c.bf16 %v3392, %v3392
        %v3425 = vpack.c.bf16 %v3393, %v3393
        %v3426 = vpack.c.bf16 %v3394, %v3394
        %v3427 = vpack.c.bf16 %v3395, %v3395
        %v3428 = vpack.c.bf16 %v3396, %v3396
        %v3429 = vpack.c.bf16 %v3397, %v3397
        %v3430 = vld [vmem:[#allocation6 + $0x200] sm:$0xf]
        %v3431 = vld [vmem:[#allocation6 + $0x204] sm:$0xf]
        %v3432 = vld [vmem:[#allocation6 + $0x208] sm:$0xf]
        %v3433 = vld [vmem:[#allocation6 + $0x20c] sm:$0xf]
        %v3434 = vld [vmem:[#allocation6 + $0x210] sm:$0xf]
        %v3435 = vld [vmem:[#allocation6 + $0x214] sm:$0xf]
        %v3436 = vld [vmem:[#allocation6 + $0x218] sm:$0xf]
        %v3437 = vld [vmem:[#allocation6 + $0x21c] sm:$0xf]
        %v3438 = vld [vmem:[#allocation6 + $0x220] sm:$0xf]
        %v3439 = vld [vmem:[#allocation6 + $0x224] sm:$0xf]
        %v3440 = vld [vmem:[#allocation6 + $0x228] sm:$0xf]
        %v3441 = vld [vmem:[#allocation6 + $0x22c] sm:$0xf]
        %v3442 = vld [vmem:[#allocation6 + $0x230] sm:$0xf]
        %v3443 = vld [vmem:[#allocation6 + $0x234] sm:$0xf]
        %v3444 = vld [vmem:[#allocation6 + $0x238] sm:$0xf]
        %v3445 = vld [vmem:[#allocation6 + $0x23c] sm:$0xf]
        %v3478 = vunpack.c.l.b16 %v3398
        %v3479 = vunpack.c.l.b16 %v3399
        %v3480 = vunpack.c.l.b16 %v3400
        %v3481 = vunpack.c.l.b16 %v3401
        %v3482 = vunpack.c.l.b16 %v3402
        %v3483 = vunpack.c.l.b16 %v3403
        %v3484 = vunpack.c.l.b16 %v3404
        %v3485 = vunpack.c.l.b16 %v3405
        %v3486 = vunpack.c.l.b16 %v3406
        %v3487 = vunpack.c.l.b16 %v3407
        %v3488 = vunpack.c.l.b16 %v3408
        %v3489 = vunpack.c.l.b16 %v3409
        %v3490 = vunpack.c.l.b16 %v3410
        %v3491 = vunpack.c.l.b16 %v3411
        %v3492 = vunpack.c.l.b16 %v3412
        %v3493 = vunpack.c.l.b16 %v3413
        %v3494 = vunpack.c.l.b16 %v3414
        %v3495 = vunpack.c.l.b16 %v3415
        %v3496 = vunpack.c.l.b16 %v3416
        %v3497 = vunpack.c.l.b16 %v3417
        %v3498 = vunpack.c.l.b16 %v3418
        %v3499 = vunpack.c.l.b16 %v3419
        %v3500 = vunpack.c.l.b16 %v3420
        %v3501 = vunpack.c.l.b16 %v3421
        %v3502 = vunpack.c.l.b16 %v3422
        %v3503 = vunpack.c.l.b16 %v3423
        %v3504 = vunpack.c.l.b16 %v3424
        %v3505 = vunpack.c.l.b16 %v3425
        %v3506 = vunpack.c.l.b16 %v3426
        %v3507 = vunpack.c.l.b16 %v3427
        %v3508 = vunpack.c.l.b16 %v3428
        %v3509 = vunpack.c.l.b16 %v3429
        %v3510 = vpack.c.b16 %v3479, %v3478
        %v3511 = vpack.c.b16 %v3481, %v3480
        %v3512 = vpack.c.b16 %v3483, %v3482
        %v3513 = vpack.c.b16 %v3485, %v3484
        %v3514 = vpack.c.b16 %v3487, %v3486
        %v3515 = vpack.c.b16 %v3489, %v3488
        %v3516 = vpack.c.b16 %v3491, %v3490
        %v3517 = vpack.c.b16 %v3493, %v3492
        %v3518 = vpack.c.b16 %v3495, %v3494
        %v3519 = vpack.c.b16 %v3497, %v3496
        %v3520 = vpack.c.b16 %v3499, %v3498
        %v3521 = vpack.c.b16 %v3501, %v3500
        %v3522 = vpack.c.b16 %v3503, %v3502
        %v3523 = vpack.c.b16 %v3505, %v3504
        %v3524 = vpack.c.b16 %v3507, %v3506
        %v3525 = vpack.c.b16 %v3509, %v3508
        %v3558 = vunpack.c.l.b16 %v3430
        %v3559 = vunpack.c.l.b16 %v3431
        %v3560 = vunpack.c.l.b16 %v3432
        %v3561 = vunpack.c.l.b16 %v3433
        %v3562 = vunpack.c.l.b16 %v3434
        %v3563 = vunpack.c.l.b16 %v3435
        %v3564 = vunpack.c.l.b16 %v3436
        %v3565 = vunpack.c.l.b16 %v3437
        %v3566 = vunpack.c.l.b16 %v3438
        %v3567 = vunpack.c.l.b16 %v3439
        %v3568 = vunpack.c.l.b16 %v3440
        %v3569 = vunpack.c.l.b16 %v3441
        %v3570 = vunpack.c.l.b16 %v3442
        %v3571 = vunpack.c.l.b16 %v3443
        %v3572 = vunpack.c.l.b16 %v3444
        %v3573 = vunpack.c.l.b16 %v3445
        %v3574 = vpack.c.b16 %v3559, %v3558
        %v3575 = vpack.c.b16 %v3561, %v3560
        %v3576 = vpack.c.b16 %v3563, %v3562
        %v3577 = vpack.c.b16 %v3565, %v3564
        %v3578 = vpack.c.b16 %v3567, %v3566
        %v3579 = vpack.c.b16 %v3569, %v3568
        %v3580 = vpack.c.b16 %v3571, %v3570
        %v3581 = vpack.c.b16 %v3573, %v3572
        %3590 = vmatpush.bf16.msra.mxu0 %v3581
        %3591 = vmatpush.bf16.msra.mxu0 %v3580
        %3592 = vmatpush.bf16.msra.mxu0 %v3579
        %3593 = vmatpush.bf16.msra.mxu0 %v3578
        %3594 = vmatpush.bf16.msra.mxu0 %v3577
        %3595 = vmatpush.bf16.msra.mxu0 %v3576
        %3596 = vmatpush.bf16.msra.mxu0 %v3575
        %3597 = vmatpush.bf16.msra.mxu0 %v3574
        %3598 = vmatmul.bf16.gmra.mxu0 %v3510
        %v3599 = vpop.f32.mrf.mxu0
        %v3600 = vadd.f32 0.0, %v3599
        %v3601 = vpop.f32.mrf.mxu0
        %v3602 = vadd.f32 0.0, %v3601
        %3603 = vmatmul.bf16.gmra.mxu0 %v3511
        %v3604 = vpop.f32.mrf.mxu0
        %v3605 = vadd.f32 0.0, %v3604
        %v3606 = vpop.f32.mrf.mxu0
        %v3607 = vadd.f32 0.0, %v3606
        %3608 = vmatmul.bf16.gmra.mxu0 %v3512
        %v3609 = vpop.f32.mrf.mxu0
        %v3610 = vadd.f32 0.0, %v3609
        %v3611 = vpop.f32.mrf.mxu0
        %v3612 = vadd.f32 0.0, %v3611
        %3613 = vmatmul.bf16.gmra.mxu0 %v3513
        %v3614 = vpop.f32.mrf.mxu0
        %v3615 = vadd.f32 0.0, %v3614
        %v3616 = vpop.f32.mrf.mxu0
        %v3617 = vadd.f32 0.0, %v3616
        %3618 = vmatmul.bf16.gmra.mxu0 %v3514
        %v3619 = vpop.f32.mrf.mxu0
        %v3620 = vadd.f32 0.0, %v3619
        %v3621 = vpop.f32.mrf.mxu0
        %v3622 = vadd.f32 0.0, %v3621
        %3623 = vmatmul.bf16.gmra.mxu0 %v3515
        %v3624 = vpop.f32.mrf.mxu0
        %v3625 = vadd.f32 0.0, %v3624
        %v3626 = vpop.f32.mrf.mxu0
        %v3627 = vadd.f32 0.0, %v3626
        %3628 = vmatmul.bf16.gmra.mxu0 %v3516
        %v3629 = vpop.f32.mrf.mxu0
        %v3630 = vadd.f32 0.0, %v3629
        %v3631 = vpop.f32.mrf.mxu0
        %v3632 = vadd.f32 0.0, %v3631
        %3633 = vmatmul.bf16.gmra.mxu0 %v3517
        %v3634 = vpop.f32.mrf.mxu0
        %v3635 = vadd.f32 0.0, %v3634
        %v3636 = vpop.f32.mrf.mxu0
        %v3637 = vadd.f32 0.0, %v3636
        %3638 = vmatmul.bf16.gmra.mxu0 %v3518
        %v3639 = vpop.f32.mrf.mxu0
        %v3640 = vadd.f32 0.0, %v3639
        %v3641 = vpop.f32.mrf.mxu0
        %v3642 = vadd.f32 0.0, %v3641
        %3643 = vmatmul.bf16.gmra.mxu0 %v3519
        %v3644 = vpop.f32.mrf.mxu0
        %v3645 = vadd.f32 0.0, %v3644
        %v3646 = vpop.f32.mrf.mxu0
        %v3647 = vadd.f32 0.0, %v3646
        %3648 = vmatmul.bf16.gmra.mxu0 %v3520
        %v3649 = vpop.f32.mrf.mxu0
        %v3650 = vadd.f32 0.0, %v3649
        %v3651 = vpop.f32.mrf.mxu0
        %v3652 = vadd.f32 0.0, %v3651
        %3653 = vmatmul.bf16.gmra.mxu0 %v3521
        %v3654 = vpop.f32.mrf.mxu0
        %v3655 = vadd.f32 0.0, %v3654
        %v3656 = vpop.f32.mrf.mxu0
        %v3657 = vadd.f32 0.0, %v3656
        %3658 = vmatmul.bf16.gmra.mxu0 %v3522
        %v3659 = vpop.f32.mrf.mxu0
        %v3660 = vadd.f32 0.0, %v3659
        %v3661 = vpop.f32.mrf.mxu0
        %v3662 = vadd.f32 0.0, %v3661
        %3663 = vmatmul.bf16.gmra.mxu0 %v3523
        %v3664 = vpop.f32.mrf.mxu0
        %v3665 = vadd.f32 0.0, %v3664
        %v3666 = vpop.f32.mrf.mxu0
        %v3667 = vadd.f32 0.0, %v3666
        %3668 = vmatmul.bf16.gmra.mxu0 %v3524
        %v3669 = vpop.f32.mrf.mxu0
        %v3670 = vadd.f32 0.0, %v3669
        %v3671 = vpop.f32.mrf.mxu0
        %v3672 = vadd.f32 0.0, %v3671
        %3673 = vmatmul.bf16.gmra.mxu0 %v3525
        %v3674 = vpop.f32.mrf.mxu0
        %v3675 = vadd.f32 0.0, %v3674
        %v3676 = vpop.f32.mrf.mxu0
        %v3677 = vadd.f32 0.0, %v3676
        %3678 = vdwg.mxu0
        %v3679 = vadd.f32 %v3334, %v3600
        %v3680 = vadd.f32 %v3335, %v3602
        %v3681 = vadd.f32 %v3336, %v3605
        %v3682 = vadd.f32 %v3337, %v3607
        %v3683 = vadd.f32 %v3338, %v3610
        %v3684 = vadd.f32 %v3339, %v3612
        %v3685 = vadd.f32 %v3340, %v3615
        %v3686 = vadd.f32 %v3341, %v3617
        %v3687 = vadd.f32 %v3342, %v3620
        %v3688 = vadd.f32 %v3343, %v3622
        %v3689 = vadd.f32 %v3344, %v3625
        %v3690 = vadd.f32 %v3345, %v3627
        %v3691 = vadd.f32 %v3346, %v3630
        %v3692 = vadd.f32 %v3347, %v3632
        %v3693 = vadd.f32 %v3348, %v3635
        %v3694 = vadd.f32 %v3349, %v3637
        %v3695 = vadd.f32 %v3350, %v3640
        %v3696 = vadd.f32 %v3351, %v3642
        %v3697 = vadd.f32 %v3352, %v3645
        %v3698 = vadd.f32 %v3353, %v3647
        %v3699 = vadd.f32 %v3354, %v3650
        %v3700 = vadd.f32 %v3355, %v3652
        %v3701 = vadd.f32 %v3356, %v3655
        %v3702 = vadd.f32 %v3357, %v3657
        %v3703 = vadd.f32 %v3358, %v3660
        %v3704 = vadd.f32 %v3359, %v3662
        %v3705 = vadd.f32 %v3360, %v3665
        %v3706 = vadd.f32 %v3361, %v3667
        %v3707 = vadd.f32 %v3362, %v3670
        %v3708 = vadd.f32 %v3363, %v3672
        %v3709 = vadd.f32 %v3364, %v3675
        %v3710 = vadd.f32 %v3365, %v3677
        %v3711 = vld [vmem:[%s2] sm:$0x1]
        %v3713 = vperm.slane %v3711, 0
        %v3715 = vmul.f32 %v3679, %v3713
        %v3716 = vmul.f32 %v3680, %v3713
        %v3717 = vmul.f32 %v3681, %v3713
        %v3718 = vmul.f32 %v3682, %v3713
        %v3719 = vmul.f32 %v3683, %v3713
        %v3720 = vmul.f32 %v3684, %v3713
        %v3721 = vmul.f32 %v3685, %v3713
        %v3722 = vmul.f32 %v3686, %v3713
        %v3723 = vmul.f32 %v3687, %v3713
        %v3724 = vmul.f32 %v3688, %v3713
        %v3725 = vmul.f32 %v3689, %v3713
        %v3726 = vmul.f32 %v3690, %v3713
        %v3727 = vmul.f32 %v3691, %v3713
        %v3728 = vmul.f32 %v3692, %v3713
        %v3729 = vmul.f32 %v3693, %v3713
        %v3730 = vmul.f32 %v3694, %v3713
        %v3731 = vmul.f32 %v3695, %v3713
        %v3732 = vmul.f32 %v3696, %v3713
        %v3733 = vmul.f32 %v3697, %v3713
        %v3734 = vmul.f32 %v3698, %v3713
        %v3735 = vmul.f32 %v3699, %v3713
        %v3736 = vmul.f32 %v3700, %v3713
        %v3737 = vmul.f32 %v3701, %v3713
        %v3738 = vmul.f32 %v3702, %v3713
        %v3739 = vmul.f32 %v3703, %v3713
        %v3740 = vmul.f32 %v3704, %v3713
        %v3741 = vmul.f32 %v3705, %v3713
        %v3742 = vmul.f32 %v3706, %v3713
        %v3743 = vmul.f32 %v3707, %v3713
        %v3744 = vmul.f32 %v3708, %v3713
        %v3745 = vmul.f32 %v3709, %v3713
        %v3746 = vmul.f32 %v3710, %v3713
        %v3747 = vld [vmem:[%s3] sm:$0x1]
        %v3749 = vperm.slane %v3747, 0
        %v3751 = vadd.f32 %v3715, %v3749
        %v3752 = vadd.f32 %v3716, %v3749
        %v3753 = vadd.f32 %v3717, %v3749
        %v3754 = vadd.f32 %v3718, %v3749
        %v3755 = vadd.f32 %v3719, %v3749
        %v3756 = vadd.f32 %v3720, %v3749
        %v3757 = vadd.f32 %v3721, %v3749
        %v3758 = vadd.f32 %v3722, %v3749
        %v3759 = vadd.f32 %v3723, %v3749
        %v3760 = vadd.f32 %v3724, %v3749
        %v3761 = vadd.f32 %v3725, %v3749
        %v3762 = vadd.f32 %v3726, %v3749
        %v3763 = vadd.f32 %v3727, %v3749
        %v3764 = vadd.f32 %v3728, %v3749
        %v3765 = vadd.f32 %v3729, %v3749
        %v3766 = vadd.f32 %v3730, %v3749
        %v3767 = vadd.f32 %v3731, %v3749
        %v3768 = vadd.f32 %v3732, %v3749
        %v3769 = vadd.f32 %v3733, %v3749
        %v3770 = vadd.f32 %v3734, %v3749
        %v3771 = vadd.f32 %v3735, %v3749
        %v3772 = vadd.f32 %v3736, %v3749
        %v3773 = vadd.f32 %v3737, %v3749
        %v3774 = vadd.f32 %v3738, %v3749
        %v3775 = vadd.f32 %v3739, %v3749
        %v3776 = vadd.f32 %v3740, %v3749
        %v3777 = vadd.f32 %v3741, %v3749
        %v3778 = vadd.f32 %v3742, %v3749
        %v3779 = vadd.f32 %v3743, %v3749
        %v3780 = vadd.f32 %v3744, %v3749
        %v3781 = vadd.f32 %v3745, %v3749
        %v3782 = vadd.f32 %v3746, %v3749
        %v3783 = vmax.f32 %v3751, 0.0
        %v3784 = vmax.f32 %v3752, 0.0
        %v3785 = vmax.f32 %v3753, 0.0
        %v3786 = vmax.f32 %v3754, 0.0
        %v3787 = vmax.f32 %v3755, 0.0
        %v3788 = vmax.f32 %v3756, 0.0
        %v3789 = vmax.f32 %v3757, 0.0
        %v3790 = vmax.f32 %v3758, 0.0
        %v3791 = vmax.f32 %v3759, 0.0
        %v3792 = vmax.f32 %v3760, 0.0
        %v3793 = vmax.f32 %v3761, 0.0
        %v3794 = vmax.f32 %v3762, 0.0
        %v3795 = vmax.f32 %v3763, 0.0
        %v3796 = vmax.f32 %v3764, 0.0
        %v3797 = vmax.f32 %v3765, 0.0
        %v3798 = vmax.f32 %v3766, 0.0
        %v3799 = vmax.f32 %v3767, 0.0
        %v3800 = vmax.f32 %v3768, 0.0
        %v3801 = vmax.f32 %v3769, 0.0
        %v3802 = vmax.f32 %v3770, 0.0
        %v3803 = vmax.f32 %v3771, 0.0
        %v3804 = vmax.f32 %v3772, 0.0
        %v3805 = vmax.f32 %v3773, 0.0
        %v3806 = vmax.f32 %v3774, 0.0
        %v3807 = vmax.f32 %v3775, 0.0
        %v3808 = vmax.f32 %v3776, 0.0
        %v3809 = vmax.f32 %v3777, 0.0
        %v3810 = vmax.f32 %v3778, 0.0
        %v3811 = vmax.f32 %v3779, 0.0
        %v3812 = vmax.f32 %v3780, 0.0
        %v3813 = vmax.f32 %v3781, 0.0
        %v3814 = vmax.f32 %v3782, 0.0
        %3815 = vst [vmem:[%s636 + $0x1] sm:$0xff] %v3783
        %3816 = vst [vmem:[%s636 + $0x9] sm:$0xff] %v3784
        %3817 = vst [vmem:[%s636 + $0x19] sm:$0xff] %v3785
        %3818 = vst [vmem:[%s636 + $0x21] sm:$0xff] %v3786
        %3819 = vst [vmem:[%s636 + $0x31] sm:$0xff] %v3787
        %3820 = vst [vmem:[%s636 + $0x39] sm:$0xff] %v3788
        %3821 = vst [vmem:[%s636 + $0x49] sm:$0xff] %v3789
        %3822 = vst [vmem:[%s636 + $0x51] sm:$0xff] %v3790
        %3823 = vst [vmem:[%s636 + $0x61] sm:$0xff] %v3791
        %3824 = vst [vmem:[%s636 + $0x69] sm:$0xff] %v3792
        %3825 = vst [vmem:[%s636 + $0x79] sm:$0xff] %v3793
        %3826 = vst [vmem:[%s636 + $0x81] sm:$0xff] %v3794
        %3827 = vst [vmem:[%s636 + $0x91] sm:$0xff] %v3795
        %3828 = vst [vmem:[%s636 + $0x99] sm:$0xff] %v3796
        %3829 = vst [vmem:[%s636 + $0xa9] sm:$0xff] %v3797
        %3830 = vst [vmem:[%s636 + $0xb1] sm:$0xff] %v3798
        %3831 = vst [vmem:[%s636 + $0xc1] sm:$0xff] %v3799
        %3832 = vst [vmem:[%s636 + $0xc9] sm:$0xff] %v3800
        %3833 = vst [vmem:[%s636 + $0xd9] sm:$0xff] %v3801
        %3834 = vst [vmem:[%s636 + $0xe1] sm:$0xff] %v3802
        %3835 = vst [vmem:[%s636 + $0xf1] sm:$0xff] %v3803
        %3836 = vst [vmem:[%s636 + $0xf9] sm:$0xff] %v3804
        %3837 = vst [vmem:[%s636 + $0x109] sm:$0xff] %v3805
        %3838 = vst [vmem:[%s636 + $0x111] sm:$0xff] %v3806
        %3839 = vst [vmem:[%s636 + $0x121] sm:$0xff] %v3807
        %3840 = vst [vmem:[%s636 + $0x129] sm:$0xff] %v3808
        %3841 = vst [vmem:[%s636 + $0x139] sm:$0xff] %v3809
        %3842 = vst [vmem:[%s636 + $0x141] sm:$0xff] %v3810
        %3843 = vst [vmem:[%s636 + $0x151] sm:$0xff] %v3811
        %3844 = vst [vmem:[%s636 + $0x159] sm:$0xff] %v3812
        %3845 = vst [vmem:[%s636 + $0x169] sm:$0xff] %v3813
        %3846 = vst [vmem:[%s636 + $0x171] sm:$0xff] %v3814
        %v3847 = vld [vmem:[#allocation2] sm:$0xff]
        %v3848 = vld [vmem:[#allocation2 + $0x8] sm:$0xff]
        %v3849 = vld [vmem:[#allocation2 + $0x18] sm:$0xff]
        %v3850 = vld [vmem:[#allocation2 + $0x20] sm:$0xff]
        %v3851 = vld [vmem:[#allocation2 + $0x30] sm:$0xff]
        %v3852 = vld [vmem:[#allocation2 + $0x38] sm:$0xff]
        %v3853 = vld [vmem:[#allocation2 + $0x48] sm:$0xff]
        %v3854 = vld [vmem:[#allocation2 + $0x50] sm:$0xff]
        %v3855 = vld [vmem:[#allocation2 + $0x60] sm:$0xff]
        %v3856 = vld [vmem:[#allocation2 + $0x68] sm:$0xff]
        %v3857 = vld [vmem:[#allocation2 + $0x78] sm:$0xff]
        %v3858 = vld [vmem:[#allocation2 + $0x80] sm:$0xff]
        %v3859 = vld [vmem:[#allocation2 + $0x90] sm:$0xff]
        %v3860 = vld [vmem:[#allocation2 + $0x98] sm:$0xff]
        %v3861 = vld [vmem:[#allocation2 + $0xa8] sm:$0xff]
        %v3862 = vld [vmem:[#allocation2 + $0xb0] sm:$0xff]
        %v3863 = vld [vmem:[#allocation2 + $0xc0] sm:$0xff]
        %v3864 = vld [vmem:[#allocation2 + $0xc8] sm:$0xff]
        %v3865 = vld [vmem:[#allocation2 + $0xd8] sm:$0xff]
        %v3866 = vld [vmem:[#allocation2 + $0xe0] sm:$0xff]
        %v3867 = vld [vmem:[#allocation2 + $0xf0] sm:$0xff]
        %v3868 = vld [vmem:[#allocation2 + $0xf8] sm:$0xff]
        %v3869 = vld [vmem:[#allocation2 + $0x108] sm:$0xff]
        %v3870 = vld [vmem:[#allocation2 + $0x110] sm:$0xff]
        %v3871 = vld [vmem:[#allocation2 + $0x120] sm:$0xff]
        %v3872 = vld [vmem:[#allocation2 + $0x128] sm:$0xff]
        %v3873 = vld [vmem:[#allocation2 + $0x138] sm:$0xff]
        %v3874 = vld [vmem:[#allocation2 + $0x140] sm:$0xff]
        %v3875 = vld [vmem:[#allocation2 + $0x150] sm:$0xff]
        %v3876 = vld [vmem:[#allocation2 + $0x158] sm:$0xff]
        %v3877 = vld [vmem:[#allocation2 + $0x168] sm:$0xff]
        %v3878 = vld [vmem:[#allocation2 + $0x170] sm:$0xff]
        %v3879 = vpack.c.bf16 %v3847, %v3847
        %v3880 = vpack.c.bf16 %v3848, %v3848
        %v3881 = vpack.c.bf16 %v3849, %v3849
        %v3882 = vpack.c.bf16 %v3850, %v3850
        %v3883 = vpack.c.bf16 %v3851, %v3851
        %v3884 = vpack.c.bf16 %v3852, %v3852
        %v3885 = vpack.c.bf16 %v3853, %v3853
        %v3886 = vpack.c.bf16 %v3854, %v3854
        %v3887 = vpack.c.bf16 %v3855, %v3855
        %v3888 = vpack.c.bf16 %v3856, %v3856
        %v3889 = vpack.c.bf16 %v3857, %v3857
        %v3890 = vpack.c.bf16 %v3858, %v3858
        %v3891 = vpack.c.bf16 %v3859, %v3859
        %v3892 = vpack.c.bf16 %v3860, %v3860
        %v3893 = vpack.c.bf16 %v3861, %v3861
        %v3894 = vpack.c.bf16 %v3862, %v3862
        %v3895 = vpack.c.bf16 %v3863, %v3863
        %v3896 = vpack.c.bf16 %v3864, %v3864
        %v3897 = vpack.c.bf16 %v3865, %v3865
        %v3898 = vpack.c.bf16 %v3866, %v3866
        %v3899 = vpack.c.bf16 %v3867, %v3867
        %v3900 = vpack.c.bf16 %v3868, %v3868
        %v3901 = vpack.c.bf16 %v3869, %v3869
        %v3902 = vpack.c.bf16 %v3870, %v3870
        %v3903 = vpack.c.bf16 %v3871, %v3871
        %v3904 = vpack.c.bf16 %v3872, %v3872
        %v3905 = vpack.c.bf16 %v3873, %v3873
        %v3906 = vpack.c.bf16 %v3874, %v3874
        %v3907 = vpack.c.bf16 %v3875, %v3875
        %v3908 = vpack.c.bf16 %v3876, %v3876
        %v3909 = vpack.c.bf16 %v3877, %v3877
        %v3910 = vpack.c.bf16 %v3878, %v3878
        %v3911 = vld [vmem:[#allocation8] sm:$0xf]
        %v3912 = vld [vmem:[#allocation8 + $0x4] sm:$0xf]
        %v3913 = vld [vmem:[#allocation8 + $0x8] sm:$0xf]
        %v3914 = vld [vmem:[#allocation8 + $0xc] sm:$0xf]
        %v3915 = vld [vmem:[#allocation8 + $0x10] sm:$0xf]
        %v3916 = vld [vmem:[#allocation8 + $0x14] sm:$0xf]
        %v3917 = vld [vmem:[#allocation8 + $0x18] sm:$0xf]
        %v3918 = vld [vmem:[#allocation8 + $0x1c] sm:$0xf]
        %v3919 = vld [vmem:[#allocation8 + $0x20] sm:$0xf]
        %v3920 = vld [vmem:[#allocation8 + $0x24] sm:$0xf]
        %v3921 = vld [vmem:[#allocation8 + $0x28] sm:$0xf]
        %v3922 = vld [vmem:[#allocation8 + $0x2c] sm:$0xf]
        %v3923 = vld [vmem:[#allocation8 + $0x30] sm:$0xf]
        %v3924 = vld [vmem:[#allocation8 + $0x34] sm:$0xf]
        %v3925 = vld [vmem:[#allocation8 + $0x38] sm:$0xf]
        %v3926 = vld [vmem:[#allocation8 + $0x3c] sm:$0xf]
        %v3927 = vld [vmem:[#allocation2 + $0x1] sm:$0xff]
        %v3928 = vld [vmem:[#allocation2 + $0x9] sm:$0xff]
        %v3929 = vld [vmem:[#allocation2 + $0x19] sm:$0xff]
        %v3930 = vld [vmem:[#allocation2 + $0x21] sm:$0xff]
        %v3931 = vld [vmem:[#allocation2 + $0x31] sm:$0xff]
        %v3932 = vld [vmem:[#allocation2 + $0x39] sm:$0xff]
        %v3933 = vld [vmem:[#allocation2 + $0x49] sm:$0xff]
        %v3934 = vld [vmem:[#allocation2 + $0x51] sm:$0xff]
        %v3935 = vld [vmem:[#allocation2 + $0x61] sm:$0xff]
        %v3936 = vld [vmem:[#allocation2 + $0x69] sm:$0xff]
        %v3937 = vld [vmem:[#allocation2 + $0x79] sm:$0xff]
        %v3938 = vld [vmem:[#allocation2 + $0x81] sm:$0xff]
        %v3939 = vld [vmem:[#allocation2 + $0x91] sm:$0xff]
        %v3940 = vld [vmem:[#allocation2 + $0x99] sm:$0xff]
        %v3941 = vld [vmem:[#allocation2 + $0xa9] sm:$0xff]
        %v3942 = vld [vmem:[#allocation2 + $0xb1] sm:$0xff]
        %v3943 = vld [vmem:[#allocation2 + $0xc1] sm:$0xff]
        %v3944 = vld [vmem:[#allocation2 + $0xc9] sm:$0xff]
        %v3945 = vld [vmem:[#allocation2 + $0xd9] sm:$0xff]
        %v3946 = vld [vmem:[#allocation2 + $0xe1] sm:$0xff]
        %v3947 = vld [vmem:[#allocation2 + $0xf1] sm:$0xff]
        %v3948 = vld [vmem:[#allocation2 + $0xf9] sm:$0xff]
        %v3949 = vld [vmem:[#allocation2 + $0x109] sm:$0xff]
        %v3950 = vld [vmem:[#allocation2 + $0x111] sm:$0xff]
        %v3951 = vld [vmem:[#allocation2 + $0x121] sm:$0xff]
        %v3952 = vld [vmem:[#allocation2 + $0x129] sm:$0xff]
        %v3953 = vld [vmem:[#allocation2 + $0x139] sm:$0xff]
        %v3954 = vld [vmem:[#allocation2 + $0x141] sm:$0xff]
        %v3955 = vld [vmem:[#allocation2 + $0x151] sm:$0xff]
        %v3956 = vld [vmem:[#allocation2 + $0x159] sm:$0xff]
        %v3957 = vld [vmem:[#allocation2 + $0x169] sm:$0xff]
        %v3958 = vld [vmem:[#allocation2 + $0x171] sm:$0xff]
        %v3959 = vpack.c.bf16 %v3927, %v3927
        %v3960 = vpack.c.bf16 %v3928, %v3928
        %v3961 = vpack.c.bf16 %v3929, %v3929
        %v3962 = vpack.c.bf16 %v3930, %v3930
        %v3963 = vpack.c.bf16 %v3931, %v3931
        %v3964 = vpack.c.bf16 %v3932, %v3932
        %v3965 = vpack.c.bf16 %v3933, %v3933
        %v3966 = vpack.c.bf16 %v3934, %v3934
        %v3967 = vpack.c.bf16 %v3935, %v3935
        %v3968 = vpack.c.bf16 %v3936, %v3936
        %v3969 = vpack.c.bf16 %v3937, %v3937
        %v3970 = vpack.c.bf16 %v3938, %v3938
        %v3971 = vpack.c.bf16 %v3939, %v3939
        %v3972 = vpack.c.bf16 %v3940, %v3940
        %v3973 = vpack.c.bf16 %v3941, %v3941
        %v3974 = vpack.c.bf16 %v3942, %v3942
        %v3975 = vpack.c.bf16 %v3943, %v3943
        %v3976 = vpack.c.bf16 %v3944, %v3944
        %v3977 = vpack.c.bf16 %v3945, %v3945
        %v3978 = vpack.c.bf16 %v3946, %v3946
        %v3979 = vpack.c.bf16 %v3947, %v3947
        %v3980 = vpack.c.bf16 %v3948, %v3948
        %v3981 = vpack.c.bf16 %v3949, %v3949
        %v3982 = vpack.c.bf16 %v3950, %v3950
        %v3983 = vpack.c.bf16 %v3951, %v3951
        %v3984 = vpack.c.bf16 %v3952, %v3952
        %v3985 = vpack.c.bf16 %v3953, %v3953
        %v3986 = vpack.c.bf16 %v3954, %v3954
        %v3987 = vpack.c.bf16 %v3955, %v3955
        %v3988 = vpack.c.bf16 %v3956, %v3956
        %v3989 = vpack.c.bf16 %v3957, %v3957
        %v3990 = vpack.c.bf16 %v3958, %v3958
        %v3991 = vld [vmem:[#allocation8 + $0x40] sm:$0xf]
        %v3992 = vld [vmem:[#allocation8 + $0x44] sm:$0xf]
        %v3993 = vld [vmem:[#allocation8 + $0x48] sm:$0xf]
        %v3994 = vld [vmem:[#allocation8 + $0x4c] sm:$0xf]
        %v3995 = vld [vmem:[#allocation8 + $0x50] sm:$0xf]
        %v3996 = vld [vmem:[#allocation8 + $0x54] sm:$0xf]
        %v3997 = vld [vmem:[#allocation8 + $0x58] sm:$0xf]
        %v3998 = vld [vmem:[#allocation8 + $0x5c] sm:$0xf]
        %v3999 = vld [vmem:[#allocation8 + $0x60] sm:$0xf]
        %v4000 = vld [vmem:[#allocation8 + $0x64] sm:$0xf]
        %v4001 = vld [vmem:[#allocation8 + $0x68] sm:$0xf]
        %v4002 = vld [vmem:[#allocation8 + $0x6c] sm:$0xf]
        %v4003 = vld [vmem:[#allocation8 + $0x70] sm:$0xf]
        %v4004 = vld [vmem:[#allocation8 + $0x74] sm:$0xf]
        %v4005 = vld [vmem:[#allocation8 + $0x78] sm:$0xf]
        %v4006 = vld [vmem:[#allocation8 + $0x7c] sm:$0xf]
        %v4039 = vunpack.c.l.b16 %v3959
        %v4040 = vunpack.c.l.b16 %v3960
        %v4041 = vunpack.c.l.b16 %v3961
        %v4042 = vunpack.c.l.b16 %v3962
        %v4043 = vunpack.c.l.b16 %v3963
        %v4044 = vunpack.c.l.b16 %v3964
        %v4045 = vunpack.c.l.b16 %v3965
        %v4046 = vunpack.c.l.b16 %v3966
        %v4047 = vunpack.c.l.b16 %v3967
        %v4048 = vunpack.c.l.b16 %v3968
        %v4049 = vunpack.c.l.b16 %v3969
        %v4050 = vunpack.c.l.b16 %v3970
        %v4051 = vunpack.c.l.b16 %v3971
        %v4052 = vunpack.c.l.b16 %v3972
        %v4053 = vunpack.c.l.b16 %v3973
        %v4054 = vunpack.c.l.b16 %v3974
        %v4055 = vunpack.c.l.b16 %v3975
        %v4056 = vunpack.c.l.b16 %v3976
        %v4057 = vunpack.c.l.b16 %v3977
        %v4058 = vunpack.c.l.b16 %v3978
        %v4059 = vunpack.c.l.b16 %v3979
        %v4060 = vunpack.c.l.b16 %v3980
        %v4061 = vunpack.c.l.b16 %v3981
        %v4062 = vunpack.c.l.b16 %v3982
        %v4063 = vunpack.c.l.b16 %v3983
        %v4064 = vunpack.c.l.b16 %v3984
        %v4065 = vunpack.c.l.b16 %v3985
        %v4066 = vunpack.c.l.b16 %v3986
        %v4067 = vunpack.c.l.b16 %v3987
        %v4068 = vunpack.c.l.b16 %v3988
        %v4069 = vunpack.c.l.b16 %v3989
        %v4070 = vunpack.c.l.b16 %v3990
        %v4071 = vpack.c.b16 %v4040, %v4039
        %v4072 = vpack.c.b16 %v4042, %v4041
        %v4073 = vpack.c.b16 %v4044, %v4043
        %v4074 = vpack.c.b16 %v4046, %v4045
        %v4075 = vpack.c.b16 %v4048, %v4047
        %v4076 = vpack.c.b16 %v4050, %v4049
        %v4077 = vpack.c.b16 %v4052, %v4051
        %v4078 = vpack.c.b16 %v4054, %v4053
        %v4079 = vpack.c.b16 %v4056, %v4055
        %v4080 = vpack.c.b16 %v4058, %v4057
        %v4081 = vpack.c.b16 %v4060, %v4059
        %v4082 = vpack.c.b16 %v4062, %v4061
        %v4083 = vpack.c.b16 %v4064, %v4063
        %v4084 = vpack.c.b16 %v4066, %v4065
        %v4085 = vpack.c.b16 %v4068, %v4067
        %v4086 = vpack.c.b16 %v4070, %v4069
        %v4119 = vunpack.c.l.b16 %v3991
        %v4120 = vunpack.c.l.b16 %v3992
        %v4121 = vunpack.c.l.b16 %v3993
        %v4122 = vunpack.c.l.b16 %v3994
        %v4123 = vunpack.c.l.b16 %v3995
        %v4124 = vunpack.c.l.b16 %v3996
        %v4125 = vunpack.c.l.b16 %v3997
        %v4126 = vunpack.c.l.b16 %v3998
        %v4127 = vunpack.c.l.b16 %v3999
        %v4128 = vunpack.c.l.b16 %v4000
        %v4129 = vunpack.c.l.b16 %v4001
        %v4130 = vunpack.c.l.b16 %v4002
        %v4131 = vunpack.c.l.b16 %v4003
        %v4132 = vunpack.c.l.b16 %v4004
        %v4133 = vunpack.c.l.b16 %v4005
        %v4134 = vunpack.c.l.b16 %v4006
        %v4135 = vpack.c.b16 %v4120, %v4119
        %v4136 = vpack.c.b16 %v4122, %v4121
        %v4137 = vpack.c.b16 %v4124, %v4123
        %v4138 = vpack.c.b16 %v4126, %v4125
        %v4139 = vpack.c.b16 %v4128, %v4127
        %v4140 = vpack.c.b16 %v4130, %v4129
        %v4141 = vpack.c.b16 %v4132, %v4131
        %v4142 = vpack.c.b16 %v4134, %v4133
        %4151 = vmatpush.bf16.msra.mxu0 %v4142
        %4152 = vmatpush.bf16.msra.mxu0 %v4141
        %4153 = vmatpush.bf16.msra.mxu0 %v4140
        %4154 = vmatpush.bf16.msra.mxu0 %v4139
        %4155 = vmatpush.bf16.msra.mxu0 %v4138
        %4156 = vmatpush.bf16.msra.mxu0 %v4137
        %4157 = vmatpush.bf16.msra.mxu0 %v4136
        %4158 = vmatpush.bf16.msra.mxu0 %v4135
        %4159 = vmatmul.bf16.gmra.mxu0 %v4071
        %v4160 = vpop.f32.mrf.mxu0
        %v4161 = vadd.f32 0.0, %v4160
        %v4162 = vpop.f32.mrf.mxu0
        %v4163 = vadd.f32 0.0, %v4162
        %4164 = vmatmul.bf16.gmra.mxu0 %v4072
        %v4165 = vpop.f32.mrf.mxu0
        %v4166 = vadd.f32 0.0, %v4165
        %v4167 = vpop.f32.mrf.mxu0
        %v4168 = vadd.f32 0.0, %v4167
        %4169 = vmatmul.bf16.gmra.mxu0 %v4073
        %v4170 = vpop.f32.mrf.mxu0
        %v4171 = vadd.f32 0.0, %v4170
        %v4172 = vpop.f32.mrf.mxu0
        %v4173 = vadd.f32 0.0, %v4172
        %4174 = vmatmul.bf16.gmra.mxu0 %v4074
        %v4175 = vpop.f32.mrf.mxu0
        %v4176 = vadd.f32 0.0, %v4175
        %v4177 = vpop.f32.mrf.mxu0
        %v4178 = vadd.f32 0.0, %v4177
        %4179 = vmatmul.bf16.gmra.mxu0 %v4075
        %v4180 = vpop.f32.mrf.mxu0
        %v4181 = vadd.f32 0.0, %v4180
        %v4182 = vpop.f32.mrf.mxu0
        %v4183 = vadd.f32 0.0, %v4182
        %4184 = vmatmul.bf16.gmra.mxu0 %v4076
        %v4185 = vpop.f32.mrf.mxu0
        %v4186 = vadd.f32 0.0, %v4185
        %v4187 = vpop.f32.mrf.mxu0
        %v4188 = vadd.f32 0.0, %v4187
        %4189 = vmatmul.bf16.gmra.mxu0 %v4077
        %v4190 = vpop.f32.mrf.mxu0
        %v4191 = vadd.f32 0.0, %v4190
        %v4192 = vpop.f32.mrf.mxu0
        %v4193 = vadd.f32 0.0, %v4192
        %4194 = vmatmul.bf16.gmra.mxu0 %v4078
        %v4195 = vpop.f32.mrf.mxu0
        %v4196 = vadd.f32 0.0, %v4195
        %v4197 = vpop.f32.mrf.mxu0
        %v4198 = vadd.f32 0.0, %v4197
        %4199 = vmatmul.bf16.gmra.mxu0 %v4079
        %v4200 = vpop.f32.mrf.mxu0
        %v4201 = vadd.f32 0.0, %v4200
        %v4202 = vpop.f32.mrf.mxu0
        %v4203 = vadd.f32 0.0, %v4202
        %4204 = vmatmul.bf16.gmra.mxu0 %v4080
        %v4205 = vpop.f32.mrf.mxu0
        %v4206 = vadd.f32 0.0, %v4205
        %v4207 = vpop.f32.mrf.mxu0
        %v4208 = vadd.f32 0.0, %v4207
        %4209 = vmatmul.bf16.gmra.mxu0 %v4081
        %v4210 = vpop.f32.mrf.mxu0
        %v4211 = vadd.f32 0.0, %v4210
        %v4212 = vpop.f32.mrf.mxu0
        %v4213 = vadd.f32 0.0, %v4212
        %4214 = vmatmul.bf16.gmra.mxu0 %v4082
        %v4215 = vpop.f32.mrf.mxu0
        %v4216 = vadd.f32 0.0, %v4215
        %v4217 = vpop.f32.mrf.mxu0
        %v4218 = vadd.f32 0.0, %v4217
        %4219 = vmatmul.bf16.gmra.mxu0 %v4083
        %v4220 = vpop.f32.mrf.mxu0
        %v4221 = vadd.f32 0.0, %v4220
        %v4222 = vpop.f32.mrf.mxu0
        %v4223 = vadd.f32 0.0, %v4222
        %4224 = vmatmul.bf16.gmra.mxu0 %v4084
        %v4225 = vpop.f32.mrf.mxu0
        %v4226 = vadd.f32 0.0, %v4225
        %v4227 = vpop.f32.mrf.mxu0
        %v4228 = vadd.f32 0.0, %v4227
        %4229 = vmatmul.bf16.gmra.mxu0 %v4085
        %v4230 = vpop.f32.mrf.mxu0
        %v4231 = vadd.f32 0.0, %v4230
        %v4232 = vpop.f32.mrf.mxu0
        %v4233 = vadd.f32 0.0, %v4232
        %4234 = vmatmul.bf16.gmra.mxu0 %v4086
        %v4235 = vpop.f32.mrf.mxu0
        %v4236 = vadd.f32 0.0, %v4235
        %v4237 = vpop.f32.mrf.mxu0
        %v4238 = vadd.f32 0.0, %v4237
        %4239 = vdwg.mxu0
        %v4272 = vunpack.c.l.b16 %v3879
        %v4273 = vunpack.c.l.b16 %v3880
        %v4274 = vunpack.c.l.b16 %v3881
        %v4275 = vunpack.c.l.b16 %v3882
        %v4276 = vunpack.c.l.b16 %v3883
        %v4277 = vunpack.c.l.b16 %v3884
        %v4278 = vunpack.c.l.b16 %v3885
        %v4279 = vunpack.c.l.b16 %v3886
        %v4280 = vunpack.c.l.b16 %v3887
        %v4281 = vunpack.c.l.b16 %v3888
        %v4282 = vunpack.c.l.b16 %v3889
        %v4283 = vunpack.c.l.b16 %v3890
        %v4284 = vunpack.c.l.b16 %v3891
        %v4285 = vunpack.c.l.b16 %v3892
        %v4286 = vunpack.c.l.b16 %v3893
        %v4287 = vunpack.c.l.b16 %v3894
        %v4288 = vunpack.c.l.b16 %v3895
        %v4289 = vunpack.c.l.b16 %v3896
        %v4290 = vunpack.c.l.b16 %v3897
        %v4291 = vunpack.c.l.b16 %v3898
        %v4292 = vunpack.c.l.b16 %v3899
        %v4293 = vunpack.c.l.b16 %v3900
        %v4294 = vunpack.c.l.b16 %v3901
        %v4295 = vunpack.c.l.b16 %v3902
        %v4296 = vunpack.c.l.b16 %v3903
        %v4297 = vunpack.c.l.b16 %v3904
        %v4298 = vunpack.c.l.b16 %v3905
        %v4299 = vunpack.c.l.b16 %v3906
        %v4300 = vunpack.c.l.b16 %v3907
        %v4301 = vunpack.c.l.b16 %v3908
        %v4302 = vunpack.c.l.b16 %v3909
        %v4303 = vunpack.c.l.b16 %v3910
        %v4304 = vpack.c.b16 %v4273, %v4272
        %v4305 = vpack.c.b16 %v4275, %v4274
        %v4306 = vpack.c.b16 %v4277, %v4276
        %v4307 = vpack.c.b16 %v4279, %v4278
        %v4308 = vpack.c.b16 %v4281, %v4280
        %v4309 = vpack.c.b16 %v4283, %v4282
        %v4310 = vpack.c.b16 %v4285, %v4284
        %v4311 = vpack.c.b16 %v4287, %v4286
        %v4312 = vpack.c.b16 %v4289, %v4288
        %v4313 = vpack.c.b16 %v4291, %v4290
        %v4314 = vpack.c.b16 %v4293, %v4292
        %v4315 = vpack.c.b16 %v4295, %v4294
        %v4316 = vpack.c.b16 %v4297, %v4296
        %v4317 = vpack.c.b16 %v4299, %v4298
        %v4318 = vpack.c.b16 %v4301, %v4300
        %v4319 = vpack.c.b16 %v4303, %v4302
        %v4352 = vunpack.c.l.b16 %v3911
        %v4353 = vunpack.c.l.b16 %v3912
        %v4354 = vunpack.c.l.b16 %v3913
        %v4355 = vunpack.c.l.b16 %v3914
        %v4356 = vunpack.c.l.b16 %v3915
        %v4357 = vunpack.c.l.b16 %v3916
        %v4358 = vunpack.c.l.b16 %v3917
        %v4359 = vunpack.c.l.b16 %v3918
        %v4360 = vunpack.c.l.b16 %v3919
        %v4361 = vunpack.c.l.b16 %v3920
        %v4362 = vunpack.c.l.b16 %v3921
        %v4363 = vunpack.c.l.b16 %v3922
        %v4364 = vunpack.c.l.b16 %v3923
        %v4365 = vunpack.c.l.b16 %v3924
        %v4366 = vunpack.c.l.b16 %v3925
        %v4367 = vunpack.c.l.b16 %v3926
        %v4368 = vpack.c.b16 %v4353, %v4352
        %v4369 = vpack.c.b16 %v4355, %v4354
        %v4370 = vpack.c.b16 %v4357, %v4356
        %v4371 = vpack.c.b16 %v4359, %v4358
        %v4372 = vpack.c.b16 %v4361, %v4360
        %v4373 = vpack.c.b16 %v4363, %v4362
        %v4374 = vpack.c.b16 %v4365, %v4364
        %v4375 = vpack.c.b16 %v4367, %v4366
        %4384 = vmatpush.bf16.msra.mxu0 %v4375
        %4385 = vmatpush.bf16.msra.mxu0 %v4374
        %4386 = vmatpush.bf16.msra.mxu0 %v4373
        %4387 = vmatpush.bf16.msra.mxu0 %v4372
        %4388 = vmatpush.bf16.msra.mxu0 %v4371
        %4389 = vmatpush.bf16.msra.mxu0 %v4370
        %4390 = vmatpush.bf16.msra.mxu0 %v4369
        %4391 = vmatpush.bf16.msra.mxu0 %v4368
        %4392 = vmatmul.bf16.gmra.mxu0 %v4304
        %v4393 = vpop.f32.mrf.mxu0
        %v4394 = vadd.f32 %v4161, %v4393
        %v4395 = vpop.f32.mrf.mxu0
        %v4396 = vadd.f32 %v4163, %v4395
        %4397 = vmatmul.bf16.gmra.mxu0 %v4305
        %v4398 = vpop.f32.mrf.mxu0
        %v4399 = vadd.f32 %v4166, %v4398
        %v4400 = vpop.f32.mrf.mxu0
        %v4401 = vadd.f32 %v4168, %v4400
        %4402 = vmatmul.bf16.gmra.mxu0 %v4306
        %v4403 = vpop.f32.mrf.mxu0
        %v4404 = vadd.f32 %v4171, %v4403
        %v4405 = vpop.f32.mrf.mxu0
        %v4406 = vadd.f32 %v4173, %v4405
        %4407 = vmatmul.bf16.gmra.mxu0 %v4307
        %v4408 = vpop.f32.mrf.mxu0
        %v4409 = vadd.f32 %v4176, %v4408
        %v4410 = vpop.f32.mrf.mxu0
        %v4411 = vadd.f32 %v4178, %v4410
        %4412 = vmatmul.bf16.gmra.mxu0 %v4308
        %v4413 = vpop.f32.mrf.mxu0
        %v4414 = vadd.f32 %v4181, %v4413
        %v4415 = vpop.f32.mrf.mxu0
        %v4416 = vadd.f32 %v4183, %v4415
        %4417 = vmatmul.bf16.gmra.mxu0 %v4309
        %v4418 = vpop.f32.mrf.mxu0
        %v4419 = vadd.f32 %v4186, %v4418
        %v4420 = vpop.f32.mrf.mxu0
        %v4421 = vadd.f32 %v4188, %v4420
        %4422 = vmatmul.bf16.gmra.mxu0 %v4310
        %v4423 = vpop.f32.mrf.mxu0
        %v4424 = vadd.f32 %v4191, %v4423
        %v4425 = vpop.f32.mrf.mxu0
        %v4426 = vadd.f32 %v4193, %v4425
        %4427 = vmatmul.bf16.gmra.mxu0 %v4311
        %v4428 = vpop.f32.mrf.mxu0
        %v4429 = vadd.f32 %v4196, %v4428
        %v4430 = vpop.f32.mrf.mxu0
        %v4431 = vadd.f32 %v4198, %v4430
        %4432 = vmatmul.bf16.gmra.mxu0 %v4312
        %v4433 = vpop.f32.mrf.mxu0
        %v4434 = vadd.f32 %v4201, %v4433
        %v4435 = vpop.f32.mrf.mxu0
        %v4436 = vadd.f32 %v4203, %v4435
        %4437 = vmatmul.bf16.gmra.mxu0 %v4313
        %v4438 = vpop.f32.mrf.mxu0
        %v4439 = vadd.f32 %v4206, %v4438
        %v4440 = vpop.f32.mrf.mxu0
        %v4441 = vadd.f32 %v4208, %v4440
        %4442 = vmatmul.bf16.gmra.mxu0 %v4314
        %v4443 = vpop.f32.mrf.mxu0
        %v4444 = vadd.f32 %v4211, %v4443
        %v4445 = vpop.f32.mrf.mxu0
        %v4446 = vadd.f32 %v4213, %v4445
        %4447 = vmatmul.bf16.gmra.mxu0 %v4315
        %v4448 = vpop.f32.mrf.mxu0
        %v4449 = vadd.f32 %v4216, %v4448
        %v4450 = vpop.f32.mrf.mxu0
        %v4451 = vadd.f32 %v4218, %v4450
        %4452 = vmatmul.bf16.gmra.mxu0 %v4316
        %v4453 = vpop.f32.mrf.mxu0
        %v4454 = vadd.f32 %v4221, %v4453
        %v4455 = vpop.f32.mrf.mxu0
        %v4456 = vadd.f32 %v4223, %v4455
        %4457 = vmatmul.bf16.gmra.mxu0 %v4317
        %v4458 = vpop.f32.mrf.mxu0
        %v4459 = vadd.f32 %v4226, %v4458
        %v4460 = vpop.f32.mrf.mxu0
        %v4461 = vadd.f32 %v4228, %v4460
        %4462 = vmatmul.bf16.gmra.mxu0 %v4318
        %v4463 = vpop.f32.mrf.mxu0
        %v4464 = vadd.f32 %v4231, %v4463
        %v4465 = vpop.f32.mrf.mxu0
        %v4466 = vadd.f32 %v4233, %v4465
        %4467 = vmatmul.bf16.gmra.mxu0 %v4319
        %v4468 = vpop.f32.mrf.mxu0
        %v4469 = vadd.f32 %v4236, %v4468
        %v4470 = vpop.f32.mrf.mxu0
        %v4471 = vadd.f32 %v4238, %v4470
        %4472 = vdwg.mxu0
        %v4473 = vld [vmem:[#allocation2 + $0x2] sm:$0xff]
        %v4474 = vld [vmem:[#allocation2 + $0xa] sm:$0xff]
        %v4475 = vld [vmem:[#allocation2 + $0x1a] sm:$0xff]
        %v4476 = vld [vmem:[#allocation2 + $0x22] sm:$0xff]
        %v4477 = vld [vmem:[#allocation2 + $0x32] sm:$0xff]
        %v4478 = vld [vmem:[#allocation2 + $0x3a] sm:$0xff]
        %v4479 = vld [vmem:[#allocation2 + $0x4a] sm:$0xff]
        %v4480 = vld [vmem:[#allocation2 + $0x52] sm:$0xff]
        %v4481 = vld [vmem:[#allocation2 + $0x62] sm:$0xff]
        %v4482 = vld [vmem:[#allocation2 + $0x6a] sm:$0xff]
        %v4483 = vld [vmem:[#allocation2 + $0x7a] sm:$0xff]
        %v4484 = vld [vmem:[#allocation2 + $0x82] sm:$0xff]
        %v4485 = vld [vmem:[#allocation2 + $0x92] sm:$0xff]
        %v4486 = vld [vmem:[#allocation2 + $0x9a] sm:$0xff]
        %v4487 = vld [vmem:[#allocation2 + $0xaa] sm:$0xff]
        %v4488 = vld [vmem:[#allocation2 + $0xb2] sm:$0xff]
        %v4489 = vld [vmem:[#allocation2 + $0xc2] sm:$0xff]
        %v4490 = vld [vmem:[#allocation2 + $0xca] sm:$0xff]
        %v4491 = vld [vmem:[#allocation2 + $0xda] sm:$0xff]
        %v4492 = vld [vmem:[#allocation2 + $0xe2] sm:$0xff]
        %v4493 = vld [vmem:[#allocation2 + $0xf2] sm:$0xff]
        %v4494 = vld [vmem:[#allocation2 + $0xfa] sm:$0xff]
        %v4495 = vld [vmem:[#allocation2 + $0x10a] sm:$0xff]
        %v4496 = vld [vmem:[#allocation2 + $0x112] sm:$0xff]
        %v4497 = vld [vmem:[#allocation2 + $0x122] sm:$0xff]
        %v4498 = vld [vmem:[#allocation2 + $0x12a] sm:$0xff]
        %v4499 = vld [vmem:[#allocation2 + $0x13a] sm:$0xff]
        %v4500 = vld [vmem:[#allocation2 + $0x142] sm:$0xff]
        %v4501 = vld [vmem:[#allocation2 + $0x152] sm:$0xff]
        %v4502 = vld [vmem:[#allocation2 + $0x15a] sm:$0xff]
        %v4503 = vld [vmem:[#allocation2 + $0x16a] sm:$0xff]
        %v4504 = vld [vmem:[#allocation2 + $0x172] sm:$0xff]
        %v4505 = vpack.c.bf16 %v4473, %v4473
        %v4506 = vpack.c.bf16 %v4474, %v4474
        %v4507 = vpack.c.bf16 %v4475, %v4475
        %v4508 = vpack.c.bf16 %v4476, %v4476
        %v4509 = vpack.c.bf16 %v4477, %v4477
        %v4510 = vpack.c.bf16 %v4478, %v4478
        %v4511 = vpack.c.bf16 %v4479, %v4479
        %v4512 = vpack.c.bf16 %v4480, %v4480
        %v4513 = vpack.c.bf16 %v4481, %v4481
        %v4514 = vpack.c.bf16 %v4482, %v4482
        %v4515 = vpack.c.bf16 %v4483, %v4483
        %v4516 = vpack.c.bf16 %v4484, %v4484
        %v4517 = vpack.c.bf16 %v4485, %v4485
        %v4518 = vpack.c.bf16 %v4486, %v4486
        %v4519 = vpack.c.bf16 %v4487, %v4487
        %v4520 = vpack.c.bf16 %v4488, %v4488
        %v4521 = vpack.c.bf16 %v4489, %v4489
        %v4522 = vpack.c.bf16 %v4490, %v4490
        %v4523 = vpack.c.bf16 %v4491, %v4491
        %v4524 = vpack.c.bf16 %v4492, %v4492
        %v4525 = vpack.c.bf16 %v4493, %v4493
        %v4526 = vpack.c.bf16 %v4494, %v4494
        %v4527 = vpack.c.bf16 %v4495, %v4495
        %v4528 = vpack.c.bf16 %v4496, %v4496
        %v4529 = vpack.c.bf16 %v4497, %v4497
        %v4530 = vpack.c.bf16 %v4498, %v4498
        %v4531 = vpack.c.bf16 %v4499, %v4499
        %v4532 = vpack.c.bf16 %v4500, %v4500
        %v4533 = vpack.c.bf16 %v4501, %v4501
        %v4534 = vpack.c.bf16 %v4502, %v4502
        %v4535 = vpack.c.bf16 %v4503, %v4503
        %v4536 = vpack.c.bf16 %v4504, %v4504
        %v4537 = vld [vmem:[#allocation8 + $0x80] sm:$0xf]
        %v4538 = vld [vmem:[#allocation8 + $0x84] sm:$0xf]
        %v4539 = vld [vmem:[#allocation8 + $0x88] sm:$0xf]
        %v4540 = vld [vmem:[#allocation8 + $0x8c] sm:$0xf]
        %v4541 = vld [vmem:[#allocation8 + $0x90] sm:$0xf]
        %v4542 = vld [vmem:[#allocation8 + $0x94] sm:$0xf]
        %v4543 = vld [vmem:[#allocation8 + $0x98] sm:$0xf]
        %v4544 = vld [vmem:[#allocation8 + $0x9c] sm:$0xf]
        %v4545 = vld [vmem:[#allocation8 + $0xa0] sm:$0xf]
        %v4546 = vld [vmem:[#allocation8 + $0xa4] sm:$0xf]
        %v4547 = vld [vmem:[#allocation8 + $0xa8] sm:$0xf]
        %v4548 = vld [vmem:[#allocation8 + $0xac] sm:$0xf]
        %v4549 = vld [vmem:[#allocation8 + $0xb0] sm:$0xf]
        %v4550 = vld [vmem:[#allocation8 + $0xb4] sm:$0xf]
        %v4551 = vld [vmem:[#allocation8 + $0xb8] sm:$0xf]
        %v4552 = vld [vmem:[#allocation8 + $0xbc] sm:$0xf]
        %v4585 = vunpack.c.l.b16 %v4505
        %v4586 = vunpack.c.l.b16 %v4506
        %v4587 = vunpack.c.l.b16 %v4507
        %v4588 = vunpack.c.l.b16 %v4508
        %v4589 = vunpack.c.l.b16 %v4509
        %v4590 = vunpack.c.l.b16 %v4510
        %v4591 = vunpack.c.l.b16 %v4511
        %v4592 = vunpack.c.l.b16 %v4512
        %v4593 = vunpack.c.l.b16 %v4513
        %v4594 = vunpack.c.l.b16 %v4514
        %v4595 = vunpack.c.l.b16 %v4515
        %v4596 = vunpack.c.l.b16 %v4516
        %v4597 = vunpack.c.l.b16 %v4517
        %v4598 = vunpack.c.l.b16 %v4518
        %v4599 = vunpack.c.l.b16 %v4519
        %v4600 = vunpack.c.l.b16 %v4520
        %v4601 = vunpack.c.l.b16 %v4521
        %v4602 = vunpack.c.l.b16 %v4522
        %v4603 = vunpack.c.l.b16 %v4523
        %v4604 = vunpack.c.l.b16 %v4524
        %v4605 = vunpack.c.l.b16 %v4525
        %v4606 = vunpack.c.l.b16 %v4526
        %v4607 = vunpack.c.l.b16 %v4527
        %v4608 = vunpack.c.l.b16 %v4528
        %v4609 = vunpack.c.l.b16 %v4529
        %v4610 = vunpack.c.l.b16 %v4530
        %v4611 = vunpack.c.l.b16 %v4531
        %v4612 = vunpack.c.l.b16 %v4532
        %v4613 = vunpack.c.l.b16 %v4533
        %v4614 = vunpack.c.l.b16 %v4534
        %v4615 = vunpack.c.l.b16 %v4535
        %v4616 = vunpack.c.l.b16 %v4536
        %v4617 = vpack.c.b16 %v4586, %v4585
        %v4618 = vpack.c.b16 %v4588, %v4587
        %v4619 = vpack.c.b16 %v4590, %v4589
        %v4620 = vpack.c.b16 %v4592, %v4591
        %v4621 = vpack.c.b16 %v4594, %v4593
        %v4622 = vpack.c.b16 %v4596, %v4595
        %v4623 = vpack.c.b16 %v4598, %v4597
        %v4624 = vpack.c.b16 %v4600, %v4599
        %v4625 = vpack.c.b16 %v4602, %v4601
        %v4626 = vpack.c.b16 %v4604, %v4603
        %v4627 = vpack.c.b16 %v4606, %v4605
        %v4628 = vpack.c.b16 %v4608, %v4607
        %v4629 = vpack.c.b16 %v4610, %v4609
        %v4630 = vpack.c.b16 %v4612, %v4611
        %v4631 = vpack.c.b16 %v4614, %v4613
        %v4632 = vpack.c.b16 %v4616, %v4615
        %v4665 = vunpack.c.l.b16 %v4537
        %v4666 = vunpack.c.l.b16 %v4538
        %v4667 = vunpack.c.l.b16 %v4539
        %v4668 = vunpack.c.l.b16 %v4540
        %v4669 = vunpack.c.l.b16 %v4541
        %v4670 = vunpack.c.l.b16 %v4542
        %v4671 = vunpack.c.l.b16 %v4543
        %v4672 = vunpack.c.l.b16 %v4544
        %v4673 = vunpack.c.l.b16 %v4545
        %v4674 = vunpack.c.l.b16 %v4546
        %v4675 = vunpack.c.l.b16 %v4547
        %v4676 = vunpack.c.l.b16 %v4548
        %v4677 = vunpack.c.l.b16 %v4549
        %v4678 = vunpack.c.l.b16 %v4550
        %v4679 = vunpack.c.l.b16 %v4551
        %v4680 = vunpack.c.l.b16 %v4552
        %v4681 = vpack.c.b16 %v4666, %v4665
        %v4682 = vpack.c.b16 %v4668, %v4667
        %v4683 = vpack.c.b16 %v4670, %v4669
        %v4684 = vpack.c.b16 %v4672, %v4671
        %v4685 = vpack.c.b16 %v4674, %v4673
        %v4686 = vpack.c.b16 %v4676, %v4675
        %v4687 = vpack.c.b16 %v4678, %v4677
        %v4688 = vpack.c.b16 %v4680, %v4679
        %4697 = vmatpush.bf16.msra.mxu0 %v4688
        %4698 = vmatpush.bf16.msra.mxu0 %v4687
        %4699 = vmatpush.bf16.msra.mxu0 %v4686
        %4700 = vmatpush.bf16.msra.mxu0 %v4685
        %4701 = vmatpush.bf16.msra.mxu0 %v4684
        %4702 = vmatpush.bf16.msra.mxu0 %v4683
        %4703 = vmatpush.bf16.msra.mxu0 %v4682
        %4704 = vmatpush.bf16.msra.mxu0 %v4681
        %4705 = vmatmul.bf16.gmra.mxu0 %v4617
        %v4706 = vpop.f32.mrf.mxu0
        %v4707 = vadd.f32 0.0, %v4706
        %v4708 = vpop.f32.mrf.mxu0
        %v4709 = vadd.f32 0.0, %v4708
        %4710 = vmatmul.bf16.gmra.mxu0 %v4618
        %v4711 = vpop.f32.mrf.mxu0
        %v4712 = vadd.f32 0.0, %v4711
        %v4713 = vpop.f32.mrf.mxu0
        %v4714 = vadd.f32 0.0, %v4713
        %4715 = vmatmul.bf16.gmra.mxu0 %v4619
        %v4716 = vpop.f32.mrf.mxu0
        %v4717 = vadd.f32 0.0, %v4716
        %v4718 = vpop.f32.mrf.mxu0
        %v4719 = vadd.f32 0.0, %v4718
        %4720 = vmatmul.bf16.gmra.mxu0 %v4620
        %v4721 = vpop.f32.mrf.mxu0
        %v4722 = vadd.f32 0.0, %v4721
        %v4723 = vpop.f32.mrf.mxu0
        %v4724 = vadd.f32 0.0, %v4723
        %4725 = vmatmul.bf16.gmra.mxu0 %v4621
        %v4726 = vpop.f32.mrf.mxu0
        %v4727 = vadd.f32 0.0, %v4726
        %v4728 = vpop.f32.mrf.mxu0
        %v4729 = vadd.f32 0.0, %v4728
        %4730 = vmatmul.bf16.gmra.mxu0 %v4622
        %v4731 = vpop.f32.mrf.mxu0
        %v4732 = vadd.f32 0.0, %v4731
        %v4733 = vpop.f32.mrf.mxu0
        %v4734 = vadd.f32 0.0, %v4733
        %4735 = vmatmul.bf16.gmra.mxu0 %v4623
        %v4736 = vpop.f32.mrf.mxu0
        %v4737 = vadd.f32 0.0, %v4736
        %v4738 = vpop.f32.mrf.mxu0
        %v4739 = vadd.f32 0.0, %v4738
        %4740 = vmatmul.bf16.gmra.mxu0 %v4624
        %v4741 = vpop.f32.mrf.mxu0
        %v4742 = vadd.f32 0.0, %v4741
        %v4743 = vpop.f32.mrf.mxu0
        %v4744 = vadd.f32 0.0, %v4743
        %4745 = vmatmul.bf16.gmra.mxu0 %v4625
        %v4746 = vpop.f32.mrf.mxu0
        %v4747 = vadd.f32 0.0, %v4746
        %v4748 = vpop.f32.mrf.mxu0
        %v4749 = vadd.f32 0.0, %v4748
        %4750 = vmatmul.bf16.gmra.mxu0 %v4626
        %v4751 = vpop.f32.mrf.mxu0
        %v4752 = vadd.f32 0.0, %v4751
        %v4753 = vpop.f32.mrf.mxu0
        %v4754 = vadd.f32 0.0, %v4753
        %4755 = vmatmul.bf16.gmra.mxu0 %v4627
        %v4756 = vpop.f32.mrf.mxu0
        %v4757 = vadd.f32 0.0, %v4756
        %v4758 = vpop.f32.mrf.mxu0
        %v4759 = vadd.f32 0.0, %v4758
        %4760 = vmatmul.bf16.gmra.mxu0 %v4628
        %v4761 = vpop.f32.mrf.mxu0
        %v4762 = vadd.f32 0.0, %v4761
        %v4763 = vpop.f32.mrf.mxu0
        %v4764 = vadd.f32 0.0, %v4763
        %4765 = vmatmul.bf16.gmra.mxu0 %v4629
        %v4766 = vpop.f32.mrf.mxu0
        %v4767 = vadd.f32 0.0, %v4766
        %v4768 = vpop.f32.mrf.mxu0
        %v4769 = vadd.f32 0.0, %v4768
        %4770 = vmatmul.bf16.gmra.mxu0 %v4630
        %v4771 = vpop.f32.mrf.mxu0
        %v4772 = vadd.f32 0.0, %v4771
        %v4773 = vpop.f32.mrf.mxu0
        %v4774 = vadd.f32 0.0, %v4773
        %4775 = vmatmul.bf16.gmra.mxu0 %v4631
        %v4776 = vpop.f32.mrf.mxu0
        %v4777 = vadd.f32 0.0, %v4776
        %v4778 = vpop.f32.mrf.mxu0
        %v4779 = vadd.f32 0.0, %v4778
        %4780 = vmatmul.bf16.gmra.mxu0 %v4632
        %v4781 = vpop.f32.mrf.mxu0
        %v4782 = vadd.f32 0.0, %v4781
        %v4783 = vpop.f32.mrf.mxu0
        %v4784 = vadd.f32 0.0, %v4783
        %4785 = vdwg.mxu0
        %v4786 = vadd.f32 %v4394, %v4707
        %v4787 = vadd.f32 %v4396, %v4709
        %v4788 = vadd.f32 %v4399, %v4712
        %v4789 = vadd.f32 %v4401, %v4714
        %v4790 = vadd.f32 %v4404, %v4717
        %v4791 = vadd.f32 %v4406, %v4719
        %v4792 = vadd.f32 %v4409, %v4722
        %v4793 = vadd.f32 %v4411, %v4724
        %v4794 = vadd.f32 %v4414, %v4727
        %v4795 = vadd.f32 %v4416, %v4729
        %v4796 = vadd.f32 %v4419, %v4732
        %v4797 = vadd.f32 %v4421, %v4734
        %v4798 = vadd.f32 %v4424, %v4737
        %v4799 = vadd.f32 %v4426, %v4739
        %v4800 = vadd.f32 %v4429, %v4742
        %v4801 = vadd.f32 %v4431, %v4744
        %v4802 = vadd.f32 %v4434, %v4747
        %v4803 = vadd.f32 %v4436, %v4749
        %v4804 = vadd.f32 %v4439, %v4752
        %v4805 = vadd.f32 %v4441, %v4754
        %v4806 = vadd.f32 %v4444, %v4757
        %v4807 = vadd.f32 %v4446, %v4759
        %v4808 = vadd.f32 %v4449, %v4762
        %v4809 = vadd.f32 %v4451, %v4764
        %v4810 = vadd.f32 %v4454, %v4767
        %v4811 = vadd.f32 %v4456, %v4769
        %v4812 = vadd.f32 %v4459, %v4772
        %v4813 = vadd.f32 %v4461, %v4774
        %v4814 = vadd.f32 %v4464, %v4777
        %v4815 = vadd.f32 %v4466, %v4779
        %v4816 = vadd.f32 %v4469, %v4782
        %v4817 = vadd.f32 %v4471, %v4784
        %v4818 = vld [vmem:[%s636] sm:$0xff]
        %v4819 = vld [vmem:[%s636 + $0x8] sm:$0xff]
        %v4820 = vld [vmem:[%s636 + $0x18] sm:$0xff]
        %v4821 = vld [vmem:[%s636 + $0x20] sm:$0xff]
        %v4822 = vld [vmem:[%s636 + $0x30] sm:$0xff]
        %v4823 = vld [vmem:[%s636 + $0x38] sm:$0xff]
        %v4824 = vld [vmem:[%s636 + $0x48] sm:$0xff]
        %v4825 = vld [vmem:[%s636 + $0x50] sm:$0xff]
        %v4826 = vld [vmem:[%s636 + $0x60] sm:$0xff]
        %v4827 = vld [vmem:[%s636 + $0x68] sm:$0xff]
        %v4828 = vld [vmem:[%s636 + $0x78] sm:$0xff]
        %v4829 = vld [vmem:[%s636 + $0x80] sm:$0xff]
        %v4830 = vld [vmem:[%s636 + $0x90] sm:$0xff]
        %v4831 = vld [vmem:[%s636 + $0x98] sm:$0xff]
        %v4832 = vld [vmem:[%s636 + $0xa8] sm:$0xff]
        %v4833 = vld [vmem:[%s636 + $0xb0] sm:$0xff]
        %v4834 = vld [vmem:[%s636 + $0xc0] sm:$0xff]
        %v4835 = vld [vmem:[%s636 + $0xc8] sm:$0xff]
        %v4836 = vld [vmem:[%s636 + $0xd8] sm:$0xff]
        %v4837 = vld [vmem:[%s636 + $0xe0] sm:$0xff]
        %v4838 = vld [vmem:[%s636 + $0xf0] sm:$0xff]
        %v4839 = vld [vmem:[%s636 + $0xf8] sm:$0xff]
        %v4840 = vld [vmem:[%s636 + $0x108] sm:$0xff]
        %v4841 = vld [vmem:[%s636 + $0x110] sm:$0xff]
        %v4842 = vld [vmem:[%s636 + $0x120] sm:$0xff]
        %v4843 = vld [vmem:[%s636 + $0x128] sm:$0xff]
        %v4844 = vld [vmem:[%s636 + $0x138] sm:$0xff]
        %v4845 = vld [vmem:[%s636 + $0x140] sm:$0xff]
        %v4846 = vld [vmem:[%s636 + $0x150] sm:$0xff]
        %v4847 = vld [vmem:[%s636 + $0x158] sm:$0xff]
        %v4848 = vld [vmem:[%s636 + $0x168] sm:$0xff]
        %v4849 = vld [vmem:[%s636 + $0x170] sm:$0xff]
        %v4850 = vpack.c.bf16 %v4818, %v4818
        %v4851 = vpack.c.bf16 %v4819, %v4819
        %v4852 = vpack.c.bf16 %v4820, %v4820
        %v4853 = vpack.c.bf16 %v4821, %v4821
        %v4854 = vpack.c.bf16 %v4822, %v4822
        %v4855 = vpack.c.bf16 %v4823, %v4823
        %v4856 = vpack.c.bf16 %v4824, %v4824
        %v4857 = vpack.c.bf16 %v4825, %v4825
        %v4858 = vpack.c.bf16 %v4826, %v4826
        %v4859 = vpack.c.bf16 %v4827, %v4827
        %v4860 = vpack.c.bf16 %v4828, %v4828
        %v4861 = vpack.c.bf16 %v4829, %v4829
        %v4862 = vpack.c.bf16 %v4830, %v4830
        %v4863 = vpack.c.bf16 %v4831, %v4831
        %v4864 = vpack.c.bf16 %v4832, %v4832
        %v4865 = vpack.c.bf16 %v4833, %v4833
        %v4866 = vpack.c.bf16 %v4834, %v4834
        %v4867 = vpack.c.bf16 %v4835, %v4835
        %v4868 = vpack.c.bf16 %v4836, %v4836
        %v4869 = vpack.c.bf16 %v4837, %v4837
        %v4870 = vpack.c.bf16 %v4838, %v4838
        %v4871 = vpack.c.bf16 %v4839, %v4839
        %v4872 = vpack.c.bf16 %v4840, %v4840
        %v4873 = vpack.c.bf16 %v4841, %v4841
        %v4874 = vpack.c.bf16 %v4842, %v4842
        %v4875 = vpack.c.bf16 %v4843, %v4843
        %v4876 = vpack.c.bf16 %v4844, %v4844
        %v4877 = vpack.c.bf16 %v4845, %v4845
        %v4878 = vpack.c.bf16 %v4846, %v4846
        %v4879 = vpack.c.bf16 %v4847, %v4847
        %v4880 = vpack.c.bf16 %v4848, %v4848
        %v4881 = vpack.c.bf16 %v4849, %v4849
        %v4882 = vld [vmem:[#allocation8 + $0xc0] sm:$0xf]
        %v4883 = vld [vmem:[#allocation8 + $0xc4] sm:$0xf]
        %v4884 = vld [vmem:[#allocation8 + $0xc8] sm:$0xf]
        %v4885 = vld [vmem:[#allocation8 + $0xcc] sm:$0xf]
        %v4886 = vld [vmem:[#allocation8 + $0xd0] sm:$0xf]
        %v4887 = vld [vmem:[#allocation8 + $0xd4] sm:$0xf]
        %v4888 = vld [vmem:[#allocation8 + $0xd8] sm:$0xf]
        %v4889 = vld [vmem:[#allocation8 + $0xdc] sm:$0xf]
        %v4890 = vld [vmem:[#allocation8 + $0xe0] sm:$0xf]
        %v4891 = vld [vmem:[#allocation8 + $0xe4] sm:$0xf]
        %v4892 = vld [vmem:[#allocation8 + $0xe8] sm:$0xf]
        %v4893 = vld [vmem:[#allocation8 + $0xec] sm:$0xf]
        %v4894 = vld [vmem:[#allocation8 + $0xf0] sm:$0xf]
        %v4895 = vld [vmem:[#allocation8 + $0xf4] sm:$0xf]
        %v4896 = vld [vmem:[#allocation8 + $0xf8] sm:$0xf]
        %v4897 = vld [vmem:[#allocation8 + $0xfc] sm:$0xf]
        %v4930 = vunpack.c.l.b16 %v4850
        %v4931 = vunpack.c.l.b16 %v4851
        %v4932 = vunpack.c.l.b16 %v4852
        %v4933 = vunpack.c.l.b16 %v4853
        %v4934 = vunpack.c.l.b16 %v4854
        %v4935 = vunpack.c.l.b16 %v4855
        %v4936 = vunpack.c.l.b16 %v4856
        %v4937 = vunpack.c.l.b16 %v4857
        %v4938 = vunpack.c.l.b16 %v4858
        %v4939 = vunpack.c.l.b16 %v4859
        %v4940 = vunpack.c.l.b16 %v4860
        %v4941 = vunpack.c.l.b16 %v4861
        %v4942 = vunpack.c.l.b16 %v4862
        %v4943 = vunpack.c.l.b16 %v4863
        %v4944 = vunpack.c.l.b16 %v4864
        %v4945 = vunpack.c.l.b16 %v4865
        %v4946 = vunpack.c.l.b16 %v4866
        %v4947 = vunpack.c.l.b16 %v4867
        %v4948 = vunpack.c.l.b16 %v4868
        %v4949 = vunpack.c.l.b16 %v4869
        %v4950 = vunpack.c.l.b16 %v4870
        %v4951 = vunpack.c.l.b16 %v4871
        %v4952 = vunpack.c.l.b16 %v4872
        %v4953 = vunpack.c.l.b16 %v4873
        %v4954 = vunpack.c.l.b16 %v4874
        %v4955 = vunpack.c.l.b16 %v4875
        %v4956 = vunpack.c.l.b16 %v4876
        %v4957 = vunpack.c.l.b16 %v4877
        %v4958 = vunpack.c.l.b16 %v4878
        %v4959 = vunpack.c.l.b16 %v4879
        %v4960 = vunpack.c.l.b16 %v4880
        %v4961 = vunpack.c.l.b16 %v4881
        %v4962 = vpack.c.b16 %v4931, %v4930
        %v4963 = vpack.c.b16 %v4933, %v4932
        %v4964 = vpack.c.b16 %v4935, %v4934
        %v4965 = vpack.c.b16 %v4937, %v4936
        %v4966 = vpack.c.b16 %v4939, %v4938
        %v4967 = vpack.c.b16 %v4941, %v4940
        %v4968 = vpack.c.b16 %v4943, %v4942
        %v4969 = vpack.c.b16 %v4945, %v4944
        %v4970 = vpack.c.b16 %v4947, %v4946
        %v4971 = vpack.c.b16 %v4949, %v4948
        %v4972 = vpack.c.b16 %v4951, %v4950
        %v4973 = vpack.c.b16 %v4953, %v4952
        %v4974 = vpack.c.b16 %v4955, %v4954
        %v4975 = vpack.c.b16 %v4957, %v4956
        %v4976 = vpack.c.b16 %v4959, %v4958
        %v4977 = vpack.c.b16 %v4961, %v4960
        %v5010 = vunpack.c.l.b16 %v4882
        %v5011 = vunpack.c.l.b16 %v4883
        %v5012 = vunpack.c.l.b16 %v4884
        %v5013 = vunpack.c.l.b16 %v4885
        %v5014 = vunpack.c.l.b16 %v4886
        %v5015 = vunpack.c.l.b16 %v4887
        %v5016 = vunpack.c.l.b16 %v4888
        %v5017 = vunpack.c.l.b16 %v4889
        %v5018 = vunpack.c.l.b16 %v4890
        %v5019 = vunpack.c.l.b16 %v4891
        %v5020 = vunpack.c.l.b16 %v4892
        %v5021 = vunpack.c.l.b16 %v4893
        %v5022 = vunpack.c.l.b16 %v4894
        %v5023 = vunpack.c.l.b16 %v4895
        %v5024 = vunpack.c.l.b16 %v4896
        %v5025 = vunpack.c.l.b16 %v4897
        %v5026 = vpack.c.b16 %v5011, %v5010
        %v5027 = vpack.c.b16 %v5013, %v5012
        %v5028 = vpack.c.b16 %v5015, %v5014
        %v5029 = vpack.c.b16 %v5017, %v5016
        %v5030 = vpack.c.b16 %v5019, %v5018
        %v5031 = vpack.c.b16 %v5021, %v5020
        %v5032 = vpack.c.b16 %v5023, %v5022
        %v5033 = vpack.c.b16 %v5025, %v5024
        %5042 = vmatpush.bf16.msra.mxu0 %v5033
        %5043 = vmatpush.bf16.msra.mxu0 %v5032
        %5044 = vmatpush.bf16.msra.mxu0 %v5031
        %5045 = vmatpush.bf16.msra.mxu0 %v5030
        %5046 = vmatpush.bf16.msra.mxu0 %v5029
        %5047 = vmatpush.bf16.msra.mxu0 %v5028
        %5048 = vmatpush.bf16.msra.mxu0 %v5027
        %5049 = vmatpush.bf16.msra.mxu0 %v5026
        %5050 = vmatmul.bf16.gmra.mxu0 %v4962
        %v5051 = vpop.f32.mrf.mxu0
        %v5052 = vadd.f32 0.0, %v5051
        %v5053 = vpop.f32.mrf.mxu0
        %v5054 = vadd.f32 0.0, %v5053
        %5055 = vmatmul.bf16.gmra.mxu0 %v4963
        %v5056 = vpop.f32.mrf.mxu0
        %v5057 = vadd.f32 0.0, %v5056
        %v5058 = vpop.f32.mrf.mxu0
        %v5059 = vadd.f32 0.0, %v5058
        %5060 = vmatmul.bf16.gmra.mxu0 %v4964
        %v5061 = vpop.f32.mrf.mxu0
        %v5062 = vadd.f32 0.0, %v5061
        %v5063 = vpop.f32.mrf.mxu0
        %v5064 = vadd.f32 0.0, %v5063
        %5065 = vmatmul.bf16.gmra.mxu0 %v4965
        %v5066 = vpop.f32.mrf.mxu0
        %v5067 = vadd.f32 0.0, %v5066
        %v5068 = vpop.f32.mrf.mxu0
        %v5069 = vadd.f32 0.0, %v5068
        %5070 = vmatmul.bf16.gmra.mxu0 %v4966
        %v5071 = vpop.f32.mrf.mxu0
        %v5072 = vadd.f32 0.0, %v5071
        %v5073 = vpop.f32.mrf.mxu0
        %v5074 = vadd.f32 0.0, %v5073
        %5075 = vmatmul.bf16.gmra.mxu0 %v4967
        %v5076 = vpop.f32.mrf.mxu0
        %v5077 = vadd.f32 0.0, %v5076
        %v5078 = vpop.f32.mrf.mxu0
        %v5079 = vadd.f32 0.0, %v5078
        %5080 = vmatmul.bf16.gmra.mxu0 %v4968
        %v5081 = vpop.f32.mrf.mxu0
        %v5082 = vadd.f32 0.0, %v5081
        %v5083 = vpop.f32.mrf.mxu0
        %v5084 = vadd.f32 0.0, %v5083
        %5085 = vmatmul.bf16.gmra.mxu0 %v4969
        %v5086 = vpop.f32.mrf.mxu0
        %v5087 = vadd.f32 0.0, %v5086
        %v5088 = vpop.f32.mrf.mxu0
        %v5089 = vadd.f32 0.0, %v5088
        %5090 = vmatmul.bf16.gmra.mxu0 %v4970
        %v5091 = vpop.f32.mrf.mxu0
        %v5092 = vadd.f32 0.0, %v5091
        %v5093 = vpop.f32.mrf.mxu0
        %v5094 = vadd.f32 0.0, %v5093
        %5095 = vmatmul.bf16.gmra.mxu0 %v4971
        %v5096 = vpop.f32.mrf.mxu0
        %v5097 = vadd.f32 0.0, %v5096
        %v5098 = vpop.f32.mrf.mxu0
        %v5099 = vadd.f32 0.0, %v5098
        %5100 = vmatmul.bf16.gmra.mxu0 %v4972
        %v5101 = vpop.f32.mrf.mxu0
        %v5102 = vadd.f32 0.0, %v5101
        %v5103 = vpop.f32.mrf.mxu0
        %v5104 = vadd.f32 0.0, %v5103
        %5105 = vmatmul.bf16.gmra.mxu0 %v4973
        %v5106 = vpop.f32.mrf.mxu0
        %v5107 = vadd.f32 0.0, %v5106
        %v5108 = vpop.f32.mrf.mxu0
        %v5109 = vadd.f32 0.0, %v5108
        %5110 = vmatmul.bf16.gmra.mxu0 %v4974
        %v5111 = vpop.f32.mrf.mxu0
        %v5112 = vadd.f32 0.0, %v5111
        %v5113 = vpop.f32.mrf.mxu0
        %v5114 = vadd.f32 0.0, %v5113
        %5115 = vmatmul.bf16.gmra.mxu0 %v4975
        %v5116 = vpop.f32.mrf.mxu0
        %v5117 = vadd.f32 0.0, %v5116
        %v5118 = vpop.f32.mrf.mxu0
        %v5119 = vadd.f32 0.0, %v5118
        %5120 = vmatmul.bf16.gmra.mxu0 %v4976
        %v5121 = vpop.f32.mrf.mxu0
        %v5122 = vadd.f32 0.0, %v5121
        %v5123 = vpop.f32.mrf.mxu0
        %v5124 = vadd.f32 0.0, %v5123
        %5125 = vmatmul.bf16.gmra.mxu0 %v4977
        %v5126 = vpop.f32.mrf.mxu0
        %v5127 = vadd.f32 0.0, %v5126
        %v5128 = vpop.f32.mrf.mxu0
        %v5129 = vadd.f32 0.0, %v5128
        %5130 = vdwg.mxu0
        %v5131 = vadd.f32 %v4786, %v5052
        %v5132 = vadd.f32 %v4787, %v5054
        %v5133 = vadd.f32 %v4788, %v5057
        %v5134 = vadd.f32 %v4789, %v5059
        %v5135 = vadd.f32 %v4790, %v5062
        %v5136 = vadd.f32 %v4791, %v5064
        %v5137 = vadd.f32 %v4792, %v5067
        %v5138 = vadd.f32 %v4793, %v5069
        %v5139 = vadd.f32 %v4794, %v5072
        %v5140 = vadd.f32 %v4795, %v5074
        %v5141 = vadd.f32 %v4796, %v5077
        %v5142 = vadd.f32 %v4797, %v5079
        %v5143 = vadd.f32 %v4798, %v5082
        %v5144 = vadd.f32 %v4799, %v5084
        %v5145 = vadd.f32 %v4800, %v5087
        %v5146 = vadd.f32 %v4801, %v5089
        %v5147 = vadd.f32 %v4802, %v5092
        %v5148 = vadd.f32 %v4803, %v5094
        %v5149 = vadd.f32 %v4804, %v5097
        %v5150 = vadd.f32 %v4805, %v5099
        %v5151 = vadd.f32 %v4806, %v5102
        %v5152 = vadd.f32 %v4807, %v5104
        %v5153 = vadd.f32 %v4808, %v5107
        %v5154 = vadd.f32 %v4809, %v5109
        %v5155 = vadd.f32 %v4810, %v5112
        %v5156 = vadd.f32 %v4811, %v5114
        %v5157 = vadd.f32 %v4812, %v5117
        %v5158 = vadd.f32 %v4813, %v5119
        %v5159 = vadd.f32 %v4814, %v5122
        %v5160 = vadd.f32 %v4815, %v5124
        %v5161 = vadd.f32 %v4816, %v5127
        %v5162 = vadd.f32 %v4817, %v5129
        %v5163 = vld [vmem:[%s636 + $0x1] sm:$0xff]
        %v5164 = vld [vmem:[%s636 + $0x9] sm:$0xff]
        %v5165 = vld [vmem:[%s636 + $0x19] sm:$0xff]
        %v5166 = vld [vmem:[%s636 + $0x21] sm:$0xff]
        %v5167 = vld [vmem:[%s636 + $0x31] sm:$0xff]
        %v5168 = vld [vmem:[%s636 + $0x39] sm:$0xff]
        %v5169 = vld [vmem:[%s636 + $0x49] sm:$0xff]
        %v5170 = vld [vmem:[%s636 + $0x51] sm:$0xff]
        %v5171 = vld [vmem:[%s636 + $0x61] sm:$0xff]
        %v5172 = vld [vmem:[%s636 + $0x69] sm:$0xff]
        %v5173 = vld [vmem:[%s636 + $0x79] sm:$0xff]
        %v5174 = vld [vmem:[%s636 + $0x81] sm:$0xff]
        %v5175 = vld [vmem:[%s636 + $0x91] sm:$0xff]
        %v5176 = vld [vmem:[%s636 + $0x99] sm:$0xff]
        %v5177 = vld [vmem:[%s636 + $0xa9] sm:$0xff]
        %v5178 = vld [vmem:[%s636 + $0xb1] sm:$0xff]
        %v5179 = vld [vmem:[%s636 + $0xc1] sm:$0xff]
        %v5180 = vld [vmem:[%s636 + $0xc9] sm:$0xff]
        %v5181 = vld [vmem:[%s636 + $0xd9] sm:$0xff]
        %v5182 = vld [vmem:[%s636 + $0xe1] sm:$0xff]
        %v5183 = vld [vmem:[%s636 + $0xf1] sm:$0xff]
        %v5184 = vld [vmem:[%s636 + $0xf9] sm:$0xff]
        %v5185 = vld [vmem:[%s636 + $0x109] sm:$0xff]
        %v5186 = vld [vmem:[%s636 + $0x111] sm:$0xff]
        %v5187 = vld [vmem:[%s636 + $0x121] sm:$0xff]
        %v5188 = vld [vmem:[%s636 + $0x129] sm:$0xff]
        %v5189 = vld [vmem:[%s636 + $0x139] sm:$0xff]
        %v5190 = vld [vmem:[%s636 + $0x141] sm:$0xff]
        %v5191 = vld [vmem:[%s636 + $0x151] sm:$0xff]
        %v5192 = vld [vmem:[%s636 + $0x159] sm:$0xff]
        %v5193 = vld [vmem:[%s636 + $0x169] sm:$0xff]
        %v5194 = vld [vmem:[%s636 + $0x171] sm:$0xff]
        %v5195 = vpack.c.bf16 %v5163, %v5163
        %v5196 = vpack.c.bf16 %v5164, %v5164
        %v5197 = vpack.c.bf16 %v5165, %v5165
        %v5198 = vpack.c.bf16 %v5166, %v5166
        %v5199 = vpack.c.bf16 %v5167, %v5167
        %v5200 = vpack.c.bf16 %v5168, %v5168
        %v5201 = vpack.c.bf16 %v5169, %v5169
        %v5202 = vpack.c.bf16 %v5170, %v5170
        %v5203 = vpack.c.bf16 %v5171, %v5171
        %v5204 = vpack.c.bf16 %v5172, %v5172
        %v5205 = vpack.c.bf16 %v5173, %v5173
        %v5206 = vpack.c.bf16 %v5174, %v5174
        %v5207 = vpack.c.bf16 %v5175, %v5175
        %v5208 = vpack.c.bf16 %v5176, %v5176
        %v5209 = vpack.c.bf16 %v5177, %v5177
        %v5210 = vpack.c.bf16 %v5178, %v5178
        %v5211 = vpack.c.bf16 %v5179, %v5179
        %v5212 = vpack.c.bf16 %v5180, %v5180
        %v5213 = vpack.c.bf16 %v5181, %v5181
        %v5214 = vpack.c.bf16 %v5182, %v5182
        %v5215 = vpack.c.bf16 %v5183, %v5183
        %v5216 = vpack.c.bf16 %v5184, %v5184
        %v5217 = vpack.c.bf16 %v5185, %v5185
        %v5218 = vpack.c.bf16 %v5186, %v5186
        %v5219 = vpack.c.bf16 %v5187, %v5187
        %v5220 = vpack.c.bf16 %v5188, %v5188
        %v5221 = vpack.c.bf16 %v5189, %v5189
        %v5222 = vpack.c.bf16 %v5190, %v5190
        %v5223 = vpack.c.bf16 %v5191, %v5191
        %v5224 = vpack.c.bf16 %v5192, %v5192
        %v5225 = vpack.c.bf16 %v5193, %v5193
        %v5226 = vpack.c.bf16 %v5194, %v5194
        %v5227 = vld [vmem:[#allocation8 + $0x100] sm:$0xf]
        %v5228 = vld [vmem:[#allocation8 + $0x104] sm:$0xf]
        %v5229 = vld [vmem:[#allocation8 + $0x108] sm:$0xf]
        %v5230 = vld [vmem:[#allocation8 + $0x10c] sm:$0xf]
        %v5231 = vld [vmem:[#allocation8 + $0x110] sm:$0xf]
        %v5232 = vld [vmem:[#allocation8 + $0x114] sm:$0xf]
        %v5233 = vld [vmem:[#allocation8 + $0x118] sm:$0xf]
        %v5234 = vld [vmem:[#allocation8 + $0x11c] sm:$0xf]
        %v5235 = vld [vmem:[#allocation8 + $0x120] sm:$0xf]
        %v5236 = vld [vmem:[#allocation8 + $0x124] sm:$0xf]
        %v5237 = vld [vmem:[#allocation8 + $0x128] sm:$0xf]
        %v5238 = vld [vmem:[#allocation8 + $0x12c] sm:$0xf]
        %v5239 = vld [vmem:[#allocation8 + $0x130] sm:$0xf]
        %v5240 = vld [vmem:[#allocation8 + $0x134] sm:$0xf]
        %v5241 = vld [vmem:[#allocation8 + $0x138] sm:$0xf]
        %v5242 = vld [vmem:[#allocation8 + $0x13c] sm:$0xf]
        %v5275 = vunpack.c.l.b16 %v5195
        %v5276 = vunpack.c.l.b16 %v5196
        %v5277 = vunpack.c.l.b16 %v5197
        %v5278 = vunpack.c.l.b16 %v5198
        %v5279 = vunpack.c.l.b16 %v5199
        %v5280 = vunpack.c.l.b16 %v5200
        %v5281 = vunpack.c.l.b16 %v5201
        %v5282 = vunpack.c.l.b16 %v5202
        %v5283 = vunpack.c.l.b16 %v5203
        %v5284 = vunpack.c.l.b16 %v5204
        %v5285 = vunpack.c.l.b16 %v5205
        %v5286 = vunpack.c.l.b16 %v5206
        %v5287 = vunpack.c.l.b16 %v5207
        %v5288 = vunpack.c.l.b16 %v5208
        %v5289 = vunpack.c.l.b16 %v5209
        %v5290 = vunpack.c.l.b16 %v5210
        %v5291 = vunpack.c.l.b16 %v5211
        %v5292 = vunpack.c.l.b16 %v5212
        %v5293 = vunpack.c.l.b16 %v5213
        %v5294 = vunpack.c.l.b16 %v5214
        %v5295 = vunpack.c.l.b16 %v5215
        %v5296 = vunpack.c.l.b16 %v5216
        %v5297 = vunpack.c.l.b16 %v5217
        %v5298 = vunpack.c.l.b16 %v5218
        %v5299 = vunpack.c.l.b16 %v5219
        %v5300 = vunpack.c.l.b16 %v5220
        %v5301 = vunpack.c.l.b16 %v5221
        %v5302 = vunpack.c.l.b16 %v5222
        %v5303 = vunpack.c.l.b16 %v5223
        %v5304 = vunpack.c.l.b16 %v5224
        %v5305 = vunpack.c.l.b16 %v5225
        %v5306 = vunpack.c.l.b16 %v5226
        %v5307 = vpack.c.b16 %v5276, %v5275
        %v5308 = vpack.c.b16 %v5278, %v5277
        %v5309 = vpack.c.b16 %v5280, %v5279
        %v5310 = vpack.c.b16 %v5282, %v5281
        %v5311 = vpack.c.b16 %v5284, %v5283
        %v5312 = vpack.c.b16 %v5286, %v5285
        %v5313 = vpack.c.b16 %v5288, %v5287
        %v5314 = vpack.c.b16 %v5290, %v5289
        %v5315 = vpack.c.b16 %v5292, %v5291
        %v5316 = vpack.c.b16 %v5294, %v5293
        %v5317 = vpack.c.b16 %v5296, %v5295
        %v5318 = vpack.c.b16 %v5298, %v5297
        %v5319 = vpack.c.b16 %v5300, %v5299
        %v5320 = vpack.c.b16 %v5302, %v5301
        %v5321 = vpack.c.b16 %v5304, %v5303
        %v5322 = vpack.c.b16 %v5306, %v5305
        %v5355 = vunpack.c.l.b16 %v5227
        %v5356 = vunpack.c.l.b16 %v5228
        %v5357 = vunpack.c.l.b16 %v5229
        %v5358 = vunpack.c.l.b16 %v5230
        %v5359 = vunpack.c.l.b16 %v5231
        %v5360 = vunpack.c.l.b16 %v5232
        %v5361 = vunpack.c.l.b16 %v5233
        %v5362 = vunpack.c.l.b16 %v5234
        %v5363 = vunpack.c.l.b16 %v5235
        %v5364 = vunpack.c.l.b16 %v5236
        %v5365 = vunpack.c.l.b16 %v5237
        %v5366 = vunpack.c.l.b16 %v5238
        %v5367 = vunpack.c.l.b16 %v5239
        %v5368 = vunpack.c.l.b16 %v5240
        %v5369 = vunpack.c.l.b16 %v5241
        %v5370 = vunpack.c.l.b16 %v5242
        %v5371 = vpack.c.b16 %v5356, %v5355
        %v5372 = vpack.c.b16 %v5358, %v5357
        %v5373 = vpack.c.b16 %v5360, %v5359
        %v5374 = vpack.c.b16 %v5362, %v5361
        %v5375 = vpack.c.b16 %v5364, %v5363
        %v5376 = vpack.c.b16 %v5366, %v5365
        %v5377 = vpack.c.b16 %v5368, %v5367
        %v5378 = vpack.c.b16 %v5370, %v5369
        %5387 = vmatpush.bf16.msra.mxu0 %v5378
        %5388 = vmatpush.bf16.msra.mxu0 %v5377
        %5389 = vmatpush.bf16.msra.mxu0 %v5376
        %5390 = vmatpush.bf16.msra.mxu0 %v5375
        %5391 = vmatpush.bf16.msra.mxu0 %v5374
        %5392 = vmatpush.bf16.msra.mxu0 %v5373
        %5393 = vmatpush.bf16.msra.mxu0 %v5372
        %5394 = vmatpush.bf16.msra.mxu0 %v5371
        %5395 = vmatmul.bf16.gmra.mxu0 %v5307
        %v5396 = vpop.f32.mrf.mxu0
        %v5397 = vadd.f32 0.0, %v5396
        %v5398 = vpop.f32.mrf.mxu0
        %v5399 = vadd.f32 0.0, %v5398
        %5400 = vmatmul.bf16.gmra.mxu0 %v5308
        %v5401 = vpop.f32.mrf.mxu0
        %v5402 = vadd.f32 0.0, %v5401
        %v5403 = vpop.f32.mrf.mxu0
        %v5404 = vadd.f32 0.0, %v5403
        %5405 = vmatmul.bf16.gmra.mxu0 %v5309
        %v5406 = vpop.f32.mrf.mxu0
        %v5407 = vadd.f32 0.0, %v5406
        %v5408 = vpop.f32.mrf.mxu0
        %v5409 = vadd.f32 0.0, %v5408
        %5410 = vmatmul.bf16.gmra.mxu0 %v5310
        %v5411 = vpop.f32.mrf.mxu0
        %v5412 = vadd.f32 0.0, %v5411
        %v5413 = vpop.f32.mrf.mxu0
        %v5414 = vadd.f32 0.0, %v5413
        %5415 = vmatmul.bf16.gmra.mxu0 %v5311
        %v5416 = vpop.f32.mrf.mxu0
        %v5417 = vadd.f32 0.0, %v5416
        %v5418 = vpop.f32.mrf.mxu0
        %v5419 = vadd.f32 0.0, %v5418
        %5420 = vmatmul.bf16.gmra.mxu0 %v5312
        %v5421 = vpop.f32.mrf.mxu0
        %v5422 = vadd.f32 0.0, %v5421
        %v5423 = vpop.f32.mrf.mxu0
        %v5424 = vadd.f32 0.0, %v5423
        %5425 = vmatmul.bf16.gmra.mxu0 %v5313
        %v5426 = vpop.f32.mrf.mxu0
        %v5427 = vadd.f32 0.0, %v5426
        %v5428 = vpop.f32.mrf.mxu0
        %v5429 = vadd.f32 0.0, %v5428
        %5430 = vmatmul.bf16.gmra.mxu0 %v5314
        %v5431 = vpop.f32.mrf.mxu0
        %v5432 = vadd.f32 0.0, %v5431
        %v5433 = vpop.f32.mrf.mxu0
        %v5434 = vadd.f32 0.0, %v5433
        %5435 = vmatmul.bf16.gmra.mxu0 %v5315
        %v5436 = vpop.f32.mrf.mxu0
        %v5437 = vadd.f32 0.0, %v5436
        %v5438 = vpop.f32.mrf.mxu0
        %v5439 = vadd.f32 0.0, %v5438
        %5440 = vmatmul.bf16.gmra.mxu0 %v5316
        %v5441 = vpop.f32.mrf.mxu0
        %v5442 = vadd.f32 0.0, %v5441
        %v5443 = vpop.f32.mrf.mxu0
        %v5444 = vadd.f32 0.0, %v5443
        %5445 = vmatmul.bf16.gmra.mxu0 %v5317
        %v5446 = vpop.f32.mrf.mxu0
        %v5447 = vadd.f32 0.0, %v5446
        %v5448 = vpop.f32.mrf.mxu0
        %v5449 = vadd.f32 0.0, %v5448
        %5450 = vmatmul.bf16.gmra.mxu0 %v5318
        %v5451 = vpop.f32.mrf.mxu0
        %v5452 = vadd.f32 0.0, %v5451
        %v5453 = vpop.f32.mrf.mxu0
        %v5454 = vadd.f32 0.0, %v5453
        %5455 = vmatmul.bf16.gmra.mxu0 %v5319
        %v5456 = vpop.f32.mrf.mxu0
        %v5457 = vadd.f32 0.0, %v5456
        %v5458 = vpop.f32.mrf.mxu0
        %v5459 = vadd.f32 0.0, %v5458
        %5460 = vmatmul.bf16.gmra.mxu0 %v5320
        %v5461 = vpop.f32.mrf.mxu0
        %v5462 = vadd.f32 0.0, %v5461
        %v5463 = vpop.f32.mrf.mxu0
        %v5464 = vadd.f32 0.0, %v5463
        %5465 = vmatmul.bf16.gmra.mxu0 %v5321
        %v5466 = vpop.f32.mrf.mxu0
        %v5467 = vadd.f32 0.0, %v5466
        %v5468 = vpop.f32.mrf.mxu0
        %v5469 = vadd.f32 0.0, %v5468
        %5470 = vmatmul.bf16.gmra.mxu0 %v5322
        %v5471 = vpop.f32.mrf.mxu0
        %v5472 = vadd.f32 0.0, %v5471
        %v5473 = vpop.f32.mrf.mxu0
        %v5474 = vadd.f32 0.0, %v5473
        %5475 = vdwg.mxu0
        %v5476 = vadd.f32 %v5131, %v5397
        %v5477 = vadd.f32 %v5132, %v5399
        %v5478 = vadd.f32 %v5133, %v5402
        %v5479 = vadd.f32 %v5134, %v5404
        %v5480 = vadd.f32 %v5135, %v5407
        %v5481 = vadd.f32 %v5136, %v5409
        %v5482 = vadd.f32 %v5137, %v5412
        %v5483 = vadd.f32 %v5138, %v5414
        %v5484 = vadd.f32 %v5139, %v5417
        %v5485 = vadd.f32 %v5140, %v5419
        %v5486 = vadd.f32 %v5141, %v5422
        %v5487 = vadd.f32 %v5142, %v5424
        %v5488 = vadd.f32 %v5143, %v5427
        %v5489 = vadd.f32 %v5144, %v5429
        %v5490 = vadd.f32 %v5145, %v5432
        %v5491 = vadd.f32 %v5146, %v5434
        %v5492 = vadd.f32 %v5147, %v5437
        %v5493 = vadd.f32 %v5148, %v5439
        %v5494 = vadd.f32 %v5149, %v5442
        %v5495 = vadd.f32 %v5150, %v5444
        %v5496 = vadd.f32 %v5151, %v5447
        %v5497 = vadd.f32 %v5152, %v5449
        %v5498 = vadd.f32 %v5153, %v5452
        %v5499 = vadd.f32 %v5154, %v5454
        %v5500 = vadd.f32 %v5155, %v5457
        %v5501 = vadd.f32 %v5156, %v5459
        %v5502 = vadd.f32 %v5157, %v5462
        %v5503 = vadd.f32 %v5158, %v5464
        %v5504 = vadd.f32 %v5159, %v5467
        %v5505 = vadd.f32 %v5160, %v5469
        %v5506 = vadd.f32 %v5161, %v5472
        %v5507 = vadd.f32 %v5162, %v5474
        %v5508 = vld [vmem:[%s636 + $0x2] sm:$0xff]
        %v5509 = vld [vmem:[%s636 + $0xa] sm:$0xff]
        %v5510 = vld [vmem:[%s636 + $0x1a] sm:$0xff]
        %v5511 = vld [vmem:[%s636 + $0x22] sm:$0xff]
        %v5512 = vld [vmem:[%s636 + $0x32] sm:$0xff]
        %v5513 = vld [vmem:[%s636 + $0x3a] sm:$0xff]
        %v5514 = vld [vmem:[%s636 + $0x4a] sm:$0xff]
        %v5515 = vld [vmem:[%s636 + $0x52] sm:$0xff]
        %v5516 = vld [vmem:[%s636 + $0x62] sm:$0xff]
        %v5517 = vld [vmem:[%s636 + $0x6a] sm:$0xff]
        %v5518 = vld [vmem:[%s636 + $0x7a] sm:$0xff]
        %v5519 = vld [vmem:[%s636 + $0x82] sm:$0xff]
        %v5520 = vld [vmem:[%s636 + $0x92] sm:$0xff]
        %v5521 = vld [vmem:[%s636 + $0x9a] sm:$0xff]
        %v5522 = vld [vmem:[%s636 + $0xaa] sm:$0xff]
        %v5523 = vld [vmem:[%s636 + $0xb2] sm:$0xff]
        %v5524 = vld [vmem:[%s636 + $0xc2] sm:$0xff]
        %v5525 = vld [vmem:[%s636 + $0xca] sm:$0xff]
        %v5526 = vld [vmem:[%s636 + $0xda] sm:$0xff]
        %v5527 = vld [vmem:[%s636 + $0xe2] sm:$0xff]
        %v5528 = vld [vmem:[%s636 + $0xf2] sm:$0xff]
        %v5529 = vld [vmem:[%s636 + $0xfa] sm:$0xff]
        %v5530 = vld [vmem:[%s636 + $0x10a] sm:$0xff]
        %v5531 = vld [vmem:[%s636 + $0x112] sm:$0xff]
        %v5532 = vld [vmem:[%s636 + $0x122] sm:$0xff]
        %v5533 = vld [vmem:[%s636 + $0x12a] sm:$0xff]
        %v5534 = vld [vmem:[%s636 + $0x13a] sm:$0xff]
        %v5535 = vld [vmem:[%s636 + $0x142] sm:$0xff]
        %v5536 = vld [vmem:[%s636 + $0x152] sm:$0xff]
        %v5537 = vld [vmem:[%s636 + $0x15a] sm:$0xff]
        %v5538 = vld [vmem:[%s636 + $0x16a] sm:$0xff]
        %v5539 = vld [vmem:[%s636 + $0x172] sm:$0xff]
        %v5540 = vpack.c.bf16 %v5508, %v5508
        %v5541 = vpack.c.bf16 %v5509, %v5509
        %v5542 = vpack.c.bf16 %v5510, %v5510
        %v5543 = vpack.c.bf16 %v5511, %v5511
        %v5544 = vpack.c.bf16 %v5512, %v5512
        %v5545 = vpack.c.bf16 %v5513, %v5513
        %v5546 = vpack.c.bf16 %v5514, %v5514
        %v5547 = vpack.c.bf16 %v5515, %v5515
        %v5548 = vpack.c.bf16 %v5516, %v5516
        %v5549 = vpack.c.bf16 %v5517, %v5517
        %v5550 = vpack.c.bf16 %v5518, %v5518
        %v5551 = vpack.c.bf16 %v5519, %v5519
        %v5552 = vpack.c.bf16 %v5520, %v5520
        %v5553 = vpack.c.bf16 %v5521, %v5521
        %v5554 = vpack.c.bf16 %v5522, %v5522
        %v5555 = vpack.c.bf16 %v5523, %v5523
        %v5556 = vpack.c.bf16 %v5524, %v5524
        %v5557 = vpack.c.bf16 %v5525, %v5525
        %v5558 = vpack.c.bf16 %v5526, %v5526
        %v5559 = vpack.c.bf16 %v5527, %v5527
        %v5560 = vpack.c.bf16 %v5528, %v5528
        %v5561 = vpack.c.bf16 %v5529, %v5529
        %v5562 = vpack.c.bf16 %v5530, %v5530
        %v5563 = vpack.c.bf16 %v5531, %v5531
        %v5564 = vpack.c.bf16 %v5532, %v5532
        %v5565 = vpack.c.bf16 %v5533, %v5533
        %v5566 = vpack.c.bf16 %v5534, %v5534
        %v5567 = vpack.c.bf16 %v5535, %v5535
        %v5568 = vpack.c.bf16 %v5536, %v5536
        %v5569 = vpack.c.bf16 %v5537, %v5537
        %v5570 = vpack.c.bf16 %v5538, %v5538
        %v5571 = vpack.c.bf16 %v5539, %v5539
        %v5572 = vld [vmem:[#allocation8 + $0x140] sm:$0xf]
        %v5573 = vld [vmem:[#allocation8 + $0x144] sm:$0xf]
        %v5574 = vld [vmem:[#allocation8 + $0x148] sm:$0xf]
        %v5575 = vld [vmem:[#allocation8 + $0x14c] sm:$0xf]
        %v5576 = vld [vmem:[#allocation8 + $0x150] sm:$0xf]
        %v5577 = vld [vmem:[#allocation8 + $0x154] sm:$0xf]
        %v5578 = vld [vmem:[#allocation8 + $0x158] sm:$0xf]
        %v5579 = vld [vmem:[#allocation8 + $0x15c] sm:$0xf]
        %v5580 = vld [vmem:[#allocation8 + $0x160] sm:$0xf]
        %v5581 = vld [vmem:[#allocation8 + $0x164] sm:$0xf]
        %v5582 = vld [vmem:[#allocation8 + $0x168] sm:$0xf]
        %v5583 = vld [vmem:[#allocation8 + $0x16c] sm:$0xf]
        %v5584 = vld [vmem:[#allocation8 + $0x170] sm:$0xf]
        %v5585 = vld [vmem:[#allocation8 + $0x174] sm:$0xf]
        %v5586 = vld [vmem:[#allocation8 + $0x178] sm:$0xf]
        %v5587 = vld [vmem:[#allocation8 + $0x17c] sm:$0xf]
        %v5620 = vunpack.c.l.b16 %v5540
        %v5621 = vunpack.c.l.b16 %v5541
        %v5622 = vunpack.c.l.b16 %v5542
        %v5623 = vunpack.c.l.b16 %v5543
        %v5624 = vunpack.c.l.b16 %v5544
        %v5625 = vunpack.c.l.b16 %v5545
        %v5626 = vunpack.c.l.b16 %v5546
        %v5627 = vunpack.c.l.b16 %v5547
        %v5628 = vunpack.c.l.b16 %v5548
        %v5629 = vunpack.c.l.b16 %v5549
        %v5630 = vunpack.c.l.b16 %v5550
        %v5631 = vunpack.c.l.b16 %v5551
        %v5632 = vunpack.c.l.b16 %v5552
        %v5633 = vunpack.c.l.b16 %v5553
        %v5634 = vunpack.c.l.b16 %v5554
        %v5635 = vunpack.c.l.b16 %v5555
        %v5636 = vunpack.c.l.b16 %v5556
        %v5637 = vunpack.c.l.b16 %v5557
        %v5638 = vunpack.c.l.b16 %v5558
        %v5639 = vunpack.c.l.b16 %v5559
        %v5640 = vunpack.c.l.b16 %v5560
        %v5641 = vunpack.c.l.b16 %v5561
        %v5642 = vunpack.c.l.b16 %v5562
        %v5643 = vunpack.c.l.b16 %v5563
        %v5644 = vunpack.c.l.b16 %v5564
        %v5645 = vunpack.c.l.b16 %v5565
        %v5646 = vunpack.c.l.b16 %v5566
        %v5647 = vunpack.c.l.b16 %v5567
        %v5648 = vunpack.c.l.b16 %v5568
        %v5649 = vunpack.c.l.b16 %v5569
        %v5650 = vunpack.c.l.b16 %v5570
        %v5651 = vunpack.c.l.b16 %v5571
        %v5652 = vpack.c.b16 %v5621, %v5620
        %v5653 = vpack.c.b16 %v5623, %v5622
        %v5654 = vpack.c.b16 %v5625, %v5624
        %v5655 = vpack.c.b16 %v5627, %v5626
        %v5656 = vpack.c.b16 %v5629, %v5628
        %v5657 = vpack.c.b16 %v5631, %v5630
        %v5658 = vpack.c.b16 %v5633, %v5632
        %v5659 = vpack.c.b16 %v5635, %v5634
        %v5660 = vpack.c.b16 %v5637, %v5636
        %v5661 = vpack.c.b16 %v5639, %v5638
        %v5662 = vpack.c.b16 %v5641, %v5640
        %v5663 = vpack.c.b16 %v5643, %v5642
        %v5664 = vpack.c.b16 %v5645, %v5644
        %v5665 = vpack.c.b16 %v5647, %v5646
        %v5666 = vpack.c.b16 %v5649, %v5648
        %v5667 = vpack.c.b16 %v5651, %v5650
        %v5700 = vunpack.c.l.b16 %v5572
        %v5701 = vunpack.c.l.b16 %v5573
        %v5702 = vunpack.c.l.b16 %v5574
        %v5703 = vunpack.c.l.b16 %v5575
        %v5704 = vunpack.c.l.b16 %v5576
        %v5705 = vunpack.c.l.b16 %v5577
        %v5706 = vunpack.c.l.b16 %v5578
        %v5707 = vunpack.c.l.b16 %v5579
        %v5708 = vunpack.c.l.b16 %v5580
        %v5709 = vunpack.c.l.b16 %v5581
        %v5710 = vunpack.c.l.b16 %v5582
        %v5711 = vunpack.c.l.b16 %v5583
        %v5712 = vunpack.c.l.b16 %v5584
        %v5713 = vunpack.c.l.b16 %v5585
        %v5714 = vunpack.c.l.b16 %v5586
        %v5715 = vunpack.c.l.b16 %v5587
        %v5716 = vpack.c.b16 %v5701, %v5700
        %v5717 = vpack.c.b16 %v5703, %v5702
        %v5718 = vpack.c.b16 %v5705, %v5704
        %v5719 = vpack.c.b16 %v5707, %v5706
        %v5720 = vpack.c.b16 %v5709, %v5708
        %v5721 = vpack.c.b16 %v5711, %v5710
        %v5722 = vpack.c.b16 %v5713, %v5712
        %v5723 = vpack.c.b16 %v5715, %v5714
        %5732 = vmatpush.bf16.msra.mxu0 %v5723
        %5733 = vmatpush.bf16.msra.mxu0 %v5722
        %5734 = vmatpush.bf16.msra.mxu0 %v5721
        %5735 = vmatpush.bf16.msra.mxu0 %v5720
        %5736 = vmatpush.bf16.msra.mxu0 %v5719
        %5737 = vmatpush.bf16.msra.mxu0 %v5718
        %5738 = vmatpush.bf16.msra.mxu0 %v5717
        %5739 = vmatpush.bf16.msra.mxu0 %v5716
        %5740 = vmatmul.bf16.gmra.mxu0 %v5652
        %v5741 = vpop.f32.mrf.mxu0
        %v5742 = vadd.f32 0.0, %v5741
        %v5743 = vpop.f32.mrf.mxu0
        %v5744 = vadd.f32 0.0, %v5743
        %5745 = vmatmul.bf16.gmra.mxu0 %v5653
        %v5746 = vpop.f32.mrf.mxu0
        %v5747 = vadd.f32 0.0, %v5746
        %v5748 = vpop.f32.mrf.mxu0
        %v5749 = vadd.f32 0.0, %v5748
        %5750 = vmatmul.bf16.gmra.mxu0 %v5654
        %v5751 = vpop.f32.mrf.mxu0
        %v5752 = vadd.f32 0.0, %v5751
        %v5753 = vpop.f32.mrf.mxu0
        %v5754 = vadd.f32 0.0, %v5753
        %5755 = vmatmul.bf16.gmra.mxu0 %v5655
        %v5756 = vpop.f32.mrf.mxu0
        %v5757 = vadd.f32 0.0, %v5756
        %v5758 = vpop.f32.mrf.mxu0
        %v5759 = vadd.f32 0.0, %v5758
        %5760 = vmatmul.bf16.gmra.mxu0 %v5656
        %v5761 = vpop.f32.mrf.mxu0
        %v5762 = vadd.f32 0.0, %v5761
        %v5763 = vpop.f32.mrf.mxu0
        %v5764 = vadd.f32 0.0, %v5763
        %5765 = vmatmul.bf16.gmra.mxu0 %v5657
        %v5766 = vpop.f32.mrf.mxu0
        %v5767 = vadd.f32 0.0, %v5766
        %v5768 = vpop.f32.mrf.mxu0
        %v5769 = vadd.f32 0.0, %v5768
        %5770 = vmatmul.bf16.gmra.mxu0 %v5658
        %v5771 = vpop.f32.mrf.mxu0
        %v5772 = vadd.f32 0.0, %v5771
        %v5773 = vpop.f32.mrf.mxu0
        %v5774 = vadd.f32 0.0, %v5773
        %5775 = vmatmul.bf16.gmra.mxu0 %v5659
        %v5776 = vpop.f32.mrf.mxu0
        %v5777 = vadd.f32 0.0, %v5776
        %v5778 = vpop.f32.mrf.mxu0
        %v5779 = vadd.f32 0.0, %v5778
        %5780 = vmatmul.bf16.gmra.mxu0 %v5660
        %v5781 = vpop.f32.mrf.mxu0
        %v5782 = vadd.f32 0.0, %v5781
        %v5783 = vpop.f32.mrf.mxu0
        %v5784 = vadd.f32 0.0, %v5783
        %5785 = vmatmul.bf16.gmra.mxu0 %v5661
        %v5786 = vpop.f32.mrf.mxu0
        %v5787 = vadd.f32 0.0, %v5786
        %v5788 = vpop.f32.mrf.mxu0
        %v5789 = vadd.f32 0.0, %v5788
        %5790 = vmatmul.bf16.gmra.mxu0 %v5662
        %v5791 = vpop.f32.mrf.mxu0
        %v5792 = vadd.f32 0.0, %v5791
        %v5793 = vpop.f32.mrf.mxu0
        %v5794 = vadd.f32 0.0, %v5793
        %5795 = vmatmul.bf16.gmra.mxu0 %v5663
        %v5796 = vpop.f32.mrf.mxu0
        %v5797 = vadd.f32 0.0, %v5796
        %v5798 = vpop.f32.mrf.mxu0
        %v5799 = vadd.f32 0.0, %v5798
        %5800 = vmatmul.bf16.gmra.mxu0 %v5664
        %v5801 = vpop.f32.mrf.mxu0
        %v5802 = vadd.f32 0.0, %v5801
        %v5803 = vpop.f32.mrf.mxu0
        %v5804 = vadd.f32 0.0, %v5803
        %5805 = vmatmul.bf16.gmra.mxu0 %v5665
        %v5806 = vpop.f32.mrf.mxu0
        %v5807 = vadd.f32 0.0, %v5806
        %v5808 = vpop.f32.mrf.mxu0
        %v5809 = vadd.f32 0.0, %v5808
        %5810 = vmatmul.bf16.gmra.mxu0 %v5666
        %v5811 = vpop.f32.mrf.mxu0
        %v5812 = vadd.f32 0.0, %v5811
        %v5813 = vpop.f32.mrf.mxu0
        %v5814 = vadd.f32 0.0, %v5813
        %5815 = vmatmul.bf16.gmra.mxu0 %v5667
        %v5816 = vpop.f32.mrf.mxu0
        %v5817 = vadd.f32 0.0, %v5816
        %v5818 = vpop.f32.mrf.mxu0
        %v5819 = vadd.f32 0.0, %v5818
        %5820 = vdwg.mxu0
        %v5821 = vadd.f32 %v5476, %v5742
        %v5822 = vadd.f32 %v5477, %v5744
        %v5823 = vadd.f32 %v5478, %v5747
        %v5824 = vadd.f32 %v5479, %v5749
        %v5825 = vadd.f32 %v5480, %v5752
        %v5826 = vadd.f32 %v5481, %v5754
        %v5827 = vadd.f32 %v5482, %v5757
        %v5828 = vadd.f32 %v5483, %v5759
        %v5829 = vadd.f32 %v5484, %v5762
        %v5830 = vadd.f32 %v5485, %v5764
        %v5831 = vadd.f32 %v5486, %v5767
        %v5832 = vadd.f32 %v5487, %v5769
        %v5833 = vadd.f32 %v5488, %v5772
        %v5834 = vadd.f32 %v5489, %v5774
        %v5835 = vadd.f32 %v5490, %v5777
        %v5836 = vadd.f32 %v5491, %v5779
        %v5837 = vadd.f32 %v5492, %v5782
        %v5838 = vadd.f32 %v5493, %v5784
        %v5839 = vadd.f32 %v5494, %v5787
        %v5840 = vadd.f32 %v5495, %v5789
        %v5841 = vadd.f32 %v5496, %v5792
        %v5842 = vadd.f32 %v5497, %v5794
        %v5843 = vadd.f32 %v5498, %v5797
        %v5844 = vadd.f32 %v5499, %v5799
        %v5845 = vadd.f32 %v5500, %v5802
        %v5846 = vadd.f32 %v5501, %v5804
        %v5847 = vadd.f32 %v5502, %v5807
        %v5848 = vadd.f32 %v5503, %v5809
        %v5849 = vadd.f32 %v5504, %v5812
        %v5850 = vadd.f32 %v5505, %v5814
        %v5851 = vadd.f32 %v5506, %v5817
        %v5852 = vadd.f32 %v5507, %v5819
        %v5853 = vld [vmem:[%s2675] sm:$0xff]
        %v5854 = vld [vmem:[%s2675 + $0x8] sm:$0xff]
        %v5855 = vld [vmem:[%s2675 + $0x18] sm:$0xff]
        %v5856 = vld [vmem:[%s2675 + $0x20] sm:$0xff]
        %v5857 = vld [vmem:[%s2675 + $0x30] sm:$0xff]
        %v5858 = vld [vmem:[%s2675 + $0x38] sm:$0xff]
        %v5859 = vld [vmem:[%s2675 + $0x48] sm:$0xff]
        %v5860 = vld [vmem:[%s2675 + $0x50] sm:$0xff]
        %v5861 = vld [vmem:[%s2675 + $0x60] sm:$0xff]
        %v5862 = vld [vmem:[%s2675 + $0x68] sm:$0xff]
        %v5863 = vld [vmem:[%s2675 + $0x78] sm:$0xff]
        %v5864 = vld [vmem:[%s2675 + $0x80] sm:$0xff]
        %v5865 = vld [vmem:[%s2675 + $0x90] sm:$0xff]
        %v5866 = vld [vmem:[%s2675 + $0x98] sm:$0xff]
        %v5867 = vld [vmem:[%s2675 + $0xa8] sm:$0xff]
        %v5868 = vld [vmem:[%s2675 + $0xb0] sm:$0xff]
        %v5869 = vld [vmem:[%s2675 + $0xc0] sm:$0xff]
        %v5870 = vld [vmem:[%s2675 + $0xc8] sm:$0xff]
        %v5871 = vld [vmem:[%s2675 + $0xd8] sm:$0xff]
        %v5872 = vld [vmem:[%s2675 + $0xe0] sm:$0xff]
        %v5873 = vld [vmem:[%s2675 + $0xf0] sm:$0xff]
        %v5874 = vld [vmem:[%s2675 + $0xf8] sm:$0xff]
        %v5875 = vld [vmem:[%s2675 + $0x108] sm:$0xff]
        %v5876 = vld [vmem:[%s2675 + $0x110] sm:$0xff]
        %v5877 = vld [vmem:[%s2675 + $0x120] sm:$0xff]
        %v5878 = vld [vmem:[%s2675 + $0x128] sm:$0xff]
        %v5879 = vld [vmem:[%s2675 + $0x138] sm:$0xff]
        %v5880 = vld [vmem:[%s2675 + $0x140] sm:$0xff]
        %v5881 = vld [vmem:[%s2675 + $0x150] sm:$0xff]
        %v5882 = vld [vmem:[%s2675 + $0x158] sm:$0xff]
        %v5883 = vld [vmem:[%s2675 + $0x168] sm:$0xff]
        %v5884 = vld [vmem:[%s2675 + $0x170] sm:$0xff]
        %v5885 = vpack.c.bf16 %v5853, %v5853
        %v5886 = vpack.c.bf16 %v5854, %v5854
        %v5887 = vpack.c.bf16 %v5855, %v5855
        %v5888 = vpack.c.bf16 %v5856, %v5856
        %v5889 = vpack.c.bf16 %v5857, %v5857
        %v5890 = vpack.c.bf16 %v5858, %v5858
        %v5891 = vpack.c.bf16 %v5859, %v5859
        %v5892 = vpack.c.bf16 %v5860, %v5860
        %v5893 = vpack.c.bf16 %v5861, %v5861
        %v5894 = vpack.c.bf16 %v5862, %v5862
        %v5895 = vpack.c.bf16 %v5863, %v5863
        %v5896 = vpack.c.bf16 %v5864, %v5864
        %v5897 = vpack.c.bf16 %v5865, %v5865
        %v5898 = vpack.c.bf16 %v5866, %v5866
        %v5899 = vpack.c.bf16 %v5867, %v5867
        %v5900 = vpack.c.bf16 %v5868, %v5868
        %v5901 = vpack.c.bf16 %v5869, %v5869
        %v5902 = vpack.c.bf16 %v5870, %v5870
        %v5903 = vpack.c.bf16 %v5871, %v5871
        %v5904 = vpack.c.bf16 %v5872, %v5872
        %v5905 = vpack.c.bf16 %v5873, %v5873
        %v5906 = vpack.c.bf16 %v5874, %v5874
        %v5907 = vpack.c.bf16 %v5875, %v5875
        %v5908 = vpack.c.bf16 %v5876, %v5876
        %v5909 = vpack.c.bf16 %v5877, %v5877
        %v5910 = vpack.c.bf16 %v5878, %v5878
        %v5911 = vpack.c.bf16 %v5879, %v5879
        %v5912 = vpack.c.bf16 %v5880, %v5880
        %v5913 = vpack.c.bf16 %v5881, %v5881
        %v5914 = vpack.c.bf16 %v5882, %v5882
        %v5915 = vpack.c.bf16 %v5883, %v5883
        %v5916 = vpack.c.bf16 %v5884, %v5884
        %v5917 = vld [vmem:[#allocation8 + $0x180] sm:$0xf]
        %v5918 = vld [vmem:[#allocation8 + $0x184] sm:$0xf]
        %v5919 = vld [vmem:[#allocation8 + $0x188] sm:$0xf]
        %v5920 = vld [vmem:[#allocation8 + $0x18c] sm:$0xf]
        %v5921 = vld [vmem:[#allocation8 + $0x190] sm:$0xf]
        %v5922 = vld [vmem:[#allocation8 + $0x194] sm:$0xf]
        %v5923 = vld [vmem:[#allocation8 + $0x198] sm:$0xf]
        %v5924 = vld [vmem:[#allocation8 + $0x19c] sm:$0xf]
        %v5925 = vld [vmem:[#allocation8 + $0x1a0] sm:$0xf]
        %v5926 = vld [vmem:[#allocation8 + $0x1a4] sm:$0xf]
        %v5927 = vld [vmem:[#allocation8 + $0x1a8] sm:$0xf]
        %v5928 = vld [vmem:[#allocation8 + $0x1ac] sm:$0xf]
        %v5929 = vld [vmem:[#allocation8 + $0x1b0] sm:$0xf]
        %v5930 = vld [vmem:[#allocation8 + $0x1b4] sm:$0xf]
        %v5931 = vld [vmem:[#allocation8 + $0x1b8] sm:$0xf]
        %v5932 = vld [vmem:[#allocation8 + $0x1bc] sm:$0xf]
        %v5965 = vunpack.c.l.b16 %v5885
        %v5966 = vunpack.c.l.b16 %v5886
        %v5967 = vunpack.c.l.b16 %v5887
        %v5968 = vunpack.c.l.b16 %v5888
        %v5969 = vunpack.c.l.b16 %v5889
        %v5970 = vunpack.c.l.b16 %v5890
        %v5971 = vunpack.c.l.b16 %v5891
        %v5972 = vunpack.c.l.b16 %v5892
        %v5973 = vunpack.c.l.b16 %v5893
        %v5974 = vunpack.c.l.b16 %v5894
        %v5975 = vunpack.c.l.b16 %v5895
        %v5976 = vunpack.c.l.b16 %v5896
        %v5977 = vunpack.c.l.b16 %v5897
        %v5978 = vunpack.c.l.b16 %v5898
        %v5979 = vunpack.c.l.b16 %v5899
        %v5980 = vunpack.c.l.b16 %v5900
        %v5981 = vunpack.c.l.b16 %v5901
        %v5982 = vunpack.c.l.b16 %v5902
        %v5983 = vunpack.c.l.b16 %v5903
        %v5984 = vunpack.c.l.b16 %v5904
        %v5985 = vunpack.c.l.b16 %v5905
        %v5986 = vunpack.c.l.b16 %v5906
        %v5987 = vunpack.c.l.b16 %v5907
        %v5988 = vunpack.c.l.b16 %v5908
        %v5989 = vunpack.c.l.b16 %v5909
        %v5990 = vunpack.c.l.b16 %v5910
        %v5991 = vunpack.c.l.b16 %v5911
        %v5992 = vunpack.c.l.b16 %v5912
        %v5993 = vunpack.c.l.b16 %v5913
        %v5994 = vunpack.c.l.b16 %v5914
        %v5995 = vunpack.c.l.b16 %v5915
        %v5996 = vunpack.c.l.b16 %v5916
        %v5997 = vpack.c.b16 %v5966, %v5965
        %v5998 = vpack.c.b16 %v5968, %v5967
        %v5999 = vpack.c.b16 %v5970, %v5969
        %v6000 = vpack.c.b16 %v5972, %v5971
        %v6001 = vpack.c.b16 %v5974, %v5973
        %v6002 = vpack.c.b16 %v5976, %v5975
        %v6003 = vpack.c.b16 %v5978, %v5977
        %v6004 = vpack.c.b16 %v5980, %v5979
        %v6005 = vpack.c.b16 %v5982, %v5981
        %v6006 = vpack.c.b16 %v5984, %v5983
        %v6007 = vpack.c.b16 %v5986, %v5985
        %v6008 = vpack.c.b16 %v5988, %v5987
        %v6009 = vpack.c.b16 %v5990, %v5989
        %v6010 = vpack.c.b16 %v5992, %v5991
        %v6011 = vpack.c.b16 %v5994, %v5993
        %v6012 = vpack.c.b16 %v5996, %v5995
        %v6045 = vunpack.c.l.b16 %v5917
        %v6046 = vunpack.c.l.b16 %v5918
        %v6047 = vunpack.c.l.b16 %v5919
        %v6048 = vunpack.c.l.b16 %v5920
        %v6049 = vunpack.c.l.b16 %v5921
        %v6050 = vunpack.c.l.b16 %v5922
        %v6051 = vunpack.c.l.b16 %v5923
        %v6052 = vunpack.c.l.b16 %v5924
        %v6053 = vunpack.c.l.b16 %v5925
        %v6054 = vunpack.c.l.b16 %v5926
        %v6055 = vunpack.c.l.b16 %v5927
        %v6056 = vunpack.c.l.b16 %v5928
        %v6057 = vunpack.c.l.b16 %v5929
        %v6058 = vunpack.c.l.b16 %v5930
        %v6059 = vunpack.c.l.b16 %v5931
        %v6060 = vunpack.c.l.b16 %v5932
        %v6061 = vpack.c.b16 %v6046, %v6045
        %v6062 = vpack.c.b16 %v6048, %v6047
        %v6063 = vpack.c.b16 %v6050, %v6049
        %v6064 = vpack.c.b16 %v6052, %v6051
        %v6065 = vpack.c.b16 %v6054, %v6053
        %v6066 = vpack.c.b16 %v6056, %v6055
        %v6067 = vpack.c.b16 %v6058, %v6057
        %v6068 = vpack.c.b16 %v6060, %v6059
        %6077 = vmatpush.bf16.msra.mxu0 %v6068
        %6078 = vmatpush.bf16.msra.mxu0 %v6067
        %6079 = vmatpush.bf16.msra.mxu0 %v6066
        %6080 = vmatpush.bf16.msra.mxu0 %v6065
        %6081 = vmatpush.bf16.msra.mxu0 %v6064
        %6082 = vmatpush.bf16.msra.mxu0 %v6063
        %6083 = vmatpush.bf16.msra.mxu0 %v6062
        %6084 = vmatpush.bf16.msra.mxu0 %v6061
        %6085 = vmatmul.bf16.gmra.mxu0 %v5997
        %v6086 = vpop.f32.mrf.mxu0
        %v6087 = vadd.f32 0.0, %v6086
        %v6088 = vpop.f32.mrf.mxu0
        %v6089 = vadd.f32 0.0, %v6088
        %6090 = vmatmul.bf16.gmra.mxu0 %v5998
        %v6091 = vpop.f32.mrf.mxu0
        %v6092 = vadd.f32 0.0, %v6091
        %v6093 = vpop.f32.mrf.mxu0
        %v6094 = vadd.f32 0.0, %v6093
        %6095 = vmatmul.bf16.gmra.mxu0 %v5999
        %v6096 = vpop.f32.mrf.mxu0
        %v6097 = vadd.f32 0.0, %v6096
        %v6098 = vpop.f32.mrf.mxu0
        %v6099 = vadd.f32 0.0, %v6098
        %6100 = vmatmul.bf16.gmra.mxu0 %v6000
        %v6101 = vpop.f32.mrf.mxu0
        %v6102 = vadd.f32 0.0, %v6101
        %v6103 = vpop.f32.mrf.mxu0
        %v6104 = vadd.f32 0.0, %v6103
        %6105 = vmatmul.bf16.gmra.mxu0 %v6001
        %v6106 = vpop.f32.mrf.mxu0
        %v6107 = vadd.f32 0.0, %v6106
        %v6108 = vpop.f32.mrf.mxu0
        %v6109 = vadd.f32 0.0, %v6108
        %6110 = vmatmul.bf16.gmra.mxu0 %v6002
        %v6111 = vpop.f32.mrf.mxu0
        %v6112 = vadd.f32 0.0, %v6111
        %v6113 = vpop.f32.mrf.mxu0
        %v6114 = vadd.f32 0.0, %v6113
        %6115 = vmatmul.bf16.gmra.mxu0 %v6003
        %v6116 = vpop.f32.mrf.mxu0
        %v6117 = vadd.f32 0.0, %v6116
        %v6118 = vpop.f32.mrf.mxu0
        %v6119 = vadd.f32 0.0, %v6118
        %6120 = vmatmul.bf16.gmra.mxu0 %v6004
        %v6121 = vpop.f32.mrf.mxu0
        %v6122 = vadd.f32 0.0, %v6121
        %v6123 = vpop.f32.mrf.mxu0
        %v6124 = vadd.f32 0.0, %v6123
        %6125 = vmatmul.bf16.gmra.mxu0 %v6005
        %v6126 = vpop.f32.mrf.mxu0
        %v6127 = vadd.f32 0.0, %v6126
        %v6128 = vpop.f32.mrf.mxu0
        %v6129 = vadd.f32 0.0, %v6128
        %6130 = vmatmul.bf16.gmra.mxu0 %v6006
        %v6131 = vpop.f32.mrf.mxu0
        %v6132 = vadd.f32 0.0, %v6131
        %v6133 = vpop.f32.mrf.mxu0
        %v6134 = vadd.f32 0.0, %v6133
        %6135 = vmatmul.bf16.gmra.mxu0 %v6007
        %v6136 = vpop.f32.mrf.mxu0
        %v6137 = vadd.f32 0.0, %v6136
        %v6138 = vpop.f32.mrf.mxu0
        %v6139 = vadd.f32 0.0, %v6138
        %6140 = vmatmul.bf16.gmra.mxu0 %v6008
        %v6141 = vpop.f32.mrf.mxu0
        %v6142 = vadd.f32 0.0, %v6141
        %v6143 = vpop.f32.mrf.mxu0
        %v6144 = vadd.f32 0.0, %v6143
        %6145 = vmatmul.bf16.gmra.mxu0 %v6009
        %v6146 = vpop.f32.mrf.mxu0
        %v6147 = vadd.f32 0.0, %v6146
        %v6148 = vpop.f32.mrf.mxu0
        %v6149 = vadd.f32 0.0, %v6148
        %6150 = vmatmul.bf16.gmra.mxu0 %v6010
        %v6151 = vpop.f32.mrf.mxu0
        %v6152 = vadd.f32 0.0, %v6151
        %v6153 = vpop.f32.mrf.mxu0
        %v6154 = vadd.f32 0.0, %v6153
        %6155 = vmatmul.bf16.gmra.mxu0 %v6011
        %v6156 = vpop.f32.mrf.mxu0
        %v6157 = vadd.f32 0.0, %v6156
        %v6158 = vpop.f32.mrf.mxu0
        %v6159 = vadd.f32 0.0, %v6158
        %6160 = vmatmul.bf16.gmra.mxu0 %v6012
        %v6161 = vpop.f32.mrf.mxu0
        %v6162 = vadd.f32 0.0, %v6161
        %v6163 = vpop.f32.mrf.mxu0
        %v6164 = vadd.f32 0.0, %v6163
        %6165 = vdwg.mxu0
        %v6166 = vadd.f32 %v5821, %v6087
        %v6167 = vadd.f32 %v5822, %v6089
        %v6168 = vadd.f32 %v5823, %v6092
        %v6169 = vadd.f32 %v5824, %v6094
        %v6170 = vadd.f32 %v5825, %v6097
        %v6171 = vadd.f32 %v5826, %v6099
        %v6172 = vadd.f32 %v5827, %v6102
        %v6173 = vadd.f32 %v5828, %v6104
        %v6174 = vadd.f32 %v5829, %v6107
        %v6175 = vadd.f32 %v5830, %v6109
        %v6176 = vadd.f32 %v5831, %v6112
        %v6177 = vadd.f32 %v5832, %v6114
        %v6178 = vadd.f32 %v5833, %v6117
        %v6179 = vadd.f32 %v5834, %v6119
        %v6180 = vadd.f32 %v5835, %v6122
        %v6181 = vadd.f32 %v5836, %v6124
        %v6182 = vadd.f32 %v5837, %v6127
        %v6183 = vadd.f32 %v5838, %v6129
        %v6184 = vadd.f32 %v5839, %v6132
        %v6185 = vadd.f32 %v5840, %v6134
        %v6186 = vadd.f32 %v5841, %v6137
        %v6187 = vadd.f32 %v5842, %v6139
        %v6188 = vadd.f32 %v5843, %v6142
        %v6189 = vadd.f32 %v5844, %v6144
        %v6190 = vadd.f32 %v5845, %v6147
        %v6191 = vadd.f32 %v5846, %v6149
        %v6192 = vadd.f32 %v5847, %v6152
        %v6193 = vadd.f32 %v5848, %v6154
        %v6194 = vadd.f32 %v5849, %v6157
        %v6195 = vadd.f32 %v5850, %v6159
        %v6196 = vadd.f32 %v5851, %v6162
        %v6197 = vadd.f32 %v5852, %v6164
        %v6198 = vld [vmem:[%s2675 + $0x1] sm:$0xff]
        %v6199 = vld [vmem:[%s2675 + $0x9] sm:$0xff]
        %v6200 = vld [vmem:[%s2675 + $0x19] sm:$0xff]
        %v6201 = vld [vmem:[%s2675 + $0x21] sm:$0xff]
        %v6202 = vld [vmem:[%s2675 + $0x31] sm:$0xff]
        %v6203 = vld [vmem:[%s2675 + $0x39] sm:$0xff]
        %v6204 = vld [vmem:[%s2675 + $0x49] sm:$0xff]
        %v6205 = vld [vmem:[%s2675 + $0x51] sm:$0xff]
        %v6206 = vld [vmem:[%s2675 + $0x61] sm:$0xff]
        %v6207 = vld [vmem:[%s2675 + $0x69] sm:$0xff]
        %v6208 = vld [vmem:[%s2675 + $0x79] sm:$0xff]
        %v6209 = vld [vmem:[%s2675 + $0x81] sm:$0xff]
        %v6210 = vld [vmem:[%s2675 + $0x91] sm:$0xff]
        %v6211 = vld [vmem:[%s2675 + $0x99] sm:$0xff]
        %v6212 = vld [vmem:[%s2675 + $0xa9] sm:$0xff]
        %v6213 = vld [vmem:[%s2675 + $0xb1] sm:$0xff]
        %v6214 = vld [vmem:[%s2675 + $0xc1] sm:$0xff]
        %v6215 = vld [vmem:[%s2675 + $0xc9] sm:$0xff]
        %v6216 = vld [vmem:[%s2675 + $0xd9] sm:$0xff]
        %v6217 = vld [vmem:[%s2675 + $0xe1] sm:$0xff]
        %v6218 = vld [vmem:[%s2675 + $0xf1] sm:$0xff]
        %v6219 = vld [vmem:[%s2675 + $0xf9] sm:$0xff]
        %v6220 = vld [vmem:[%s2675 + $0x109] sm:$0xff]
        %v6221 = vld [vmem:[%s2675 + $0x111] sm:$0xff]
        %v6222 = vld [vmem:[%s2675 + $0x121] sm:$0xff]
        %v6223 = vld [vmem:[%s2675 + $0x129] sm:$0xff]
        %v6224 = vld [vmem:[%s2675 + $0x139] sm:$0xff]
        %v6225 = vld [vmem:[%s2675 + $0x141] sm:$0xff]
        %v6226 = vld [vmem:[%s2675 + $0x151] sm:$0xff]
        %v6227 = vld [vmem:[%s2675 + $0x159] sm:$0xff]
        %v6228 = vld [vmem:[%s2675 + $0x169] sm:$0xff]
        %v6229 = vld [vmem:[%s2675 + $0x171] sm:$0xff]
        %v6230 = vpack.c.bf16 %v6198, %v6198
        %v6231 = vpack.c.bf16 %v6199, %v6199
        %v6232 = vpack.c.bf16 %v6200, %v6200
        %v6233 = vpack.c.bf16 %v6201, %v6201
        %v6234 = vpack.c.bf16 %v6202, %v6202
        %v6235 = vpack.c.bf16 %v6203, %v6203
        %v6236 = vpack.c.bf16 %v6204, %v6204
        %v6237 = vpack.c.bf16 %v6205, %v6205
        %v6238 = vpack.c.bf16 %v6206, %v6206
        %v6239 = vpack.c.bf16 %v6207, %v6207
        %v6240 = vpack.c.bf16 %v6208, %v6208
        %v6241 = vpack.c.bf16 %v6209, %v6209
        %v6242 = vpack.c.bf16 %v6210, %v6210
        %v6243 = vpack.c.bf16 %v6211, %v6211
        %v6244 = vpack.c.bf16 %v6212, %v6212
        %v6245 = vpack.c.bf16 %v6213, %v6213
        %v6246 = vpack.c.bf16 %v6214, %v6214
        %v6247 = vpack.c.bf16 %v6215, %v6215
        %v6248 = vpack.c.bf16 %v6216, %v6216
        %v6249 = vpack.c.bf16 %v6217, %v6217
        %v6250 = vpack.c.bf16 %v6218, %v6218
        %v6251 = vpack.c.bf16 %v6219, %v6219
        %v6252 = vpack.c.bf16 %v6220, %v6220
        %v6253 = vpack.c.bf16 %v6221, %v6221
        %v6254 = vpack.c.bf16 %v6222, %v6222
        %v6255 = vpack.c.bf16 %v6223, %v6223
        %v6256 = vpack.c.bf16 %v6224, %v6224
        %v6257 = vpack.c.bf16 %v6225, %v6225
        %v6258 = vpack.c.bf16 %v6226, %v6226
        %v6259 = vpack.c.bf16 %v6227, %v6227
        %v6260 = vpack.c.bf16 %v6228, %v6228
        %v6261 = vpack.c.bf16 %v6229, %v6229
        %v6262 = vld [vmem:[#allocation8 + $0x1c0] sm:$0xf]
        %v6263 = vld [vmem:[#allocation8 + $0x1c4] sm:$0xf]
        %v6264 = vld [vmem:[#allocation8 + $0x1c8] sm:$0xf]
        %v6265 = vld [vmem:[#allocation8 + $0x1cc] sm:$0xf]
        %v6266 = vld [vmem:[#allocation8 + $0x1d0] sm:$0xf]
        %v6267 = vld [vmem:[#allocation8 + $0x1d4] sm:$0xf]
        %v6268 = vld [vmem:[#allocation8 + $0x1d8] sm:$0xf]
        %v6269 = vld [vmem:[#allocation8 + $0x1dc] sm:$0xf]
        %v6270 = vld [vmem:[#allocation8 + $0x1e0] sm:$0xf]
        %v6271 = vld [vmem:[#allocation8 + $0x1e4] sm:$0xf]
        %v6272 = vld [vmem:[#allocation8 + $0x1e8] sm:$0xf]
        %v6273 = vld [vmem:[#allocation8 + $0x1ec] sm:$0xf]
        %v6274 = vld [vmem:[#allocation8 + $0x1f0] sm:$0xf]
        %v6275 = vld [vmem:[#allocation8 + $0x1f4] sm:$0xf]
        %v6276 = vld [vmem:[#allocation8 + $0x1f8] sm:$0xf]
        %v6277 = vld [vmem:[#allocation8 + $0x1fc] sm:$0xf]
        %v6310 = vunpack.c.l.b16 %v6230
        %v6311 = vunpack.c.l.b16 %v6231
        %v6312 = vunpack.c.l.b16 %v6232
        %v6313 = vunpack.c.l.b16 %v6233
        %v6314 = vunpack.c.l.b16 %v6234
        %v6315 = vunpack.c.l.b16 %v6235
        %v6316 = vunpack.c.l.b16 %v6236
        %v6317 = vunpack.c.l.b16 %v6237
        %v6318 = vunpack.c.l.b16 %v6238
        %v6319 = vunpack.c.l.b16 %v6239
        %v6320 = vunpack.c.l.b16 %v6240
        %v6321 = vunpack.c.l.b16 %v6241
        %v6322 = vunpack.c.l.b16 %v6242
        %v6323 = vunpack.c.l.b16 %v6243
        %v6324 = vunpack.c.l.b16 %v6244
        %v6325 = vunpack.c.l.b16 %v6245
        %v6326 = vunpack.c.l.b16 %v6246
        %v6327 = vunpack.c.l.b16 %v6247
        %v6328 = vunpack.c.l.b16 %v6248
        %v6329 = vunpack.c.l.b16 %v6249
        %v6330 = vunpack.c.l.b16 %v6250
        %v6331 = vunpack.c.l.b16 %v6251
        %v6332 = vunpack.c.l.b16 %v6252
        %v6333 = vunpack.c.l.b16 %v6253
        %v6334 = vunpack.c.l.b16 %v6254
        %v6335 = vunpack.c.l.b16 %v6255
        %v6336 = vunpack.c.l.b16 %v6256
        %v6337 = vunpack.c.l.b16 %v6257
        %v6338 = vunpack.c.l.b16 %v6258
        %v6339 = vunpack.c.l.b16 %v6259
        %v6340 = vunpack.c.l.b16 %v6260
        %v6341 = vunpack.c.l.b16 %v6261
        %v6342 = vpack.c.b16 %v6311, %v6310
        %v6343 = vpack.c.b16 %v6313, %v6312
        %v6344 = vpack.c.b16 %v6315, %v6314
        %v6345 = vpack.c.b16 %v6317, %v6316
        %v6346 = vpack.c.b16 %v6319, %v6318
        %v6347 = vpack.c.b16 %v6321, %v6320
        %v6348 = vpack.c.b16 %v6323, %v6322
        %v6349 = vpack.c.b16 %v6325, %v6324
        %v6350 = vpack.c.b16 %v6327, %v6326
        %v6351 = vpack.c.b16 %v6329, %v6328
        %v6352 = vpack.c.b16 %v6331, %v6330
        %v6353 = vpack.c.b16 %v6333, %v6332
        %v6354 = vpack.c.b16 %v6335, %v6334
        %v6355 = vpack.c.b16 %v6337, %v6336
        %v6356 = vpack.c.b16 %v6339, %v6338
        %v6357 = vpack.c.b16 %v6341, %v6340
        %v6390 = vunpack.c.l.b16 %v6262
        %v6391 = vunpack.c.l.b16 %v6263
        %v6392 = vunpack.c.l.b16 %v6264
        %v6393 = vunpack.c.l.b16 %v6265
        %v6394 = vunpack.c.l.b16 %v6266
        %v6395 = vunpack.c.l.b16 %v6267
        %v6396 = vunpack.c.l.b16 %v6268
        %v6397 = vunpack.c.l.b16 %v6269
        %v6398 = vunpack.c.l.b16 %v6270
        %v6399 = vunpack.c.l.b16 %v6271
        %v6400 = vunpack.c.l.b16 %v6272
        %v6401 = vunpack.c.l.b16 %v6273
        %v6402 = vunpack.c.l.b16 %v6274
        %v6403 = vunpack.c.l.b16 %v6275
        %v6404 = vunpack.c.l.b16 %v6276
        %v6405 = vunpack.c.l.b16 %v6277
        %v6406 = vpack.c.b16 %v6391, %v6390
        %v6407 = vpack.c.b16 %v6393, %v6392
        %v6408 = vpack.c.b16 %v6395, %v6394
        %v6409 = vpack.c.b16 %v6397, %v6396
        %v6410 = vpack.c.b16 %v6399, %v6398
        %v6411 = vpack.c.b16 %v6401, %v6400
        %v6412 = vpack.c.b16 %v6403, %v6402
        %v6413 = vpack.c.b16 %v6405, %v6404
        %6422 = vmatpush.bf16.msra.mxu0 %v6413
        %6423 = vmatpush.bf16.msra.mxu0 %v6412
        %6424 = vmatpush.bf16.msra.mxu0 %v6411
        %6425 = vmatpush.bf16.msra.mxu0 %v6410
        %6426 = vmatpush.bf16.msra.mxu0 %v6409
        %6427 = vmatpush.bf16.msra.mxu0 %v6408
        %6428 = vmatpush.bf16.msra.mxu0 %v6407
        %6429 = vmatpush.bf16.msra.mxu0 %v6406
        %6430 = vmatmul.bf16.gmra.mxu0 %v6342
        %v6431 = vpop.f32.mrf.mxu0
        %v6432 = vadd.f32 0.0, %v6431
        %v6433 = vpop.f32.mrf.mxu0
        %v6434 = vadd.f32 0.0, %v6433
        %6435 = vmatmul.bf16.gmra.mxu0 %v6343
        %v6436 = vpop.f32.mrf.mxu0
        %v6437 = vadd.f32 0.0, %v6436
        %v6438 = vpop.f32.mrf.mxu0
        %v6439 = vadd.f32 0.0, %v6438
        %6440 = vmatmul.bf16.gmra.mxu0 %v6344
        %v6441 = vpop.f32.mrf.mxu0
        %v6442 = vadd.f32 0.0, %v6441
        %v6443 = vpop.f32.mrf.mxu0
        %v6444 = vadd.f32 0.0, %v6443
        %6445 = vmatmul.bf16.gmra.mxu0 %v6345
        %v6446 = vpop.f32.mrf.mxu0
        %v6447 = vadd.f32 0.0, %v6446
        %v6448 = vpop.f32.mrf.mxu0
        %v6449 = vadd.f32 0.0, %v6448
        %6450 = vmatmul.bf16.gmra.mxu0 %v6346
        %v6451 = vpop.f32.mrf.mxu0
        %v6452 = vadd.f32 0.0, %v6451
        %v6453 = vpop.f32.mrf.mxu0
        %v6454 = vadd.f32 0.0, %v6453
        %6455 = vmatmul.bf16.gmra.mxu0 %v6347
        %v6456 = vpop.f32.mrf.mxu0
        %v6457 = vadd.f32 0.0, %v6456
        %v6458 = vpop.f32.mrf.mxu0
        %v6459 = vadd.f32 0.0, %v6458
        %6460 = vmatmul.bf16.gmra.mxu0 %v6348
        %v6461 = vpop.f32.mrf.mxu0
        %v6462 = vadd.f32 0.0, %v6461
        %v6463 = vpop.f32.mrf.mxu0
        %v6464 = vadd.f32 0.0, %v6463
        %6465 = vmatmul.bf16.gmra.mxu0 %v6349
        %v6466 = vpop.f32.mrf.mxu0
        %v6467 = vadd.f32 0.0, %v6466
        %v6468 = vpop.f32.mrf.mxu0
        %v6469 = vadd.f32 0.0, %v6468
        %6470 = vmatmul.bf16.gmra.mxu0 %v6350
        %v6471 = vpop.f32.mrf.mxu0
        %v6472 = vadd.f32 0.0, %v6471
        %v6473 = vpop.f32.mrf.mxu0
        %v6474 = vadd.f32 0.0, %v6473
        %6475 = vmatmul.bf16.gmra.mxu0 %v6351
        %v6476 = vpop.f32.mrf.mxu0
        %v6477 = vadd.f32 0.0, %v6476
        %v6478 = vpop.f32.mrf.mxu0
        %v6479 = vadd.f32 0.0, %v6478
        %6480 = vmatmul.bf16.gmra.mxu0 %v6352
        %v6481 = vpop.f32.mrf.mxu0
        %v6482 = vadd.f32 0.0, %v6481
        %v6483 = vpop.f32.mrf.mxu0
        %v6484 = vadd.f32 0.0, %v6483
        %6485 = vmatmul.bf16.gmra.mxu0 %v6353
        %v6486 = vpop.f32.mrf.mxu0
        %v6487 = vadd.f32 0.0, %v6486
        %v6488 = vpop.f32.mrf.mxu0
        %v6489 = vadd.f32 0.0, %v6488
        %6490 = vmatmul.bf16.gmra.mxu0 %v6354
        %v6491 = vpop.f32.mrf.mxu0
        %v6492 = vadd.f32 0.0, %v6491
        %v6493 = vpop.f32.mrf.mxu0
        %v6494 = vadd.f32 0.0, %v6493
        %6495 = vmatmul.bf16.gmra.mxu0 %v6355
        %v6496 = vpop.f32.mrf.mxu0
        %v6497 = vadd.f32 0.0, %v6496
        %v6498 = vpop.f32.mrf.mxu0
        %v6499 = vadd.f32 0.0, %v6498
        %6500 = vmatmul.bf16.gmra.mxu0 %v6356
        %v6501 = vpop.f32.mrf.mxu0
        %v6502 = vadd.f32 0.0, %v6501
        %v6503 = vpop.f32.mrf.mxu0
        %v6504 = vadd.f32 0.0, %v6503
        %6505 = vmatmul.bf16.gmra.mxu0 %v6357
        %v6506 = vpop.f32.mrf.mxu0
        %v6507 = vadd.f32 0.0, %v6506
        %v6508 = vpop.f32.mrf.mxu0
        %v6509 = vadd.f32 0.0, %v6508
        %6510 = vdwg.mxu0
        %v6511 = vadd.f32 %v6166, %v6432
        %v6512 = vadd.f32 %v6167, %v6434
        %v6513 = vadd.f32 %v6168, %v6437
        %v6514 = vadd.f32 %v6169, %v6439
        %v6515 = vadd.f32 %v6170, %v6442
        %v6516 = vadd.f32 %v6171, %v6444
        %v6517 = vadd.f32 %v6172, %v6447
        %v6518 = vadd.f32 %v6173, %v6449
        %v6519 = vadd.f32 %v6174, %v6452
        %v6520 = vadd.f32 %v6175, %v6454
        %v6521 = vadd.f32 %v6176, %v6457
        %v6522 = vadd.f32 %v6177, %v6459
        %v6523 = vadd.f32 %v6178, %v6462
        %v6524 = vadd.f32 %v6179, %v6464
        %v6525 = vadd.f32 %v6180, %v6467
        %v6526 = vadd.f32 %v6181, %v6469
        %v6527 = vadd.f32 %v6182, %v6472
        %v6528 = vadd.f32 %v6183, %v6474
        %v6529 = vadd.f32 %v6184, %v6477
        %v6530 = vadd.f32 %v6185, %v6479
        %v6531 = vadd.f32 %v6186, %v6482
        %v6532 = vadd.f32 %v6187, %v6484
        %v6533 = vadd.f32 %v6188, %v6487
        %v6534 = vadd.f32 %v6189, %v6489
        %v6535 = vadd.f32 %v6190, %v6492
        %v6536 = vadd.f32 %v6191, %v6494
        %v6537 = vadd.f32 %v6192, %v6497
        %v6538 = vadd.f32 %v6193, %v6499
        %v6539 = vadd.f32 %v6194, %v6502
        %v6540 = vadd.f32 %v6195, %v6504
        %v6541 = vadd.f32 %v6196, %v6507
        %v6542 = vadd.f32 %v6197, %v6509
        %v6543 = vld [vmem:[%s2675 + $0x2] sm:$0xff]
        %v6544 = vld [vmem:[%s2675 + $0xa] sm:$0xff]
        %v6545 = vld [vmem:[%s2675 + $0x1a] sm:$0xff]
        %v6546 = vld [vmem:[%s2675 + $0x22] sm:$0xff]
        %v6547 = vld [vmem:[%s2675 + $0x32] sm:$0xff]
        %v6548 = vld [vmem:[%s2675 + $0x3a] sm:$0xff]
        %v6549 = vld [vmem:[%s2675 + $0x4a] sm:$0xff]
        %v6550 = vld [vmem:[%s2675 + $0x52] sm:$0xff]
        %v6551 = vld [vmem:[%s2675 + $0x62] sm:$0xff]
        %v6552 = vld [vmem:[%s2675 + $0x6a] sm:$0xff]
        %v6553 = vld [vmem:[%s2675 + $0x7a] sm:$0xff]
        %v6554 = vld [vmem:[%s2675 + $0x82] sm:$0xff]
        %v6555 = vld [vmem:[%s2675 + $0x92] sm:$0xff]
        %v6556 = vld [vmem:[%s2675 + $0x9a] sm:$0xff]
        %v6557 = vld [vmem:[%s2675 + $0xaa] sm:$0xff]
        %v6558 = vld [vmem:[%s2675 + $0xb2] sm:$0xff]
        %v6559 = vld [vmem:[%s2675 + $0xc2] sm:$0xff]
        %v6560 = vld [vmem:[%s2675 + $0xca] sm:$0xff]
        %v6561 = vld [vmem:[%s2675 + $0xda] sm:$0xff]
        %v6562 = vld [vmem:[%s2675 + $0xe2] sm:$0xff]
        %v6563 = vld [vmem:[%s2675 + $0xf2] sm:$0xff]
        %v6564 = vld [vmem:[%s2675 + $0xfa] sm:$0xff]
        %v6565 = vld [vmem:[%s2675 + $0x10a] sm:$0xff]
        %v6566 = vld [vmem:[%s2675 + $0x112] sm:$0xff]
        %v6567 = vld [vmem:[%s2675 + $0x122] sm:$0xff]
        %v6568 = vld [vmem:[%s2675 + $0x12a] sm:$0xff]
        %v6569 = vld [vmem:[%s2675 + $0x13a] sm:$0xff]
        %v6570 = vld [vmem:[%s2675 + $0x142] sm:$0xff]
        %v6571 = vld [vmem:[%s2675 + $0x152] sm:$0xff]
        %v6572 = vld [vmem:[%s2675 + $0x15a] sm:$0xff]
        %v6573 = vld [vmem:[%s2675 + $0x16a] sm:$0xff]
        %v6574 = vld [vmem:[%s2675 + $0x172] sm:$0xff]
        %v6575 = vpack.c.bf16 %v6543, %v6543
        %v6576 = vpack.c.bf16 %v6544, %v6544
        %v6577 = vpack.c.bf16 %v6545, %v6545
        %v6578 = vpack.c.bf16 %v6546, %v6546
        %v6579 = vpack.c.bf16 %v6547, %v6547
        %v6580 = vpack.c.bf16 %v6548, %v6548
        %v6581 = vpack.c.bf16 %v6549, %v6549
        %v6582 = vpack.c.bf16 %v6550, %v6550
        %v6583 = vpack.c.bf16 %v6551, %v6551
        %v6584 = vpack.c.bf16 %v6552, %v6552
        %v6585 = vpack.c.bf16 %v6553, %v6553
        %v6586 = vpack.c.bf16 %v6554, %v6554
        %v6587 = vpack.c.bf16 %v6555, %v6555
        %v6588 = vpack.c.bf16 %v6556, %v6556
        %v6589 = vpack.c.bf16 %v6557, %v6557
        %v6590 = vpack.c.bf16 %v6558, %v6558
        %v6591 = vpack.c.bf16 %v6559, %v6559
        %v6592 = vpack.c.bf16 %v6560, %v6560
        %v6593 = vpack.c.bf16 %v6561, %v6561
        %v6594 = vpack.c.bf16 %v6562, %v6562
        %v6595 = vpack.c.bf16 %v6563, %v6563
        %v6596 = vpack.c.bf16 %v6564, %v6564
        %v6597 = vpack.c.bf16 %v6565, %v6565
        %v6598 = vpack.c.bf16 %v6566, %v6566
        %v6599 = vpack.c.bf16 %v6567, %v6567
        %v6600 = vpack.c.bf16 %v6568, %v6568
        %v6601 = vpack.c.bf16 %v6569, %v6569
        %v6602 = vpack.c.bf16 %v6570, %v6570
        %v6603 = vpack.c.bf16 %v6571, %v6571
        %v6604 = vpack.c.bf16 %v6572, %v6572
        %v6605 = vpack.c.bf16 %v6573, %v6573
        %v6606 = vpack.c.bf16 %v6574, %v6574
        %v6607 = vld [vmem:[#allocation8 + $0x200] sm:$0xf]
        %v6608 = vld [vmem:[#allocation8 + $0x204] sm:$0xf]
        %v6609 = vld [vmem:[#allocation8 + $0x208] sm:$0xf]
        %v6610 = vld [vmem:[#allocation8 + $0x20c] sm:$0xf]
        %v6611 = vld [vmem:[#allocation8 + $0x210] sm:$0xf]
        %v6612 = vld [vmem:[#allocation8 + $0x214] sm:$0xf]
        %v6613 = vld [vmem:[#allocation8 + $0x218] sm:$0xf]
        %v6614 = vld [vmem:[#allocation8 + $0x21c] sm:$0xf]
        %v6615 = vld [vmem:[#allocation8 + $0x220] sm:$0xf]
        %v6616 = vld [vmem:[#allocation8 + $0x224] sm:$0xf]
        %v6617 = vld [vmem:[#allocation8 + $0x228] sm:$0xf]
        %v6618 = vld [vmem:[#allocation8 + $0x22c] sm:$0xf]
        %v6619 = vld [vmem:[#allocation8 + $0x230] sm:$0xf]
        %v6620 = vld [vmem:[#allocation8 + $0x234] sm:$0xf]
        %v6621 = vld [vmem:[#allocation8 + $0x238] sm:$0xf]
        %v6622 = vld [vmem:[#allocation8 + $0x23c] sm:$0xf]
        %v6655 = vunpack.c.l.b16 %v6575
        %v6656 = vunpack.c.l.b16 %v6576
        %v6657 = vunpack.c.l.b16 %v6577
        %v6658 = vunpack.c.l.b16 %v6578
        %v6659 = vunpack.c.l.b16 %v6579
        %v6660 = vunpack.c.l.b16 %v6580
        %v6661 = vunpack.c.l.b16 %v6581
        %v6662 = vunpack.c.l.b16 %v6582
        %v6663 = vunpack.c.l.b16 %v6583
        %v6664 = vunpack.c.l.b16 %v6584
        %v6665 = vunpack.c.l.b16 %v6585
        %v6666 = vunpack.c.l.b16 %v6586
        %v6667 = vunpack.c.l.b16 %v6587
        %v6668 = vunpack.c.l.b16 %v6588
        %v6669 = vunpack.c.l.b16 %v6589
        %v6670 = vunpack.c.l.b16 %v6590
        %v6671 = vunpack.c.l.b16 %v6591
        %v6672 = vunpack.c.l.b16 %v6592
        %v6673 = vunpack.c.l.b16 %v6593
        %v6674 = vunpack.c.l.b16 %v6594
        %v6675 = vunpack.c.l.b16 %v6595
        %v6676 = vunpack.c.l.b16 %v6596
        %v6677 = vunpack.c.l.b16 %v6597
        %v6678 = vunpack.c.l.b16 %v6598
        %v6679 = vunpack.c.l.b16 %v6599
        %v6680 = vunpack.c.l.b16 %v6600
        %v6681 = vunpack.c.l.b16 %v6601
        %v6682 = vunpack.c.l.b16 %v6602
        %v6683 = vunpack.c.l.b16 %v6603
        %v6684 = vunpack.c.l.b16 %v6604
        %v6685 = vunpack.c.l.b16 %v6605
        %v6686 = vunpack.c.l.b16 %v6606
        %v6687 = vpack.c.b16 %v6656, %v6655
        %v6688 = vpack.c.b16 %v6658, %v6657
        %v6689 = vpack.c.b16 %v6660, %v6659
        %v6690 = vpack.c.b16 %v6662, %v6661
        %v6691 = vpack.c.b16 %v6664, %v6663
        %v6692 = vpack.c.b16 %v6666, %v6665
        %v6693 = vpack.c.b16 %v6668, %v6667
        %v6694 = vpack.c.b16 %v6670, %v6669
        %v6695 = vpack.c.b16 %v6672, %v6671
        %v6696 = vpack.c.b16 %v6674, %v6673
        %v6697 = vpack.c.b16 %v6676, %v6675
        %v6698 = vpack.c.b16 %v6678, %v6677
        %v6699 = vpack.c.b16 %v6680, %v6679
        %v6700 = vpack.c.b16 %v6682, %v6681
        %v6701 = vpack.c.b16 %v6684, %v6683
        %v6702 = vpack.c.b16 %v6686, %v6685
        %v6735 = vunpack.c.l.b16 %v6607
        %v6736 = vunpack.c.l.b16 %v6608
        %v6737 = vunpack.c.l.b16 %v6609
        %v6738 = vunpack.c.l.b16 %v6610
        %v6739 = vunpack.c.l.b16 %v6611
        %v6740 = vunpack.c.l.b16 %v6612
        %v6741 = vunpack.c.l.b16 %v6613
        %v6742 = vunpack.c.l.b16 %v6614
        %v6743 = vunpack.c.l.b16 %v6615
        %v6744 = vunpack.c.l.b16 %v6616
        %v6745 = vunpack.c.l.b16 %v6617
        %v6746 = vunpack.c.l.b16 %v6618
        %v6747 = vunpack.c.l.b16 %v6619
        %v6748 = vunpack.c.l.b16 %v6620
        %v6749 = vunpack.c.l.b16 %v6621
        %v6750 = vunpack.c.l.b16 %v6622
        %v6751 = vpack.c.b16 %v6736, %v6735
        %v6752 = vpack.c.b16 %v6738, %v6737
        %v6753 = vpack.c.b16 %v6740, %v6739
        %v6754 = vpack.c.b16 %v6742, %v6741
        %v6755 = vpack.c.b16 %v6744, %v6743
        %v6756 = vpack.c.b16 %v6746, %v6745
        %v6757 = vpack.c.b16 %v6748, %v6747
        %v6758 = vpack.c.b16 %v6750, %v6749
        %6767 = vmatpush.bf16.msra.mxu0 %v6758
        %6768 = vmatpush.bf16.msra.mxu0 %v6757
        %6769 = vmatpush.bf16.msra.mxu0 %v6756
        %6770 = vmatpush.bf16.msra.mxu0 %v6755
        %6771 = vmatpush.bf16.msra.mxu0 %v6754
        %6772 = vmatpush.bf16.msra.mxu0 %v6753
        %6773 = vmatpush.bf16.msra.mxu0 %v6752
        %6774 = vmatpush.bf16.msra.mxu0 %v6751
        %6775 = vmatmul.bf16.gmra.mxu0 %v6687
        %v6776 = vpop.f32.mrf.mxu0
        %v6777 = vadd.f32 0.0, %v6776
        %v6778 = vpop.f32.mrf.mxu0
        %v6779 = vadd.f32 0.0, %v6778
        %6780 = vmatmul.bf16.gmra.mxu0 %v6688
        %v6781 = vpop.f32.mrf.mxu0
        %v6782 = vadd.f32 0.0, %v6781
        %v6783 = vpop.f32.mrf.mxu0
        %v6784 = vadd.f32 0.0, %v6783
        %6785 = vmatmul.bf16.gmra.mxu0 %v6689
        %v6786 = vpop.f32.mrf.mxu0
        %v6787 = vadd.f32 0.0, %v6786
        %v6788 = vpop.f32.mrf.mxu0
        %v6789 = vadd.f32 0.0, %v6788
        %6790 = vmatmul.bf16.gmra.mxu0 %v6690
        %v6791 = vpop.f32.mrf.mxu0
        %v6792 = vadd.f32 0.0, %v6791
        %v6793 = vpop.f32.mrf.mxu0
        %v6794 = vadd.f32 0.0, %v6793
        %6795 = vmatmul.bf16.gmra.mxu0 %v6691
        %v6796 = vpop.f32.mrf.mxu0
        %v6797 = vadd.f32 0.0, %v6796
        %v6798 = vpop.f32.mrf.mxu0
        %v6799 = vadd.f32 0.0, %v6798
        %6800 = vmatmul.bf16.gmra.mxu0 %v6692
        %v6801 = vpop.f32.mrf.mxu0
        %v6802 = vadd.f32 0.0, %v6801
        %v6803 = vpop.f32.mrf.mxu0
        %v6804 = vadd.f32 0.0, %v6803
        %6805 = vmatmul.bf16.gmra.mxu0 %v6693
        %v6806 = vpop.f32.mrf.mxu0
        %v6807 = vadd.f32 0.0, %v6806
        %v6808 = vpop.f32.mrf.mxu0
        %v6809 = vadd.f32 0.0, %v6808
        %6810 = vmatmul.bf16.gmra.mxu0 %v6694
        %v6811 = vpop.f32.mrf.mxu0
        %v6812 = vadd.f32 0.0, %v6811
        %v6813 = vpop.f32.mrf.mxu0
        %v6814 = vadd.f32 0.0, %v6813
        %6815 = vmatmul.bf16.gmra.mxu0 %v6695
        %v6816 = vpop.f32.mrf.mxu0
        %v6817 = vadd.f32 0.0, %v6816
        %v6818 = vpop.f32.mrf.mxu0
        %v6819 = vadd.f32 0.0, %v6818
        %6820 = vmatmul.bf16.gmra.mxu0 %v6696
        %v6821 = vpop.f32.mrf.mxu0
        %v6822 = vadd.f32 0.0, %v6821
        %v6823 = vpop.f32.mrf.mxu0
        %v6824 = vadd.f32 0.0, %v6823
        %6825 = vmatmul.bf16.gmra.mxu0 %v6697
        %v6826 = vpop.f32.mrf.mxu0
        %v6827 = vadd.f32 0.0, %v6826
        %v6828 = vpop.f32.mrf.mxu0
        %v6829 = vadd.f32 0.0, %v6828
        %6830 = vmatmul.bf16.gmra.mxu0 %v6698
        %v6831 = vpop.f32.mrf.mxu0
        %v6832 = vadd.f32 0.0, %v6831
        %v6833 = vpop.f32.mrf.mxu0
        %v6834 = vadd.f32 0.0, %v6833
        %6835 = vmatmul.bf16.gmra.mxu0 %v6699
        %v6836 = vpop.f32.mrf.mxu0
        %v6837 = vadd.f32 0.0, %v6836
        %v6838 = vpop.f32.mrf.mxu0
        %v6839 = vadd.f32 0.0, %v6838
        %6840 = vmatmul.bf16.gmra.mxu0 %v6700
        %v6841 = vpop.f32.mrf.mxu0
        %v6842 = vadd.f32 0.0, %v6841
        %v6843 = vpop.f32.mrf.mxu0
        %v6844 = vadd.f32 0.0, %v6843
        %6845 = vmatmul.bf16.gmra.mxu0 %v6701
        %v6846 = vpop.f32.mrf.mxu0
        %v6847 = vadd.f32 0.0, %v6846
        %v6848 = vpop.f32.mrf.mxu0
        %v6849 = vadd.f32 0.0, %v6848
        %6850 = vmatmul.bf16.gmra.mxu0 %v6702
        %v6851 = vpop.f32.mrf.mxu0
        %v6852 = vadd.f32 0.0, %v6851
        %v6853 = vpop.f32.mrf.mxu0
        %v6854 = vadd.f32 0.0, %v6853
        %6855 = vdwg.mxu0
        %v6856 = vadd.f32 %v6511, %v6777
        %v6857 = vadd.f32 %v6512, %v6779
        %v6858 = vadd.f32 %v6513, %v6782
        %v6859 = vadd.f32 %v6514, %v6784
        %v6860 = vadd.f32 %v6515, %v6787
        %v6861 = vadd.f32 %v6516, %v6789
        %v6862 = vadd.f32 %v6517, %v6792
        %v6863 = vadd.f32 %v6518, %v6794
        %v6864 = vadd.f32 %v6519, %v6797
        %v6865 = vadd.f32 %v6520, %v6799
        %v6866 = vadd.f32 %v6521, %v6802
        %v6867 = vadd.f32 %v6522, %v6804
        %v6868 = vadd.f32 %v6523, %v6807
        %v6869 = vadd.f32 %v6524, %v6809
        %v6870 = vadd.f32 %v6525, %v6812
        %v6871 = vadd.f32 %v6526, %v6814
        %v6872 = vadd.f32 %v6527, %v6817
        %v6873 = vadd.f32 %v6528, %v6819
        %v6874 = vadd.f32 %v6529, %v6822
        %v6875 = vadd.f32 %v6530, %v6824
        %v6876 = vadd.f32 %v6531, %v6827
        %v6877 = vadd.f32 %v6532, %v6829
        %v6878 = vadd.f32 %v6533, %v6832
        %v6879 = vadd.f32 %v6534, %v6834
        %v6880 = vadd.f32 %v6535, %v6837
        %v6881 = vadd.f32 %v6536, %v6839
        %v6882 = vadd.f32 %v6537, %v6842
        %v6883 = vadd.f32 %v6538, %v6844
        %v6884 = vadd.f32 %v6539, %v6847
        %v6885 = vadd.f32 %v6540, %v6849
        %v6886 = vadd.f32 %v6541, %v6852
        %v6887 = vadd.f32 %v6542, %v6854
        %v6888 = vld [vmem:[#allocation9] sm:$0x1]
        %v6890 = vperm.slane %v6888, 0
        %v6892 = vmul.f32 %v6856, %v6890
        %v6893 = vmul.f32 %v6857, %v6890
        %v6894 = vmul.f32 %v6858, %v6890
        %v6895 = vmul.f32 %v6859, %v6890
        %v6896 = vmul.f32 %v6860, %v6890
        %v6897 = vmul.f32 %v6861, %v6890
        %v6898 = vmul.f32 %v6862, %v6890
        %v6899 = vmul.f32 %v6863, %v6890
        %v6900 = vmul.f32 %v6864, %v6890
        %v6901 = vmul.f32 %v6865, %v6890
        %v6902 = vmul.f32 %v6866, %v6890
        %v6903 = vmul.f32 %v6867, %v6890
        %v6904 = vmul.f32 %v6868, %v6890
        %v6905 = vmul.f32 %v6869, %v6890
        %v6906 = vmul.f32 %v6870, %v6890
        %v6907 = vmul.f32 %v6871, %v6890
        %v6908 = vmul.f32 %v6872, %v6890
        %v6909 = vmul.f32 %v6873, %v6890
        %v6910 = vmul.f32 %v6874, %v6890
        %v6911 = vmul.f32 %v6875, %v6890
        %v6912 = vmul.f32 %v6876, %v6890
        %v6913 = vmul.f32 %v6877, %v6890
        %v6914 = vmul.f32 %v6878, %v6890
        %v6915 = vmul.f32 %v6879, %v6890
        %v6916 = vmul.f32 %v6880, %v6890
        %v6917 = vmul.f32 %v6881, %v6890
        %v6918 = vmul.f32 %v6882, %v6890
        %v6919 = vmul.f32 %v6883, %v6890
        %v6920 = vmul.f32 %v6884, %v6890
        %v6921 = vmul.f32 %v6885, %v6890
        %v6922 = vmul.f32 %v6886, %v6890
        %v6923 = vmul.f32 %v6887, %v6890
        %v6924 = vld [vmem:[#allocation11] sm:$0x1]
        %v6926 = vperm.slane %v6924, 0
        %v6928 = vadd.f32 %v6892, %v6926
        %v6929 = vadd.f32 %v6893, %v6926
        %v6930 = vadd.f32 %v6894, %v6926
        %v6931 = vadd.f32 %v6895, %v6926
        %v6932 = vadd.f32 %v6896, %v6926
        %v6933 = vadd.f32 %v6897, %v6926
        %v6934 = vadd.f32 %v6898, %v6926
        %v6935 = vadd.f32 %v6899, %v6926
        %v6936 = vadd.f32 %v6900, %v6926
        %v6937 = vadd.f32 %v6901, %v6926
        %v6938 = vadd.f32 %v6902, %v6926
        %v6939 = vadd.f32 %v6903, %v6926
        %v6940 = vadd.f32 %v6904, %v6926
        %v6941 = vadd.f32 %v6905, %v6926
        %v6942 = vadd.f32 %v6906, %v6926
        %v6943 = vadd.f32 %v6907, %v6926
        %v6944 = vadd.f32 %v6908, %v6926
        %v6945 = vadd.f32 %v6909, %v6926
        %v6946 = vadd.f32 %v6910, %v6926
        %v6947 = vadd.f32 %v6911, %v6926
        %v6948 = vadd.f32 %v6912, %v6926
        %v6949 = vadd.f32 %v6913, %v6926
        %v6950 = vadd.f32 %v6914, %v6926
        %v6951 = vadd.f32 %v6915, %v6926
        %v6952 = vadd.f32 %v6916, %v6926
        %v6953 = vadd.f32 %v6917, %v6926
        %v6954 = vadd.f32 %v6918, %v6926
        %v6955 = vadd.f32 %v6919, %v6926
        %v6956 = vadd.f32 %v6920, %v6926
        %v6957 = vadd.f32 %v6921, %v6926
        %v6958 = vadd.f32 %v6922, %v6926
        %v6959 = vadd.f32 %v6923, %v6926
        %v6960 = vld [vmem:[#allocation14] sm:$0xf]
        %v6961 = vld [vmem:[#allocation14 + $0x4] sm:$0xf]
        %v6962 = vld [vmem:[#allocation14 + $0x8] sm:$0xf]
        %v6963 = vld [vmem:[#allocation14 + $0xc] sm:$0xf]
        %v6964 = vld [vmem:[#allocation14 + $0x10] sm:$0xf]
        %v6965 = vld [vmem:[#allocation14 + $0x14] sm:$0xf]
        %v6966 = vld [vmem:[#allocation14 + $0x18] sm:$0xf]
        %v6967 = vld [vmem:[#allocation14 + $0x1c] sm:$0xf]
        %v6968 = vld [vmem:[#allocation14 + $0x20] sm:$0xf]
        %v6969 = vld [vmem:[#allocation14 + $0x24] sm:$0xf]
        %v6970 = vld [vmem:[#allocation14 + $0x28] sm:$0xf]
        %v6971 = vld [vmem:[#allocation14 + $0x2c] sm:$0xf]
        %v6972 = vld [vmem:[#allocation14 + $0x30] sm:$0xf]
        %v6973 = vld [vmem:[#allocation14 + $0x34] sm:$0xf]
        %v6974 = vld [vmem:[#allocation14 + $0x38] sm:$0xf]
        %v6975 = vld [vmem:[#allocation14 + $0x3c] sm:$0xf]
        %v7008 = vunpack.c.l.b16 %v529
        %v7009 = vunpack.c.l.b16 %v530
        %v7010 = vunpack.c.l.b16 %v531
        %v7011 = vunpack.c.l.b16 %v532
        %v7012 = vunpack.c.l.b16 %v533
        %v7013 = vunpack.c.l.b16 %v534
        %v7014 = vunpack.c.l.b16 %v535
        %v7015 = vunpack.c.l.b16 %v536
        %v7016 = vunpack.c.l.b16 %v537
        %v7017 = vunpack.c.l.b16 %v538
        %v7018 = vunpack.c.l.b16 %v539
        %v7019 = vunpack.c.l.b16 %v540
        %v7020 = vunpack.c.l.b16 %v541
        %v7021 = vunpack.c.l.b16 %v542
        %v7022 = vunpack.c.l.b16 %v543
        %v7023 = vunpack.c.l.b16 %v544
        %v7024 = vunpack.c.l.b16 %v545
        %v7025 = vunpack.c.l.b16 %v546
        %v7026 = vunpack.c.l.b16 %v547
        %v7027 = vunpack.c.l.b16 %v548
        %v7028 = vunpack.c.l.b16 %v549
        %v7029 = vunpack.c.l.b16 %v550
        %v7030 = vunpack.c.l.b16 %v551
        %v7031 = vunpack.c.l.b16 %v552
        %v7032 = vunpack.c.l.b16 %v553
        %v7033 = vunpack.c.l.b16 %v554
        %v7034 = vunpack.c.l.b16 %v555
        %v7035 = vunpack.c.l.b16 %v556
        %v7036 = vunpack.c.l.b16 %v557
        %v7037 = vunpack.c.l.b16 %v558
        %v7038 = vunpack.c.l.b16 %v559
        %v7039 = vunpack.c.l.b16 %v560
        %v7040 = vpack.c.b16 %v7009, %v7008
        %v7041 = vpack.c.b16 %v7011, %v7010
        %v7042 = vpack.c.b16 %v7013, %v7012
        %v7043 = vpack.c.b16 %v7015, %v7014
        %v7044 = vpack.c.b16 %v7017, %v7016
        %v7045 = vpack.c.b16 %v7019, %v7018
        %v7046 = vpack.c.b16 %v7021, %v7020
        %v7047 = vpack.c.b16 %v7023, %v7022
        %v7048 = vpack.c.b16 %v7025, %v7024
        %v7049 = vpack.c.b16 %v7027, %v7026
        %v7050 = vpack.c.b16 %v7029, %v7028
        %v7051 = vpack.c.b16 %v7031, %v7030
        %v7052 = vpack.c.b16 %v7033, %v7032
        %v7053 = vpack.c.b16 %v7035, %v7034
        %v7054 = vpack.c.b16 %v7037, %v7036
        %v7055 = vpack.c.b16 %v7039, %v7038
        %v7088 = vunpack.c.l.b16 %v6960
        %v7089 = vunpack.c.l.b16 %v6961
        %v7090 = vunpack.c.l.b16 %v6962
        %v7091 = vunpack.c.l.b16 %v6963
        %v7092 = vunpack.c.l.b16 %v6964
        %v7093 = vunpack.c.l.b16 %v6965
        %v7094 = vunpack.c.l.b16 %v6966
        %v7095 = vunpack.c.l.b16 %v6967
        %v7096 = vunpack.c.l.b16 %v6968
        %v7097 = vunpack.c.l.b16 %v6969
        %v7098 = vunpack.c.l.b16 %v6970
        %v7099 = vunpack.c.l.b16 %v6971
        %v7100 = vunpack.c.l.b16 %v6972
        %v7101 = vunpack.c.l.b16 %v6973
        %v7102 = vunpack.c.l.b16 %v6974
        %v7103 = vunpack.c.l.b16 %v6975
        %v7104 = vpack.c.b16 %v7089, %v7088
        %v7105 = vpack.c.b16 %v7091, %v7090
        %v7106 = vpack.c.b16 %v7093, %v7092
        %v7107 = vpack.c.b16 %v7095, %v7094
        %v7108 = vpack.c.b16 %v7097, %v7096
        %v7109 = vpack.c.b16 %v7099, %v7098
        %v7110 = vpack.c.b16 %v7101, %v7100
        %v7111 = vpack.c.b16 %v7103, %v7102
        %7120 = vmatpush.bf16.msra.mxu0 %v7111
        %7121 = vmatpush.bf16.msra.mxu0 %v7110
        %7122 = vmatpush.bf16.msra.mxu0 %v7109
        %7123 = vmatpush.bf16.msra.mxu0 %v7108
        %7124 = vmatpush.bf16.msra.mxu0 %v7107
        %7125 = vmatpush.bf16.msra.mxu0 %v7106
        %7126 = vmatpush.bf16.msra.mxu0 %v7105
        %7127 = vmatpush.bf16.msra.mxu0 %v7104
        %7128 = vmatmul.bf16.gmra.mxu0 %v7040
        %v7129 = vpop.f32.mrf.mxu0
        %v7130 = vadd.f32 0.0, %v7129
        %v7131 = vpop.f32.mrf.mxu0
        %v7132 = vadd.f32 0.0, %v7131
        %7133 = vmatmul.bf16.gmra.mxu0 %v7041
        %v7134 = vpop.f32.mrf.mxu0
        %v7135 = vadd.f32 0.0, %v7134
        %v7136 = vpop.f32.mrf.mxu0
        %v7137 = vadd.f32 0.0, %v7136
        %7138 = vmatmul.bf16.gmra.mxu0 %v7042
        %v7139 = vpop.f32.mrf.mxu0
        %v7140 = vadd.f32 0.0, %v7139
        %v7141 = vpop.f32.mrf.mxu0
        %v7142 = vadd.f32 0.0, %v7141
        %7143 = vmatmul.bf16.gmra.mxu0 %v7043
        %v7144 = vpop.f32.mrf.mxu0
        %v7145 = vadd.f32 0.0, %v7144
        %v7146 = vpop.f32.mrf.mxu0
        %v7147 = vadd.f32 0.0, %v7146
        %7148 = vmatmul.bf16.gmra.mxu0 %v7044
        %v7149 = vpop.f32.mrf.mxu0
        %v7150 = vadd.f32 0.0, %v7149
        %v7151 = vpop.f32.mrf.mxu0
        %v7152 = vadd.f32 0.0, %v7151
        %7153 = vmatmul.bf16.gmra.mxu0 %v7045
        %v7154 = vpop.f32.mrf.mxu0
        %v7155 = vadd.f32 0.0, %v7154
        %v7156 = vpop.f32.mrf.mxu0
        %v7157 = vadd.f32 0.0, %v7156
        %7158 = vmatmul.bf16.gmra.mxu0 %v7046
        %v7159 = vpop.f32.mrf.mxu0
        %v7160 = vadd.f32 0.0, %v7159
        %v7161 = vpop.f32.mrf.mxu0
        %v7162 = vadd.f32 0.0, %v7161
        %7163 = vmatmul.bf16.gmra.mxu0 %v7047
        %v7164 = vpop.f32.mrf.mxu0
        %v7165 = vadd.f32 0.0, %v7164
        %v7166 = vpop.f32.mrf.mxu0
        %v7167 = vadd.f32 0.0, %v7166
        %7168 = vmatmul.bf16.gmra.mxu0 %v7048
        %v7169 = vpop.f32.mrf.mxu0
        %v7170 = vadd.f32 0.0, %v7169
        %v7171 = vpop.f32.mrf.mxu0
        %v7172 = vadd.f32 0.0, %v7171
        %7173 = vmatmul.bf16.gmra.mxu0 %v7049
        %v7174 = vpop.f32.mrf.mxu0
        %v7175 = vadd.f32 0.0, %v7174
        %v7176 = vpop.f32.mrf.mxu0
        %v7177 = vadd.f32 0.0, %v7176
        %7178 = vmatmul.bf16.gmra.mxu0 %v7050
        %v7179 = vpop.f32.mrf.mxu0
        %v7180 = vadd.f32 0.0, %v7179
        %v7181 = vpop.f32.mrf.mxu0
        %v7182 = vadd.f32 0.0, %v7181
        %7183 = vmatmul.bf16.gmra.mxu0 %v7051
        %v7184 = vpop.f32.mrf.mxu0
        %v7185 = vadd.f32 0.0, %v7184
        %v7186 = vpop.f32.mrf.mxu0
        %v7187 = vadd.f32 0.0, %v7186
        %7188 = vmatmul.bf16.gmra.mxu0 %v7052
        %v7189 = vpop.f32.mrf.mxu0
        %v7190 = vadd.f32 0.0, %v7189
        %v7191 = vpop.f32.mrf.mxu0
        %v7192 = vadd.f32 0.0, %v7191
        %7193 = vmatmul.bf16.gmra.mxu0 %v7053
        %v7194 = vpop.f32.mrf.mxu0
        %v7195 = vadd.f32 0.0, %v7194
        %v7196 = vpop.f32.mrf.mxu0
        %v7197 = vadd.f32 0.0, %v7196
        %7198 = vmatmul.bf16.gmra.mxu0 %v7054
        %v7199 = vpop.f32.mrf.mxu0
        %v7200 = vadd.f32 0.0, %v7199
        %v7201 = vpop.f32.mrf.mxu0
        %v7202 = vadd.f32 0.0, %v7201
        %7203 = vmatmul.bf16.gmra.mxu0 %v7055
        %v7204 = vpop.f32.mrf.mxu0
        %v7205 = vadd.f32 0.0, %v7204
        %v7206 = vpop.f32.mrf.mxu0
        %v7207 = vadd.f32 0.0, %v7206
        %7208 = vdwg.mxu0
        %v7209 = vld [vmem:[%s10] sm:$0x1]
        %v7211 = vperm.slane %v7209, 0
        %v7213 = vmul.f32 %v7130, %v7211
        %v7214 = vmul.f32 %v7132, %v7211
        %v7215 = vmul.f32 %v7135, %v7211
        %v7216 = vmul.f32 %v7137, %v7211
        %v7217 = vmul.f32 %v7140, %v7211
        %v7218 = vmul.f32 %v7142, %v7211
        %v7219 = vmul.f32 %v7145, %v7211
        %v7220 = vmul.f32 %v7147, %v7211
        %v7221 = vmul.f32 %v7150, %v7211
        %v7222 = vmul.f32 %v7152, %v7211
        %v7223 = vmul.f32 %v7155, %v7211
        %v7224 = vmul.f32 %v7157, %v7211
        %v7225 = vmul.f32 %v7160, %v7211
        %v7226 = vmul.f32 %v7162, %v7211
        %v7227 = vmul.f32 %v7165, %v7211
        %v7228 = vmul.f32 %v7167, %v7211
        %v7229 = vmul.f32 %v7170, %v7211
        %v7230 = vmul.f32 %v7172, %v7211
        %v7231 = vmul.f32 %v7175, %v7211
        %v7232 = vmul.f32 %v7177, %v7211
        %v7233 = vmul.f32 %v7180, %v7211
        %v7234 = vmul.f32 %v7182, %v7211
        %v7235 = vmul.f32 %v7185, %v7211
        %v7236 = vmul.f32 %v7187, %v7211
        %v7237 = vmul.f32 %v7190, %v7211
        %v7238 = vmul.f32 %v7192, %v7211
        %v7239 = vmul.f32 %v7195, %v7211
        %v7240 = vmul.f32 %v7197, %v7211
        %v7241 = vmul.f32 %v7200, %v7211
        %v7242 = vmul.f32 %v7202, %v7211
        %v7243 = vmul.f32 %v7205, %v7211
        %v7244 = vmul.f32 %v7207, %v7211
        %v7245 = vld [vmem:[%s11] sm:$0x1]
        %v7247 = vperm.slane %v7245, 0
        %v7249 = vadd.f32 %v7213, %v7247
        %v7250 = vadd.f32 %v7214, %v7247
        %v7251 = vadd.f32 %v7215, %v7247
        %v7252 = vadd.f32 %v7216, %v7247
        %v7253 = vadd.f32 %v7217, %v7247
        %v7254 = vadd.f32 %v7218, %v7247
        %v7255 = vadd.f32 %v7219, %v7247
        %v7256 = vadd.f32 %v7220, %v7247
        %v7257 = vadd.f32 %v7221, %v7247
        %v7258 = vadd.f32 %v7222, %v7247
        %v7259 = vadd.f32 %v7223, %v7247
        %v7260 = vadd.f32 %v7224, %v7247
        %v7261 = vadd.f32 %v7225, %v7247
        %v7262 = vadd.f32 %v7226, %v7247
        %v7263 = vadd.f32 %v7227, %v7247
        %v7264 = vadd.f32 %v7228, %v7247
        %v7265 = vadd.f32 %v7229, %v7247
        %v7266 = vadd.f32 %v7230, %v7247
        %v7267 = vadd.f32 %v7231, %v7247
        %v7268 = vadd.f32 %v7232, %v7247
        %v7269 = vadd.f32 %v7233, %v7247
        %v7270 = vadd.f32 %v7234, %v7247
        %v7271 = vadd.f32 %v7235, %v7247
        %v7272 = vadd.f32 %v7236, %v7247
        %v7273 = vadd.f32 %v7237, %v7247
        %v7274 = vadd.f32 %v7238, %v7247
        %v7275 = vadd.f32 %v7239, %v7247
        %v7276 = vadd.f32 %v7240, %v7247
        %v7277 = vadd.f32 %v7241, %v7247
        %v7278 = vadd.f32 %v7242, %v7247
        %v7279 = vadd.f32 %v7243, %v7247
        %v7280 = vadd.f32 %v7244, %v7247
        %v7281 = vpack.c.bf16 %v6929, %v6928
        %v7282 = vpack.c.bf16 %v6931, %v6930
        %v7283 = vpack.c.bf16 %v6933, %v6932
        %v7284 = vpack.c.bf16 %v6935, %v6934
        %v7285 = vpack.c.bf16 %v6937, %v6936
        %v7286 = vpack.c.bf16 %v6939, %v6938
        %v7287 = vpack.c.bf16 %v6941, %v6940
        %v7288 = vpack.c.bf16 %v6943, %v6942
        %v7289 = vpack.c.bf16 %v6945, %v6944
        %v7290 = vpack.c.bf16 %v6947, %v6946
        %v7291 = vpack.c.bf16 %v6949, %v6948
        %v7292 = vpack.c.bf16 %v6951, %v6950
        %v7293 = vpack.c.bf16 %v6953, %v6952
        %v7294 = vpack.c.bf16 %v6955, %v6954
        %v7295 = vpack.c.bf16 %v6957, %v6956
        %v7296 = vpack.c.bf16 %v6959, %v6958
        %v7297 = vld [vmem:[#allocation12] sm:$0xff]
        %v7298 = vld [vmem:[#allocation12 + $0x8] sm:$0xf]
        %v7299 = vld [vmem:[#allocation12 + $0xc] sm:$0xff]
        %v7300 = vld [vmem:[#allocation12 + $0x14] sm:$0xf]
        %v7301 = vld [vmem:[#allocation12 + $0x18] sm:$0xff]
        %v7302 = vld [vmem:[#allocation12 + $0x20] sm:$0xf]
        %v7303 = vld [vmem:[#allocation12 + $0x24] sm:$0xff]
        %v7304 = vld [vmem:[#allocation12 + $0x2c] sm:$0xf]
        %v7305 = vld [vmem:[#allocation12 + $0x30] sm:$0xff]
        %v7306 = vld [vmem:[#allocation12 + $0x38] sm:$0xf]
        %v7307 = vld [vmem:[#allocation12 + $0x3c] sm:$0xff]
        %v7308 = vld [vmem:[#allocation12 + $0x44] sm:$0xf]
        %v7309 = vld [vmem:[#allocation12 + $0x48] sm:$0xff]
        %v7310 = vld [vmem:[#allocation12 + $0x50] sm:$0xf]
        %v7311 = vld [vmem:[#allocation12 + $0x54] sm:$0xff]
        %v7312 = vld [vmem:[#allocation12 + $0x5c] sm:$0xf]
        %v7313 = vld [vmem:[#allocation12 + $0x60] sm:$0xff]
        %v7314 = vld [vmem:[#allocation12 + $0x68] sm:$0xf]
        %v7315 = vld [vmem:[#allocation12 + $0x6c] sm:$0xff]
        %v7316 = vld [vmem:[#allocation12 + $0x74] sm:$0xf]
        %v7317 = vld [vmem:[#allocation12 + $0x78] sm:$0xff]
        %v7318 = vld [vmem:[#allocation12 + $0x80] sm:$0xf]
        %v7319 = vld [vmem:[#allocation12 + $0x84] sm:$0xff]
        %v7320 = vld [vmem:[#allocation12 + $0x8c] sm:$0xf]
        %v7321 = vld [vmem:[#allocation12 + $0x90] sm:$0xff]
        %v7322 = vld [vmem:[#allocation12 + $0x98] sm:$0xf]
        %v7323 = vld [vmem:[#allocation12 + $0x9c] sm:$0xff]
        %v7324 = vld [vmem:[#allocation12 + $0xa4] sm:$0xf]
        %v7325 = vld [vmem:[#allocation12 + $0xa8] sm:$0xff]
        %v7326 = vld [vmem:[#allocation12 + $0xb0] sm:$0xf]
        %v7327 = vld [vmem:[#allocation12 + $0xb4] sm:$0xff]
        %v7328 = vld [vmem:[#allocation12 + $0xbc] sm:$0xf]
        %v7329 = vld [vmem:[%s8] sm:$0x7]
        %v7331 = vperm.slane %v7329, 0
        %v7332 = vperm.slane %v7329, 1
        %v7333 = vperm.slane %v7329, 2
        %v7369 = vunpack.c.l.b16 %v7297
        %v7370 = vunpack.c.h.b16 %v7297
        %v7371 = vunpack.c.l.b16 %v7298
        %v7372 = vunpack.c.l.b16 %v7299
        %v7373 = vunpack.c.h.b16 %v7299
        %v7374 = vunpack.c.l.b16 %v7300
        %v7375 = vunpack.c.l.b16 %v7301
        %v7376 = vunpack.c.h.b16 %v7301
        %v7377 = vunpack.c.l.b16 %v7302
        %v7378 = vunpack.c.l.b16 %v7303
        %v7379 = vunpack.c.h.b16 %v7303
        %v7380 = vunpack.c.l.b16 %v7304
        %v7381 = vunpack.c.l.b16 %v7305
        %v7382 = vunpack.c.h.b16 %v7305
        %v7383 = vunpack.c.l.b16 %v7306
        %v7384 = vunpack.c.l.b16 %v7307
        %v7385 = vunpack.c.h.b16 %v7307
        %v7386 = vunpack.c.l.b16 %v7308
        %v7387 = vunpack.c.l.b16 %v7309
        %v7388 = vunpack.c.h.b16 %v7309
        %v7389 = vunpack.c.l.b16 %v7310
        %v7390 = vunpack.c.l.b16 %v7311
        %v7391 = vunpack.c.h.b16 %v7311
        %v7392 = vunpack.c.l.b16 %v7312
        %v7393 = vunpack.c.l.b16 %v7313
        %v7394 = vunpack.c.h.b16 %v7313
        %v7395 = vunpack.c.l.b16 %v7314
        %v7396 = vunpack.c.l.b16 %v7315
        %v7397 = vunpack.c.h.b16 %v7315
        %v7398 = vunpack.c.l.b16 %v7316
        %v7399 = vunpack.c.l.b16 %v7317
        %v7400 = vunpack.c.h.b16 %v7317
        %v7401 = vunpack.c.l.b16 %v7318
        %v7402 = vunpack.c.l.b16 %v7319
        %v7403 = vunpack.c.h.b16 %v7319
        %v7404 = vunpack.c.l.b16 %v7320
        %v7405 = vunpack.c.l.b16 %v7321
        %v7406 = vunpack.c.h.b16 %v7321
        %v7407 = vunpack.c.l.b16 %v7322
        %v7408 = vunpack.c.l.b16 %v7323
        %v7409 = vunpack.c.h.b16 %v7323
        %v7410 = vunpack.c.l.b16 %v7324
        %v7411 = vunpack.c.l.b16 %v7325
        %v7412 = vunpack.c.h.b16 %v7325
        %v7413 = vunpack.c.l.b16 %v7326
        %v7414 = vunpack.c.l.b16 %v7327
        %v7415 = vunpack.c.h.b16 %v7327
        %v7416 = vunpack.c.l.b16 %v7328
        %v7417 = vpack.c.b16 %v7372, %v7369
        %v7418 = vpack.c.b16 %v7373, %v7370
        %v7419 = vpack.c.b16 %v7374, %v7371
        %v7420 = vpack.c.b16 %v7378, %v7375
        %v7421 = vpack.c.b16 %v7379, %v7376
        %v7422 = vpack.c.b16 %v7380, %v7377
        %v7423 = vpack.c.b16 %v7384, %v7381
        %v7424 = vpack.c.b16 %v7385, %v7382
        %v7425 = vpack.c.b16 %v7386, %v7383
        %v7426 = vpack.c.b16 %v7390, %v7387
        %v7427 = vpack.c.b16 %v7391, %v7388
        %v7428 = vpack.c.b16 %v7392, %v7389
        %v7429 = vpack.c.b16 %v7396, %v7393
        %v7430 = vpack.c.b16 %v7397, %v7394
        %v7431 = vpack.c.b16 %v7398, %v7395
        %v7432 = vpack.c.b16 %v7402, %v7399
        %v7433 = vpack.c.b16 %v7403, %v7400
        %v7434 = vpack.c.b16 %v7404, %v7401
        %v7435 = vpack.c.b16 %v7408, %v7405
        %v7436 = vpack.c.b16 %v7409, %v7406
        %v7437 = vpack.c.b16 %v7410, %v7407
        %v7438 = vpack.c.b16 %v7414, %v7411
        %v7439 = vpack.c.b16 %v7415, %v7412
        %v7440 = vpack.c.b16 %v7416, %v7413
        %7465 = vmatpush.bf16.msra.mxu0 %v7438
        %7466 = vmatpush.bf16.msra.mxu0 %v7435
        %7467 = vmatpush.bf16.msra.mxu0 %v7432
        %7468 = vmatpush.bf16.msra.mxu0 %v7429
        %7469 = vmatpush.bf16.msra.mxu0 %v7426
        %7470 = vmatpush.bf16.msra.mxu0 %v7423
        %7471 = vmatpush.bf16.msra.mxu0 %v7420
        %7472 = vmatpush.bf16.msra.mxu0 %v7417
        %7473 = vmatmul.bf16.gmra.mxu0 %v7281
        %v7474 = vpop.f32.mrf.mxu0
        %v7475 = vadd.f32 %v7331, %v7474
        %v7476 = vpop.f32.mrf.mxu0
        %v7477 = vadd.f32 %v7331, %v7476
        %7478 = vmatmul.bf16.gmra.mxu0 %v7282
        %v7479 = vpop.f32.mrf.mxu0
        %v7480 = vadd.f32 %v7331, %v7479
        %v7481 = vpop.f32.mrf.mxu0
        %v7482 = vadd.f32 %v7331, %v7481
        %7483 = vmatmul.bf16.gmra.mxu0 %v7283
        %v7484 = vpop.f32.mrf.mxu0
        %v7485 = vadd.f32 %v7331, %v7484
        %v7486 = vpop.f32.mrf.mxu0
        %v7487 = vadd.f32 %v7331, %v7486
        %7488 = vmatmul.bf16.gmra.mxu0 %v7284
        %v7489 = vpop.f32.mrf.mxu0
        %v7490 = vadd.f32 %v7331, %v7489
        %v7491 = vpop.f32.mrf.mxu0
        %v7492 = vadd.f32 %v7331, %v7491
        %7493 = vmatmul.bf16.gmra.mxu0 %v7285
        %v7494 = vpop.f32.mrf.mxu0
        %v7495 = vadd.f32 %v7331, %v7494
        %v7496 = vpop.f32.mrf.mxu0
        %v7497 = vadd.f32 %v7331, %v7496
        %7498 = vmatmul.bf16.gmra.mxu0 %v7286
        %v7499 = vpop.f32.mrf.mxu0
        %v7500 = vadd.f32 %v7331, %v7499
        %v7501 = vpop.f32.mrf.mxu0
        %v7502 = vadd.f32 %v7331, %v7501
        %7503 = vmatmul.bf16.gmra.mxu0 %v7287
        %v7504 = vpop.f32.mrf.mxu0
        %v7505 = vadd.f32 %v7331, %v7504
        %v7506 = vpop.f32.mrf.mxu0
        %v7507 = vadd.f32 %v7331, %v7506
        %7508 = vmatmul.bf16.gmra.mxu0 %v7288
        %v7509 = vpop.f32.mrf.mxu0
        %v7510 = vadd.f32 %v7331, %v7509
        %v7511 = vpop.f32.mrf.mxu0
        %v7512 = vadd.f32 %v7331, %v7511
        %7513 = vmatmul.bf16.gmra.mxu0 %v7289
        %v7514 = vpop.f32.mrf.mxu0
        %v7515 = vadd.f32 %v7331, %v7514
        %v7516 = vpop.f32.mrf.mxu0
        %v7517 = vadd.f32 %v7331, %v7516
        %7518 = vmatmul.bf16.gmra.mxu0 %v7290
        %v7519 = vpop.f32.mrf.mxu0
        %v7520 = vadd.f32 %v7331, %v7519
        %v7521 = vpop.f32.mrf.mxu0
        %v7522 = vadd.f32 %v7331, %v7521
        %7523 = vmatmul.bf16.gmra.mxu0 %v7291
        %v7524 = vpop.f32.mrf.mxu0
        %v7525 = vadd.f32 %v7331, %v7524
        %v7526 = vpop.f32.mrf.mxu0
        %v7527 = vadd.f32 %v7331, %v7526
        %7528 = vmatmul.bf16.gmra.mxu0 %v7292
        %v7529 = vpop.f32.mrf.mxu0
        %v7530 = vadd.f32 %v7331, %v7529
        %v7531 = vpop.f32.mrf.mxu0
        %v7532 = vadd.f32 %v7331, %v7531
        %7533 = vmatmul.bf16.gmra.mxu0 %v7293
        %v7534 = vpop.f32.mrf.mxu0
        %v7535 = vadd.f32 %v7331, %v7534
        %v7536 = vpop.f32.mrf.mxu0
        %v7537 = vadd.f32 %v7331, %v7536
        %7538 = vmatmul.bf16.gmra.mxu0 %v7294
        %v7539 = vpop.f32.mrf.mxu0
        %v7540 = vadd.f32 %v7331, %v7539
        %v7541 = vpop.f32.mrf.mxu0
        %v7542 = vadd.f32 %v7331, %v7541
        %7543 = vmatmul.bf16.gmra.mxu0 %v7295
        %v7544 = vpop.f32.mrf.mxu0
        %v7545 = vadd.f32 %v7331, %v7544
        %v7546 = vpop.f32.mrf.mxu0
        %v7547 = vadd.f32 %v7331, %v7546
        %7548 = vmatmul.bf16.gmra.mxu0 %v7296
        %v7549 = vpop.f32.mrf.mxu0
        %v7550 = vadd.f32 %v7331, %v7549
        %v7551 = vpop.f32.mrf.mxu0
        %v7552 = vadd.f32 %v7331, %v7551
        %7553 = vdwg.mxu0
        %7554 = vmatpush.bf16.msra.mxu0 %v7439
        %7555 = vmatpush.bf16.msra.mxu0 %v7436
        %7556 = vmatpush.bf16.msra.mxu0 %v7433
        %7557 = vmatpush.bf16.msra.mxu0 %v7430
        %7558 = vmatpush.bf16.msra.mxu0 %v7427
        %7559 = vmatpush.bf16.msra.mxu0 %v7424
        %7560 = vmatpush.bf16.msra.mxu0 %v7421
        %7561 = vmatpush.bf16.msra.mxu0 %v7418
        %7562 = vmatmul.bf16.gmra.mxu0 %v7281
        %v7563 = vpop.f32.mrf.mxu0
        %v7564 = vadd.f32 %v7332, %v7563
        %v7565 = vpop.f32.mrf.mxu0
        %v7566 = vadd.f32 %v7332, %v7565
        %7567 = vmatmul.bf16.gmra.mxu0 %v7282
        %v7568 = vpop.f32.mrf.mxu0
        %v7569 = vadd.f32 %v7332, %v7568
        %v7570 = vpop.f32.mrf.mxu0
        %v7571 = vadd.f32 %v7332, %v7570
        %7572 = vmatmul.bf16.gmra.mxu0 %v7283
        %v7573 = vpop.f32.mrf.mxu0
        %v7574 = vadd.f32 %v7332, %v7573
        %v7575 = vpop.f32.mrf.mxu0
        %v7576 = vadd.f32 %v7332, %v7575
        %7577 = vmatmul.bf16.gmra.mxu0 %v7284
        %v7578 = vpop.f32.mrf.mxu0
        %v7579 = vadd.f32 %v7332, %v7578
        %v7580 = vpop.f32.mrf.mxu0
        %v7581 = vadd.f32 %v7332, %v7580
        %7582 = vmatmul.bf16.gmra.mxu0 %v7285
        %v7583 = vpop.f32.mrf.mxu0
        %v7584 = vadd.f32 %v7332, %v7583
        %v7585 = vpop.f32.mrf.mxu0
        %v7586 = vadd.f32 %v7332, %v7585
        %7587 = vmatmul.bf16.gmra.mxu0 %v7286
        %v7588 = vpop.f32.mrf.mxu0
        %v7589 = vadd.f32 %v7332, %v7588
        %v7590 = vpop.f32.mrf.mxu0
        %v7591 = vadd.f32 %v7332, %v7590
        %7592 = vmatmul.bf16.gmra.mxu0 %v7287
        %v7593 = vpop.f32.mrf.mxu0
        %v7594 = vadd.f32 %v7332, %v7593
        %v7595 = vpop.f32.mrf.mxu0
        %v7596 = vadd.f32 %v7332, %v7595
        %7597 = vmatmul.bf16.gmra.mxu0 %v7288
        %v7598 = vpop.f32.mrf.mxu0
        %v7599 = vadd.f32 %v7332, %v7598
        %v7600 = vpop.f32.mrf.mxu0
        %v7601 = vadd.f32 %v7332, %v7600
        %7602 = vmatmul.bf16.gmra.mxu0 %v7289
        %v7603 = vpop.f32.mrf.mxu0
        %v7604 = vadd.f32 %v7332, %v7603
        %v7605 = vpop.f32.mrf.mxu0
        %v7606 = vadd.f32 %v7332, %v7605
        %7607 = vmatmul.bf16.gmra.mxu0 %v7290
        %v7608 = vpop.f32.mrf.mxu0
        %v7609 = vadd.f32 %v7332, %v7608
        %v7610 = vpop.f32.mrf.mxu0
        %v7611 = vadd.f32 %v7332, %v7610
        %7612 = vmatmul.bf16.gmra.mxu0 %v7291
        %v7613 = vpop.f32.mrf.mxu0
        %v7614 = vadd.f32 %v7332, %v7613
        %v7615 = vpop.f32.mrf.mxu0
        %v7616 = vadd.f32 %v7332, %v7615
        %7617 = vmatmul.bf16.gmra.mxu0 %v7292
        %v7618 = vpop.f32.mrf.mxu0
        %v7619 = vadd.f32 %v7332, %v7618
        %v7620 = vpop.f32.mrf.mxu0
        %v7621 = vadd.f32 %v7332, %v7620
        %7622 = vmatmul.bf16.gmra.mxu0 %v7293
        %v7623 = vpop.f32.mrf.mxu0
        %v7624 = vadd.f32 %v7332, %v7623
        %v7625 = vpop.f32.mrf.mxu0
        %v7626 = vadd.f32 %v7332, %v7625
        %7627 = vmatmul.bf16.gmra.mxu0 %v7294
        %v7628 = vpop.f32.mrf.mxu0
        %v7629 = vadd.f32 %v7332, %v7628
        %v7630 = vpop.f32.mrf.mxu0
        %v7631 = vadd.f32 %v7332, %v7630
        %7632 = vmatmul.bf16.gmra.mxu0 %v7295
        %v7633 = vpop.f32.mrf.mxu0
        %v7634 = vadd.f32 %v7332, %v7633
        %v7635 = vpop.f32.mrf.mxu0
        %v7636 = vadd.f32 %v7332, %v7635
        %7637 = vmatmul.bf16.gmra.mxu0 %v7296
        %v7638 = vpop.f32.mrf.mxu0
        %v7639 = vadd.f32 %v7332, %v7638
        %v7640 = vpop.f32.mrf.mxu0
        %v7641 = vadd.f32 %v7332, %v7640
        %7642 = vdwg.mxu0
        %7643 = vmatpush.bf16.msra.mxu0 %v7440
        %7644 = vmatpush.bf16.msra.mxu0 %v7437
        %7645 = vmatpush.bf16.msra.mxu0 %v7434
        %7646 = vmatpush.bf16.msra.mxu0 %v7431
        %7647 = vmatpush.bf16.msra.mxu0 %v7428
        %7648 = vmatpush.bf16.msra.mxu0 %v7425
        %7649 = vmatpush.bf16.msra.mxu0 %v7422
        %7650 = vmatpush.bf16.msra.mxu0 %v7419
        %7651 = vmatmul.bf16.gmra.mxu0 %v7281
        %v7652 = vpop.f32.mrf.mxu0
        %v7653 = vadd.f32 %v7333, %v7652
        %v7654 = vpop.f32.mrf.mxu0
        %v7655 = vadd.f32 %v7333, %v7654
        %7656 = vmatmul.bf16.gmra.mxu0 %v7282
        %v7657 = vpop.f32.mrf.mxu0
        %v7658 = vadd.f32 %v7333, %v7657
        %v7659 = vpop.f32.mrf.mxu0
        %v7660 = vadd.f32 %v7333, %v7659
        %7661 = vmatmul.bf16.gmra.mxu0 %v7283
        %v7662 = vpop.f32.mrf.mxu0
        %v7663 = vadd.f32 %v7333, %v7662
        %v7664 = vpop.f32.mrf.mxu0
        %v7665 = vadd.f32 %v7333, %v7664
        %7666 = vmatmul.bf16.gmra.mxu0 %v7284
        %v7667 = vpop.f32.mrf.mxu0
        %v7668 = vadd.f32 %v7333, %v7667
        %v7669 = vpop.f32.mrf.mxu0
        %v7670 = vadd.f32 %v7333, %v7669
        %7671 = vmatmul.bf16.gmra.mxu0 %v7285
        %v7672 = vpop.f32.mrf.mxu0
        %v7673 = vadd.f32 %v7333, %v7672
        %v7674 = vpop.f32.mrf.mxu0
        %v7675 = vadd.f32 %v7333, %v7674
        %7676 = vmatmul.bf16.gmra.mxu0 %v7286
        %v7677 = vpop.f32.mrf.mxu0
        %v7678 = vadd.f32 %v7333, %v7677
        %v7679 = vpop.f32.mrf.mxu0
        %v7680 = vadd.f32 %v7333, %v7679
        %7681 = vmatmul.bf16.gmra.mxu0 %v7287
        %v7682 = vpop.f32.mrf.mxu0
        %v7683 = vadd.f32 %v7333, %v7682
        %v7684 = vpop.f32.mrf.mxu0
        %v7685 = vadd.f32 %v7333, %v7684
        %7686 = vmatmul.bf16.gmra.mxu0 %v7288
        %v7687 = vpop.f32.mrf.mxu0
        %v7688 = vadd.f32 %v7333, %v7687
        %v7689 = vpop.f32.mrf.mxu0
        %v7690 = vadd.f32 %v7333, %v7689
        %7691 = vmatmul.bf16.gmra.mxu0 %v7289
        %v7692 = vpop.f32.mrf.mxu0
        %v7693 = vadd.f32 %v7333, %v7692
        %v7694 = vpop.f32.mrf.mxu0
        %v7695 = vadd.f32 %v7333, %v7694
        %7696 = vmatmul.bf16.gmra.mxu0 %v7290
        %v7697 = vpop.f32.mrf.mxu0
        %v7698 = vadd.f32 %v7333, %v7697
        %v7699 = vpop.f32.mrf.mxu0
        %v7700 = vadd.f32 %v7333, %v7699
        %7701 = vmatmul.bf16.gmra.mxu0 %v7291
        %v7702 = vpop.f32.mrf.mxu0
        %v7703 = vadd.f32 %v7333, %v7702
        %v7704 = vpop.f32.mrf.mxu0
        %v7705 = vadd.f32 %v7333, %v7704
        %7706 = vmatmul.bf16.gmra.mxu0 %v7292
        %v7707 = vpop.f32.mrf.mxu0
        %v7708 = vadd.f32 %v7333, %v7707
        %v7709 = vpop.f32.mrf.mxu0
        %v7710 = vadd.f32 %v7333, %v7709
        %7711 = vmatmul.bf16.gmra.mxu0 %v7293
        %v7712 = vpop.f32.mrf.mxu0
        %v7713 = vadd.f32 %v7333, %v7712
        %v7714 = vpop.f32.mrf.mxu0
        %v7715 = vadd.f32 %v7333, %v7714
        %7716 = vmatmul.bf16.gmra.mxu0 %v7294
        %v7717 = vpop.f32.mrf.mxu0
        %v7718 = vadd.f32 %v7333, %v7717
        %v7719 = vpop.f32.mrf.mxu0
        %v7720 = vadd.f32 %v7333, %v7719
        %7721 = vmatmul.bf16.gmra.mxu0 %v7295
        %v7722 = vpop.f32.mrf.mxu0
        %v7723 = vadd.f32 %v7333, %v7722
        %v7724 = vpop.f32.mrf.mxu0
        %v7725 = vadd.f32 %v7333, %v7724
        %7726 = vmatmul.bf16.gmra.mxu0 %v7296
        %v7727 = vpop.f32.mrf.mxu0
        %v7728 = vadd.f32 %v7333, %v7727
        %v7729 = vpop.f32.mrf.mxu0
        %v7730 = vadd.f32 %v7333, %v7729
        %7731 = vdwg.mxu0
        %v7732 = vpack.c.bf16 %v7477, %v7475
        %v7733 = vpack.c.bf16 %v7482, %v7480
        %v7734 = vpack.c.bf16 %v7487, %v7485
        %v7735 = vpack.c.bf16 %v7492, %v7490
        %v7736 = vpack.c.bf16 %v7497, %v7495
        %v7737 = vpack.c.bf16 %v7502, %v7500
        %v7738 = vpack.c.bf16 %v7507, %v7505
        %v7739 = vpack.c.bf16 %v7512, %v7510
        %v7740 = vpack.c.bf16 %v7517, %v7515
        %v7741 = vpack.c.bf16 %v7522, %v7520
        %v7742 = vpack.c.bf16 %v7527, %v7525
        %v7743 = vpack.c.bf16 %v7532, %v7530
        %v7744 = vpack.c.bf16 %v7537, %v7535
        %v7745 = vpack.c.bf16 %v7542, %v7540
        %v7746 = vpack.c.bf16 %v7547, %v7545
        %v7747 = vpack.c.bf16 %v7552, %v7550
        %v7748 = vpack.c.bf16 %v7566, %v7564
        %v7749 = vpack.c.bf16 %v7571, %v7569
        %v7750 = vpack.c.bf16 %v7576, %v7574
        %v7751 = vpack.c.bf16 %v7581, %v7579
        %v7752 = vpack.c.bf16 %v7586, %v7584
        %v7753 = vpack.c.bf16 %v7591, %v7589
        %v7754 = vpack.c.bf16 %v7596, %v7594
        %v7755 = vpack.c.bf16 %v7601, %v7599
        %v7756 = vpack.c.bf16 %v7606, %v7604
        %v7757 = vpack.c.bf16 %v7611, %v7609
        %v7758 = vpack.c.bf16 %v7616, %v7614
        %v7759 = vpack.c.bf16 %v7621, %v7619
        %v7760 = vpack.c.bf16 %v7626, %v7624
        %v7761 = vpack.c.bf16 %v7631, %v7629
        %v7762 = vpack.c.bf16 %v7636, %v7634
        %v7763 = vpack.c.bf16 %v7641, %v7639
        %v7764 = vpack.c.bf16 %v7655, %v7653
        %v7765 = vpack.c.bf16 %v7660, %v7658
        %v7766 = vpack.c.bf16 %v7665, %v7663
        %v7767 = vpack.c.bf16 %v7670, %v7668
        %v7768 = vpack.c.bf16 %v7675, %v7673
        %v7769 = vpack.c.bf16 %v7680, %v7678
        %v7770 = vpack.c.bf16 %v7685, %v7683
        %v7771 = vpack.c.bf16 %v7690, %v7688
        %v7772 = vpack.c.bf16 %v7695, %v7693
        %v7773 = vpack.c.bf16 %v7700, %v7698
        %v7774 = vpack.c.bf16 %v7705, %v7703
        %v7775 = vpack.c.bf16 %v7710, %v7708
        %v7776 = vpack.c.bf16 %v7715, %v7713
        %v7777 = vpack.c.bf16 %v7720, %v7718
        %v7778 = vpack.c.bf16 %v7725, %v7723
        %v7779 = vpack.c.bf16 %v7730, %v7728
        %7780 = vmatpush.bf16.xpose.msra.mxu0 %v7755
        %7781 = vmatpush.bf16.xpose.msra.mxu0 %v7754
        %7782 = vmatpush.bf16.xpose.msra.mxu0 %v7753
        %7783 = vmatpush.bf16.xpose.msra.mxu0 %v7752
        %7784 = vmatpush.bf16.xpose.msra.mxu0 %v7751
        %7785 = vmatpush.bf16.xpose.msra.mxu0 %v7750
        %7786 = vmatpush.bf16.xpose.msra.mxu0 %v7749
        %7787 = vmatpush.bf16.xpose.msra.mxu0 %v7748
        %7788 = vmatmul.bf16.gmra.mxu0 %v7732
        %v7789 = vpop.f32.mrf.mxu0
        %v7790 = vadd.f32 0.0, %v7789
        %v7791 = vpop.f32.mrf.mxu0
        %v7792 = vadd.f32 0.0, %v7791
        %7793 = vmatmul.bf16.gmra.mxu0 %v7733
        %v7794 = vpop.f32.mrf.mxu0
        %v7795 = vadd.f32 0.0, %v7794
        %v7796 = vpop.f32.mrf.mxu0
        %v7797 = vadd.f32 0.0, %v7796
        %7798 = vmatmul.bf16.gmra.mxu0 %v7734
        %v7799 = vpop.f32.mrf.mxu0
        %v7800 = vadd.f32 0.0, %v7799
        %v7801 = vpop.f32.mrf.mxu0
        %v7802 = vadd.f32 0.0, %v7801
        %7803 = vmatmul.bf16.gmra.mxu0 %v7735
        %v7804 = vpop.f32.mrf.mxu0
        %v7805 = vadd.f32 0.0, %v7804
        %v7806 = vpop.f32.mrf.mxu0
        %v7807 = vadd.f32 0.0, %v7806
        %7808 = vmatmul.bf16.gmra.mxu0 %v7736
        %v7809 = vpop.f32.mrf.mxu0
        %v7810 = vadd.f32 0.0, %v7809
        %v7811 = vpop.f32.mrf.mxu0
        %v7812 = vadd.f32 0.0, %v7811
        %7813 = vmatmul.bf16.gmra.mxu0 %v7737
        %v7814 = vpop.f32.mrf.mxu0
        %v7815 = vadd.f32 0.0, %v7814
        %v7816 = vpop.f32.mrf.mxu0
        %v7817 = vadd.f32 0.0, %v7816
        %7818 = vmatmul.bf16.gmra.mxu0 %v7738
        %v7819 = vpop.f32.mrf.mxu0
        %v7820 = vadd.f32 0.0, %v7819
        %v7821 = vpop.f32.mrf.mxu0
        %v7822 = vadd.f32 0.0, %v7821
        %7823 = vmatmul.bf16.gmra.mxu0 %v7739
        %v7824 = vpop.f32.mrf.mxu0
        %v7825 = vadd.f32 0.0, %v7824
        %v7826 = vpop.f32.mrf.mxu0
        %v7827 = vadd.f32 0.0, %v7826
        %7828 = vmatmul.bf16.gmra.mxu0 %v7740
        %v7829 = vpop.f32.mrf.mxu0
        %v7830 = vadd.f32 0.0, %v7829
        %v7831 = vpop.f32.mrf.mxu0
        %v7832 = vadd.f32 0.0, %v7831
        %7833 = vmatmul.bf16.gmra.mxu0 %v7741
        %v7834 = vpop.f32.mrf.mxu0
        %v7835 = vadd.f32 0.0, %v7834
        %v7836 = vpop.f32.mrf.mxu0
        %v7837 = vadd.f32 0.0, %v7836
        %7838 = vmatmul.bf16.gmra.mxu0 %v7742
        %v7839 = vpop.f32.mrf.mxu0
        %v7840 = vadd.f32 0.0, %v7839
        %v7841 = vpop.f32.mrf.mxu0
        %v7842 = vadd.f32 0.0, %v7841
        %7843 = vmatmul.bf16.gmra.mxu0 %v7743
        %v7844 = vpop.f32.mrf.mxu0
        %v7845 = vadd.f32 0.0, %v7844
        %v7846 = vpop.f32.mrf.mxu0
        %v7847 = vadd.f32 0.0, %v7846
        %7848 = vmatmul.bf16.gmra.mxu0 %v7744
        %v7849 = vpop.f32.mrf.mxu0
        %v7850 = vadd.f32 0.0, %v7849
        %v7851 = vpop.f32.mrf.mxu0
        %v7852 = vadd.f32 0.0, %v7851
        %7853 = vmatmul.bf16.gmra.mxu0 %v7745
        %v7854 = vpop.f32.mrf.mxu0
        %v7855 = vadd.f32 0.0, %v7854
        %v7856 = vpop.f32.mrf.mxu0
        %v7857 = vadd.f32 0.0, %v7856
        %7858 = vmatmul.bf16.gmra.mxu0 %v7746
        %v7859 = vpop.f32.mrf.mxu0
        %v7860 = vadd.f32 0.0, %v7859
        %v7861 = vpop.f32.mrf.mxu0
        %v7862 = vadd.f32 0.0, %v7861
        %7863 = vmatmul.bf16.gmra.mxu0 %v7747
        %v7864 = vpop.f32.mrf.mxu0
        %v7865 = vadd.f32 0.0, %v7864
        %v7866 = vpop.f32.mrf.mxu0
        %v7867 = vadd.f32 0.0, %v7866
        %7868 = vdwg.mxu0
        %7869 = vmatpush.bf16.xpose.msra.mxu0 %v7763
        %7870 = vmatpush.bf16.xpose.msra.mxu0 %v7762
        %7871 = vmatpush.bf16.xpose.msra.mxu0 %v7761
        %7872 = vmatpush.bf16.xpose.msra.mxu0 %v7760
        %7873 = vmatpush.bf16.xpose.msra.mxu0 %v7759
        %7874 = vmatpush.bf16.xpose.msra.mxu0 %v7758
        %7875 = vmatpush.bf16.xpose.msra.mxu0 %v7757
        %7876 = vmatpush.bf16.xpose.msra.mxu0 %v7756
        %7877 = vmatmul.bf16.gmra.mxu0 %v7732
        %v7878 = vpop.f32.mrf.mxu0
        %v7879 = vadd.f32 0.0, %v7878
        %v7880 = vpop.f32.mrf.mxu0
        %v7881 = vadd.f32 0.0, %v7880
        %7882 = vmatmul.bf16.gmra.mxu0 %v7733
        %v7883 = vpop.f32.mrf.mxu0
        %v7884 = vadd.f32 0.0, %v7883
        %v7885 = vpop.f32.mrf.mxu0
        %v7886 = vadd.f32 0.0, %v7885
        %7887 = vmatmul.bf16.gmra.mxu0 %v7734
        %v7888 = vpop.f32.mrf.mxu0
        %v7889 = vadd.f32 0.0, %v7888
        %v7890 = vpop.f32.mrf.mxu0
        %v7891 = vadd.f32 0.0, %v7890
        %7892 = vmatmul.bf16.gmra.mxu0 %v7735
        %v7893 = vpop.f32.mrf.mxu0
        %v7894 = vadd.f32 0.0, %v7893
        %v7895 = vpop.f32.mrf.mxu0
        %v7896 = vadd.f32 0.0, %v7895
        %7897 = vmatmul.bf16.gmra.mxu0 %v7736
        %v7898 = vpop.f32.mrf.mxu0
        %v7899 = vadd.f32 0.0, %v7898
        %v7900 = vpop.f32.mrf.mxu0
        %v7901 = vadd.f32 0.0, %v7900
        %7902 = vmatmul.bf16.gmra.mxu0 %v7737
        %v7903 = vpop.f32.mrf.mxu0
        %v7904 = vadd.f32 0.0, %v7903
        %v7905 = vpop.f32.mrf.mxu0
        %v7906 = vadd.f32 0.0, %v7905
        %7907 = vmatmul.bf16.gmra.mxu0 %v7738
        %v7908 = vpop.f32.mrf.mxu0
        %v7909 = vadd.f32 0.0, %v7908
        %v7910 = vpop.f32.mrf.mxu0
        %v7911 = vadd.f32 0.0, %v7910
        %7912 = vmatmul.bf16.gmra.mxu0 %v7739
        %v7913 = vpop.f32.mrf.mxu0
        %v7914 = vadd.f32 0.0, %v7913
        %v7915 = vpop.f32.mrf.mxu0
        %v7916 = vadd.f32 0.0, %v7915
        %7917 = vmatmul.bf16.gmra.mxu0 %v7740
        %v7918 = vpop.f32.mrf.mxu0
        %v7919 = vadd.f32 0.0, %v7918
        %v7920 = vpop.f32.mrf.mxu0
        %v7921 = vadd.f32 0.0, %v7920
        %7922 = vmatmul.bf16.gmra.mxu0 %v7741
        %v7923 = vpop.f32.mrf.mxu0
        %v7924 = vadd.f32 0.0, %v7923
        %v7925 = vpop.f32.mrf.mxu0
        %v7926 = vadd.f32 0.0, %v7925
        %7927 = vmatmul.bf16.gmra.mxu0 %v7742
        %v7928 = vpop.f32.mrf.mxu0
        %v7929 = vadd.f32 0.0, %v7928
        %v7930 = vpop.f32.mrf.mxu0
        %v7931 = vadd.f32 0.0, %v7930
        %7932 = vmatmul.bf16.gmra.mxu0 %v7743
        %v7933 = vpop.f32.mrf.mxu0
        %v7934 = vadd.f32 0.0, %v7933
        %v7935 = vpop.f32.mrf.mxu0
        %v7936 = vadd.f32 0.0, %v7935
        %7937 = vmatmul.bf16.gmra.mxu0 %v7744
        %v7938 = vpop.f32.mrf.mxu0
        %v7939 = vadd.f32 0.0, %v7938
        %v7940 = vpop.f32.mrf.mxu0
        %v7941 = vadd.f32 0.0, %v7940
        %7942 = vmatmul.bf16.gmra.mxu0 %v7745
        %v7943 = vpop.f32.mrf.mxu0
        %v7944 = vadd.f32 0.0, %v7943
        %v7945 = vpop.f32.mrf.mxu0
        %v7946 = vadd.f32 0.0, %v7945
        %7947 = vmatmul.bf16.gmra.mxu0 %v7746
        %v7948 = vpop.f32.mrf.mxu0
        %v7949 = vadd.f32 0.0, %v7948
        %v7950 = vpop.f32.mrf.mxu0
        %v7951 = vadd.f32 0.0, %v7950
        %7952 = vmatmul.bf16.gmra.mxu0 %v7747
        %v7953 = vpop.f32.mrf.mxu0
        %v7954 = vadd.f32 0.0, %v7953
        %v7955 = vpop.f32.mrf.mxu0
        %v7956 = vadd.f32 0.0, %v7955
        %7957 = vdwg.mxu0
        %v7958 = vmax.f32 %v7790, %v7879
        %7959 = vmax.xlane.f32.xlu0 %v7958
        %v7960 = vpop.xlane.xlu0 %7959
        %v7961 = vmax.f32 %v7792, %v7881
        %7962 = vmax.xlane.f32.xlu0 %v7961
        %v7963 = vpop.xlane.xlu0 %7962
        %v7964 = vmax.f32 %v7795, %v7884
        %7965 = vmax.xlane.f32.xlu0 %v7964
        %v7966 = vpop.xlane.xlu0 %7965
        %v7967 = vmax.f32 %v7797, %v7886
        %7968 = vmax.xlane.f32.xlu0 %v7967
        %v7969 = vpop.xlane.xlu0 %7968
        %v7970 = vmax.f32 %v7800, %v7889
        %7971 = vmax.xlane.f32.xlu0 %v7970
        %v7972 = vpop.xlane.xlu0 %7971
        %v7973 = vmax.f32 %v7802, %v7891
        %7974 = vmax.xlane.f32.xlu0 %v7973
        %v7975 = vpop.xlane.xlu0 %7974
        %v7976 = vmax.f32 %v7805, %v7894
        %7977 = vmax.xlane.f32.xlu0 %v7976
        %v7978 = vpop.xlane.xlu0 %7977
        %v7979 = vmax.f32 %v7807, %v7896
        %7980 = vmax.xlane.f32.xlu0 %v7979
        %v7981 = vpop.xlane.xlu0 %7980
        %v7982 = vmax.f32 %v7810, %v7899
        %7983 = vmax.xlane.f32.xlu0 %v7982
        %v7984 = vpop.xlane.xlu0 %7983
        %v7985 = vmax.f32 %v7812, %v7901
        %7986 = vmax.xlane.f32.xlu0 %v7985
        %v7987 = vpop.xlane.xlu0 %7986
        %v7988 = vmax.f32 %v7815, %v7904
        %7989 = vmax.xlane.f32.xlu0 %v7988
        %v7990 = vpop.xlane.xlu0 %7989
        %v7991 = vmax.f32 %v7817, %v7906
        %7992 = vmax.xlane.f32.xlu0 %v7991
        %v7993 = vpop.xlane.xlu0 %7992
        %v7994 = vmax.f32 %v7820, %v7909
        %7995 = vmax.xlane.f32.xlu0 %v7994
        %v7996 = vpop.xlane.xlu0 %7995
        %v7997 = vmax.f32 %v7822, %v7911
        %7998 = vmax.xlane.f32.xlu0 %v7997
        %v7999 = vpop.xlane.xlu0 %7998
        %v8000 = vmax.f32 %v7825, %v7914
        %8001 = vmax.xlane.f32.xlu0 %v8000
        %v8002 = vpop.xlane.xlu0 %8001
        %v8003 = vmax.f32 %v7827, %v7916
        %8004 = vmax.xlane.f32.xlu0 %v8003
        %v8005 = vpop.xlane.xlu0 %8004
        %v8006 = vmax.f32 %v7830, %v7919
        %8007 = vmax.xlane.f32.xlu0 %v8006
        %v8008 = vpop.xlane.xlu0 %8007
        %v8009 = vmax.f32 %v7832, %v7921
        %8010 = vmax.xlane.f32.xlu0 %v8009
        %v8011 = vpop.xlane.xlu0 %8010
        %v8012 = vmax.f32 %v7835, %v7924
        %8013 = vmax.xlane.f32.xlu0 %v8012
        %v8014 = vpop.xlane.xlu0 %8013
        %v8015 = vmax.f32 %v7837, %v7926
        %8016 = vmax.xlane.f32.xlu0 %v8015
        %v8017 = vpop.xlane.xlu0 %8016
        %v8018 = vmax.f32 %v7840, %v7929
        %8019 = vmax.xlane.f32.xlu0 %v8018
        %v8020 = vpop.xlane.xlu0 %8019
        %v8021 = vmax.f32 %v7842, %v7931
        %8022 = vmax.xlane.f32.xlu0 %v8021
        %v8023 = vpop.xlane.xlu0 %8022
        %v8024 = vmax.f32 %v7845, %v7934
        %8025 = vmax.xlane.f32.xlu0 %v8024
        %v8026 = vpop.xlane.xlu0 %8025
        %v8027 = vmax.f32 %v7847, %v7936
        %8028 = vmax.xlane.f32.xlu0 %v8027
        %v8029 = vpop.xlane.xlu0 %8028
        %v8030 = vmax.f32 %v7850, %v7939
        %8031 = vmax.xlane.f32.xlu0 %v8030
        %v8032 = vpop.xlane.xlu0 %8031
        %v8033 = vmax.f32 %v7852, %v7941
        %8034 = vmax.xlane.f32.xlu0 %v8033
        %v8035 = vpop.xlane.xlu0 %8034
        %v8036 = vmax.f32 %v7855, %v7944
        %8037 = vmax.xlane.f32.xlu0 %v8036
        %v8038 = vpop.xlane.xlu0 %8037
        %v8039 = vmax.f32 %v7857, %v7946
        %8040 = vmax.xlane.f32.xlu0 %v8039
        %v8041 = vpop.xlane.xlu0 %8040
        %v8042 = vmax.f32 %v7860, %v7949
        %8043 = vmax.xlane.f32.xlu0 %v8042
        %v8044 = vpop.xlane.xlu0 %8043
        %v8045 = vmax.f32 %v7862, %v7951
        %8046 = vmax.xlane.f32.xlu0 %v8045
        %v8047 = vpop.xlane.xlu0 %8046
        %v8048 = vmax.f32 %v7865, %v7954
        %8049 = vmax.xlane.f32.xlu0 %v8048
        %v8050 = vpop.xlane.xlu0 %8049
        %v8051 = vmax.f32 %v7867, %v7956
        %8052 = vmax.xlane.f32.xlu0 %v8051
        %v8053 = vpop.xlane.xlu0 %8052
        %v8054 = vsub.f32 %v7790, %v7960
        %v8055 = vsub.f32 %v7879, %v7960
        %v8056 = vsub.f32 %v7792, %v7963
        %v8057 = vsub.f32 %v7881, %v7963
        %v8058 = vsub.f32 %v7795, %v7966
        %v8059 = vsub.f32 %v7884, %v7966
        %v8060 = vsub.f32 %v7797, %v7969
        %v8061 = vsub.f32 %v7886, %v7969
        %v8062 = vsub.f32 %v7800, %v7972
        %v8063 = vsub.f32 %v7889, %v7972
        %v8064 = vsub.f32 %v7802, %v7975
        %v8065 = vsub.f32 %v7891, %v7975
        %v8066 = vsub.f32 %v7805, %v7978
        %v8067 = vsub.f32 %v7894, %v7978
        %v8068 = vsub.f32 %v7807, %v7981
        %v8069 = vsub.f32 %v7896, %v7981
        %v8070 = vsub.f32 %v7810, %v7984
        %v8071 = vsub.f32 %v7899, %v7984
        %v8072 = vsub.f32 %v7812, %v7987
        %v8073 = vsub.f32 %v7901, %v7987
        %v8074 = vsub.f32 %v7815, %v7990
        %v8075 = vsub.f32 %v7904, %v7990
        %v8076 = vsub.f32 %v7817, %v7993
        %v8077 = vsub.f32 %v7906, %v7993
        %v8078 = vsub.f32 %v7820, %v7996
        %v8079 = vsub.f32 %v7909, %v7996
        %v8080 = vsub.f32 %v7822, %v7999
        %v8081 = vsub.f32 %v7911, %v7999
        %v8082 = vsub.f32 %v7825, %v8002
        %v8083 = vsub.f32 %v7914, %v8002
        %v8084 = vsub.f32 %v7827, %v8005
        %v8085 = vsub.f32 %v7916, %v8005
        %v8086 = vsub.f32 %v7830, %v8008
        %v8087 = vsub.f32 %v7919, %v8008
        %v8088 = vsub.f32 %v7832, %v8011
        %v8089 = vsub.f32 %v7921, %v8011
        %v8090 = vsub.f32 %v7835, %v8014
        %v8091 = vsub.f32 %v7924, %v8014
        %v8092 = vsub.f32 %v7837, %v8017
        %v8093 = vsub.f32 %v7926, %v8017
        %v8094 = vsub.f32 %v7840, %v8020
        %v8095 = vsub.f32 %v7929, %v8020
        %v8096 = vsub.f32 %v7842, %v8023
        %v8097 = vsub.f32 %v7931, %v8023
        %v8098 = vsub.f32 %v7845, %v8026
        %v8099 = vsub.f32 %v7934, %v8026
        %v8100 = vsub.f32 %v7847, %v8029
        %v8101 = vsub.f32 %v7936, %v8029
        %v8102 = vsub.f32 %v7850, %v8032
        %v8103 = vsub.f32 %v7939, %v8032
        %v8104 = vsub.f32 %v7852, %v8035
        %v8105 = vsub.f32 %v7941, %v8035
        %v8106 = vsub.f32 %v7855, %v8038
        %v8107 = vsub.f32 %v7944, %v8038
        %v8108 = vsub.f32 %v7857, %v8041
        %v8109 = vsub.f32 %v7946, %v8041
        %v8110 = vsub.f32 %v7860, %v8044
        %v8111 = vsub.f32 %v7949, %v8044
        %v8112 = vsub.f32 %v7862, %v8047
        %v8113 = vsub.f32 %v7951, %v8047
        %v8114 = vsub.f32 %v7865, %v8050
        %v8115 = vsub.f32 %v7954, %v8050
        %v8116 = vsub.f32 %v7867, %v8053
        %v8117 = vsub.f32 %v7956, %v8053
        %v8118 = vmul.f32 %v8054, 1.442695
        %v8119 = vpow.pop %v8118
        %v8120 = vmul.f32 %v8055, 1.442695
        %v8121 = vpow.pop %v8120
        %v8122 = vmul.f32 %v8056, 1.442695
        %v8123 = vpow.pop %v8122
        %v8124 = vmul.f32 %v8057, 1.442695
        %v8125 = vpow.pop %v8124
        %v8126 = vmul.f32 %v8058, 1.442695
        %v8127 = vpow.pop %v8126
        %v8128 = vmul.f32 %v8059, 1.442695
        %v8129 = vpow.pop %v8128
        %v8130 = vmul.f32 %v8060, 1.442695
        %v8131 = vpow.pop %v8130
        %v8132 = vmul.f32 %v8061, 1.442695
        %v8133 = vpow.pop %v8132
        %v8134 = vmul.f32 %v8062, 1.442695
        %v8135 = vpow.pop %v8134
        %v8136 = vmul.f32 %v8063, 1.442695
        %v8137 = vpow.pop %v8136
        %v8138 = vmul.f32 %v8064, 1.442695
        %v8139 = vpow.pop %v8138
        %v8140 = vmul.f32 %v8065, 1.442695
        %v8141 = vpow.pop %v8140
        %v8142 = vmul.f32 %v8066, 1.442695
        %v8143 = vpow.pop %v8142
        %v8144 = vmul.f32 %v8067, 1.442695
        %v8145 = vpow.pop %v8144
        %v8146 = vmul.f32 %v8068, 1.442695
        %v8147 = vpow.pop %v8146
        %v8148 = vmul.f32 %v8069, 1.442695
        %v8149 = vpow.pop %v8148
        %v8150 = vmul.f32 %v8070, 1.442695
        %v8151 = vpow.pop %v8150
        %v8152 = vmul.f32 %v8071, 1.442695
        %v8153 = vpow.pop %v8152
        %v8154 = vmul.f32 %v8072, 1.442695
        %v8155 = vpow.pop %v8154
        %v8156 = vmul.f32 %v8073, 1.442695
        %v8157 = vpow.pop %v8156
        %v8158 = vmul.f32 %v8074, 1.442695
        %v8159 = vpow.pop %v8158
        %v8160 = vmul.f32 %v8075, 1.442695
        %v8161 = vpow.pop %v8160
        %v8162 = vmul.f32 %v8076, 1.442695
        %v8163 = vpow.pop %v8162
        %v8164 = vmul.f32 %v8077, 1.442695
        %v8165 = vpow.pop %v8164
        %v8166 = vmul.f32 %v8078, 1.442695
        %v8167 = vpow.pop %v8166
        %v8168 = vmul.f32 %v8079, 1.442695
        %v8169 = vpow.pop %v8168
        %v8170 = vmul.f32 %v8080, 1.442695
        %v8171 = vpow.pop %v8170
        %v8172 = vmul.f32 %v8081, 1.442695
        %v8173 = vpow.pop %v8172
        %v8174 = vmul.f32 %v8082, 1.442695
        %v8175 = vpow.pop %v8174
        %v8176 = vmul.f32 %v8083, 1.442695
        %v8177 = vpow.pop %v8176
        %v8178 = vmul.f32 %v8084, 1.442695
        %v8179 = vpow.pop %v8178
        %v8180 = vmul.f32 %v8085, 1.442695
        %v8181 = vpow.pop %v8180
        %v8182 = vmul.f32 %v8086, 1.442695
        %v8183 = vpow.pop %v8182
        %v8184 = vmul.f32 %v8087, 1.442695
        %v8185 = vpow.pop %v8184
        %v8186 = vmul.f32 %v8088, 1.442695
        %v8187 = vpow.pop %v8186
        %v8188 = vmul.f32 %v8089, 1.442695
        %v8189 = vpow.pop %v8188
        %v8190 = vmul.f32 %v8090, 1.442695
        %v8191 = vpow.pop %v8190
        %v8192 = vmul.f32 %v8091, 1.442695
        %v8193 = vpow.pop %v8192
        %v8194 = vmul.f32 %v8092, 1.442695
        %v8195 = vpow.pop %v8194
        %v8196 = vmul.f32 %v8093, 1.442695
        %v8197 = vpow.pop %v8196
        %v8198 = vmul.f32 %v8094, 1.442695
        %v8199 = vpow.pop %v8198
        %v8200 = vmul.f32 %v8095, 1.442695
        %v8201 = vpow.pop %v8200
        %v8202 = vmul.f32 %v8096, 1.442695
        %v8203 = vpow.pop %v8202
        %v8204 = vmul.f32 %v8097, 1.442695
        %v8205 = vpow.pop %v8204
        %v8206 = vmul.f32 %v8098, 1.442695
        %v8207 = vpow.pop %v8206
        %v8208 = vmul.f32 %v8099, 1.442695
        %v8209 = vpow.pop %v8208
        %v8210 = vmul.f32 %v8100, 1.442695
        %v8211 = vpow.pop %v8210
        %v8212 = vmul.f32 %v8101, 1.442695
        %v8213 = vpow.pop %v8212
        %v8214 = vmul.f32 %v8102, 1.442695
        %v8215 = vpow.pop %v8214
        %v8216 = vmul.f32 %v8103, 1.442695
        %v8217 = vpow.pop %v8216
        %v8218 = vmul.f32 %v8104, 1.442695
        %v8219 = vpow.pop %v8218
        %v8220 = vmul.f32 %v8105, 1.442695
        %v8221 = vpow.pop %v8220
        %v8222 = vmul.f32 %v8106, 1.442695
        %v8223 = vpow.pop %v8222
        %v8224 = vmul.f32 %v8107, 1.442695
        %v8225 = vpow.pop %v8224
        %v8226 = vmul.f32 %v8108, 1.442695
        %v8227 = vpow.pop %v8226
        %v8228 = vmul.f32 %v8109, 1.442695
        %v8229 = vpow.pop %v8228
        %v8230 = vmul.f32 %v8110, 1.442695
        %v8231 = vpow.pop %v8230
        %v8232 = vmul.f32 %v8111, 1.442695
        %v8233 = vpow.pop %v8232
        %v8234 = vmul.f32 %v8112, 1.442695
        %v8235 = vpow.pop %v8234
        %v8236 = vmul.f32 %v8113, 1.442695
        %v8237 = vpow.pop %v8236
        %v8238 = vmul.f32 %v8114, 1.442695
        %v8239 = vpow.pop %v8238
        %v8240 = vmul.f32 %v8115, 1.442695
        %v8241 = vpow.pop %v8240
        %v8242 = vmul.f32 %v8116, 1.442695
        %v8243 = vpow.pop %v8242
        %v8244 = vmul.f32 %v8117, 1.442695
        %v8245 = vpow.pop %v8244
        %v8246 = vadd.f32 %v8119, %v8121
        %8247 = vadd.xlane.f32.xlu0 %v8246
        %v8248 = vpop.xlane.xlu0 %8247
        %v8249 = vadd.f32 %v8123, %v8125
        %8250 = vadd.xlane.f32.xlu0 %v8249
        %v8251 = vpop.xlane.xlu0 %8250
        %v8252 = vadd.f32 %v8127, %v8129
        %8253 = vadd.xlane.f32.xlu0 %v8252
        %v8254 = vpop.xlane.xlu0 %8253
        %v8255 = vadd.f32 %v8131, %v8133
        %8256 = vadd.xlane.f32.xlu0 %v8255
        %v8257 = vpop.xlane.xlu0 %8256
        %v8258 = vadd.f32 %v8135, %v8137
        %8259 = vadd.xlane.f32.xlu0 %v8258
        %v8260 = vpop.xlane.xlu0 %8259
        %v8261 = vadd.f32 %v8139, %v8141
        %8262 = vadd.xlane.f32.xlu0 %v8261
        %v8263 = vpop.xlane.xlu0 %8262
        %v8264 = vadd.f32 %v8143, %v8145
        %8265 = vadd.xlane.f32.xlu0 %v8264
        %v8266 = vpop.xlane.xlu0 %8265
        %v8267 = vadd.f32 %v8147, %v8149
        %8268 = vadd.xlane.f32.xlu0 %v8267
        %v8269 = vpop.xlane.xlu0 %8268
        %v8270 = vadd.f32 %v8151, %v8153
        %8271 = vadd.xlane.f32.xlu0 %v8270
        %v8272 = vpop.xlane.xlu0 %8271
        %v8273 = vadd.f32 %v8155, %v8157
        %8274 = vadd.xlane.f32.xlu0 %v8273
        %v8275 = vpop.xlane.xlu0 %8274
        %v8276 = vadd.f32 %v8159, %v8161
        %8277 = vadd.xlane.f32.xlu0 %v8276
        %v8278 = vpop.xlane.xlu0 %8277
        %v8279 = vadd.f32 %v8163, %v8165
        %8280 = vadd.xlane.f32.xlu0 %v8279
        %v8281 = vpop.xlane.xlu0 %8280
        %v8282 = vadd.f32 %v8167, %v8169
        %8283 = vadd.xlane.f32.xlu0 %v8282
        %v8284 = vpop.xlane.xlu0 %8283
        %v8285 = vadd.f32 %v8171, %v8173
        %8286 = vadd.xlane.f32.xlu0 %v8285
        %v8287 = vpop.xlane.xlu0 %8286
        %v8288 = vadd.f32 %v8175, %v8177
        %8289 = vadd.xlane.f32.xlu0 %v8288
        %v8290 = vpop.xlane.xlu0 %8289
        %v8291 = vadd.f32 %v8179, %v8181
        %8292 = vadd.xlane.f32.xlu0 %v8291
        %v8293 = vpop.xlane.xlu0 %8292
        %v8294 = vadd.f32 %v8183, %v8185
        %8295 = vadd.xlane.f32.xlu0 %v8294
        %v8296 = vpop.xlane.xlu0 %8295
        %v8297 = vadd.f32 %v8187, %v8189
        %8298 = vadd.xlane.f32.xlu0 %v8297
        %v8299 = vpop.xlane.xlu0 %8298
        %v8300 = vadd.f32 %v8191, %v8193
        %8301 = vadd.xlane.f32.xlu0 %v8300
        %v8302 = vpop.xlane.xlu0 %8301
        %v8303 = vadd.f32 %v8195, %v8197
        %8304 = vadd.xlane.f32.xlu0 %v8303
        %v8305 = vpop.xlane.xlu0 %8304
        %v8306 = vadd.f32 %v8199, %v8201
        %8307 = vadd.xlane.f32.xlu0 %v8306
        %v8308 = vpop.xlane.xlu0 %8307
        %v8309 = vadd.f32 %v8203, %v8205
        %8310 = vadd.xlane.f32.xlu0 %v8309
        %v8311 = vpop.xlane.xlu0 %8310
        %v8312 = vadd.f32 %v8207, %v8209
        %8313 = vadd.xlane.f32.xlu0 %v8312
        %v8314 = vpop.xlane.xlu0 %8313
        %v8315 = vadd.f32 %v8211, %v8213
        %8316 = vadd.xlane.f32.xlu0 %v8315
        %v8317 = vpop.xlane.xlu0 %8316
        %v8318 = vadd.f32 %v8215, %v8217
        %8319 = vadd.xlane.f32.xlu0 %v8318
        %v8320 = vpop.xlane.xlu0 %8319
        %v8321 = vadd.f32 %v8219, %v8221
        %8322 = vadd.xlane.f32.xlu0 %v8321
        %v8323 = vpop.xlane.xlu0 %8322
        %v8324 = vadd.f32 %v8223, %v8225
        %8325 = vadd.xlane.f32.xlu0 %v8324
        %v8326 = vpop.xlane.xlu0 %8325
        %v8327 = vadd.f32 %v8227, %v8229
        %8328 = vadd.xlane.f32.xlu0 %v8327
        %v8329 = vpop.xlane.xlu0 %8328
        %v8330 = vadd.f32 %v8231, %v8233
        %8331 = vadd.xlane.f32.xlu0 %v8330
        %v8332 = vpop.xlane.xlu0 %8331
        %v8333 = vadd.f32 %v8235, %v8237
        %8334 = vadd.xlane.f32.xlu0 %v8333
        %v8335 = vpop.xlane.xlu0 %8334
        %v8336 = vadd.f32 %v8239, %v8241
        %8337 = vadd.xlane.f32.xlu0 %v8336
        %v8338 = vpop.xlane.xlu0 %8337
        %v8339 = vadd.f32 %v8243, %v8245
        %8340 = vadd.xlane.f32.xlu0 %v8339
        %v8341 = vpop.xlane.xlu0 %8340
        %v8342 = vrcp.pop %v8248
        %v8343 = vrcp.pop %v8251
        %v8344 = vrcp.pop %v8254
        %v8345 = vrcp.pop %v8257
        %v8346 = vrcp.pop %v8260
        %v8347 = vrcp.pop %v8263
        %v8348 = vrcp.pop %v8266
        %v8349 = vrcp.pop %v8269
        %v8350 = vrcp.pop %v8272
        %v8351 = vrcp.pop %v8275
        %v8352 = vrcp.pop %v8278
        %v8353 = vrcp.pop %v8281
        %v8354 = vrcp.pop %v8284
        %v8355 = vrcp.pop %v8287
        %v8356 = vrcp.pop %v8290
        %v8357 = vrcp.pop %v8293
        %v8358 = vrcp.pop %v8296
        %v8359 = vrcp.pop %v8299
        %v8360 = vrcp.pop %v8302
        %v8361 = vrcp.pop %v8305
        %v8362 = vrcp.pop %v8308
        %v8363 = vrcp.pop %v8311
        %v8364 = vrcp.pop %v8314
        %v8365 = vrcp.pop %v8317
        %v8366 = vrcp.pop %v8320
        %v8367 = vrcp.pop %v8323
        %v8368 = vrcp.pop %v8326
        %v8369 = vrcp.pop %v8329
        %v8370 = vrcp.pop %v8332
        %v8371 = vrcp.pop %v8335
        %v8372 = vrcp.pop %v8338
        %v8373 = vrcp.pop %v8341
        %v8374 = vmul.f32 %v8119, %v8342
        %v8375 = vmul.f32 %v8121, %v8342
        %v8376 = vmul.f32 %v8123, %v8343
        %v8377 = vmul.f32 %v8125, %v8343
        %v8378 = vmul.f32 %v8127, %v8344
        %v8379 = vmul.f32 %v8129, %v8344
        %v8380 = vmul.f32 %v8131, %v8345
        %v8381 = vmul.f32 %v8133, %v8345
        %v8382 = vmul.f32 %v8135, %v8346
        %v8383 = vmul.f32 %v8137, %v8346
        %v8384 = vmul.f32 %v8139, %v8347
        %v8385 = vmul.f32 %v8141, %v8347
        %v8386 = vmul.f32 %v8143, %v8348
        %v8387 = vmul.f32 %v8145, %v8348
        %v8388 = vmul.f32 %v8147, %v8349
        %v8389 = vmul.f32 %v8149, %v8349
        %v8390 = vmul.f32 %v8151, %v8350
        %v8391 = vmul.f32 %v8153, %v8350
        %v8392 = vmul.f32 %v8155, %v8351
        %v8393 = vmul.f32 %v8157, %v8351
        %v8394 = vmul.f32 %v8159, %v8352
        %v8395 = vmul.f32 %v8161, %v8352
        %v8396 = vmul.f32 %v8163, %v8353
        %v8397 = vmul.f32 %v8165, %v8353
        %v8398 = vmul.f32 %v8167, %v8354
        %v8399 = vmul.f32 %v8169, %v8354
        %v8400 = vmul.f32 %v8171, %v8355
        %v8401 = vmul.f32 %v8173, %v8355
        %v8402 = vmul.f32 %v8175, %v8356
        %v8403 = vmul.f32 %v8177, %v8356
        %v8404 = vmul.f32 %v8179, %v8357
        %v8405 = vmul.f32 %v8181, %v8357
        %v8406 = vmul.f32 %v8183, %v8358
        %v8407 = vmul.f32 %v8185, %v8358
        %v8408 = vmul.f32 %v8187, %v8359
        %v8409 = vmul.f32 %v8189, %v8359
        %v8410 = vmul.f32 %v8191, %v8360
        %v8411 = vmul.f32 %v8193, %v8360
        %v8412 = vmul.f32 %v8195, %v8361
        %v8413 = vmul.f32 %v8197, %v8361
        %v8414 = vmul.f32 %v8199, %v8362
        %v8415 = vmul.f32 %v8201, %v8362
        %v8416 = vmul.f32 %v8203, %v8363
        %v8417 = vmul.f32 %v8205, %v8363
        %v8418 = vmul.f32 %v8207, %v8364
        %v8419 = vmul.f32 %v8209, %v8364
        %v8420 = vmul.f32 %v8211, %v8365
        %v8421 = vmul.f32 %v8213, %v8365
        %v8422 = vmul.f32 %v8215, %v8366
        %v8423 = vmul.f32 %v8217, %v8366
        %v8424 = vmul.f32 %v8219, %v8367
        %v8425 = vmul.f32 %v8221, %v8367
        %v8426 = vmul.f32 %v8223, %v8368
        %v8427 = vmul.f32 %v8225, %v8368
        %v8428 = vmul.f32 %v8227, %v8369
        %v8429 = vmul.f32 %v8229, %v8369
        %v8430 = vmul.f32 %v8231, %v8370
        %v8431 = vmul.f32 %v8233, %v8370
        %v8432 = vmul.f32 %v8235, %v8371
        %v8433 = vmul.f32 %v8237, %v8371
        %v8434 = vmul.f32 %v8239, %v8372
        %v8435 = vmul.f32 %v8241, %v8372
        %v8436 = vmul.f32 %v8243, %v8373
        %v8437 = vmul.f32 %v8245, %v8373
        %v8438 = vpack.c.bf16 %v8376, %v8374
        %v8439 = vpack.c.bf16 %v8377, %v8375
        %v8440 = vpack.c.bf16 %v8380, %v8378
        %v8441 = vpack.c.bf16 %v8381, %v8379
        %v8442 = vpack.c.bf16 %v8384, %v8382
        %v8443 = vpack.c.bf16 %v8385, %v8383
        %v8444 = vpack.c.bf16 %v8388, %v8386
        %v8445 = vpack.c.bf16 %v8389, %v8387
        %v8446 = vpack.c.bf16 %v8392, %v8390
        %v8447 = vpack.c.bf16 %v8393, %v8391
        %v8448 = vpack.c.bf16 %v8396, %v8394
        %v8449 = vpack.c.bf16 %v8397, %v8395
        %v8450 = vpack.c.bf16 %v8400, %v8398
        %v8451 = vpack.c.bf16 %v8401, %v8399
        %v8452 = vpack.c.bf16 %v8404, %v8402
        %v8453 = vpack.c.bf16 %v8405, %v8403
        %v8454 = vpack.c.bf16 %v8408, %v8406
        %v8455 = vpack.c.bf16 %v8409, %v8407
        %v8456 = vpack.c.bf16 %v8412, %v8410
        %v8457 = vpack.c.bf16 %v8413, %v8411
        %v8458 = vpack.c.bf16 %v8416, %v8414
        %v8459 = vpack.c.bf16 %v8417, %v8415
        %v8460 = vpack.c.bf16 %v8420, %v8418
        %v8461 = vpack.c.bf16 %v8421, %v8419
        %v8462 = vpack.c.bf16 %v8424, %v8422
        %v8463 = vpack.c.bf16 %v8425, %v8423
        %v8464 = vpack.c.bf16 %v8428, %v8426
        %v8465 = vpack.c.bf16 %v8429, %v8427
        %v8466 = vpack.c.bf16 %v8432, %v8430
        %v8467 = vpack.c.bf16 %v8433, %v8431
        %v8468 = vpack.c.bf16 %v8436, %v8434
        %v8469 = vpack.c.bf16 %v8437, %v8435
        %8470 = vmatpush.bf16.msra.mxu0 %v7771
        %8471 = vmatpush.bf16.msra.mxu0 %v7770
        %8472 = vmatpush.bf16.msra.mxu0 %v7769
        %8473 = vmatpush.bf16.msra.mxu0 %v7768
        %8474 = vmatpush.bf16.msra.mxu0 %v7767
        %8475 = vmatpush.bf16.msra.mxu0 %v7766
        %8476 = vmatpush.bf16.msra.mxu0 %v7765
        %8477 = vmatpush.bf16.msra.mxu0 %v7764
        %8478 = vmatmul.bf16.gmra.mxu0 %v8438
        %v8479 = vpop.f32.mrf.mxu0
        %v8480 = vadd.f32 %v6928, %v8479
        %v8481 = vpop.f32.mrf.mxu0
        %v8482 = vadd.f32 %v6929, %v8481
        %8483 = vmatmul.bf16.gmra.mxu0 %v8440
        %v8484 = vpop.f32.mrf.mxu0
        %v8485 = vadd.f32 %v6930, %v8484
        %v8486 = vpop.f32.mrf.mxu0
        %v8487 = vadd.f32 %v6931, %v8486
        %8488 = vmatmul.bf16.gmra.mxu0 %v8442
        %v8489 = vpop.f32.mrf.mxu0
        %v8490 = vadd.f32 %v6932, %v8489
        %v8491 = vpop.f32.mrf.mxu0
        %v8492 = vadd.f32 %v6933, %v8491
        %8493 = vmatmul.bf16.gmra.mxu0 %v8444
        %v8494 = vpop.f32.mrf.mxu0
        %v8495 = vadd.f32 %v6934, %v8494
        %v8496 = vpop.f32.mrf.mxu0
        %v8497 = vadd.f32 %v6935, %v8496
        %8498 = vmatmul.bf16.gmra.mxu0 %v8446
        %v8499 = vpop.f32.mrf.mxu0
        %v8500 = vadd.f32 %v6936, %v8499
        %v8501 = vpop.f32.mrf.mxu0
        %v8502 = vadd.f32 %v6937, %v8501
        %8503 = vmatmul.bf16.gmra.mxu0 %v8448
        %v8504 = vpop.f32.mrf.mxu0
        %v8505 = vadd.f32 %v6938, %v8504
        %v8506 = vpop.f32.mrf.mxu0
        %v8507 = vadd.f32 %v6939, %v8506
        %8508 = vmatmul.bf16.gmra.mxu0 %v8450
        %v8509 = vpop.f32.mrf.mxu0
        %v8510 = vadd.f32 %v6940, %v8509
        %v8511 = vpop.f32.mrf.mxu0
        %v8512 = vadd.f32 %v6941, %v8511
        %8513 = vmatmul.bf16.gmra.mxu0 %v8452
        %v8514 = vpop.f32.mrf.mxu0
        %v8515 = vadd.f32 %v6942, %v8514
        %v8516 = vpop.f32.mrf.mxu0
        %v8517 = vadd.f32 %v6943, %v8516
        %8518 = vmatmul.bf16.gmra.mxu0 %v8454
        %v8519 = vpop.f32.mrf.mxu0
        %v8520 = vadd.f32 %v6944, %v8519
        %v8521 = vpop.f32.mrf.mxu0
        %v8522 = vadd.f32 %v6945, %v8521
        %8523 = vmatmul.bf16.gmra.mxu0 %v8456
        %v8524 = vpop.f32.mrf.mxu0
        %v8525 = vadd.f32 %v6946, %v8524
        %v8526 = vpop.f32.mrf.mxu0
        %v8527 = vadd.f32 %v6947, %v8526
        %8528 = vmatmul.bf16.gmra.mxu0 %v8458
        %v8529 = vpop.f32.mrf.mxu0
        %v8530 = vadd.f32 %v6948, %v8529
        %v8531 = vpop.f32.mrf.mxu0
        %v8532 = vadd.f32 %v6949, %v8531
        %8533 = vmatmul.bf16.gmra.mxu0 %v8460
        %v8534 = vpop.f32.mrf.mxu0
        %v8535 = vadd.f32 %v6950, %v8534
        %v8536 = vpop.f32.mrf.mxu0
        %v8537 = vadd.f32 %v6951, %v8536
        %8538 = vmatmul.bf16.gmra.mxu0 %v8462
        %v8539 = vpop.f32.mrf.mxu0
        %v8540 = vadd.f32 %v6952, %v8539
        %v8541 = vpop.f32.mrf.mxu0
        %v8542 = vadd.f32 %v6953, %v8541
        %8543 = vmatmul.bf16.gmra.mxu0 %v8464
        %v8544 = vpop.f32.mrf.mxu0
        %v8545 = vadd.f32 %v6954, %v8544
        %v8546 = vpop.f32.mrf.mxu0
        %v8547 = vadd.f32 %v6955, %v8546
        %8548 = vmatmul.bf16.gmra.mxu0 %v8466
        %v8549 = vpop.f32.mrf.mxu0
        %v8550 = vadd.f32 %v6956, %v8549
        %v8551 = vpop.f32.mrf.mxu0
        %v8552 = vadd.f32 %v6957, %v8551
        %8553 = vmatmul.bf16.gmra.mxu0 %v8468
        %v8554 = vpop.f32.mrf.mxu0
        %v8555 = vadd.f32 %v6958, %v8554
        %v8556 = vpop.f32.mrf.mxu0
        %v8557 = vadd.f32 %v6959, %v8556
        %8558 = vdwg.mxu0
        %8559 = vmatpush.bf16.msra.mxu0 %v7779
        %8560 = vmatpush.bf16.msra.mxu0 %v7778
        %8561 = vmatpush.bf16.msra.mxu0 %v7777
        %8562 = vmatpush.bf16.msra.mxu0 %v7776
        %8563 = vmatpush.bf16.msra.mxu0 %v7775
        %8564 = vmatpush.bf16.msra.mxu0 %v7774
        %8565 = vmatpush.bf16.msra.mxu0 %v7773
        %8566 = vmatpush.bf16.msra.mxu0 %v7772
        %8567 = vmatmul.bf16.gmra.mxu0 %v8439
        %v8568 = vpop.f32.mrf.mxu0
        %v8569 = vadd.f32 %v8480, %v8568
        %v8570 = vpop.f32.mrf.mxu0
        %v8571 = vadd.f32 %v8482, %v8570
        %8572 = vmatmul.bf16.gmra.mxu0 %v8441
        %v8573 = vpop.f32.mrf.mxu0
        %v8574 = vadd.f32 %v8485, %v8573
        %v8575 = vpop.f32.mrf.mxu0
        %v8576 = vadd.f32 %v8487, %v8575
        %8577 = vmatmul.bf16.gmra.mxu0 %v8443
        %v8578 = vpop.f32.mrf.mxu0
        %v8579 = vadd.f32 %v8490, %v8578
        %v8580 = vpop.f32.mrf.mxu0
        %v8581 = vadd.f32 %v8492, %v8580
        %8582 = vmatmul.bf16.gmra.mxu0 %v8445
        %v8583 = vpop.f32.mrf.mxu0
        %v8584 = vadd.f32 %v8495, %v8583
        %v8585 = vpop.f32.mrf.mxu0
        %v8586 = vadd.f32 %v8497, %v8585
        %8587 = vmatmul.bf16.gmra.mxu0 %v8447
        %v8588 = vpop.f32.mrf.mxu0
        %v8589 = vadd.f32 %v8500, %v8588
        %v8590 = vpop.f32.mrf.mxu0
        %v8591 = vadd.f32 %v8502, %v8590
        %8592 = vmatmul.bf16.gmra.mxu0 %v8449
        %v8593 = vpop.f32.mrf.mxu0
        %v8594 = vadd.f32 %v8505, %v8593
        %v8595 = vpop.f32.mrf.mxu0
        %v8596 = vadd.f32 %v8507, %v8595
        %8597 = vmatmul.bf16.gmra.mxu0 %v8451
        %v8598 = vpop.f32.mrf.mxu0
        %v8599 = vadd.f32 %v8510, %v8598
        %v8600 = vpop.f32.mrf.mxu0
        %v8601 = vadd.f32 %v8512, %v8600
        %8602 = vmatmul.bf16.gmra.mxu0 %v8453
        %v8603 = vpop.f32.mrf.mxu0
        %v8604 = vadd.f32 %v8515, %v8603
        %v8605 = vpop.f32.mrf.mxu0
        %v8606 = vadd.f32 %v8517, %v8605
        %8607 = vmatmul.bf16.gmra.mxu0 %v8455
        %v8608 = vpop.f32.mrf.mxu0
        %v8609 = vadd.f32 %v8520, %v8608
        %v8610 = vpop.f32.mrf.mxu0
        %v8611 = vadd.f32 %v8522, %v8610
        %8612 = vmatmul.bf16.gmra.mxu0 %v8457
        %v8613 = vpop.f32.mrf.mxu0
        %v8614 = vadd.f32 %v8525, %v8613
        %v8615 = vpop.f32.mrf.mxu0
        %v8616 = vadd.f32 %v8527, %v8615
        %8617 = vmatmul.bf16.gmra.mxu0 %v8459
        %v8618 = vpop.f32.mrf.mxu0
        %v8619 = vadd.f32 %v8530, %v8618
        %v8620 = vpop.f32.mrf.mxu0
        %v8621 = vadd.f32 %v8532, %v8620
        %8622 = vmatmul.bf16.gmra.mxu0 %v8461
        %v8623 = vpop.f32.mrf.mxu0
        %v8624 = vadd.f32 %v8535, %v8623
        %v8625 = vpop.f32.mrf.mxu0
        %v8626 = vadd.f32 %v8537, %v8625
        %8627 = vmatmul.bf16.gmra.mxu0 %v8463
        %v8628 = vpop.f32.mrf.mxu0
        %v8629 = vadd.f32 %v8540, %v8628
        %v8630 = vpop.f32.mrf.mxu0
        %v8631 = vadd.f32 %v8542, %v8630
        %8632 = vmatmul.bf16.gmra.mxu0 %v8465
        %v8633 = vpop.f32.mrf.mxu0
        %v8634 = vadd.f32 %v8545, %v8633
        %v8635 = vpop.f32.mrf.mxu0
        %v8636 = vadd.f32 %v8547, %v8635
        %8637 = vmatmul.bf16.gmra.mxu0 %v8467
        %v8638 = vpop.f32.mrf.mxu0
        %v8639 = vadd.f32 %v8550, %v8638
        %v8640 = vpop.f32.mrf.mxu0
        %v8641 = vadd.f32 %v8552, %v8640
        %8642 = vmatmul.bf16.gmra.mxu0 %v8469
        %v8643 = vpop.f32.mrf.mxu0
        %v8644 = vadd.f32 %v8555, %v8643
        %v8645 = vpop.f32.mrf.mxu0
        %v8646 = vadd.f32 %v8557, %v8645
        %8647 = vdwg.mxu0
        %v8648 = vadd.f32 %v8569, %v7249
        %v8649 = vadd.f32 %v8571, %v7250
        %v8650 = vadd.f32 %v8574, %v7251
        %v8651 = vadd.f32 %v8576, %v7252
        %v8652 = vadd.f32 %v8579, %v7253
        %v8653 = vadd.f32 %v8581, %v7254
        %v8654 = vadd.f32 %v8584, %v7255
        %v8655 = vadd.f32 %v8586, %v7256
        %v8656 = vadd.f32 %v8589, %v7257
        %v8657 = vadd.f32 %v8591, %v7258
        %v8658 = vadd.f32 %v8594, %v7259
        %v8659 = vadd.f32 %v8596, %v7260
        %v8660 = vadd.f32 %v8599, %v7261
        %v8661 = vadd.f32 %v8601, %v7262
        %v8662 = vadd.f32 %v8604, %v7263
        %v8663 = vadd.f32 %v8606, %v7264
        %v8664 = vadd.f32 %v8609, %v7265
        %v8665 = vadd.f32 %v8611, %v7266
        %v8666 = vadd.f32 %v8614, %v7267
        %v8667 = vadd.f32 %v8616, %v7268
        %v8668 = vadd.f32 %v8619, %v7269
        %v8669 = vadd.f32 %v8621, %v7270
        %v8670 = vadd.f32 %v8624, %v7271
        %v8671 = vadd.f32 %v8626, %v7272
        %v8672 = vadd.f32 %v8629, %v7273
        %v8673 = vadd.f32 %v8631, %v7274
        %v8674 = vadd.f32 %v8634, %v7275
        %v8675 = vadd.f32 %v8636, %v7276
        %v8676 = vadd.f32 %v8639, %v7277
        %v8677 = vadd.f32 %v8641, %v7278
        %v8678 = vadd.f32 %v8644, %v7279
        %v8679 = vadd.f32 %v8646, %v7280
        %v8680 = vmax.f32 %v8648, 0.0
        %v8681 = vmax.f32 %v8649, 0.0
        %v8682 = vmax.f32 %v8650, 0.0
        %v8683 = vmax.f32 %v8651, 0.0
        %v8684 = vmax.f32 %v8652, 0.0
        %v8685 = vmax.f32 %v8653, 0.0
        %v8686 = vmax.f32 %v8654, 0.0
        %v8687 = vmax.f32 %v8655, 0.0
        %v8688 = vmax.f32 %v8656, 0.0
        %v8689 = vmax.f32 %v8657, 0.0
        %v8690 = vmax.f32 %v8658, 0.0
        %v8691 = vmax.f32 %v8659, 0.0
        %v8692 = vmax.f32 %v8660, 0.0
        %v8693 = vmax.f32 %v8661, 0.0
        %v8694 = vmax.f32 %v8662, 0.0
        %v8695 = vmax.f32 %v8663, 0.0
        %v8696 = vmax.f32 %v8664, 0.0
        %v8697 = vmax.f32 %v8665, 0.0
        %v8698 = vmax.f32 %v8666, 0.0
        %v8699 = vmax.f32 %v8667, 0.0
        %v8700 = vmax.f32 %v8668, 0.0
        %v8701 = vmax.f32 %v8669, 0.0
        %v8702 = vmax.f32 %v8670, 0.0
        %v8703 = vmax.f32 %v8671, 0.0
        %v8704 = vmax.f32 %v8672, 0.0
        %v8705 = vmax.f32 %v8673, 0.0
        %v8706 = vmax.f32 %v8674, 0.0
        %v8707 = vmax.f32 %v8675, 0.0
        %v8708 = vmax.f32 %v8676, 0.0
        %v8709 = vmax.f32 %v8677, 0.0
        %v8710 = vmax.f32 %v8678, 0.0
        %v8711 = vmax.f32 %v8679, 0.0
        %8712 = vxpose.xlu0.b32.start [1/16] %v8680, 128
        %8713 = vxpose.xlu0.b32.cont [2/16] %v8681, 128
        %8714 = vxpose.xlu0.b32.cont [3/16] %v8682, 128
        %8715 = vxpose.xlu0.b32.cont [4/16] %v8683, 128
        %8716 = vxpose.xlu0.b32.cont [5/16] %v8684, 128
        %8717 = vxpose.xlu0.b32.cont [6/16] %v8685, 128
        %8718 = vxpose.xlu0.b32.cont [7/16] %v8686, 128
        %8719 = vxpose.xlu0.b32.cont [8/16] %v8687, 128
        %8720 = vxpose.xlu0.b32.cont [9/16] %v8688, 128
        %8721 = vxpose.xlu0.b32.cont [10/16] %v8689, 128
        %8722 = vxpose.xlu0.b32.cont [11/16] %v8690, 128
        %8723 = vxpose.xlu0.b32.cont [12/16] %v8691, 128
        %8724 = vxpose.xlu0.b32.cont [13/16] %v8692, 128
        %8725 = vxpose.xlu0.b32.cont [14/16] %v8693, 128
        %8726 = vxpose.xlu0.b32.cont [15/16] %v8694, 128
        %8727 = vxpose.xlu0.b32.end [16/16] %v8695, 128
        %v8728 = vpop.trf.xlu0
        %v8729 = vpop.trf.xlu0
        %v8730 = vpop.trf.xlu0
        %v8731 = vpop.trf.xlu0
        %v8732 = vpop.trf.xlu0
        %v8733 = vpop.trf.xlu0
        %v8734 = vpop.trf.xlu0
        %v8735 = vpop.trf.xlu0
        %v8736 = vpop.trf.xlu0
        %v8737 = vpop.trf.xlu0
        %v8738 = vpop.trf.xlu0
        %v8739 = vpop.trf.xlu0
        %v8740 = vpop.trf.xlu0
        %v8741 = vpop.trf.xlu0
        %v8742 = vpop.trf.xlu0
        %v8743 = vpop.trf.xlu0
        %8744 = vxpose.xlu0.b32.start [1/16] %v8696, 128
        %8745 = vxpose.xlu0.b32.cont [2/16] %v8697, 128
        %8746 = vxpose.xlu0.b32.cont [3/16] %v8698, 128
        %8747 = vxpose.xlu0.b32.cont [4/16] %v8699, 128
        %8748 = vxpose.xlu0.b32.cont [5/16] %v8700, 128
        %8749 = vxpose.xlu0.b32.cont [6/16] %v8701, 128
        %8750 = vxpose.xlu0.b32.cont [7/16] %v8702, 128
        %8751 = vxpose.xlu0.b32.cont [8/16] %v8703, 128
        %8752 = vxpose.xlu0.b32.cont [9/16] %v8704, 128
        %8753 = vxpose.xlu0.b32.cont [10/16] %v8705, 128
        %8754 = vxpose.xlu0.b32.cont [11/16] %v8706, 128
        %8755 = vxpose.xlu0.b32.cont [12/16] %v8707, 128
        %8756 = vxpose.xlu0.b32.cont [13/16] %v8708, 128
        %8757 = vxpose.xlu0.b32.cont [14/16] %v8709, 128
        %8758 = vxpose.xlu0.b32.cont [15/16] %v8710, 128
        %8759 = vxpose.xlu0.b32.end [16/16] %v8711, 128
        %v8760 = vpop.trf.xlu0
        %v8761 = vpop.trf.xlu0
        %v8762 = vpop.trf.xlu0
        %v8763 = vpop.trf.xlu0
        %v8764 = vpop.trf.xlu0
        %v8765 = vpop.trf.xlu0
        %v8766 = vpop.trf.xlu0
        %v8767 = vpop.trf.xlu0
        %v8768 = vpop.trf.xlu0
        %v8769 = vpop.trf.xlu0
        %v8770 = vpop.trf.xlu0
        %v8771 = vpop.trf.xlu0
        %v8772 = vpop.trf.xlu0
        %v8773 = vpop.trf.xlu0
        %v8774 = vpop.trf.xlu0
        %v8775 = vpop.trf.xlu0
        %8776 = vst [vmem:[%s528] sm:$0xff] %v8728
        %8777 = vst [vmem:[%s528 + $0x8] sm:$0xff] %v8760
        %8778 = vst [vmem:[%s528 + $0x10] sm:$0xff] %v8729
        %8779 = vst [vmem:[%s528 + $0x18] sm:$0xff] %v8761
        %s8780 = sand.u32 %s297, 1
        %s8781 = scalar_lea.sflag [#allocation5], %s8780
        %s8782 = sand.u32 %s297, 1
        %s8783 = smul.addr %s8782, 32
        %s8784 = scalar_lea.vmem [#allocation15], %s8783
        // Predicated region
        $region97: #{tpu_custom_call.1} parent=67 // pred_check
          %p8785 = pneg %p307
        $region98: #{tpu_custom_call.1} parent=67 // pred_check_branch
          %8787 = sbr.rel (%p8785) target = $region100
        $region99: #{tpu_custom_call.1} parent=67 // pred_region
          %8789 = vsyncadd %s8781, 0
          %s8790 = smul.addr %s32, 4
          %s8791 = smul.addr %s8790, 8
          %s8792 = scalar_lea.hbm %s12, %s8791
          %s8793 = sshll.u32 %s8784, 4
          %s8794 = int_to_ptr.vmem [resolvable:$true] %s8793
          %s8795 = sshll.u32 %s8792, 4
          %s8796 = int_to_ptr.hbm [resolvable:$true] %s8795
          %8801 = dma.vmem_to_hbm [thread:$0]  %s8794, 512, %s8796, %s8781, 256, 256, 16
        $region100: #{tpu_custom_call.1} parent=67 // pred_fallthru
          _
      $region68: #{tpu_custom_call.1} parent=5 // pred_fallthru
        _
      %p8802 = scmp.le.s32.totalorder 2, %s27
      // Predicated region
      $region101: #{tpu_custom_call.1} parent=5 // pred_check
        %p8803 = pneg %p8802
      $region102: #{tpu_custom_call.1} parent=5 // pred_check_branch
        %8805 = sbr.rel (%p8803) target = $region104
      $region103: #{tpu_custom_call.1} parent=5 // pred_region
        %s8806 = ssub.s32 %s27, 2
        // Predicated region
        $region105: #{tpu_custom_call.1} parent=103 // pred_check
          %p8807 = pneg %p313
        $region106: #{tpu_custom_call.1} parent=103 // pred_check_branch
          %8809 = sbr.rel (%p8807) target = $region108
        $region107: #{tpu_custom_call.1} parent=103 // pred_region
          %s8810 = sand.u32 %s298, 1
          %s8811 = scalar_lea.sflag [#allocation5], %s8810
          %s8812 = sand.u32 %s298, 1
          %s8813 = smul.addr %s8812, 32
          %s8814 = scalar_lea.vmem [#allocation15], %s8813
          %8816 = dma.done %s8811, 512
        $region108: #{tpu_custom_call.1} parent=103 // pred_fallthru
          _
      $region104: #{tpu_custom_call.1} parent=5 // pred_fallthru
        _
    $region6: #{tpu_custom_call.1} parent=1 // loop_footer
      %s31 = sadd.s32 1, %s27
    $region7: #{tpu_custom_call.1} parent=1 // loop_footer_branch
      %26 = sbr.rel target = $region3
    $region8: #{tpu_custom_call.1} parent=1 // loop_exit
      _
    %8817 = vsyncpa [#allocation4], 1
    %s8818 = scalar_lea.sflag [#allocation4], 1
    %8819 = vsyncpa %s8818, 1
    %8820 = vsyncpa [#allocation7], 1
    %8821 = vsyncpa [#allocation10], 1
    %8822 = vsyncpa [#allocation13], 1
    %8823 = vsyncpa [#allocation5], 1
    %s8824 = scalar_lea.sflag [#allocation5], 1
    %8825 = vsyncpa %s8824, 1

</llo_original>
